<compile_context>
chip_gen: v7x
topology: tpu7x:2x2x1
jax: 0.10.0
libtpu: 0.0.40
codegen_flags: <defaults>
</compile_context>

<pallas_src>
import functools
import math

import jax
import jax.numpy as jnp
from jax.experimental import pallas as pl
from jax.experimental.pallas import tpu as pltpu  # noqa: F401  (TPU backend hooks)

EPS = 1e-5  # nn.LayerNorm default eps


# ----------------------------- shared helpers ------------------------------

def _layernorm(x, g, b):
    mu = jnp.mean(x, axis=-1, keepdims=True)
    var = jnp.mean((x - mu) ** 2, axis=-1, keepdims=True)
    return (x - mu) * jax.lax.rsqrt(var + EPS) * g + b


def _fcnn(x, p):
    # FullyConnectedNN(in_dim, [L0, L1], out_dim): 3 Linears + ReLUs + skip proj.
    W1, b1, W2, b2, W3, b3, Wsk, bsk = p
    h = jnp.maximum(jnp.dot(x, W1, preferred_element_type=jnp.float32) + b1, 0.0)
    h = jnp.maximum(jnp.dot(h, W2, preferred_element_type=jnp.float32) + b2, 0.0)
    out = jnp.dot(h, W3, preferred_element_type=jnp.float32) + b3
    skip = jnp.dot(x, Wsk, preferred_element_type=jnp.float32) + bsk
    return out + skip


# --------------------------------- kernel ----------------------------------

def _block_rnn_kernel(B, C, H, O, L0, L1, R,
                      h0_ref, c0_ref, wc_ref, w23_ref, bc_ref, wsh_ref, bsh_ref,
                      out_ref, hfin_ref):
    bf16 = jnp.bfloat16

    def dot32(a, w):
        # bf16 MXU operands, f32 accumulation.
        return jnp.dot(a.astype(bf16), w, preferred_element_type=jnp.float32)

    LW1 = 2 * (L0 + H)              # fused layer-1 output width

    # ---- per-cell bias / LN rows: read + broadcast ONCE (hoisted out of the
    #      rounds loop; weight slices deliberately NOT hoisted -> vreg pressure).
    b1c = [jnp.broadcast_to(bc_ref[ci, 0:1, 0:LW1], (B, LW1)) for ci in range(C)]
    gbc = [jnp.broadcast_to(bc_ref[ci, 1:2, 0:4 * H], (B, 4 * H)) for ci in range(C)]
    b2c = [jnp.broadcast_to(bc_ref[ci, 2:3, 0:2 * L1], (B, 2 * L1)) for ci in range(C)]
    b3c = [jnp.broadcast_to(bc_ref[ci, 3:4, 0:2 * H], (B, 2 * H)) for ci in range(C)]
    hgc = [bc_ref[ci, 4:5, 0:H] for ci in range(C)]
    hbc = [bc_ref[ci, 5:6, 0:H] for ci in range(C)]
    cgc = [bc_ref[ci, 6:7, 0:H] for ci in range(C)]
    cbc = [bc_ref[ci, 7:8, 0:H] for ci in range(C)]

    # ---- chain / external states, lane-packed [h | c] (one vreg tile each;
    #      states never leave vregs across the whole unrolled R x C run).
    hc0 = jnp.concatenate([h0_ref[...], c0_ref[...]], axis=1)        # (B, 2H)
    chain = [hc0] * C
    ext = hc0

    for _ in range(R):
        for ci in range(C):
            sstate = ext if ci == 0 else chain[ci - 1]               # [h_sp|c_sp]
            tstate = chain[ci]                                       # [h_t |c_t ]

            # Fused (hidden_processor | cell_processor | both skip projections)
            # first layer: ONE K=4H matmul; LHS = [h_sp|c_sp|h_t|c_t].
            lhs = jnp.concatenate([sstate, tstate], axis=1)          # (B, 4H)
            z1 = dot32(lhs, wc_ref[ci, 0:4 * H, 0:LW1]) + b1c[ci]
            hid = jnp.maximum(z1[:, 0:2 * L0], 0.0)                  # [hp | cp] hidden
            skips = z1[:, 2 * L0:2 * L0 + 2 * H]                     # [hp | cp] skips
            hid = jnp.maximum(
                dot32(hid, w23_ref[ci, 0:2 * L0, 0:2 * L1]) + b2c[ci], 0.0)
            z3 = (dot32(hid, w23_ref[ci, 2 * L0:2 * L0 + 2 * L1, 0:2 * H])
                  + b3c[ci] + skips)                                 # [ph_pre | pc_pre]

            ph = _layernorm(z3[:, 0:H], hgc[ci], hbc[ci])
            pc = _layernorm(z3[:, H:2 * H], cgc[ci], cbc[ci])

            # LSTMCell (torch gate order i, f, g, o). The x-path is a constant
            # (fc_in + LayerNorm(1) collapse), folded into the gate bias row.
            # g-gate weight/bias columns were pre-scaled by 2 host-side so ONE
            # sigmoid pass yields every gate: tanh(x) = 2*sigmoid(2x) - 1.
            gates = dot32(ph, wc_ref[ci, 4 * H:5 * H, 0:4 * H]) + gbc[ci]
            sg = jax.nn.sigmoid(gates)                               # single EUP pass
            i_g, f_g, o_g = sg[:, 0:H], sg[:, H:2 * H], sg[:, 3 * H:4 * H]
            g_g = 2.0 * sg[:, 2 * H:3 * H] - 1.0                     # tanh(g_pre)
            c_new = f_g * pc + i_g * g_g
            h_new = o_g * jnp.tanh(c_new)
            chain[ci] = jnp.concatenate([h_new, c_new], axis=1)      # re-pack [h|c]

        ext = chain[C - 1]

    # ---- LatticeRNN output head: computed once, after the final round ----
    final_hc = chain[C - 1]
    r2, r3, r4 = 2 * H, 2 * H + L0, 2 * H + L0 + L1
    z1 = dot32(final_hc, wsh_ref[0:2 * H, 0:L0 + H]) + bsh_ref[0:1, 0:L0 + H]
    h1 = jnp.maximum(z1[:, 0:L0], 0.0)
    skip = z1[:, L0:L0 + H]
    h2 = jnp.maximum(dot32(h1, wsh_ref[r2:r2 + L0, 0:L1]) + bsh_ref[1:2, 0:L1], 0.0)
    o3 = dot32(h2, wsh_ref[r3:r3 + L1, 0:H]) + bsh_ref[2:3, 0:H] + skip
    o3 = _layernorm(o3, bsh_ref[3:4, 0:H], bsh_ref[4:5, 0:H])
    # TODO(synk): dropout layers are identity here (eval-mode forward).
    out = jax.nn.sigmoid(dot32(o3, wsh_ref[r4:r4 + H, 0:O]) + bsh_ref[5:6, 0:O])

    out_ref[...] = out
    hfin_ref[...] = final_hc[:, 0:H]


# --------------------------- host-side param packing ------------------------

def _pack_params(cell_params, shared_params, C, H, L0, L1, O,
                 wdtype=jnp.bfloat16):
    (hp_W1, hp_b1, hp_W2, hp_b2, hp_W3, hp_b3, hp_Wsk, hp_bsk,
     cp_W1, cp_b1, cp_W2, cp_b2, cp_W3, cp_b3, cp_Wsk, cp_bsk,
     l_wih, l_whh, l_b, hn_g, hn_b, cn_g, cn_b) = cell_params
    (fi_w, fi_b, in_g, in_b,
     fo_W1, fo_b1, fo_W2, fo_b2, fo_W3, fo_b3, fo_Wsk, fo_bsk,
     on_g, on_b, fin_W, fin_b) = shared_params

    del fi_w, fi_b, in_g  # dead path: LayerNorm(1) output == beta (in_b) exactly.

    LW1 = 2 * (L0 + H)
    CW = max(LW1, 4 * H)                       # per-cell slab lane width

    def pad_last(a, w):
        p = w - a.shape[-1]
        if p == 0:
            return a
        return jnp.concatenate(
            [a, jnp.zeros(a.shape[:-1] + (p,), a.dtype)], axis=-1)

    zL0 = jnp.zeros((C, H, L0), jnp.float32)
    zH = jnp.zeros((C, H, H), jnp.float32)

    # Pre-scale the g-gate (columns 2H:3H) weight/bias by 2 so the kernel needs
    # only one sigmoid pass: tanh(x) = 2*sigmoid(2x) - 1.  Exact (power of 2).
    l_whh = l_whh.at[:, :, 2 * H:3 * H].multiply(2.0)

    # Fused layer-1 weights; rows ordered [h_space | c_space | h_time | c_time]
    # (matches the lane-packed LHS), output columns
    # [hp_hidden | cp_hidden | hp_skip | cp_skip].
    w1_hs = jnp.concatenate([hp_W1[:, :H, :], zL0, hp_Wsk[:, :H, :], zH], axis=-1)
    w1_cs = jnp.concatenate([zL0, cp_W1[:, :H, :], zH, cp_Wsk[:, :H, :]], axis=-1)
    w1_ht = jnp.concatenate([hp_W1[:, H:, :], zL0, hp_Wsk[:, H:, :], zH], axis=-1)
    w1_ct = jnp.concatenate([zL0, cp_W1[:, H:, :], zH, cp_Wsk[:, H:, :]], axis=-1)
    wcell = jnp.concatenate(
        [pad_last(w1_hs, CW), pad_last(w1_cs, CW),
         pad_last(w1_ht, CW), pad_last(w1_ct, CW),
         pad_last(l_whh, CW)], axis=1).astype(wdtype)           # (C, 5H, CW)

    # Block-diagonal layer-2 / layer-3 weights.
    zW2 = jnp.zeros((C, L0, L1), jnp.float32)
    zW3 = jnp.zeros((C, L1, H), jnp.float32)
    w2f = jnp.concatenate([jnp.concatenate([hp_W2, zW2], -1),
                           jnp.concatenate([zW2, cp_W2], -1)], axis=1)
    w3f = jnp.concatenate([jnp.concatenate([hp_W3, zW3], -1),
                           jnp.concatenate([zW3, cp_W3], -1)], axis=1)
    W23W = max(2 * L1, 2 * H)
    w23 = jnp.concatenate([pad_last(w2f, W23W),
                           pad_last(w3f, W23W)], axis=1).astype(wdtype)  # (C, 2L0+2L1, W23W)

    # Per-cell bias / LN slab (f32). Row layout:
    #   0: fused layer-1 bias  1: gate bias  2: layer-2 bias  3: layer-3 bias
    #   4: hn_gamma  5: hn_beta  6: cn_gamma  7: cn_beta
    gate_bias = in_b[0, 0] * l_wih + l_b                        # exact x-fold
    gate_bias = gate_bias.at[:, :, 2 * H:3 * H].multiply(2.0)   # g-gate x2 (see above)
    b1f = jnp.concatenate([hp_b1, cp_b1, hp_bsk, cp_bsk], -1)
    b2f = jnp.concatenate([hp_b2, cp_b2], -1)
    b3f = jnp.concatenate([hp_b3, cp_b3], -1)
    bcell = jnp.concatenate(
        [pad_last(b1f, CW), pad_last(gate_bias, CW),
         pad_last(b2f, CW), pad_last(b3f, CW),
         pad_last(hn_g, CW), pad_last(hn_b, CW),
         pad_last(cn_g, CW), pad_last(cn_b, CW)],
        axis=1).astype(jnp.float32)                             # (C, 8, CW)

    # Shared (output head) slabs.
    SW = max(L0 + H, L1, H, O)
    fo_w1h = jnp.concatenate([fo_W1[:H, :], fo_Wsk[:H, :]], -1)
    fo_w1c = jnp.concatenate([fo_W1[H:, :], fo_Wsk[H:, :]], -1)
    wsh = jnp.concatenate(
        [pad_last(fo_w1h, SW), pad_last(fo_w1c, SW),
         pad_last(fo_W2, SW), pad_last(fo_W3, SW),
         pad_last(fin_W, SW)], axis=0).astype(wdtype)           # (2H+L0+L1+H, SW)

    fb1 = jnp.concatenate([fo_b1, fo_bsk], -1)
    bsh = jnp.concatenate(
        [pad_last(fb1, SW), pad_last(fo_b2, SW), pad_last(fo_b3, SW),
         pad_last(on_g, SW), pad_last(on_b, SW), pad_last(fin_b, SW)],
        axis=0).astype(jnp.float32)                             # (6, SW)

    return wcell, w23, bcell, wsh, bsh


# --------------------------------- wrapper ----------------------------------

def block_rnn_forward(x, h0, c0, cell_params, shared_params):
    """x: [batch, num_rounds, chain_length] f32; returns (output, final_h).

    Note: the module's fc_in(Linear(1,1)) + LayerNorm(1) collapse every input
    element to the LayerNorm beta, so x only contributes its shape; its effect
    is folded into a constant per-cell gate bias (exact, zero numeric change).
    """
    B, R, C = x.shape
    H = h0.shape[1]
    L0 = cell_params[0].shape[2]          # hp_W1: (C, 2H, L0)
    L1 = cell_params[2].shape[2]          # hp_W2: (C, L0, L1)
    O = shared_params[-1].shape[1]        # fin_b: (1, O)

    wcell, w23, bcell, wsh, bsh = _pack_params(cell_params, shared_params,
                                               C, H, L0, L1, O)

    kernel = functools.partial(_block_rnn_kernel, B, C, H, O, L0, L1, R)
    # Gridless call: ~250 KB of packed operands stay VMEM-resident; the fully
    # serial R x C chain is unrolled in-kernel (no per-step pipeline overhead).
    out, h_fin = pl.pallas_call(
        kernel,
        out_shape=(jax.ShapeDtypeStruct((B, O), jnp.float32),
                   jax.ShapeDtypeStruct((B, H), jnp.float32)),
    )(h0.astype(jnp.float32), c0.astype(jnp.float32), wcell, w23, bcell, wsh, bsh)
    return out, h_fin


# --------------------------- parameter construction -------------------------

def _xavier(key, fan_out, fan_in):
    bound = math.sqrt(6.0 / (fan_in + fan_out))
    return jax.random.uniform(key, (fan_out, fan_in), jnp.float32, -bound, bound)


def _make_fcnn_params(key, in_dim, l0, l1, out_dim):
    ks = jax.random.split(key, 4)
    return [_xavier(ks[0], l0, in_dim).T, jnp.zeros((1, l0), jnp.float32),
            _xavier(ks[1], l1, l0).T, jnp.zeros((1, l1), jnp.float32),
            _xavier(ks[2], out_dim, l1).T, jnp.zeros((1, out_dim), jnp.float32),
            _xavier(ks[3], out_dim, in_dim).T, jnp.zeros((1, out_dim), jnp.float32)]


def _make_cell_params(key, H, l0, l1):
    k_hp, k_cp, k_ih, k_hh = jax.random.split(key, 4)
    hp = _make_fcnn_params(k_hp, 2 * H, l0, l1, H)
    cp = _make_fcnn_params(k_cp, 2 * H, l0, l1, H)
    w_ih = _xavier(k_ih, 4 * H, 1).T                              # (1, 4H)
    w_hh = jax.nn.initializers.orthogonal()(k_hh, (4 * H, H), jnp.float32).T
    # bias_ih + bias_hh, each with forget-gate chunk = 1.0  -> summed = 2.0
    b = jnp.zeros((4 * H,), jnp.float32).at[H:2 * H].set(2.0).reshape(1, 4 * H)
    hn_g = jnp.ones((1, H), jnp.float32); hn_b = jnp.zeros((1, H), jnp.float32)
    cn_g = jnp.ones((1, H), jnp.float32); cn_b = jnp.zeros((1, H), jnp.float32)
    return hp + cp + [w_ih, w_hh, b, hn_g, hn_b, cn_g, cn_b]


N_CELL_PARAMS = 23


def make_params(key, C, H, O, l0, l1):
    k_cells, k_fi, k_fo, k_fin = jax.random.split(key, 4)
    per_cell = [_make_cell_params(k, H, l0, l1)
                for k in jax.random.split(k_cells, C)]
    cell_params = [jnp.stack([per_cell[ci][j] for ci in range(C)], axis=0)
                   for j in range(N_CELL_PARAMS)]

    fi_w = _xavier(k_fi, 1, 1)                     # fc_in Linear(1,1)
    fi_b = jnp.zeros((1, 1), jnp.float32)
    in_g = jnp.ones((1, 1), jnp.float32)           # input_norm = LayerNorm(1)
    in_b = jnp.zeros((1, 1), jnp.float32)
    fo = _make_fcnn_params(k_fo, 2 * H, l0, l1, H)  # fc_out
    on_g = jnp.ones((1, H), jnp.float32)
    on_b = jnp.zeros((1, H), jnp.float32)
    fin_W = _xavier(k_fin, O, H).T                 # final_output Linear(H, O)
    fin_b = jnp.zeros((1, O), jnp.float32)
    shared_params = [fi_w, fi_b, in_g, in_b] + fo + [on_g, on_b, fin_W, fin_b]
    return cell_params, shared_params


# ---------------------------- pure-JAX reference ----------------------------

def reference_forward(x, h0, c0, cell_params, shared_params):
    B, R, C = x.shape
    H = h0.shape[1]
    (hp_W1, hp_b1, hp_W2, hp_b2, hp_W3, hp_b3, hp_Wsk, hp_bsk,
     cp_W1, cp_b1, cp_W2, cp_b2, cp_W3, cp_b3, cp_Wsk, cp_bsk,
     l_wih, l_whh, l_b, hn_g, hn_b, cn_g, cn_b) = cell_params
    (fi_w, fi_b, in_g, in_b,
     fo_W1, fo_b1, fo_W2, fo_b2, fo_W3, fo_b3, fo_Wsk, fo_bsk,
     on_g, on_b, fin_W, fin_b) = shared_params

    chain_h = [h0] * C
    chain_c = [c0] * C
    hext, cext = h0, c0
    out = None
    for r in range(R):
        xr = x[:, r, :]
        xin = xr * fi_w + fi_b
        xin = jnp.zeros_like(xin) * in_g + in_b    # LayerNorm(1) -> beta
        for ci in range(C):
            hs, cs = (hext, cext) if ci == 0 else (chain_h[ci - 1], chain_c[ci - 1])
            ht, ct = chain_h[ci], chain_c[ci]
            ph = _fcnn(jnp.concatenate([hs, ht], axis=1),
                       (hp_W1[ci], hp_b1[ci], hp_W2[ci], hp_b2[ci],
                        hp_W3[ci], hp_b3[ci], hp_Wsk[ci], hp_bsk[ci]))
            pc = _fcnn(jnp.concatenate([cs, ct], axis=1),
                       (cp_W1[ci], cp_b1[ci], cp_W2[ci], cp_b2[ci],
                        cp_W3[ci], cp_b3[ci], cp_Wsk[ci], cp_bsk[ci]))
            ph = _layernorm(ph, hn_g[ci], hn_b[ci])
            pc = _layernorm(pc, cn_g[ci], cn_b[ci])
            gates = xin[:, ci:ci + 1] * l_wih[ci] + ph @ l_whh[ci] + l_b[ci]
            i_g = jax.nn.sigmoid(gates[:, 0:H])
            f_g = jax.nn.sigmoid(gates[:, H:2 * H])
            g_g = jnp.tanh(gates[:, 2 * H:3 * H])
            o_g = jax.nn.sigmoid(gates[:, 3 * H:4 * H])
            c_new = f_g * pc + i_g * g_g
            h_new = o_g * jnp.tanh(c_new)
            chain_h[ci], chain_c[ci] = h_new, c_new
        hext, cext = chain_h[-1], chain_c[-1]
        final = jnp.concatenate([hext, cext], axis=1)
        o = _fcnn(final, (fo_W1, fo_b1, fo_W2, fo_b2, fo_W3, fo_b3, fo_Wsk, fo_bsk))
        o = _layernorm(o, on_g, on_b)
        out = jax.nn.sigmoid(o @ fin_W + fin_b)
    return out, hext


# ----------------------------------- main -----------------------------------

if __name__ == "__main__":
    # BlockRNN(input_size=1, hidden_size=32, output_size=4, chain_length=4,
    #          fc_layers_intra=[32, 32], fc_layers_out=[32, 32], batch_size=2)
    B, C, H, O, R = 2, 4, 32, 4, 3
    L0 = L1 = 32

    key = jax.random.PRNGKey(0)
    k_x, k_h, k_c, k_p = jax.random.split(key, 4)
    x = jax.random.normal(k_x, (B, R, C), jnp.float32)      # [batch, rounds, chain]
    init_std = 1.0 / math.sqrt(H)
    h0 = jax.random.normal(k_h, (B, H), jnp.float32) * init_std
    c0 = jax.random.normal(k_c, (B, H), jnp.float32) * init_std

    cell_params, shared_params = make_params(k_p, C, H, O, L0, L1)

    out, h_fin = block_rnn_forward(x, h0, c0, cell_params, shared_params)
    jax.block_until_ready((out, h_fin))

    ref_out, ref_h = reference_forward(x, h0, c0, cell_params, shared_params)
    assert out.shape == (B, O) and h_fin.shape == (B, H)
    if not (bool(jnp.allclose(out, ref_out, rtol=5e-2, atol=5e-2)) and
            bool(jnp.allclose(h_fin, ref_h, rtol=5e-2, atol=5e-2))):
        raise AssertionError("Pallas kernel output mismatch vs JAX reference")

    print("KERNEL_OK")
</pallas_src>

<mosaic_0001>
module attributes {stable_mosaic.version = 11 : i64} {
  func.func @_block_rnn_kernel(%arg0: memref<2x32xf32, #tpu.memory_space<vmem>>, %arg1: memref<2x32xf32, #tpu.memory_space<vmem>>, %arg2: memref<4x160x128xbf16, #tpu.memory_space<vmem>>, %arg3: memref<4x128x64xbf16, #tpu.memory_space<vmem>>, %arg4: memref<4x8x128xf32, #tpu.memory_space<vmem>>, %arg5: memref<160x64xbf16, #tpu.memory_space<vmem>>, %arg6: memref<6x64xf32, #tpu.memory_space<vmem>>, %arg7: memref<2x4xf32, #tpu.memory_space<vmem>>, %arg8: memref<2x32xf32, #tpu.memory_space<vmem>>) attributes {dimension_semantics = [], scalar_prefetch = 0 : i64, scratch_operands = 0 : i64, tpu.core_type = #tpu.core_type<tc>} {
    %c0 = arith.constant 0 : index
    %c0_0 = arith.constant 0 : index
    %c0_1 = arith.constant 0 : index
    %0 = vector.load %arg4[%c0, %c0_0, %c0_1] : memref<4x8x128xf32, #tpu.memory_space<vmem>>, vector<1x1x128xf32>
    %1 = vector.shape_cast %0 : vector<1x1x128xf32> to vector<1x128xf32>
    %2 = vector.shape_cast %1 : vector<1x128xf32> to vector<1x128xf32>
    %3 = vector.broadcast %2 : vector<1x128xf32> to vector<2x128xf32>
    %c1 = arith.constant 1 : index
    %c0_2 = arith.constant 0 : index
    %c0_3 = arith.constant 0 : index
    %4 = vector.load %arg4[%c1, %c0_2, %c0_3] : memref<4x8x128xf32, #tpu.memory_space<vmem>>, vector<1x1x128xf32>
    %5 = vector.shape_cast %4 : vector<1x1x128xf32> to vector<1x128xf32>
    %6 = vector.shape_cast %5 : vector<1x128xf32> to vector<1x128xf32>
    %7 = vector.broadcast %6 : vector<1x128xf32> to vector<2x128xf32>
    %c2 = arith.constant 2 : index
    %c0_4 = arith.constant 0 : index
    %c0_5 = arith.constant 0 : index
    %8 = vector.load %arg4[%c2, %c0_4, %c0_5] : memref<4x8x128xf32, #tpu.memory_space<vmem>>, vector<1x1x128xf32>
    %9 = vector.shape_cast %8 : vector<1x1x128xf32> to vector<1x128xf32>
    %10 = vector.shape_cast %9 : vector<1x128xf32> to vector<1x128xf32>
    %11 = vector.broadcast %10 : vector<1x128xf32> to vector<2x128xf32>
    %c3 = arith.constant 3 : index
    %c0_6 = arith.constant 0 : index
    %c0_7 = arith.constant 0 : index
    %12 = vector.load %arg4[%c3, %c0_6, %c0_7] : memref<4x8x128xf32, #tpu.memory_space<vmem>>, vector<1x1x128xf32>
    %13 = vector.shape_cast %12 : vector<1x1x128xf32> to vector<1x128xf32>
    %14 = vector.shape_cast %13 : vector<1x128xf32> to vector<1x128xf32>
    %15 = vector.broadcast %14 : vector<1x128xf32> to vector<2x128xf32>
    %c0_8 = arith.constant 0 : index
    %c1_9 = arith.constant 1 : index
    %c0_10 = arith.constant 0 : index
    %16 = vector.load %arg4[%c0_8, %c1_9, %c0_10] : memref<4x8x128xf32, #tpu.memory_space<vmem>>, vector<1x1x128xf32>
    %17 = vector.shape_cast %16 : vector<1x1x128xf32> to vector<1x128xf32>
    %18 = vector.shape_cast %17 : vector<1x128xf32> to vector<1x128xf32>
    %19 = vector.broadcast %18 : vector<1x128xf32> to vector<2x128xf32>
    %c1_11 = arith.constant 1 : index
    %c1_12 = arith.constant 1 : index
    %c0_13 = arith.constant 0 : index
    %20 = vector.load %arg4[%c1_11, %c1_12, %c0_13] : memref<4x8x128xf32, #tpu.memory_space<vmem>>, vector<1x1x128xf32>
    %21 = vector.shape_cast %20 : vector<1x1x128xf32> to vector<1x128xf32>
    %22 = vector.shape_cast %21 : vector<1x128xf32> to vector<1x128xf32>
    %23 = vector.broadcast %22 : vector<1x128xf32> to vector<2x128xf32>
    %c2_14 = arith.constant 2 : index
    %c1_15 = arith.constant 1 : index
    %c0_16 = arith.constant 0 : index
    %24 = vector.load %arg4[%c2_14, %c1_15, %c0_16] : memref<4x8x128xf32, #tpu.memory_space<vmem>>, vector<1x1x128xf32>
    %25 = vector.shape_cast %24 : vector<1x1x128xf32> to vector<1x128xf32>
    %26 = vector.shape_cast %25 : vector<1x128xf32> to vector<1x128xf32>
    %27 = vector.broadcast %26 : vector<1x128xf32> to vector<2x128xf32>
    %c3_17 = arith.constant 3 : index
    %c1_18 = arith.constant 1 : index
    %c0_19 = arith.constant 0 : index
    %28 = vector.load %arg4[%c3_17, %c1_18, %c0_19] : memref<4x8x128xf32, #tpu.memory_space<vmem>>, vector<1x1x128xf32>
    %29 = vector.shape_cast %28 : vector<1x1x128xf32> to vector<1x128xf32>
    %30 = vector.shape_cast %29 : vector<1x128xf32> to vector<1x128xf32>
    %31 = vector.broadcast %30 : vector<1x128xf32> to vector<2x128xf32>
    %c0_20 = arith.constant 0 : index
    %c2_21 = arith.constant 2 : index
    %c0_22 = arith.constant 0 : index
    %32 = vector.load %arg4[%c0_20, %c2_21, %c0_22] : memref<4x8x128xf32, #tpu.memory_space<vmem>>, vector<1x1x64xf32>
    %33 = vector.shape_cast %32 : vector<1x1x64xf32> to vector<1x64xf32>
    %34 = vector.shape_cast %33 : vector<1x64xf32> to vector<1x64xf32>
    %35 = vector.broadcast %34 : vector<1x64xf32> to vector<2x64xf32>
    %c1_23 = arith.constant 1 : index
    %c2_24 = arith.constant 2 : index
    %c0_25 = arith.constant 0 : index
    %36 = vector.load %arg4[%c1_23, %c2_24, %c0_25] : memref<4x8x128xf32, #tpu.memory_space<vmem>>, vector<1x1x64xf32>
    %37 = vector.shape_cast %36 : vector<1x1x64xf32> to vector<1x64xf32>
    %38 = vector.shape_cast %37 : vector<1x64xf32> to vector<1x64xf32>
    %39 = vector.broadcast %38 : vector<1x64xf32> to vector<2x64xf32>
    %c2_26 = arith.constant 2 : index
    %c2_27 = arith.constant 2 : index
    %c0_28 = arith.constant 0 : index
    %40 = vector.load %arg4[%c2_26, %c2_27, %c0_28] : memref<4x8x128xf32, #tpu.memory_space<vmem>>, vector<1x1x64xf32>
    %41 = vector.shape_cast %40 : vector<1x1x64xf32> to vector<1x64xf32>
    %42 = vector.shape_cast %41 : vector<1x64xf32> to vector<1x64xf32>
    %43 = vector.broadcast %42 : vector<1x64xf32> to vector<2x64xf32>
    %c3_29 = arith.constant 3 : index
    %c2_30 = arith.constant 2 : index
    %c0_31 = arith.constant 0 : index
    %44 = vector.load %arg4[%c3_29, %c2_30, %c0_31] : memref<4x8x128xf32, #tpu.memory_space<vmem>>, vector<1x1x64xf32>
    %45 = vector.shape_cast %44 : vector<1x1x64xf32> to vector<1x64xf32>
    %46 = vector.shape_cast %45 : vector<1x64xf32> to vector<1x64xf32>
    %47 = vector.broadcast %46 : vector<1x64xf32> to vector<2x64xf32>
    %c0_32 = arith.constant 0 : index
    %c3_33 = arith.constant 3 : index
    %c0_34 = arith.constant 0 : index
    %48 = vector.load %arg4[%c0_32, %c3_33, %c0_34] : memref<4x8x128xf32, #tpu.memory_space<vmem>>, vector<1x1x64xf32>
    %49 = vector.shape_cast %48 : vector<1x1x64xf32> to vector<1x64xf32>
    %50 = vector.shape_cast %49 : vector<1x64xf32> to vector<1x64xf32>
    %51 = vector.broadcast %50 : vector<1x64xf32> to vector<2x64xf32>
    %c1_35 = arith.constant 1 : index
    %c3_36 = arith.constant 3 : index
    %c0_37 = arith.constant 0 : index
    %52 = vector.load %arg4[%c1_35, %c3_36, %c0_37] : memref<4x8x128xf32, #tpu.memory_space<vmem>>, vector<1x1x64xf32>
    %53 = vector.shape_cast %52 : vector<1x1x64xf32> to vector<1x64xf32>
    %54 = vector.shape_cast %53 : vector<1x64xf32> to vector<1x64xf32>
    %55 = vector.broadcast %54 : vector<1x64xf32> to vector<2x64xf32>
    %c2_38 = arith.constant 2 : index
    %c3_39 = arith.constant 3 : index
    %c0_40 = arith.constant 0 : index
    %56 = vector.load %arg4[%c2_38, %c3_39, %c0_40] : memref<4x8x128xf32, #tpu.memory_space<vmem>>, vector<1x1x64xf32>
    %57 = vector.shape_cast %56 : vector<1x1x64xf32> to vector<1x64xf32>
    %58 = vector.shape_cast %57 : vector<1x64xf32> to vector<1x64xf32>
    %59 = vector.broadcast %58 : vector<1x64xf32> to vector<2x64xf32>
    %c3_41 = arith.constant 3 : index
    %c3_42 = arith.constant 3 : index
    %c0_43 = arith.constant 0 : index
    %60 = vector.load %arg4[%c3_41, %c3_42, %c0_43] : memref<4x8x128xf32, #tpu.memory_space<vmem>>, vector<1x1x64xf32>
    %61 = vector.shape_cast %60 : vector<1x1x64xf32> to vector<1x64xf32>
    %62 = vector.shape_cast %61 : vector<1x64xf32> to vector<1x64xf32>
    %63 = vector.broadcast %62 : vector<1x64xf32> to vector<2x64xf32>
    %c0_44 = arith.constant 0 : index
    %c4 = arith.constant 4 : index
    %c0_45 = arith.constant 0 : index
    %64 = vector.load %arg4[%c0_44, %c4, %c0_45] : memref<4x8x128xf32, #tpu.memory_space<vmem>>, vector<1x1x32xf32>
    %65 = vector.shape_cast %64 : vector<1x1x32xf32> to vector<1x32xf32>
    %c1_46 = arith.constant 1 : index
    %c4_47 = arith.constant 4 : index
    %c0_48 = arith.constant 0 : index
    %66 = vector.load %arg4[%c1_46, %c4_47, %c0_48] : memref<4x8x128xf32, #tpu.memory_space<vmem>>, vector<1x1x32xf32>
    %67 = vector.shape_cast %66 : vector<1x1x32xf32> to vector<1x32xf32>
    %c2_49 = arith.constant 2 : index
    %c4_50 = arith.constant 4 : index
    %c0_51 = arith.constant 0 : index
    %68 = vector.load %arg4[%c2_49, %c4_50, %c0_51] : memref<4x8x128xf32, #tpu.memory_space<vmem>>, vector<1x1x32xf32>
    %69 = vector.shape_cast %68 : vector<1x1x32xf32> to vector<1x32xf32>
    %c3_52 = arith.constant 3 : index
    %c4_53 = arith.constant 4 : index
    %c0_54 = arith.constant 0 : index
    %70 = vector.load %arg4[%c3_52, %c4_53, %c0_54] : memref<4x8x128xf32, #tpu.memory_space<vmem>>, vector<1x1x32xf32>
    %71 = vector.shape_cast %70 : vector<1x1x32xf32> to vector<1x32xf32>
    %c0_55 = arith.constant 0 : index
    %c5 = arith.constant 5 : index
    %c0_56 = arith.constant 0 : index
    %72 = vector.load %arg4[%c0_55, %c5, %c0_56] : memref<4x8x128xf32, #tpu.memory_space<vmem>>, vector<1x1x32xf32>
    %73 = vector.shape_cast %72 : vector<1x1x32xf32> to vector<1x32xf32>
    %c1_57 = arith.constant 1 : index
    %c5_58 = arith.constant 5 : index
    %c0_59 = arith.constant 0 : index
    %74 = vector.load %arg4[%c1_57, %c5_58, %c0_59] : memref<4x8x128xf32, #tpu.memory_space<vmem>>, vector<1x1x32xf32>
    %75 = vector.shape_cast %74 : vector<1x1x32xf32> to vector<1x32xf32>
    %c2_60 = arith.constant 2 : index
    %c5_61 = arith.constant 5 : index
    %c0_62 = arith.constant 0 : index
    %76 = vector.load %arg4[%c2_60, %c5_61, %c0_62] : memref<4x8x128xf32, #tpu.memory_space<vmem>>, vector<1x1x32xf32>
    %77 = vector.shape_cast %76 : vector<1x1x32xf32> to vector<1x32xf32>
    %c3_63 = arith.constant 3 : index
    %c5_64 = arith.constant 5 : index
    %c0_65 = arith.constant 0 : index
    %78 = vector.load %arg4[%c3_63, %c5_64, %c0_65] : memref<4x8x128xf32, #tpu.memory_space<vmem>>, vector<1x1x32xf32>
    %79 = vector.shape_cast %78 : vector<1x1x32xf32> to vector<1x32xf32>
    %c0_66 = arith.constant 0 : index
    %c6 = arith.constant 6 : index
    %c0_67 = arith.constant 0 : index
    %80 = vector.load %arg4[%c0_66, %c6, %c0_67] : memref<4x8x128xf32, #tpu.memory_space<vmem>>, vector<1x1x32xf32>
    %81 = vector.shape_cast %80 : vector<1x1x32xf32> to vector<1x32xf32>
    %c1_68 = arith.constant 1 : index
    %c6_69 = arith.constant 6 : index
    %c0_70 = arith.constant 0 : index
    %82 = vector.load %arg4[%c1_68, %c6_69, %c0_70] : memref<4x8x128xf32, #tpu.memory_space<vmem>>, vector<1x1x32xf32>
    %83 = vector.shape_cast %82 : vector<1x1x32xf32> to vector<1x32xf32>
    %c2_71 = arith.constant 2 : index
    %c6_72 = arith.constant 6 : index
    %c0_73 = arith.constant 0 : index
    %84 = vector.load %arg4[%c2_71, %c6_72, %c0_73] : memref<4x8x128xf32, #tpu.memory_space<vmem>>, vector<1x1x32xf32>
    %85 = vector.shape_cast %84 : vector<1x1x32xf32> to vector<1x32xf32>
    %c3_74 = arith.constant 3 : index
    %c6_75 = arith.constant 6 : index
    %c0_76 = arith.constant 0 : index
    %86 = vector.load %arg4[%c3_74, %c6_75, %c0_76] : memref<4x8x128xf32, #tpu.memory_space<vmem>>, vector<1x1x32xf32>
    %87 = vector.shape_cast %86 : vector<1x1x32xf32> to vector<1x32xf32>
    %c0_77 = arith.constant 0 : index
    %c7 = arith.constant 7 : index
    %c0_78 = arith.constant 0 : index
    %88 = vector.load %arg4[%c0_77, %c7, %c0_78] : memref<4x8x128xf32, #tpu.memory_space<vmem>>, vector<1x1x32xf32>
    %89 = vector.shape_cast %88 : vector<1x1x32xf32> to vector<1x32xf32>
    %c1_79 = arith.constant 1 : index
    %c7_80 = arith.constant 7 : index
    %c0_81 = arith.constant 0 : index
    %90 = vector.load %arg4[%c1_79, %c7_80, %c0_81] : memref<4x8x128xf32, #tpu.memory_space<vmem>>, vector<1x1x32xf32>
    %91 = vector.shape_cast %90 : vector<1x1x32xf32> to vector<1x32xf32>
    %c2_82 = arith.constant 2 : index
    %c7_83 = arith.constant 7 : index
    %c0_84 = arith.constant 0 : index
    %92 = vector.load %arg4[%c2_82, %c7_83, %c0_84] : memref<4x8x128xf32, #tpu.memory_space<vmem>>, vector<1x1x32xf32>
    %93 = vector.shape_cast %92 : vector<1x1x32xf32> to vector<1x32xf32>
    %c3_85 = arith.constant 3 : index
    %c7_86 = arith.constant 7 : index
    %c0_87 = arith.constant 0 : index
    %94 = vector.load %arg4[%c3_85, %c7_86, %c0_87] : memref<4x8x128xf32, #tpu.memory_space<vmem>>, vector<1x1x32xf32>
    %95 = vector.shape_cast %94 : vector<1x1x32xf32> to vector<1x32xf32>
    %c0_88 = arith.constant 0 : index
    %c0_89 = arith.constant 0 : index
    %96 = vector.load %arg0[%c0_88, %c0_89] : memref<2x32xf32, #tpu.memory_space<vmem>>, vector<2x32xf32>
    %c0_90 = arith.constant 0 : index
    %c0_91 = arith.constant 0 : index
    %97 = vector.load %arg1[%c0_90, %c0_91] : memref<2x32xf32, #tpu.memory_space<vmem>>, vector<2x32xf32>
    %98 = tpu.concatenate %96, %97 in 1 : vector<2x32xf32>, vector<2x32xf32> -> vector<2x64xf32>
    %99 = tpu.concatenate %98, %98 in 1 : vector<2x64xf32>, vector<2x64xf32> -> vector<2x128xf32>
    %c0_92 = arith.constant 0 : index
    %c0_93 = arith.constant 0 : index
    %c0_94 = arith.constant 0 : index
    %100 = vector.load %arg2[%c0_92, %c0_93, %c0_94] : memref<4x160x128xbf16, #tpu.memory_space<vmem>>, vector<1x128x128xbf16>
    %101 = vector.shape_cast %100 : vector<1x128x128xbf16> to vector<128x128xbf16>
    %102 = arith.truncf %99 : vector<2x128xf32> to vector<2x128xbf16>
    %cst = arith.constant dense<0.000000e+00> : vector<2x128xf32>
    %103 = tpu.matmul %102, %101, %cst {dimension_numbers = #tpu.dot_dimension_numbers<[1], [0], [0], [1], [0, 0, 1, 1], [], []>} : vector<2x128xbf16>, vector<128x128xbf16>, vector<2x128xf32> -> vector<2x128xf32>
    %104 = arith.addf %103, %3 : vector<2x128xf32>
    %105 = vector.extract_strided_slice %104 {offsets = [0, 0], sizes = [2, 64], strides = [1, 1]} : vector<2x128xf32> to vector<2x64xf32>
    %cst_95 = arith.constant 0.000000e+00 : f32
    %106 = vector.broadcast %cst_95 : f32 to vector<2x64xf32>
    %107 = arith.maximumf %105, %106 : vector<2x64xf32>
    %108 = vector.extract_strided_slice %104 {offsets = [0, 64], sizes = [2, 64], strides = [1, 1]} : vector<2x128xf32> to vector<2x64xf32>
    %c0_96 = arith.constant 0 : index
    %c0_97 = arith.constant 0 : index
    %c0_98 = arith.constant 0 : index
    %109 = vector.load %arg3[%c0_96, %c0_97, %c0_98] : memref<4x128x64xbf16, #tpu.memory_space<vmem>>, vector<1x64x64xbf16>
    %110 = vector.shape_cast %109 : vector<1x64x64xbf16> to vector<64x64xbf16>
    %111 = arith.truncf %107 : vector<2x64xf32> to vector<2x64xbf16>
    %cst_99 = arith.constant dense<0.000000e+00> : vector<2x64xf32>
    %112 = tpu.matmul %111, %110, %cst_99 {dimension_numbers = #tpu.dot_dimension_numbers<[1], [0], [0], [1], [0, 0, 1, 1], [], []>} : vector<2x64xbf16>, vector<64x64xbf16>, vector<2x64xf32> -> vector<2x64xf32>
    %113 = arith.addf %112, %35 : vector<2x64xf32>
    %cst_100 = arith.constant 0.000000e+00 : f32
    %114 = vector.broadcast %cst_100 : f32 to vector<2x64xf32>
    %115 = arith.maximumf %113, %114 : vector<2x64xf32>
    %c0_101 = arith.constant 0 : index
    %c64 = arith.constant 64 : index
    %c0_102 = arith.constant 0 : index
    %116 = vector.load %arg3[%c0_101, %c64, %c0_102] : memref<4x128x64xbf16, #tpu.memory_space<vmem>>, vector<1x64x64xbf16>
    %117 = vector.shape_cast %116 : vector<1x64x64xbf16> to vector<64x64xbf16>
    %118 = arith.truncf %115 : vector<2x64xf32> to vector<2x64xbf16>
    %cst_103 = arith.constant dense<0.000000e+00> : vector<2x64xf32>
    %119 = tpu.matmul %118, %117, %cst_103 {dimension_numbers = #tpu.dot_dimension_numbers<[1], [0], [0], [1], [0, 0, 1, 1], [], []>} : vector<2x64xbf16>, vector<64x64xbf16>, vector<2x64xf32> -> vector<2x64xf32>
    %120 = arith.addf %119, %51 : vector<2x64xf32>
    %121 = arith.addf %120, %108 : vector<2x64xf32>
    %122 = vector.extract_strided_slice %121 {offsets = [0, 0], sizes = [2, 32], strides = [1, 1]} : vector<2x64xf32> to vector<2x32xf32>
    %cst_104 = arith.constant dense<0.000000e+00> : vector<2xf32>
    %123 = vector.multi_reduction <add>, %122, %cst_104 [1] : vector<2x32xf32> to vector<2xf32>
    %124 = vector.shape_cast %123 : vector<2xf32> to vector<2x1xf32>
    %cst_105 = arith.constant 3.200000e+01 : f32
    %125 = vector.broadcast %cst_105 : f32 to vector<2x1xf32>
    %126 = arith.divf %124, %125 : vector<2x1xf32>
    %127 = vector.broadcast %126 : vector<2x1xf32> to vector<2x32xf32>
    %128 = arith.subf %122, %127 : vector<2x32xf32>
    %129 = arith.mulf %128, %128 : vector<2x32xf32>
    %cst_106 = arith.constant dense<0.000000e+00> : vector<2xf32>
    %130 = vector.multi_reduction <add>, %129, %cst_106 [1] : vector<2x32xf32> to vector<2xf32>
    %131 = vector.shape_cast %130 : vector<2xf32> to vector<2x1xf32>
    %cst_107 = arith.constant 3.200000e+01 : f32
    %132 = vector.broadcast %cst_107 : f32 to vector<2x1xf32>
    %133 = arith.divf %131, %132 : vector<2x1xf32>
    %134 = vector.broadcast %126 : vector<2x1xf32> to vector<2x32xf32>
    %135 = arith.subf %122, %134 : vector<2x32xf32>
    %cst_108 = arith.constant 9.99999974E-6 : f32
    %136 = vector.broadcast %cst_108 : f32 to vector<2x1xf32>
    %137 = arith.addf %133, %136 : vector<2x1xf32>
    %138 = math.rsqrt %137 : vector<2x1xf32>
    %139 = vector.broadcast %138 : vector<2x1xf32> to vector<2x32xf32>
    %140 = arith.mulf %135, %139 : vector<2x32xf32>
    %141 = vector.broadcast %65 : vector<1x32xf32> to vector<2x32xf32>
    %142 = arith.mulf %140, %141 : vector<2x32xf32>
    %143 = vector.broadcast %73 : vector<1x32xf32> to vector<2x32xf32>
    %144 = arith.addf %142, %143 : vector<2x32xf32>
    %145 = vector.extract_strided_slice %121 {offsets = [0, 32], sizes = [2, 32], strides = [1, 1]} : vector<2x64xf32> to vector<2x32xf32>
    %cst_109 = arith.constant dense<0.000000e+00> : vector<2xf32>
    %146 = vector.multi_reduction <add>, %145, %cst_109 [1] : vector<2x32xf32> to vector<2xf32>
    %147 = vector.shape_cast %146 : vector<2xf32> to vector<2x1xf32>
    %cst_110 = arith.constant 3.200000e+01 : f32
    %148 = vector.broadcast %cst_110 : f32 to vector<2x1xf32>
    %149 = arith.divf %147, %148 : vector<2x1xf32>
    %150 = vector.broadcast %149 : vector<2x1xf32> to vector<2x32xf32>
    %151 = arith.subf %145, %150 : vector<2x32xf32>
    %152 = arith.mulf %151, %151 : vector<2x32xf32>
    %cst_111 = arith.constant dense<0.000000e+00> : vector<2xf32>
    %153 = vector.multi_reduction <add>, %152, %cst_111 [1] : vector<2x32xf32> to vector<2xf32>
    %154 = vector.shape_cast %153 : vector<2xf32> to vector<2x1xf32>
    %cst_112 = arith.constant 3.200000e+01 : f32
    %155 = vector.broadcast %cst_112 : f32 to vector<2x1xf32>
    %156 = arith.divf %154, %155 : vector<2x1xf32>
    %157 = vector.broadcast %149 : vector<2x1xf32> to vector<2x32xf32>
    %158 = arith.subf %145, %157 : vector<2x32xf32>
    %cst_113 = arith.constant 9.99999974E-6 : f32
    %159 = vector.broadcast %cst_113 : f32 to vector<2x1xf32>
    %160 = arith.addf %156, %159 : vector<2x1xf32>
    %161 = math.rsqrt %160 : vector<2x1xf32>
    %162 = vector.broadcast %161 : vector<2x1xf32> to vector<2x32xf32>
    %163 = arith.mulf %158, %162 : vector<2x32xf32>
    %164 = vector.broadcast %81 : vector<1x32xf32> to vector<2x32xf32>
    %165 = arith.mulf %163, %164 : vector<2x32xf32>
    %166 = vector.broadcast %89 : vector<1x32xf32> to vector<2x32xf32>
    %167 = arith.addf %165, %166 : vector<2x32xf32>
    %c0_114 = arith.constant 0 : index
    %c128 = arith.constant 128 : index
    %c0_115 = arith.constant 0 : index
    %168 = vector.load %arg2[%c0_114, %c128, %c0_115] : memref<4x160x128xbf16, #tpu.memory_space<vmem>>, vector<1x32x128xbf16>
    %169 = vector.shape_cast %168 : vector<1x32x128xbf16> to vector<32x128xbf16>
    %170 = arith.truncf %144 : vector<2x32xf32> to vector<2x32xbf16>
    %cst_116 = arith.constant dense<0.000000e+00> : vector<2x128xf32>
    %171 = tpu.matmul %170, %169, %cst_116 {dimension_numbers = #tpu.dot_dimension_numbers<[1], [0], [0], [1], [0, 0, 1, 1], [], []>} : vector<2x32xbf16>, vector<32x128xbf16>, vector<2x128xf32> -> vector<2x128xf32>
    %172 = arith.addf %171, %19 : vector<2x128xf32>
    %173 = arith.negf %172 : vector<2x128xf32>
    %174 = math.exp %173 : vector<2x128xf32>
    %cst_117 = arith.constant 1.000000e+00 : f32
    %175 = vector.broadcast %cst_117 : f32 to vector<2x128xf32>
    %176 = arith.addf %175, %174 : vector<2x128xf32>
    %177 = arith.divf %175, %176 : vector<2x128xf32>
    %178 = vector.extract_strided_slice %177 {offsets = [0, 0], sizes = [2, 32], strides = [1, 1]} : vector<2x128xf32> to vector<2x32xf32>
    %179 = vector.extract_strided_slice %177 {offsets = [0, 32], sizes = [2, 32], strides = [1, 1]} : vector<2x128xf32> to vector<2x32xf32>
    %180 = vector.extract_strided_slice %177 {offsets = [0, 96], sizes = [2, 32], strides = [1, 1]} : vector<2x128xf32> to vector<2x32xf32>
    %181 = vector.extract_strided_slice %177 {offsets = [0, 64], sizes = [2, 32], strides = [1, 1]} : vector<2x128xf32> to vector<2x32xf32>
    %cst_118 = arith.constant 2.000000e+00 : f32
    %182 = vector.broadcast %cst_118 : f32 to vector<2x32xf32>
    %183 = arith.mulf %182, %181 : vector<2x32xf32>
    %cst_119 = arith.constant 1.000000e+00 : f32
    %184 = vector.broadcast %cst_119 : f32 to vector<2x32xf32>
    %185 = arith.subf %183, %184 : vector<2x32xf32>
    %186 = arith.mulf %179, %167 : vector<2x32xf32>
    %187 = arith.mulf %178, %185 : vector<2x32xf32>
    %188 = arith.addf %186, %187 : vector<2x32xf32>
    %189 = math.tanh %188 : vector<2x32xf32>
    %190 = arith.mulf %180, %189 : vector<2x32xf32>
    %191 = tpu.concatenate %190, %188 in 1 : vector<2x32xf32>, vector<2x32xf32> -> vector<2x64xf32>
    %192 = tpu.concatenate %191, %98 in 1 : vector<2x64xf32>, vector<2x64xf32> -> vector<2x128xf32>
    %c1_120 = arith.constant 1 : index
    %c0_121 = arith.constant 0 : index
    %c0_122 = arith.constant 0 : index
    %193 = vector.load %arg2[%c1_120, %c0_121, %c0_122] : memref<4x160x128xbf16, #tpu.memory_space<vmem>>, vector<1x128x128xbf16>
    %194 = vector.shape_cast %193 : vector<1x128x128xbf16> to vector<128x128xbf16>
    %195 = arith.truncf %192 : vector<2x128xf32> to vector<2x128xbf16>
    %cst_123 = arith.constant dense<0.000000e+00> : vector<2x128xf32>
    %196 = tpu.matmul %195, %194, %cst_123 {dimension_numbers = #tpu.dot_dimension_numbers<[1], [0], [0], [1], [0, 0, 1, 1], [], []>} : vector<2x128xbf16>, vector<128x128xbf16>, vector<2x128xf32> -> vector<2x128xf32>
    %197 = arith.addf %196, %7 : vector<2x128xf32>
    %198 = vector.extract_strided_slice %197 {offsets = [0, 0], sizes = [2, 64], strides = [1, 1]} : vector<2x128xf32> to vector<2x64xf32>
    %cst_124 = arith.constant 0.000000e+00 : f32
    %199 = vector.broadcast %cst_124 : f32 to vector<2x64xf32>
    %200 = arith.maximumf %198, %199 : vector<2x64xf32>
    %201 = vector.extract_strided_slice %197 {offsets = [0, 64], sizes = [2, 64], strides = [1, 1]} : vector<2x128xf32> to vector<2x64xf32>
    %c1_125 = arith.constant 1 : index
    %c0_126 = arith.constant 0 : index
    %c0_127 = arith.constant 0 : index
    %202 = vector.load %arg3[%c1_125, %c0_126, %c0_127] : memref<4x128x64xbf16, #tpu.memory_space<vmem>>, vector<1x64x64xbf16>
    %203 = vector.shape_cast %202 : vector<1x64x64xbf16> to vector<64x64xbf16>
    %204 = arith.truncf %200 : vector<2x64xf32> to vector<2x64xbf16>
    %cst_128 = arith.constant dense<0.000000e+00> : vector<2x64xf32>
    %205 = tpu.matmul %204, %203, %cst_128 {dimension_numbers = #tpu.dot_dimension_numbers<[1], [0], [0], [1], [0, 0, 1, 1], [], []>} : vector<2x64xbf16>, vector<64x64xbf16>, vector<2x64xf32> -> vector<2x64xf32>
    %206 = arith.addf %205, %39 : vector<2x64xf32>
    %cst_129 = arith.constant 0.000000e+00 : f32
    %207 = vector.broadcast %cst_129 : f32 to vector<2x64xf32>
    %208 = arith.maximumf %206, %207 : vector<2x64xf32>
    %c1_130 = arith.constant 1 : index
    %c64_131 = arith.constant 64 : index
    %c0_132 = arith.constant 0 : index
    %209 = vector.load %arg3[%c1_130, %c64_131, %c0_132] : memref<4x128x64xbf16, #tpu.memory_space<vmem>>, vector<1x64x64xbf16>
    %210 = vector.shape_cast %209 : vector<1x64x64xbf16> to vector<64x64xbf16>
    %211 = arith.truncf %208 : vector<2x64xf32> to vector<2x64xbf16>
    %cst_133 = arith.constant dense<0.000000e+00> : vector<2x64xf32>
    %212 = tpu.matmul %211, %210, %cst_133 {dimension_numbers = #tpu.dot_dimension_numbers<[1], [0], [0], [1], [0, 0, 1, 1], [], []>} : vector<2x64xbf16>, vector<64x64xbf16>, vector<2x64xf32> -> vector<2x64xf32>
    %213 = arith.addf %212, %55 : vector<2x64xf32>
    %214 = arith.addf %213, %201 : vector<2x64xf32>
    %215 = vector.extract_strided_slice %214 {offsets = [0, 0], sizes = [2, 32], strides = [1, 1]} : vector<2x64xf32> to vector<2x32xf32>
    %cst_134 = arith.constant dense<0.000000e+00> : vector<2xf32>
    %216 = vector.multi_reduction <add>, %215, %cst_134 [1] : vector<2x32xf32> to vector<2xf32>
    %217 = vector.shape_cast %216 : vector<2xf32> to vector<2x1xf32>
    %cst_135 = arith.constant 3.200000e+01 : f32
    %218 = vector.broadcast %cst_135 : f32 to vector<2x1xf32>
    %219 = arith.divf %217, %218 : vector<2x1xf32>
    %220 = vector.broadcast %219 : vector<2x1xf32> to vector<2x32xf32>
    %221 = arith.subf %215, %220 : vector<2x32xf32>
    %222 = arith.mulf %221, %221 : vector<2x32xf32>
    %cst_136 = arith.constant dense<0.000000e+00> : vector<2xf32>
    %223 = vector.multi_reduction <add>, %222, %cst_136 [1] : vector<2x32xf32> to vector<2xf32>
    %224 = vector.shape_cast %223 : vector<2xf32> to vector<2x1xf32>
    %cst_137 = arith.constant 3.200000e+01 : f32
    %225 = vector.broadcast %cst_137 : f32 to vector<2x1xf32>
    %226 = arith.divf %224, %225 : vector<2x1xf32>
    %227 = vector.broadcast %219 : vector<2x1xf32> to vector<2x32xf32>
    %228 = arith.subf %215, %227 : vector<2x32xf32>
    %cst_138 = arith.constant 9.99999974E-6 : f32
    %229 = vector.broadcast %cst_138 : f32 to vector<2x1xf32>
    %230 = arith.addf %226, %229 : vector<2x1xf32>
    %231 = math.rsqrt %230 : vector<2x1xf32>
    %232 = vector.broadcast %231 : vector<2x1xf32> to vector<2x32xf32>
    %233 = arith.mulf %228, %232 : vector<2x32xf32>
    %234 = vector.broadcast %67 : vector<1x32xf32> to vector<2x32xf32>
    %235 = arith.mulf %233, %234 : vector<2x32xf32>
    %236 = vector.broadcast %75 : vector<1x32xf32> to vector<2x32xf32>
    %237 = arith.addf %235, %236 : vector<2x32xf32>
    %238 = vector.extract_strided_slice %214 {offsets = [0, 32], sizes = [2, 32], strides = [1, 1]} : vector<2x64xf32> to vector<2x32xf32>
    %cst_139 = arith.constant dense<0.000000e+00> : vector<2xf32>
    %239 = vector.multi_reduction <add>, %238, %cst_139 [1] : vector<2x32xf32> to vector<2xf32>
    %240 = vector.shape_cast %239 : vector<2xf32> to vector<2x1xf32>
    %cst_140 = arith.constant 3.200000e+01 : f32
    %241 = vector.broadcast %cst_140 : f32 to vector<2x1xf32>
    %242 = arith.divf %240, %241 : vector<2x1xf32>
    %243 = vector.broadcast %242 : vector<2x1xf32> to vector<2x32xf32>
    %244 = arith.subf %238, %243 : vector<2x32xf32>
    %245 = arith.mulf %244, %244 : vector<2x32xf32>
    %cst_141 = arith.constant dense<0.000000e+00> : vector<2xf32>
    %246 = vector.multi_reduction <add>, %245, %cst_141 [1] : vector<2x32xf32> to vector<2xf32>
    %247 = vector.shape_cast %246 : vector<2xf32> to vector<2x1xf32>
    %cst_142 = arith.constant 3.200000e+01 : f32
    %248 = vector.broadcast %cst_142 : f32 to vector<2x1xf32>
    %249 = arith.divf %247, %248 : vector<2x1xf32>
    %250 = vector.broadcast %242 : vector<2x1xf32> to vector<2x32xf32>
    %251 = arith.subf %238, %250 : vector<2x32xf32>
    %cst_143 = arith.constant 9.99999974E-6 : f32
    %252 = vector.broadcast %cst_143 : f32 to vector<2x1xf32>
    %253 = arith.addf %249, %252 : vector<2x1xf32>
    %254 = math.rsqrt %253 : vector<2x1xf32>
    %255 = vector.broadcast %254 : vector<2x1xf32> to vector<2x32xf32>
    %256 = arith.mulf %251, %255 : vector<2x32xf32>
    %257 = vector.broadcast %83 : vector<1x32xf32> to vector<2x32xf32>
    %258 = arith.mulf %256, %257 : vector<2x32xf32>
    %259 = vector.broadcast %91 : vector<1x32xf32> to vector<2x32xf32>
    %260 = arith.addf %258, %259 : vector<2x32xf32>
    %c1_144 = arith.constant 1 : index
    %c128_145 = arith.constant 128 : index
    %c0_146 = arith.constant 0 : index
    %261 = vector.load %arg2[%c1_144, %c128_145, %c0_146] : memref<4x160x128xbf16, #tpu.memory_space<vmem>>, vector<1x32x128xbf16>
    %262 = vector.shape_cast %261 : vector<1x32x128xbf16> to vector<32x128xbf16>
    %263 = arith.truncf %237 : vector<2x32xf32> to vector<2x32xbf16>
    %cst_147 = arith.constant dense<0.000000e+00> : vector<2x128xf32>
    %264 = tpu.matmul %263, %262, %cst_147 {dimension_numbers = #tpu.dot_dimension_numbers<[1], [0], [0], [1], [0, 0, 1, 1], [], []>} : vector<2x32xbf16>, vector<32x128xbf16>, vector<2x128xf32> -> vector<2x128xf32>
    %265 = arith.addf %264, %23 : vector<2x128xf32>
    %266 = arith.negf %265 : vector<2x128xf32>
    %267 = math.exp %266 : vector<2x128xf32>
    %cst_148 = arith.constant 1.000000e+00 : f32
    %268 = vector.broadcast %cst_148 : f32 to vector<2x128xf32>
    %269 = arith.addf %268, %267 : vector<2x128xf32>
    %270 = arith.divf %268, %269 : vector<2x128xf32>
    %271 = vector.extract_strided_slice %270 {offsets = [0, 0], sizes = [2, 32], strides = [1, 1]} : vector<2x128xf32> to vector<2x32xf32>
    %272 = vector.extract_strided_slice %270 {offsets = [0, 32], sizes = [2, 32], strides = [1, 1]} : vector<2x128xf32> to vector<2x32xf32>
    %273 = vector.extract_strided_slice %270 {offsets = [0, 96], sizes = [2, 32], strides = [1, 1]} : vector<2x128xf32> to vector<2x32xf32>
    %274 = vector.extract_strided_slice %270 {offsets = [0, 64], sizes = [2, 32], strides = [1, 1]} : vector<2x128xf32> to vector<2x32xf32>
    %cst_149 = arith.constant 2.000000e+00 : f32
    %275 = vector.broadcast %cst_149 : f32 to vector<2x32xf32>
    %276 = arith.mulf %275, %274 : vector<2x32xf32>
    %cst_150 = arith.constant 1.000000e+00 : f32
    %277 = vector.broadcast %cst_150 : f32 to vector<2x32xf32>
    %278 = arith.subf %276, %277 : vector<2x32xf32>
    %279 = arith.mulf %272, %260 : vector<2x32xf32>
    %280 = arith.mulf %271, %278 : vector<2x32xf32>
    %281 = arith.addf %279, %280 : vector<2x32xf32>
    %282 = math.tanh %281 : vector<2x32xf32>
    %283 = arith.mulf %273, %282 : vector<2x32xf32>
    %284 = tpu.concatenate %283, %281 in 1 : vector<2x32xf32>, vector<2x32xf32> -> vector<2x64xf32>
    %285 = tpu.concatenate %284, %98 in 1 : vector<2x64xf32>, vector<2x64xf32> -> vector<2x128xf32>
    %c2_151 = arith.constant 2 : index
    %c0_152 = arith.constant 0 : index
    %c0_153 = arith.constant 0 : index
    %286 = vector.load %arg2[%c2_151, %c0_152, %c0_153] : memref<4x160x128xbf16, #tpu.memory_space<vmem>>, vector<1x128x128xbf16>
    %287 = vector.shape_cast %286 : vector<1x128x128xbf16> to vector<128x128xbf16>
    %288 = arith.truncf %285 : vector<2x128xf32> to vector<2x128xbf16>
    %cst_154 = arith.constant dense<0.000000e+00> : vector<2x128xf32>
    %289 = tpu.matmul %288, %287, %cst_154 {dimension_numbers = #tpu.dot_dimension_numbers<[1], [0], [0], [1], [0, 0, 1, 1], [], []>} : vector<2x128xbf16>, vector<128x128xbf16>, vector<2x128xf32> -> vector<2x128xf32>
    %290 = arith.addf %289, %11 : vector<2x128xf32>
    %291 = vector.extract_strided_slice %290 {offsets = [0, 0], sizes = [2, 64], strides = [1, 1]} : vector<2x128xf32> to vector<2x64xf32>
    %cst_155 = arith.constant 0.000000e+00 : f32
    %292 = vector.broadcast %cst_155 : f32 to vector<2x64xf32>
    %293 = arith.maximumf %291, %292 : vector<2x64xf32>
    %294 = vector.extract_strided_slice %290 {offsets = [0, 64], sizes = [2, 64], strides = [1, 1]} : vector<2x128xf32> to vector<2x64xf32>
    %c2_156 = arith.constant 2 : index
    %c0_157 = arith.constant 0 : index
    %c0_158 = arith.constant 0 : index
    %295 = vector.load %arg3[%c2_156, %c0_157, %c0_158] : memref<4x128x64xbf16, #tpu.memory_space<vmem>>, vector<1x64x64xbf16>
    %296 = vector.shape_cast %295 : vector<1x64x64xbf16> to vector<64x64xbf16>
    %297 = arith.truncf %293 : vector<2x64xf32> to vector<2x64xbf16>
    %cst_159 = arith.constant dense<0.000000e+00> : vector<2x64xf32>
    %298 = tpu.matmul %297, %296, %cst_159 {dimension_numbers = #tpu.dot_dimension_numbers<[1], [0], [0], [1], [0, 0, 1, 1], [], []>} : vector<2x64xbf16>, vector<64x64xbf16>, vector<2x64xf32> -> vector<2x64xf32>
    %299 = arith.addf %298, %43 : vector<2x64xf32>
    %cst_160 = arith.constant 0.000000e+00 : f32
    %300 = vector.broadcast %cst_160 : f32 to vector<2x64xf32>
    %301 = arith.maximumf %299, %300 : vector<2x64xf32>
    %c2_161 = arith.constant 2 : index
    %c64_162 = arith.constant 64 : index
    %c0_163 = arith.constant 0 : index
    %302 = vector.load %arg3[%c2_161, %c64_162, %c0_163] : memref<4x128x64xbf16, #tpu.memory_space<vmem>>, vector<1x64x64xbf16>
    %303 = vector.shape_cast %302 : vector<1x64x64xbf16> to vector<64x64xbf16>
    %304 = arith.truncf %301 : vector<2x64xf32> to vector<2x64xbf16>
    %cst_164 = arith.constant dense<0.000000e+00> : vector<2x64xf32>
    %305 = tpu.matmul %304, %303, %cst_164 {dimension_numbers = #tpu.dot_dimension_numbers<[1], [0], [0], [1], [0, 0, 1, 1], [], []>} : vector<2x64xbf16>, vector<64x64xbf16>, vector<2x64xf32> -> vector<2x64xf32>
    %306 = arith.addf %305, %59 : vector<2x64xf32>
    %307 = arith.addf %306, %294 : vector<2x64xf32>
    %308 = vector.extract_strided_slice %307 {offsets = [0, 0], sizes = [2, 32], strides = [1, 1]} : vector<2x64xf32> to vector<2x32xf32>
    %cst_165 = arith.constant dense<0.000000e+00> : vector<2xf32>
    %309 = vector.multi_reduction <add>, %308, %cst_165 [1] : vector<2x32xf32> to vector<2xf32>
    %310 = vector.shape_cast %309 : vector<2xf32> to vector<2x1xf32>
    %cst_166 = arith.constant 3.200000e+01 : f32
    %311 = vector.broadcast %cst_166 : f32 to vector<2x1xf32>
    %312 = arith.divf %310, %311 : vector<2x1xf32>
    %313 = vector.broadcast %312 : vector<2x1xf32> to vector<2x32xf32>
    %314 = arith.subf %308, %313 : vector<2x32xf32>
    %315 = arith.mulf %314, %314 : vector<2x32xf32>
    %cst_167 = arith.constant dense<0.000000e+00> : vector<2xf32>
    %316 = vector.multi_reduction <add>, %315, %cst_167 [1] : vector<2x32xf32> to vector<2xf32>
    %317 = vector.shape_cast %316 : vector<2xf32> to vector<2x1xf32>
    %cst_168 = arith.constant 3.200000e+01 : f32
    %318 = vector.broadcast %cst_168 : f32 to vector<2x1xf32>
    %319 = arith.divf %317, %318 : vector<2x1xf32>
    %320 = vector.broadcast %312 : vector<2x1xf32> to vector<2x32xf32>
    %321 = arith.subf %308, %320 : vector<2x32xf32>
    %cst_169 = arith.constant 9.99999974E-6 : f32
    %322 = vector.broadcast %cst_169 : f32 to vector<2x1xf32>
    %323 = arith.addf %319, %322 : vector<2x1xf32>
    %324 = math.rsqrt %323 : vector<2x1xf32>
    %325 = vector.broadcast %324 : vector<2x1xf32> to vector<2x32xf32>
    %326 = arith.mulf %321, %325 : vector<2x32xf32>
    %327 = vector.broadcast %69 : vector<1x32xf32> to vector<2x32xf32>
    %328 = arith.mulf %326, %327 : vector<2x32xf32>
    %329 = vector.broadcast %77 : vector<1x32xf32> to vector<2x32xf32>
    %330 = arith.addf %328, %329 : vector<2x32xf32>
    %331 = vector.extract_strided_slice %307 {offsets = [0, 32], sizes = [2, 32], strides = [1, 1]} : vector<2x64xf32> to vector<2x32xf32>
    %cst_170 = arith.constant dense<0.000000e+00> : vector<2xf32>
    %332 = vector.multi_reduction <add>, %331, %cst_170 [1] : vector<2x32xf32> to vector<2xf32>
    %333 = vector.shape_cast %332 : vector<2xf32> to vector<2x1xf32>
    %cst_171 = arith.constant 3.200000e+01 : f32
    %334 = vector.broadcast %cst_171 : f32 to vector<2x1xf32>
    %335 = arith.divf %333, %334 : vector<2x1xf32>
    %336 = vector.broadcast %335 : vector<2x1xf32> to vector<2x32xf32>
    %337 = arith.subf %331, %336 : vector<2x32xf32>
    %338 = arith.mulf %337, %337 : vector<2x32xf32>
    %cst_172 = arith.constant dense<0.000000e+00> : vector<2xf32>
    %339 = vector.multi_reduction <add>, %338, %cst_172 [1] : vector<2x32xf32> to vector<2xf32>
    %340 = vector.shape_cast %339 : vector<2xf32> to vector<2x1xf32>
    %cst_173 = arith.constant 3.200000e+01 : f32
    %341 = vector.broadcast %cst_173 : f32 to vector<2x1xf32>
    %342 = arith.divf %340, %341 : vector<2x1xf32>
    %343 = vector.broadcast %335 : vector<2x1xf32> to vector<2x32xf32>
    %344 = arith.subf %331, %343 : vector<2x32xf32>
    %cst_174 = arith.constant 9.99999974E-6 : f32
    %345 = vector.broadcast %cst_174 : f32 to vector<2x1xf32>
    %346 = arith.addf %342, %345 : vector<2x1xf32>
    %347 = math.rsqrt %346 : vector<2x1xf32>
    %348 = vector.broadcast %347 : vector<2x1xf32> to vector<2x32xf32>
    %349 = arith.mulf %344, %348 : vector<2x32xf32>
    %350 = vector.broadcast %85 : vector<1x32xf32> to vector<2x32xf32>
    %351 = arith.mulf %349, %350 : vector<2x32xf32>
    %352 = vector.broadcast %93 : vector<1x32xf32> to vector<2x32xf32>
    %353 = arith.addf %351, %352 : vector<2x32xf32>
    %c2_175 = arith.constant 2 : index
    %c128_176 = arith.constant 128 : index
    %c0_177 = arith.constant 0 : index
    %354 = vector.load %arg2[%c2_175, %c128_176, %c0_177] : memref<4x160x128xbf16, #tpu.memory_space<vmem>>, vector<1x32x128xbf16>
    %355 = vector.shape_cast %354 : vector<1x32x128xbf16> to vector<32x128xbf16>
    %356 = arith.truncf %330 : vector<2x32xf32> to vector<2x32xbf16>
    %cst_178 = arith.constant dense<0.000000e+00> : vector<2x128xf32>
    %357 = tpu.matmul %356, %355, %cst_178 {dimension_numbers = #tpu.dot_dimension_numbers<[1], [0], [0], [1], [0, 0, 1, 1], [], []>} : vector<2x32xbf16>, vector<32x128xbf16>, vector<2x128xf32> -> vector<2x128xf32>
    %358 = arith.addf %357, %27 : vector<2x128xf32>
    %359 = arith.negf %358 : vector<2x128xf32>
    %360 = math.exp %359 : vector<2x128xf32>
    %cst_179 = arith.constant 1.000000e+00 : f32
    %361 = vector.broadcast %cst_179 : f32 to vector<2x128xf32>
    %362 = arith.addf %361, %360 : vector<2x128xf32>
    %363 = arith.divf %361, %362 : vector<2x128xf32>
    %364 = vector.extract_strided_slice %363 {offsets = [0, 0], sizes = [2, 32], strides = [1, 1]} : vector<2x128xf32> to vector<2x32xf32>
    %365 = vector.extract_strided_slice %363 {offsets = [0, 32], sizes = [2, 32], strides = [1, 1]} : vector<2x128xf32> to vector<2x32xf32>
    %366 = vector.extract_strided_slice %363 {offsets = [0, 96], sizes = [2, 32], strides = [1, 1]} : vector<2x128xf32> to vector<2x32xf32>
    %367 = vector.extract_strided_slice %363 {offsets = [0, 64], sizes = [2, 32], strides = [1, 1]} : vector<2x128xf32> to vector<2x32xf32>
    %cst_180 = arith.constant 2.000000e+00 : f32
    %368 = vector.broadcast %cst_180 : f32 to vector<2x32xf32>
    %369 = arith.mulf %368, %367 : vector<2x32xf32>
    %cst_181 = arith.constant 1.000000e+00 : f32
    %370 = vector.broadcast %cst_181 : f32 to vector<2x32xf32>
    %371 = arith.subf %369, %370 : vector<2x32xf32>
    %372 = arith.mulf %365, %353 : vector<2x32xf32>
    %373 = arith.mulf %364, %371 : vector<2x32xf32>
    %374 = arith.addf %372, %373 : vector<2x32xf32>
    %375 = math.tanh %374 : vector<2x32xf32>
    %376 = arith.mulf %366, %375 : vector<2x32xf32>
    %377 = tpu.concatenate %376, %374 in 1 : vector<2x32xf32>, vector<2x32xf32> -> vector<2x64xf32>
    %378 = tpu.concatenate %377, %98 in 1 : vector<2x64xf32>, vector<2x64xf32> -> vector<2x128xf32>
    %c3_182 = arith.constant 3 : index
    %c0_183 = arith.constant 0 : index
    %c0_184 = arith.constant 0 : index
    %379 = vector.load %arg2[%c3_182, %c0_183, %c0_184] : memref<4x160x128xbf16, #tpu.memory_space<vmem>>, vector<1x128x128xbf16>
    %380 = vector.shape_cast %379 : vector<1x128x128xbf16> to vector<128x128xbf16>
    %381 = arith.truncf %378 : vector<2x128xf32> to vector<2x128xbf16>
    %cst_185 = arith.constant dense<0.000000e+00> : vector<2x128xf32>
    %382 = tpu.matmul %381, %380, %cst_185 {dimension_numbers = #tpu.dot_dimension_numbers<[1], [0], [0], [1], [0, 0, 1, 1], [], []>} : vector<2x128xbf16>, vector<128x128xbf16>, vector<2x128xf32> -> vector<2x128xf32>
    %383 = arith.addf %382, %15 : vector<2x128xf32>
    %384 = vector.extract_strided_slice %383 {offsets = [0, 0], sizes = [2, 64], strides = [1, 1]} : vector<2x128xf32> to vector<2x64xf32>
    %cst_186 = arith.constant 0.000000e+00 : f32
    %385 = vector.broadcast %cst_186 : f32 to vector<2x64xf32>
    %386 = arith.maximumf %384, %385 : vector<2x64xf32>
    %387 = vector.extract_strided_slice %383 {offsets = [0, 64], sizes = [2, 64], strides = [1, 1]} : vector<2x128xf32> to vector<2x64xf32>
    %c3_187 = arith.constant 3 : index
    %c0_188 = arith.constant 0 : index
    %c0_189 = arith.constant 0 : index
    %388 = vector.load %arg3[%c3_187, %c0_188, %c0_189] : memref<4x128x64xbf16, #tpu.memory_space<vmem>>, vector<1x64x64xbf16>
    %389 = vector.shape_cast %388 : vector<1x64x64xbf16> to vector<64x64xbf16>
    %390 = arith.truncf %386 : vector<2x64xf32> to vector<2x64xbf16>
    %cst_190 = arith.constant dense<0.000000e+00> : vector<2x64xf32>
    %391 = tpu.matmul %390, %389, %cst_190 {dimension_numbers = #tpu.dot_dimension_numbers<[1], [0], [0], [1], [0, 0, 1, 1], [], []>} : vector<2x64xbf16>, vector<64x64xbf16>, vector<2x64xf32> -> vector<2x64xf32>
    %392 = arith.addf %391, %47 : vector<2x64xf32>
    %cst_191 = arith.constant 0.000000e+00 : f32
    %393 = vector.broadcast %cst_191 : f32 to vector<2x64xf32>
    %394 = arith.maximumf %392, %393 : vector<2x64xf32>
    %c3_192 = arith.constant 3 : index
    %c64_193 = arith.constant 64 : index
    %c0_194 = arith.constant 0 : index
    %395 = vector.load %arg3[%c3_192, %c64_193, %c0_194] : memref<4x128x64xbf16, #tpu.memory_space<vmem>>, vector<1x64x64xbf16>
    %396 = vector.shape_cast %395 : vector<1x64x64xbf16> to vector<64x64xbf16>
    %397 = arith.truncf %394 : vector<2x64xf32> to vector<2x64xbf16>
    %cst_195 = arith.constant dense<0.000000e+00> : vector<2x64xf32>
    %398 = tpu.matmul %397, %396, %cst_195 {dimension_numbers = #tpu.dot_dimension_numbers<[1], [0], [0], [1], [0, 0, 1, 1], [], []>} : vector<2x64xbf16>, vector<64x64xbf16>, vector<2x64xf32> -> vector<2x64xf32>
    %399 = arith.addf %398, %63 : vector<2x64xf32>
    %400 = arith.addf %399, %387 : vector<2x64xf32>
    %401 = vector.extract_strided_slice %400 {offsets = [0, 0], sizes = [2, 32], strides = [1, 1]} : vector<2x64xf32> to vector<2x32xf32>
    %cst_196 = arith.constant dense<0.000000e+00> : vector<2xf32>
    %402 = vector.multi_reduction <add>, %401, %cst_196 [1] : vector<2x32xf32> to vector<2xf32>
    %403 = vector.shape_cast %402 : vector<2xf32> to vector<2x1xf32>
    %cst_197 = arith.constant 3.200000e+01 : f32
    %404 = vector.broadcast %cst_197 : f32 to vector<2x1xf32>
    %405 = arith.divf %403, %404 : vector<2x1xf32>
    %406 = vector.broadcast %405 : vector<2x1xf32> to vector<2x32xf32>
    %407 = arith.subf %401, %406 : vector<2x32xf32>
    %408 = arith.mulf %407, %407 : vector<2x32xf32>
    %cst_198 = arith.constant dense<0.000000e+00> : vector<2xf32>
    %409 = vector.multi_reduction <add>, %408, %cst_198 [1] : vector<2x32xf32> to vector<2xf32>
    %410 = vector.shape_cast %409 : vector<2xf32> to vector<2x1xf32>
    %cst_199 = arith.constant 3.200000e+01 : f32
    %411 = vector.broadcast %cst_199 : f32 to vector<2x1xf32>
    %412 = arith.divf %410, %411 : vector<2x1xf32>
    %413 = vector.broadcast %405 : vector<2x1xf32> to vector<2x32xf32>
    %414 = arith.subf %401, %413 : vector<2x32xf32>
    %cst_200 = arith.constant 9.99999974E-6 : f32
    %415 = vector.broadcast %cst_200 : f32 to vector<2x1xf32>
    %416 = arith.addf %412, %415 : vector<2x1xf32>
    %417 = math.rsqrt %416 : vector<2x1xf32>
    %418 = vector.broadcast %417 : vector<2x1xf32> to vector<2x32xf32>
    %419 = arith.mulf %414, %418 : vector<2x32xf32>
    %420 = vector.broadcast %71 : vector<1x32xf32> to vector<2x32xf32>
    %421 = arith.mulf %419, %420 : vector<2x32xf32>
    %422 = vector.broadcast %79 : vector<1x32xf32> to vector<2x32xf32>
    %423 = arith.addf %421, %422 : vector<2x32xf32>
    %424 = vector.extract_strided_slice %400 {offsets = [0, 32], sizes = [2, 32], strides = [1, 1]} : vector<2x64xf32> to vector<2x32xf32>
    %cst_201 = arith.constant dense<0.000000e+00> : vector<2xf32>
    %425 = vector.multi_reduction <add>, %424, %cst_201 [1] : vector<2x32xf32> to vector<2xf32>
    %426 = vector.shape_cast %425 : vector<2xf32> to vector<2x1xf32>
    %cst_202 = arith.constant 3.200000e+01 : f32
    %427 = vector.broadcast %cst_202 : f32 to vector<2x1xf32>
    %428 = arith.divf %426, %427 : vector<2x1xf32>
    %429 = vector.broadcast %428 : vector<2x1xf32> to vector<2x32xf32>
    %430 = arith.subf %424, %429 : vector<2x32xf32>
    %431 = arith.mulf %430, %430 : vector<2x32xf32>
    %cst_203 = arith.constant dense<0.000000e+00> : vector<2xf32>
    %432 = vector.multi_reduction <add>, %431, %cst_203 [1] : vector<2x32xf32> to vector<2xf32>
    %433 = vector.shape_cast %432 : vector<2xf32> to vector<2x1xf32>
    %cst_204 = arith.constant 3.200000e+01 : f32
    %434 = vector.broadcast %cst_204 : f32 to vector<2x1xf32>
    %435 = arith.divf %433, %434 : vector<2x1xf32>
    %436 = vector.broadcast %428 : vector<2x1xf32> to vector<2x32xf32>
    %437 = arith.subf %424, %436 : vector<2x32xf32>
    %cst_205 = arith.constant 9.99999974E-6 : f32
    %438 = vector.broadcast %cst_205 : f32 to vector<2x1xf32>
    %439 = arith.addf %435, %438 : vector<2x1xf32>
    %440 = math.rsqrt %439 : vector<2x1xf32>
    %441 = vector.broadcast %440 : vector<2x1xf32> to vector<2x32xf32>
    %442 = arith.mulf %437, %441 : vector<2x32xf32>
    %443 = vector.broadcast %87 : vector<1x32xf32> to vector<2x32xf32>
    %444 = arith.mulf %442, %443 : vector<2x32xf32>
    %445 = vector.broadcast %95 : vector<1x32xf32> to vector<2x32xf32>
    %446 = arith.addf %444, %445 : vector<2x32xf32>
    %c3_206 = arith.constant 3 : index
    %c128_207 = arith.constant 128 : index
    %c0_208 = arith.constant 0 : index
    %447 = vector.load %arg2[%c3_206, %c128_207, %c0_208] : memref<4x160x128xbf16, #tpu.memory_space<vmem>>, vector<1x32x128xbf16>
    %448 = vector.shape_cast %447 : vector<1x32x128xbf16> to vector<32x128xbf16>
    %449 = arith.truncf %423 : vector<2x32xf32> to vector<2x32xbf16>
    %cst_209 = arith.constant dense<0.000000e+00> : vector<2x128xf32>
    %450 = tpu.matmul %449, %448, %cst_209 {dimension_numbers = #tpu.dot_dimension_numbers<[1], [0], [0], [1], [0, 0, 1, 1], [], []>} : vector<2x32xbf16>, vector<32x128xbf16>, vector<2x128xf32> -> vector<2x128xf32>
    %451 = arith.addf %450, %31 : vector<2x128xf32>
    %452 = arith.negf %451 : vector<2x128xf32>
    %453 = math.exp %452 : vector<2x128xf32>
    %cst_210 = arith.constant 1.000000e+00 : f32
    %454 = vector.broadcast %cst_210 : f32 to vector<2x128xf32>
    %455 = arith.addf %454, %453 : vector<2x128xf32>
    %456 = arith.divf %454, %455 : vector<2x128xf32>
    %457 = vector.extract_strided_slice %456 {offsets = [0, 0], sizes = [2, 32], strides = [1, 1]} : vector<2x128xf32> to vector<2x32xf32>
    %458 = vector.extract_strided_slice %456 {offsets = [0, 32], sizes = [2, 32], strides = [1, 1]} : vector<2x128xf32> to vector<2x32xf32>
    %459 = vector.extract_strided_slice %456 {offsets = [0, 96], sizes = [2, 32], strides = [1, 1]} : vector<2x128xf32> to vector<2x32xf32>
    %460 = vector.extract_strided_slice %456 {offsets = [0, 64], sizes = [2, 32], strides = [1, 1]} : vector<2x128xf32> to vector<2x32xf32>
    %cst_211 = arith.constant 2.000000e+00 : f32
    %461 = vector.broadcast %cst_211 : f32 to vector<2x32xf32>
    %462 = arith.mulf %461, %460 : vector<2x32xf32>
    %cst_212 = arith.constant 1.000000e+00 : f32
    %463 = vector.broadcast %cst_212 : f32 to vector<2x32xf32>
    %464 = arith.subf %462, %463 : vector<2x32xf32>
    %465 = arith.mulf %458, %446 : vector<2x32xf32>
    %466 = arith.mulf %457, %464 : vector<2x32xf32>
    %467 = arith.addf %465, %466 : vector<2x32xf32>
    %468 = math.tanh %467 : vector<2x32xf32>
    %469 = arith.mulf %459, %468 : vector<2x32xf32>
    %470 = tpu.concatenate %469, %467 in 1 : vector<2x32xf32>, vector<2x32xf32> -> vector<2x64xf32>
    %471 = tpu.concatenate %470, %191 in 1 : vector<2x64xf32>, vector<2x64xf32> -> vector<2x128xf32>
    %c0_213 = arith.constant 0 : index
    %c0_214 = arith.constant 0 : index
    %c0_215 = arith.constant 0 : index
    %472 = vector.load %arg2[%c0_213, %c0_214, %c0_215] : memref<4x160x128xbf16, #tpu.memory_space<vmem>>, vector<1x128x128xbf16>
    %473 = vector.shape_cast %472 : vector<1x128x128xbf16> to vector<128x128xbf16>
    %474 = arith.truncf %471 : vector<2x128xf32> to vector<2x128xbf16>
    %cst_216 = arith.constant dense<0.000000e+00> : vector<2x128xf32>
    %475 = tpu.matmul %474, %473, %cst_216 {dimension_numbers = #tpu.dot_dimension_numbers<[1], [0], [0], [1], [0, 0, 1, 1], [], []>} : vector<2x128xbf16>, vector<128x128xbf16>, vector<2x128xf32> -> vector<2x128xf32>
    %476 = arith.addf %475, %3 : vector<2x128xf32>
    %477 = vector.extract_strided_slice %476 {offsets = [0, 0], sizes = [2, 64], strides = [1, 1]} : vector<2x128xf32> to vector<2x64xf32>
    %cst_217 = arith.constant 0.000000e+00 : f32
    %478 = vector.broadcast %cst_217 : f32 to vector<2x64xf32>
    %479 = arith.maximumf %477, %478 : vector<2x64xf32>
    %480 = vector.extract_strided_slice %476 {offsets = [0, 64], sizes = [2, 64], strides = [1, 1]} : vector<2x128xf32> to vector<2x64xf32>
    %c0_218 = arith.constant 0 : index
    %c0_219 = arith.constant 0 : index
    %c0_220 = arith.constant 0 : index
    %481 = vector.load %arg3[%c0_218, %c0_219, %c0_220] : memref<4x128x64xbf16, #tpu.memory_space<vmem>>, vector<1x64x64xbf16>
    %482 = vector.shape_cast %481 : vector<1x64x64xbf16> to vector<64x64xbf16>
    %483 = arith.truncf %479 : vector<2x64xf32> to vector<2x64xbf16>
    %cst_221 = arith.constant dense<0.000000e+00> : vector<2x64xf32>
    %484 = tpu.matmul %483, %482, %cst_221 {dimension_numbers = #tpu.dot_dimension_numbers<[1], [0], [0], [1], [0, 0, 1, 1], [], []>} : vector<2x64xbf16>, vector<64x64xbf16>, vector<2x64xf32> -> vector<2x64xf32>
    %485 = arith.addf %484, %35 : vector<2x64xf32>
    %cst_222 = arith.constant 0.000000e+00 : f32
    %486 = vector.broadcast %cst_222 : f32 to vector<2x64xf32>
    %487 = arith.maximumf %485, %486 : vector<2x64xf32>
    %c0_223 = arith.constant 0 : index
    %c64_224 = arith.constant 64 : index
    %c0_225 = arith.constant 0 : index
    %488 = vector.load %arg3[%c0_223, %c64_224, %c0_225] : memref<4x128x64xbf16, #tpu.memory_space<vmem>>, vector<1x64x64xbf16>
    %489 = vector.shape_cast %488 : vector<1x64x64xbf16> to vector<64x64xbf16>
    %490 = arith.truncf %487 : vector<2x64xf32> to vector<2x64xbf16>
    %cst_226 = arith.constant dense<0.000000e+00> : vector<2x64xf32>
    %491 = tpu.matmul %490, %489, %cst_226 {dimension_numbers = #tpu.dot_dimension_numbers<[1], [0], [0], [1], [0, 0, 1, 1], [], []>} : vector<2x64xbf16>, vector<64x64xbf16>, vector<2x64xf32> -> vector<2x64xf32>
    %492 = arith.addf %491, %51 : vector<2x64xf32>
    %493 = arith.addf %492, %480 : vector<2x64xf32>
    %494 = vector.extract_strided_slice %493 {offsets = [0, 0], sizes = [2, 32], strides = [1, 1]} : vector<2x64xf32> to vector<2x32xf32>
    %cst_227 = arith.constant dense<0.000000e+00> : vector<2xf32>
    %495 = vector.multi_reduction <add>, %494, %cst_227 [1] : vector<2x32xf32> to vector<2xf32>
    %496 = vector.shape_cast %495 : vector<2xf32> to vector<2x1xf32>
    %cst_228 = arith.constant 3.200000e+01 : f32
    %497 = vector.broadcast %cst_228 : f32 to vector<2x1xf32>
    %498 = arith.divf %496, %497 : vector<2x1xf32>
    %499 = vector.broadcast %498 : vector<2x1xf32> to vector<2x32xf32>
    %500 = arith.subf %494, %499 : vector<2x32xf32>
    %501 = arith.mulf %500, %500 : vector<2x32xf32>
    %cst_229 = arith.constant dense<0.000000e+00> : vector<2xf32>
    %502 = vector.multi_reduction <add>, %501, %cst_229 [1] : vector<2x32xf32> to vector<2xf32>
    %503 = vector.shape_cast %502 : vector<2xf32> to vector<2x1xf32>
    %cst_230 = arith.constant 3.200000e+01 : f32
    %504 = vector.broadcast %cst_230 : f32 to vector<2x1xf32>
    %505 = arith.divf %503, %504 : vector<2x1xf32>
    %506 = vector.broadcast %498 : vector<2x1xf32> to vector<2x32xf32>
    %507 = arith.subf %494, %506 : vector<2x32xf32>
    %cst_231 = arith.constant 9.99999974E-6 : f32
    %508 = vector.broadcast %cst_231 : f32 to vector<2x1xf32>
    %509 = arith.addf %505, %508 : vector<2x1xf32>
    %510 = math.rsqrt %509 : vector<2x1xf32>
    %511 = vector.broadcast %510 : vector<2x1xf32> to vector<2x32xf32>
    %512 = arith.mulf %507, %511 : vector<2x32xf32>
    %513 = vector.broadcast %65 : vector<1x32xf32> to vector<2x32xf32>
    %514 = arith.mulf %512, %513 : vector<2x32xf32>
    %515 = vector.broadcast %73 : vector<1x32xf32> to vector<2x32xf32>
    %516 = arith.addf %514, %515 : vector<2x32xf32>
    %517 = vector.extract_strided_slice %493 {offsets = [0, 32], sizes = [2, 32], strides = [1, 1]} : vector<2x64xf32> to vector<2x32xf32>
    %cst_232 = arith.constant dense<0.000000e+00> : vector<2xf32>
    %518 = vector.multi_reduction <add>, %517, %cst_232 [1] : vector<2x32xf32> to vector<2xf32>
    %519 = vector.shape_cast %518 : vector<2xf32> to vector<2x1xf32>
    %cst_233 = arith.constant 3.200000e+01 : f32
    %520 = vector.broadcast %cst_233 : f32 to vector<2x1xf32>
    %521 = arith.divf %519, %520 : vector<2x1xf32>
    %522 = vector.broadcast %521 : vector<2x1xf32> to vector<2x32xf32>
    %523 = arith.subf %517, %522 : vector<2x32xf32>
    %524 = arith.mulf %523, %523 : vector<2x32xf32>
    %cst_234 = arith.constant dense<0.000000e+00> : vector<2xf32>
    %525 = vector.multi_reduction <add>, %524, %cst_234 [1] : vector<2x32xf32> to vector<2xf32>
    %526 = vector.shape_cast %525 : vector<2xf32> to vector<2x1xf32>
    %cst_235 = arith.constant 3.200000e+01 : f32
    %527 = vector.broadcast %cst_235 : f32 to vector<2x1xf32>
    %528 = arith.divf %526, %527 : vector<2x1xf32>
    %529 = vector.broadcast %521 : vector<2x1xf32> to vector<2x32xf32>
    %530 = arith.subf %517, %529 : vector<2x32xf32>
    %cst_236 = arith.constant 9.99999974E-6 : f32
    %531 = vector.broadcast %cst_236 : f32 to vector<2x1xf32>
    %532 = arith.addf %528, %531 : vector<2x1xf32>
    %533 = math.rsqrt %532 : vector<2x1xf32>
    %534 = vector.broadcast %533 : vector<2x1xf32> to vector<2x32xf32>
    %535 = arith.mulf %530, %534 : vector<2x32xf32>
    %536 = vector.broadcast %81 : vector<1x32xf32> to vector<2x32xf32>
    %537 = arith.mulf %535, %536 : vector<2x32xf32>
    %538 = vector.broadcast %89 : vector<1x32xf32> to vector<2x32xf32>
    %539 = arith.addf %537, %538 : vector<2x32xf32>
    %c0_237 = arith.constant 0 : index
    %c128_238 = arith.constant 128 : index
    %c0_239 = arith.constant 0 : index
    %540 = vector.load %arg2[%c0_237, %c128_238, %c0_239] : memref<4x160x128xbf16, #tpu.memory_space<vmem>>, vector<1x32x128xbf16>
    %541 = vector.shape_cast %540 : vector<1x32x128xbf16> to vector<32x128xbf16>
    %542 = arith.truncf %516 : vector<2x32xf32> to vector<2x32xbf16>
    %cst_240 = arith.constant dense<0.000000e+00> : vector<2x128xf32>
    %543 = tpu.matmul %542, %541, %cst_240 {dimension_numbers = #tpu.dot_dimension_numbers<[1], [0], [0], [1], [0, 0, 1, 1], [], []>} : vector<2x32xbf16>, vector<32x128xbf16>, vector<2x128xf32> -> vector<2x128xf32>
    %544 = arith.addf %543, %19 : vector<2x128xf32>
    %545 = arith.negf %544 : vector<2x128xf32>
    %546 = math.exp %545 : vector<2x128xf32>
    %cst_241 = arith.constant 1.000000e+00 : f32
    %547 = vector.broadcast %cst_241 : f32 to vector<2x128xf32>
    %548 = arith.addf %547, %546 : vector<2x128xf32>
    %549 = arith.divf %547, %548 : vector<2x128xf32>
    %550 = vector.extract_strided_slice %549 {offsets = [0, 0], sizes = [2, 32], strides = [1, 1]} : vector<2x128xf32> to vector<2x32xf32>
    %551 = vector.extract_strided_slice %549 {offsets = [0, 32], sizes = [2, 32], strides = [1, 1]} : vector<2x128xf32> to vector<2x32xf32>
    %552 = vector.extract_strided_slice %549 {offsets = [0, 96], sizes = [2, 32], strides = [1, 1]} : vector<2x128xf32> to vector<2x32xf32>
    %553 = vector.extract_strided_slice %549 {offsets = [0, 64], sizes = [2, 32], strides = [1, 1]} : vector<2x128xf32> to vector<2x32xf32>
    %cst_242 = arith.constant 2.000000e+00 : f32
    %554 = vector.broadcast %cst_242 : f32 to vector<2x32xf32>
    %555 = arith.mulf %554, %553 : vector<2x32xf32>
    %cst_243 = arith.constant 1.000000e+00 : f32
    %556 = vector.broadcast %cst_243 : f32 to vector<2x32xf32>
    %557 = arith.subf %555, %556 : vector<2x32xf32>
    %558 = arith.mulf %551, %539 : vector<2x32xf32>
    %559 = arith.mulf %550, %557 : vector<2x32xf32>
    %560 = arith.addf %558, %559 : vector<2x32xf32>
    %561 = math.tanh %560 : vector<2x32xf32>
    %562 = arith.mulf %552, %561 : vector<2x32xf32>
    %563 = tpu.concatenate %562, %560 in 1 : vector<2x32xf32>, vector<2x32xf32> -> vector<2x64xf32>
    %564 = tpu.concatenate %563, %284 in 1 : vector<2x64xf32>, vector<2x64xf32> -> vector<2x128xf32>
    %c1_244 = arith.constant 1 : index
    %c0_245 = arith.constant 0 : index
    %c0_246 = arith.constant 0 : index
    %565 = vector.load %arg2[%c1_244, %c0_245, %c0_246] : memref<4x160x128xbf16, #tpu.memory_space<vmem>>, vector<1x128x128xbf16>
    %566 = vector.shape_cast %565 : vector<1x128x128xbf16> to vector<128x128xbf16>
    %567 = arith.truncf %564 : vector<2x128xf32> to vector<2x128xbf16>
    %cst_247 = arith.constant dense<0.000000e+00> : vector<2x128xf32>
    %568 = tpu.matmul %567, %566, %cst_247 {dimension_numbers = #tpu.dot_dimension_numbers<[1], [0], [0], [1], [0, 0, 1, 1], [], []>} : vector<2x128xbf16>, vector<128x128xbf16>, vector<2x128xf32> -> vector<2x128xf32>
    %569 = arith.addf %568, %7 : vector<2x128xf32>
    %570 = vector.extract_strided_slice %569 {offsets = [0, 0], sizes = [2, 64], strides = [1, 1]} : vector<2x128xf32> to vector<2x64xf32>
    %cst_248 = arith.constant 0.000000e+00 : f32
    %571 = vector.broadcast %cst_248 : f32 to vector<2x64xf32>
    %572 = arith.maximumf %570, %571 : vector<2x64xf32>
    %573 = vector.extract_strided_slice %569 {offsets = [0, 64], sizes = [2, 64], strides = [1, 1]} : vector<2x128xf32> to vector<2x64xf32>
    %c1_249 = arith.constant 1 : index
    %c0_250 = arith.constant 0 : index
    %c0_251 = arith.constant 0 : index
    %574 = vector.load %arg3[%c1_249, %c0_250, %c0_251] : memref<4x128x64xbf16, #tpu.memory_space<vmem>>, vector<1x64x64xbf16>
    %575 = vector.shape_cast %574 : vector<1x64x64xbf16> to vector<64x64xbf16>
    %576 = arith.truncf %572 : vector<2x64xf32> to vector<2x64xbf16>
    %cst_252 = arith.constant dense<0.000000e+00> : vector<2x64xf32>
    %577 = tpu.matmul %576, %575, %cst_252 {dimension_numbers = #tpu.dot_dimension_numbers<[1], [0], [0], [1], [0, 0, 1, 1], [], []>} : vector<2x64xbf16>, vector<64x64xbf16>, vector<2x64xf32> -> vector<2x64xf32>
    %578 = arith.addf %577, %39 : vector<2x64xf32>
    %cst_253 = arith.constant 0.000000e+00 : f32
    %579 = vector.broadcast %cst_253 : f32 to vector<2x64xf32>
    %580 = arith.maximumf %578, %579 : vector<2x64xf32>
    %c1_254 = arith.constant 1 : index
    %c64_255 = arith.constant 64 : index
    %c0_256 = arith.constant 0 : index
    %581 = vector.load %arg3[%c1_254, %c64_255, %c0_256] : memref<4x128x64xbf16, #tpu.memory_space<vmem>>, vector<1x64x64xbf16>
    %582 = vector.shape_cast %581 : vector<1x64x64xbf16> to vector<64x64xbf16>
    %583 = arith.truncf %580 : vector<2x64xf32> to vector<2x64xbf16>
    %cst_257 = arith.constant dense<0.000000e+00> : vector<2x64xf32>
    %584 = tpu.matmul %583, %582, %cst_257 {dimension_numbers = #tpu.dot_dimension_numbers<[1], [0], [0], [1], [0, 0, 1, 1], [], []>} : vector<2x64xbf16>, vector<64x64xbf16>, vector<2x64xf32> -> vector<2x64xf32>
    %585 = arith.addf %584, %55 : vector<2x64xf32>
    %586 = arith.addf %585, %573 : vector<2x64xf32>
    %587 = vector.extract_strided_slice %586 {offsets = [0, 0], sizes = [2, 32], strides = [1, 1]} : vector<2x64xf32> to vector<2x32xf32>
    %cst_258 = arith.constant dense<0.000000e+00> : vector<2xf32>
    %588 = vector.multi_reduction <add>, %587, %cst_258 [1] : vector<2x32xf32> to vector<2xf32>
    %589 = vector.shape_cast %588 : vector<2xf32> to vector<2x1xf32>
    %cst_259 = arith.constant 3.200000e+01 : f32
    %590 = vector.broadcast %cst_259 : f32 to vector<2x1xf32>
    %591 = arith.divf %589, %590 : vector<2x1xf32>
    %592 = vector.broadcast %591 : vector<2x1xf32> to vector<2x32xf32>
    %593 = arith.subf %587, %592 : vector<2x32xf32>
    %594 = arith.mulf %593, %593 : vector<2x32xf32>
    %cst_260 = arith.constant dense<0.000000e+00> : vector<2xf32>
    %595 = vector.multi_reduction <add>, %594, %cst_260 [1] : vector<2x32xf32> to vector<2xf32>
    %596 = vector.shape_cast %595 : vector<2xf32> to vector<2x1xf32>
    %cst_261 = arith.constant 3.200000e+01 : f32
    %597 = vector.broadcast %cst_261 : f32 to vector<2x1xf32>
    %598 = arith.divf %596, %597 : vector<2x1xf32>
    %599 = vector.broadcast %591 : vector<2x1xf32> to vector<2x32xf32>
    %600 = arith.subf %587, %599 : vector<2x32xf32>
    %cst_262 = arith.constant 9.99999974E-6 : f32
    %601 = vector.broadcast %cst_262 : f32 to vector<2x1xf32>
    %602 = arith.addf %598, %601 : vector<2x1xf32>
    %603 = math.rsqrt %602 : vector<2x1xf32>
    %604 = vector.broadcast %603 : vector<2x1xf32> to vector<2x32xf32>
    %605 = arith.mulf %600, %604 : vector<2x32xf32>
    %606 = vector.broadcast %67 : vector<1x32xf32> to vector<2x32xf32>
    %607 = arith.mulf %605, %606 : vector<2x32xf32>
    %608 = vector.broadcast %75 : vector<1x32xf32> to vector<2x32xf32>
    %609 = arith.addf %607, %608 : vector<2x32xf32>
    %610 = vector.extract_strided_slice %586 {offsets = [0, 32], sizes = [2, 32], strides = [1, 1]} : vector<2x64xf32> to vector<2x32xf32>
    %cst_263 = arith.constant dense<0.000000e+00> : vector<2xf32>
    %611 = vector.multi_reduction <add>, %610, %cst_263 [1] : vector<2x32xf32> to vector<2xf32>
    %612 = vector.shape_cast %611 : vector<2xf32> to vector<2x1xf32>
    %cst_264 = arith.constant 3.200000e+01 : f32
    %613 = vector.broadcast %cst_264 : f32 to vector<2x1xf32>
    %614 = arith.divf %612, %613 : vector<2x1xf32>
    %615 = vector.broadcast %614 : vector<2x1xf32> to vector<2x32xf32>
    %616 = arith.subf %610, %615 : vector<2x32xf32>
    %617 = arith.mulf %616, %616 : vector<2x32xf32>
    %cst_265 = arith.constant dense<0.000000e+00> : vector<2xf32>
    %618 = vector.multi_reduction <add>, %617, %cst_265 [1] : vector<2x32xf32> to vector<2xf32>
    %619 = vector.shape_cast %618 : vector<2xf32> to vector<2x1xf32>
    %cst_266 = arith.constant 3.200000e+01 : f32
    %620 = vector.broadcast %cst_266 : f32 to vector<2x1xf32>
    %621 = arith.divf %619, %620 : vector<2x1xf32>
    %622 = vector.broadcast %614 : vector<2x1xf32> to vector<2x32xf32>
    %623 = arith.subf %610, %622 : vector<2x32xf32>
    %cst_267 = arith.constant 9.99999974E-6 : f32
    %624 = vector.broadcast %cst_267 : f32 to vector<2x1xf32>
    %625 = arith.addf %621, %624 : vector<2x1xf32>
    %626 = math.rsqrt %625 : vector<2x1xf32>
    %627 = vector.broadcast %626 : vector<2x1xf32> to vector<2x32xf32>
    %628 = arith.mulf %623, %627 : vector<2x32xf32>
    %629 = vector.broadcast %83 : vector<1x32xf32> to vector<2x32xf32>
    %630 = arith.mulf %628, %629 : vector<2x32xf32>
    %631 = vector.broadcast %91 : vector<1x32xf32> to vector<2x32xf32>
    %632 = arith.addf %630, %631 : vector<2x32xf32>
    %c1_268 = arith.constant 1 : index
    %c128_269 = arith.constant 128 : index
    %c0_270 = arith.constant 0 : index
    %633 = vector.load %arg2[%c1_268, %c128_269, %c0_270] : memref<4x160x128xbf16, #tpu.memory_space<vmem>>, vector<1x32x128xbf16>
    %634 = vector.shape_cast %633 : vector<1x32x128xbf16> to vector<32x128xbf16>
    %635 = arith.truncf %609 : vector<2x32xf32> to vector<2x32xbf16>
    %cst_271 = arith.constant dense<0.000000e+00> : vector<2x128xf32>
    %636 = tpu.matmul %635, %634, %cst_271 {dimension_numbers = #tpu.dot_dimension_numbers<[1], [0], [0], [1], [0, 0, 1, 1], [], []>} : vector<2x32xbf16>, vector<32x128xbf16>, vector<2x128xf32> -> vector<2x128xf32>
    %637 = arith.addf %636, %23 : vector<2x128xf32>
    %638 = arith.negf %637 : vector<2x128xf32>
    %639 = math.exp %638 : vector<2x128xf32>
    %cst_272 = arith.constant 1.000000e+00 : f32
    %640 = vector.broadcast %cst_272 : f32 to vector<2x128xf32>
    %641 = arith.addf %640, %639 : vector<2x128xf32>
    %642 = arith.divf %640, %641 : vector<2x128xf32>
    %643 = vector.extract_strided_slice %642 {offsets = [0, 0], sizes = [2, 32], strides = [1, 1]} : vector<2x128xf32> to vector<2x32xf32>
    %644 = vector.extract_strided_slice %642 {offsets = [0, 32], sizes = [2, 32], strides = [1, 1]} : vector<2x128xf32> to vector<2x32xf32>
    %645 = vector.extract_strided_slice %642 {offsets = [0, 96], sizes = [2, 32], strides = [1, 1]} : vector<2x128xf32> to vector<2x32xf32>
    %646 = vector.extract_strided_slice %642 {offsets = [0, 64], sizes = [2, 32], strides = [1, 1]} : vector<2x128xf32> to vector<2x32xf32>
    %cst_273 = arith.constant 2.000000e+00 : f32
    %647 = vector.broadcast %cst_273 : f32 to vector<2x32xf32>
    %648 = arith.mulf %647, %646 : vector<2x32xf32>
    %cst_274 = arith.constant 1.000000e+00 : f32
    %649 = vector.broadcast %cst_274 : f32 to vector<2x32xf32>
    %650 = arith.subf %648, %649 : vector<2x32xf32>
    %651 = arith.mulf %644, %632 : vector<2x32xf32>
    %652 = arith.mulf %643, %650 : vector<2x32xf32>
    %653 = arith.addf %651, %652 : vector<2x32xf32>
    %654 = math.tanh %653 : vector<2x32xf32>
    %655 = arith.mulf %645, %654 : vector<2x32xf32>
    %656 = tpu.concatenate %655, %653 in 1 : vector<2x32xf32>, vector<2x32xf32> -> vector<2x64xf32>
    %657 = tpu.concatenate %656, %377 in 1 : vector<2x64xf32>, vector<2x64xf32> -> vector<2x128xf32>
    %c2_275 = arith.constant 2 : index
    %c0_276 = arith.constant 0 : index
    %c0_277 = arith.constant 0 : index
    %658 = vector.load %arg2[%c2_275, %c0_276, %c0_277] : memref<4x160x128xbf16, #tpu.memory_space<vmem>>, vector<1x128x128xbf16>
    %659 = vector.shape_cast %658 : vector<1x128x128xbf16> to vector<128x128xbf16>
    %660 = arith.truncf %657 : vector<2x128xf32> to vector<2x128xbf16>
    %cst_278 = arith.constant dense<0.000000e+00> : vector<2x128xf32>
    %661 = tpu.matmul %660, %659, %cst_278 {dimension_numbers = #tpu.dot_dimension_numbers<[1], [0], [0], [1], [0, 0, 1, 1], [], []>} : vector<2x128xbf16>, vector<128x128xbf16>, vector<2x128xf32> -> vector<2x128xf32>
    %662 = arith.addf %661, %11 : vector<2x128xf32>
    %663 = vector.extract_strided_slice %662 {offsets = [0, 0], sizes = [2, 64], strides = [1, 1]} : vector<2x128xf32> to vector<2x64xf32>
    %cst_279 = arith.constant 0.000000e+00 : f32
    %664 = vector.broadcast %cst_279 : f32 to vector<2x64xf32>
    %665 = arith.maximumf %663, %664 : vector<2x64xf32>
    %666 = vector.extract_strided_slice %662 {offsets = [0, 64], sizes = [2, 64], strides = [1, 1]} : vector<2x128xf32> to vector<2x64xf32>
    %c2_280 = arith.constant 2 : index
    %c0_281 = arith.constant 0 : index
    %c0_282 = arith.constant 0 : index
    %667 = vector.load %arg3[%c2_280, %c0_281, %c0_282] : memref<4x128x64xbf16, #tpu.memory_space<vmem>>, vector<1x64x64xbf16>
    %668 = vector.shape_cast %667 : vector<1x64x64xbf16> to vector<64x64xbf16>
    %669 = arith.truncf %665 : vector<2x64xf32> to vector<2x64xbf16>
    %cst_283 = arith.constant dense<0.000000e+00> : vector<2x64xf32>
    %670 = tpu.matmul %669, %668, %cst_283 {dimension_numbers = #tpu.dot_dimension_numbers<[1], [0], [0], [1], [0, 0, 1, 1], [], []>} : vector<2x64xbf16>, vector<64x64xbf16>, vector<2x64xf32> -> vector<2x64xf32>
    %671 = arith.addf %670, %43 : vector<2x64xf32>
    %cst_284 = arith.constant 0.000000e+00 : f32
    %672 = vector.broadcast %cst_284 : f32 to vector<2x64xf32>
    %673 = arith.maximumf %671, %672 : vector<2x64xf32>
    %c2_285 = arith.constant 2 : index
    %c64_286 = arith.constant 64 : index
    %c0_287 = arith.constant 0 : index
    %674 = vector.load %arg3[%c2_285, %c64_286, %c0_287] : memref<4x128x64xbf16, #tpu.memory_space<vmem>>, vector<1x64x64xbf16>
    %675 = vector.shape_cast %674 : vector<1x64x64xbf16> to vector<64x64xbf16>
    %676 = arith.truncf %673 : vector<2x64xf32> to vector<2x64xbf16>
    %cst_288 = arith.constant dense<0.000000e+00> : vector<2x64xf32>
    %677 = tpu.matmul %676, %675, %cst_288 {dimension_numbers = #tpu.dot_dimension_numbers<[1], [0], [0], [1], [0, 0, 1, 1], [], []>} : vector<2x64xbf16>, vector<64x64xbf16>, vector<2x64xf32> -> vector<2x64xf32>
    %678 = arith.addf %677, %59 : vector<2x64xf32>
    %679 = arith.addf %678, %666 : vector<2x64xf32>
    %680 = vector.extract_strided_slice %679 {offsets = [0, 0], sizes = [2, 32], strides = [1, 1]} : vector<2x64xf32> to vector<2x32xf32>
    %cst_289 = arith.constant dense<0.000000e+00> : vector<2xf32>
    %681 = vector.multi_reduction <add>, %680, %cst_289 [1] : vector<2x32xf32> to vector<2xf32>
    %682 = vector.shape_cast %681 : vector<2xf32> to vector<2x1xf32>
    %cst_290 = arith.constant 3.200000e+01 : f32
    %683 = vector.broadcast %cst_290 : f32 to vector<2x1xf32>
    %684 = arith.divf %682, %683 : vector<2x1xf32>
    %685 = vector.broadcast %684 : vector<2x1xf32> to vector<2x32xf32>
    %686 = arith.subf %680, %685 : vector<2x32xf32>
    %687 = arith.mulf %686, %686 : vector<2x32xf32>
    %cst_291 = arith.constant dense<0.000000e+00> : vector<2xf32>
    %688 = vector.multi_reduction <add>, %687, %cst_291 [1] : vector<2x32xf32> to vector<2xf32>
    %689 = vector.shape_cast %688 : vector<2xf32> to vector<2x1xf32>
    %cst_292 = arith.constant 3.200000e+01 : f32
    %690 = vector.broadcast %cst_292 : f32 to vector<2x1xf32>
    %691 = arith.divf %689, %690 : vector<2x1xf32>
    %692 = vector.broadcast %684 : vector<2x1xf32> to vector<2x32xf32>
    %693 = arith.subf %680, %692 : vector<2x32xf32>
    %cst_293 = arith.constant 9.99999974E-6 : f32
    %694 = vector.broadcast %cst_293 : f32 to vector<2x1xf32>
    %695 = arith.addf %691, %694 : vector<2x1xf32>
    %696 = math.rsqrt %695 : vector<2x1xf32>
    %697 = vector.broadcast %696 : vector<2x1xf32> to vector<2x32xf32>
    %698 = arith.mulf %693, %697 : vector<2x32xf32>
    %699 = vector.broadcast %69 : vector<1x32xf32> to vector<2x32xf32>
    %700 = arith.mulf %698, %699 : vector<2x32xf32>
    %701 = vector.broadcast %77 : vector<1x32xf32> to vector<2x32xf32>
    %702 = arith.addf %700, %701 : vector<2x32xf32>
    %703 = vector.extract_strided_slice %679 {offsets = [0, 32], sizes = [2, 32], strides = [1, 1]} : vector<2x64xf32> to vector<2x32xf32>
    %cst_294 = arith.constant dense<0.000000e+00> : vector<2xf32>
    %704 = vector.multi_reduction <add>, %703, %cst_294 [1] : vector<2x32xf32> to vector<2xf32>
    %705 = vector.shape_cast %704 : vector<2xf32> to vector<2x1xf32>
    %cst_295 = arith.constant 3.200000e+01 : f32
    %706 = vector.broadcast %cst_295 : f32 to vector<2x1xf32>
    %707 = arith.divf %705, %706 : vector<2x1xf32>
    %708 = vector.broadcast %707 : vector<2x1xf32> to vector<2x32xf32>
    %709 = arith.subf %703, %708 : vector<2x32xf32>
    %710 = arith.mulf %709, %709 : vector<2x32xf32>
    %cst_296 = arith.constant dense<0.000000e+00> : vector<2xf32>
    %711 = vector.multi_reduction <add>, %710, %cst_296 [1] : vector<2x32xf32> to vector<2xf32>
    %712 = vector.shape_cast %711 : vector<2xf32> to vector<2x1xf32>
    %cst_297 = arith.constant 3.200000e+01 : f32
    %713 = vector.broadcast %cst_297 : f32 to vector<2x1xf32>
    %714 = arith.divf %712, %713 : vector<2x1xf32>
    %715 = vector.broadcast %707 : vector<2x1xf32> to vector<2x32xf32>
    %716 = arith.subf %703, %715 : vector<2x32xf32>
    %cst_298 = arith.constant 9.99999974E-6 : f32
    %717 = vector.broadcast %cst_298 : f32 to vector<2x1xf32>
    %718 = arith.addf %714, %717 : vector<2x1xf32>
    %719 = math.rsqrt %718 : vector<2x1xf32>
    %720 = vector.broadcast %719 : vector<2x1xf32> to vector<2x32xf32>
    %721 = arith.mulf %716, %720 : vector<2x32xf32>
    %722 = vector.broadcast %85 : vector<1x32xf32> to vector<2x32xf32>
    %723 = arith.mulf %721, %722 : vector<2x32xf32>
    %724 = vector.broadcast %93 : vector<1x32xf32> to vector<2x32xf32>
    %725 = arith.addf %723, %724 : vector<2x32xf32>
    %c2_299 = arith.constant 2 : index
    %c128_300 = arith.constant 128 : index
    %c0_301 = arith.constant 0 : index
    %726 = vector.load %arg2[%c2_299, %c128_300, %c0_301] : memref<4x160x128xbf16, #tpu.memory_space<vmem>>, vector<1x32x128xbf16>
    %727 = vector.shape_cast %726 : vector<1x32x128xbf16> to vector<32x128xbf16>
    %728 = arith.truncf %702 : vector<2x32xf32> to vector<2x32xbf16>
    %cst_302 = arith.constant dense<0.000000e+00> : vector<2x128xf32>
    %729 = tpu.matmul %728, %727, %cst_302 {dimension_numbers = #tpu.dot_dimension_numbers<[1], [0], [0], [1], [0, 0, 1, 1], [], []>} : vector<2x32xbf16>, vector<32x128xbf16>, vector<2x128xf32> -> vector<2x128xf32>
    %730 = arith.addf %729, %27 : vector<2x128xf32>
    %731 = arith.negf %730 : vector<2x128xf32>
    %732 = math.exp %731 : vector<2x128xf32>
    %cst_303 = arith.constant 1.000000e+00 : f32
    %733 = vector.broadcast %cst_303 : f32 to vector<2x128xf32>
    %734 = arith.addf %733, %732 : vector<2x128xf32>
    %735 = arith.divf %733, %734 : vector<2x128xf32>
    %736 = vector.extract_strided_slice %735 {offsets = [0, 0], sizes = [2, 32], strides = [1, 1]} : vector<2x128xf32> to vector<2x32xf32>
    %737 = vector.extract_strided_slice %735 {offsets = [0, 32], sizes = [2, 32], strides = [1, 1]} : vector<2x128xf32> to vector<2x32xf32>
    %738 = vector.extract_strided_slice %735 {offsets = [0, 96], sizes = [2, 32], strides = [1, 1]} : vector<2x128xf32> to vector<2x32xf32>
    %739 = vector.extract_strided_slice %735 {offsets = [0, 64], sizes = [2, 32], strides = [1, 1]} : vector<2x128xf32> to vector<2x32xf32>
    %cst_304 = arith.constant 2.000000e+00 : f32
    %740 = vector.broadcast %cst_304 : f32 to vector<2x32xf32>
    %741 = arith.mulf %740, %739 : vector<2x32xf32>
    %cst_305 = arith.constant 1.000000e+00 : f32
    %742 = vector.broadcast %cst_305 : f32 to vector<2x32xf32>
    %743 = arith.subf %741, %742 : vector<2x32xf32>
    %744 = arith.mulf %737, %725 : vector<2x32xf32>
    %745 = arith.mulf %736, %743 : vector<2x32xf32>
    %746 = arith.addf %744, %745 : vector<2x32xf32>
    %747 = math.tanh %746 : vector<2x32xf32>
    %748 = arith.mulf %738, %747 : vector<2x32xf32>
    %749 = tpu.concatenate %748, %746 in 1 : vector<2x32xf32>, vector<2x32xf32> -> vector<2x64xf32>
    %750 = tpu.concatenate %749, %470 in 1 : vector<2x64xf32>, vector<2x64xf32> -> vector<2x128xf32>
    %c3_306 = arith.constant 3 : index
    %c0_307 = arith.constant 0 : index
    %c0_308 = arith.constant 0 : index
    %751 = vector.load %arg2[%c3_306, %c0_307, %c0_308] : memref<4x160x128xbf16, #tpu.memory_space<vmem>>, vector<1x128x128xbf16>
    %752 = vector.shape_cast %751 : vector<1x128x128xbf16> to vector<128x128xbf16>
    %753 = arith.truncf %750 : vector<2x128xf32> to vector<2x128xbf16>
    %cst_309 = arith.constant dense<0.000000e+00> : vector<2x128xf32>
    %754 = tpu.matmul %753, %752, %cst_309 {dimension_numbers = #tpu.dot_dimension_numbers<[1], [0], [0], [1], [0, 0, 1, 1], [], []>} : vector<2x128xbf16>, vector<128x128xbf16>, vector<2x128xf32> -> vector<2x128xf32>
    %755 = arith.addf %754, %15 : vector<2x128xf32>
    %756 = vector.extract_strided_slice %755 {offsets = [0, 0], sizes = [2, 64], strides = [1, 1]} : vector<2x128xf32> to vector<2x64xf32>
    %cst_310 = arith.constant 0.000000e+00 : f32
    %757 = vector.broadcast %cst_310 : f32 to vector<2x64xf32>
    %758 = arith.maximumf %756, %757 : vector<2x64xf32>
    %759 = vector.extract_strided_slice %755 {offsets = [0, 64], sizes = [2, 64], strides = [1, 1]} : vector<2x128xf32> to vector<2x64xf32>
    %c3_311 = arith.constant 3 : index
    %c0_312 = arith.constant 0 : index
    %c0_313 = arith.constant 0 : index
    %760 = vector.load %arg3[%c3_311, %c0_312, %c0_313] : memref<4x128x64xbf16, #tpu.memory_space<vmem>>, vector<1x64x64xbf16>
    %761 = vector.shape_cast %760 : vector<1x64x64xbf16> to vector<64x64xbf16>
    %762 = arith.truncf %758 : vector<2x64xf32> to vector<2x64xbf16>
    %cst_314 = arith.constant dense<0.000000e+00> : vector<2x64xf32>
    %763 = tpu.matmul %762, %761, %cst_314 {dimension_numbers = #tpu.dot_dimension_numbers<[1], [0], [0], [1], [0, 0, 1, 1], [], []>} : vector<2x64xbf16>, vector<64x64xbf16>, vector<2x64xf32> -> vector<2x64xf32>
    %764 = arith.addf %763, %47 : vector<2x64xf32>
    %cst_315 = arith.constant 0.000000e+00 : f32
    %765 = vector.broadcast %cst_315 : f32 to vector<2x64xf32>
    %766 = arith.maximumf %764, %765 : vector<2x64xf32>
    %c3_316 = arith.constant 3 : index
    %c64_317 = arith.constant 64 : index
    %c0_318 = arith.constant 0 : index
    %767 = vector.load %arg3[%c3_316, %c64_317, %c0_318] : memref<4x128x64xbf16, #tpu.memory_space<vmem>>, vector<1x64x64xbf16>
    %768 = vector.shape_cast %767 : vector<1x64x64xbf16> to vector<64x64xbf16>
    %769 = arith.truncf %766 : vector<2x64xf32> to vector<2x64xbf16>
    %cst_319 = arith.constant dense<0.000000e+00> : vector<2x64xf32>
    %770 = tpu.matmul %769, %768, %cst_319 {dimension_numbers = #tpu.dot_dimension_numbers<[1], [0], [0], [1], [0, 0, 1, 1], [], []>} : vector<2x64xbf16>, vector<64x64xbf16>, vector<2x64xf32> -> vector<2x64xf32>
    %771 = arith.addf %770, %63 : vector<2x64xf32>
    %772 = arith.addf %771, %759 : vector<2x64xf32>
    %773 = vector.extract_strided_slice %772 {offsets = [0, 0], sizes = [2, 32], strides = [1, 1]} : vector<2x64xf32> to vector<2x32xf32>
    %cst_320 = arith.constant dense<0.000000e+00> : vector<2xf32>
    %774 = vector.multi_reduction <add>, %773, %cst_320 [1] : vector<2x32xf32> to vector<2xf32>
    %775 = vector.shape_cast %774 : vector<2xf32> to vector<2x1xf32>
    %cst_321 = arith.constant 3.200000e+01 : f32
    %776 = vector.broadcast %cst_321 : f32 to vector<2x1xf32>
    %777 = arith.divf %775, %776 : vector<2x1xf32>
    %778 = vector.broadcast %777 : vector<2x1xf32> to vector<2x32xf32>
    %779 = arith.subf %773, %778 : vector<2x32xf32>
    %780 = arith.mulf %779, %779 : vector<2x32xf32>
    %cst_322 = arith.constant dense<0.000000e+00> : vector<2xf32>
    %781 = vector.multi_reduction <add>, %780, %cst_322 [1] : vector<2x32xf32> to vector<2xf32>
    %782 = vector.shape_cast %781 : vector<2xf32> to vector<2x1xf32>
    %cst_323 = arith.constant 3.200000e+01 : f32
    %783 = vector.broadcast %cst_323 : f32 to vector<2x1xf32>
    %784 = arith.divf %782, %783 : vector<2x1xf32>
    %785 = vector.broadcast %777 : vector<2x1xf32> to vector<2x32xf32>
    %786 = arith.subf %773, %785 : vector<2x32xf32>
    %cst_324 = arith.constant 9.99999974E-6 : f32
    %787 = vector.broadcast %cst_324 : f32 to vector<2x1xf32>
    %788 = arith.addf %784, %787 : vector<2x1xf32>
    %789 = math.rsqrt %788 : vector<2x1xf32>
    %790 = vector.broadcast %789 : vector<2x1xf32> to vector<2x32xf32>
    %791 = arith.mulf %786, %790 : vector<2x32xf32>
    %792 = vector.broadcast %71 : vector<1x32xf32> to vector<2x32xf32>
    %793 = arith.mulf %791, %792 : vector<2x32xf32>
    %794 = vector.broadcast %79 : vector<1x32xf32> to vector<2x32xf32>
    %795 = arith.addf %793, %794 : vector<2x32xf32>
    %796 = vector.extract_strided_slice %772 {offsets = [0, 32], sizes = [2, 32], strides = [1, 1]} : vector<2x64xf32> to vector<2x32xf32>
    %cst_325 = arith.constant dense<0.000000e+00> : vector<2xf32>
    %797 = vector.multi_reduction <add>, %796, %cst_325 [1] : vector<2x32xf32> to vector<2xf32>
    %798 = vector.shape_cast %797 : vector<2xf32> to vector<2x1xf32>
    %cst_326 = arith.constant 3.200000e+01 : f32
    %799 = vector.broadcast %cst_326 : f32 to vector<2x1xf32>
    %800 = arith.divf %798, %799 : vector<2x1xf32>
    %801 = vector.broadcast %800 : vector<2x1xf32> to vector<2x32xf32>
    %802 = arith.subf %796, %801 : vector<2x32xf32>
    %803 = arith.mulf %802, %802 : vector<2x32xf32>
    %cst_327 = arith.constant dense<0.000000e+00> : vector<2xf32>
    %804 = vector.multi_reduction <add>, %803, %cst_327 [1] : vector<2x32xf32> to vector<2xf32>
    %805 = vector.shape_cast %804 : vector<2xf32> to vector<2x1xf32>
    %cst_328 = arith.constant 3.200000e+01 : f32
    %806 = vector.broadcast %cst_328 : f32 to vector<2x1xf32>
    %807 = arith.divf %805, %806 : vector<2x1xf32>
    %808 = vector.broadcast %800 : vector<2x1xf32> to vector<2x32xf32>
    %809 = arith.subf %796, %808 : vector<2x32xf32>
    %cst_329 = arith.constant 9.99999974E-6 : f32
    %810 = vector.broadcast %cst_329 : f32 to vector<2x1xf32>
    %811 = arith.addf %807, %810 : vector<2x1xf32>
    %812 = math.rsqrt %811 : vector<2x1xf32>
    %813 = vector.broadcast %812 : vector<2x1xf32> to vector<2x32xf32>
    %814 = arith.mulf %809, %813 : vector<2x32xf32>
    %815 = vector.broadcast %87 : vector<1x32xf32> to vector<2x32xf32>
    %816 = arith.mulf %814, %815 : vector<2x32xf32>
    %817 = vector.broadcast %95 : vector<1x32xf32> to vector<2x32xf32>
    %818 = arith.addf %816, %817 : vector<2x32xf32>
    %c3_330 = arith.constant 3 : index
    %c128_331 = arith.constant 128 : index
    %c0_332 = arith.constant 0 : index
    %819 = vector.load %arg2[%c3_330, %c128_331, %c0_332] : memref<4x160x128xbf16, #tpu.memory_space<vmem>>, vector<1x32x128xbf16>
    %820 = vector.shape_cast %819 : vector<1x32x128xbf16> to vector<32x128xbf16>
    %821 = arith.truncf %795 : vector<2x32xf32> to vector<2x32xbf16>
    %cst_333 = arith.constant dense<0.000000e+00> : vector<2x128xf32>
    %822 = tpu.matmul %821, %820, %cst_333 {dimension_numbers = #tpu.dot_dimension_numbers<[1], [0], [0], [1], [0, 0, 1, 1], [], []>} : vector<2x32xbf16>, vector<32x128xbf16>, vector<2x128xf32> -> vector<2x128xf32>
    %823 = arith.addf %822, %31 : vector<2x128xf32>
    %824 = arith.negf %823 : vector<2x128xf32>
    %825 = math.exp %824 : vector<2x128xf32>
    %cst_334 = arith.constant 1.000000e+00 : f32
    %826 = vector.broadcast %cst_334 : f32 to vector<2x128xf32>
    %827 = arith.addf %826, %825 : vector<2x128xf32>
    %828 = arith.divf %826, %827 : vector<2x128xf32>
    %829 = vector.extract_strided_slice %828 {offsets = [0, 0], sizes = [2, 32], strides = [1, 1]} : vector<2x128xf32> to vector<2x32xf32>
    %830 = vector.extract_strided_slice %828 {offsets = [0, 32], sizes = [2, 32], strides = [1, 1]} : vector<2x128xf32> to vector<2x32xf32>
    %831 = vector.extract_strided_slice %828 {offsets = [0, 96], sizes = [2, 32], strides = [1, 1]} : vector<2x128xf32> to vector<2x32xf32>
    %832 = vector.extract_strided_slice %828 {offsets = [0, 64], sizes = [2, 32], strides = [1, 1]} : vector<2x128xf32> to vector<2x32xf32>
    %cst_335 = arith.constant 2.000000e+00 : f32
    %833 = vector.broadcast %cst_335 : f32 to vector<2x32xf32>
    %834 = arith.mulf %833, %832 : vector<2x32xf32>
    %cst_336 = arith.constant 1.000000e+00 : f32
    %835 = vector.broadcast %cst_336 : f32 to vector<2x32xf32>
    %836 = arith.subf %834, %835 : vector<2x32xf32>
    %837 = arith.mulf %830, %818 : vector<2x32xf32>
    %838 = arith.mulf %829, %836 : vector<2x32xf32>
    %839 = arith.addf %837, %838 : vector<2x32xf32>
    %840 = math.tanh %839 : vector<2x32xf32>
    %841 = arith.mulf %831, %840 : vector<2x32xf32>
    %842 = tpu.concatenate %841, %839 in 1 : vector<2x32xf32>, vector<2x32xf32> -> vector<2x64xf32>
    %843 = tpu.concatenate %842, %563 in 1 : vector<2x64xf32>, vector<2x64xf32> -> vector<2x128xf32>
    %c0_337 = arith.constant 0 : index
    %c0_338 = arith.constant 0 : index
    %c0_339 = arith.constant 0 : index
    %844 = vector.load %arg2[%c0_337, %c0_338, %c0_339] : memref<4x160x128xbf16, #tpu.memory_space<vmem>>, vector<1x128x128xbf16>
    %845 = vector.shape_cast %844 : vector<1x128x128xbf16> to vector<128x128xbf16>
    %846 = arith.truncf %843 : vector<2x128xf32> to vector<2x128xbf16>
    %cst_340 = arith.constant dense<0.000000e+00> : vector<2x128xf32>
    %847 = tpu.matmul %846, %845, %cst_340 {dimension_numbers = #tpu.dot_dimension_numbers<[1], [0], [0], [1], [0, 0, 1, 1], [], []>} : vector<2x128xbf16>, vector<128x128xbf16>, vector<2x128xf32> -> vector<2x128xf32>
    %848 = arith.addf %847, %3 : vector<2x128xf32>
    %849 = vector.extract_strided_slice %848 {offsets = [0, 0], sizes = [2, 64], strides = [1, 1]} : vector<2x128xf32> to vector<2x64xf32>
    %cst_341 = arith.constant 0.000000e+00 : f32
    %850 = vector.broadcast %cst_341 : f32 to vector<2x64xf32>
    %851 = arith.maximumf %849, %850 : vector<2x64xf32>
    %852 = vector.extract_strided_slice %848 {offsets = [0, 64], sizes = [2, 64], strides = [1, 1]} : vector<2x128xf32> to vector<2x64xf32>
    %c0_342 = arith.constant 0 : index
    %c0_343 = arith.constant 0 : index
    %c0_344 = arith.constant 0 : index
    %853 = vector.load %arg3[%c0_342, %c0_343, %c0_344] : memref<4x128x64xbf16, #tpu.memory_space<vmem>>, vector<1x64x64xbf16>
    %854 = vector.shape_cast %853 : vector<1x64x64xbf16> to vector<64x64xbf16>
    %855 = arith.truncf %851 : vector<2x64xf32> to vector<2x64xbf16>
    %cst_345 = arith.constant dense<0.000000e+00> : vector<2x64xf32>
    %856 = tpu.matmul %855, %854, %cst_345 {dimension_numbers = #tpu.dot_dimension_numbers<[1], [0], [0], [1], [0, 0, 1, 1], [], []>} : vector<2x64xbf16>, vector<64x64xbf16>, vector<2x64xf32> -> vector<2x64xf32>
    %857 = arith.addf %856, %35 : vector<2x64xf32>
    %cst_346 = arith.constant 0.000000e+00 : f32
    %858 = vector.broadcast %cst_346 : f32 to vector<2x64xf32>
    %859 = arith.maximumf %857, %858 : vector<2x64xf32>
    %c0_347 = arith.constant 0 : index
    %c64_348 = arith.constant 64 : index
    %c0_349 = arith.constant 0 : index
    %860 = vector.load %arg3[%c0_347, %c64_348, %c0_349] : memref<4x128x64xbf16, #tpu.memory_space<vmem>>, vector<1x64x64xbf16>
    %861 = vector.shape_cast %860 : vector<1x64x64xbf16> to vector<64x64xbf16>
    %862 = arith.truncf %859 : vector<2x64xf32> to vector<2x64xbf16>
    %cst_350 = arith.constant dense<0.000000e+00> : vector<2x64xf32>
    %863 = tpu.matmul %862, %861, %cst_350 {dimension_numbers = #tpu.dot_dimension_numbers<[1], [0], [0], [1], [0, 0, 1, 1], [], []>} : vector<2x64xbf16>, vector<64x64xbf16>, vector<2x64xf32> -> vector<2x64xf32>
    %864 = arith.addf %863, %51 : vector<2x64xf32>
    %865 = arith.addf %864, %852 : vector<2x64xf32>
    %866 = vector.extract_strided_slice %865 {offsets = [0, 0], sizes = [2, 32], strides = [1, 1]} : vector<2x64xf32> to vector<2x32xf32>
    %cst_351 = arith.constant dense<0.000000e+00> : vector<2xf32>
    %867 = vector.multi_reduction <add>, %866, %cst_351 [1] : vector<2x32xf32> to vector<2xf32>
    %868 = vector.shape_cast %867 : vector<2xf32> to vector<2x1xf32>
    %cst_352 = arith.constant 3.200000e+01 : f32
    %869 = vector.broadcast %cst_352 : f32 to vector<2x1xf32>
    %870 = arith.divf %868, %869 : vector<2x1xf32>
    %871 = vector.broadcast %870 : vector<2x1xf32> to vector<2x32xf32>
    %872 = arith.subf %866, %871 : vector<2x32xf32>
    %873 = arith.mulf %872, %872 : vector<2x32xf32>
    %cst_353 = arith.constant dense<0.000000e+00> : vector<2xf32>
    %874 = vector.multi_reduction <add>, %873, %cst_353 [1] : vector<2x32xf32> to vector<2xf32>
    %875 = vector.shape_cast %874 : vector<2xf32> to vector<2x1xf32>
    %cst_354 = arith.constant 3.200000e+01 : f32
    %876 = vector.broadcast %cst_354 : f32 to vector<2x1xf32>
    %877 = arith.divf %875, %876 : vector<2x1xf32>
    %878 = vector.broadcast %870 : vector<2x1xf32> to vector<2x32xf32>
    %879 = arith.subf %866, %878 : vector<2x32xf32>
    %cst_355 = arith.constant 9.99999974E-6 : f32
    %880 = vector.broadcast %cst_355 : f32 to vector<2x1xf32>
    %881 = arith.addf %877, %880 : vector<2x1xf32>
    %882 = math.rsqrt %881 : vector<2x1xf32>
    %883 = vector.broadcast %882 : vector<2x1xf32> to vector<2x32xf32>
    %884 = arith.mulf %879, %883 : vector<2x32xf32>
    %885 = vector.broadcast %65 : vector<1x32xf32> to vector<2x32xf32>
    %886 = arith.mulf %884, %885 : vector<2x32xf32>
    %887 = vector.broadcast %73 : vector<1x32xf32> to vector<2x32xf32>
    %888 = arith.addf %886, %887 : vector<2x32xf32>
    %889 = vector.extract_strided_slice %865 {offsets = [0, 32], sizes = [2, 32], strides = [1, 1]} : vector<2x64xf32> to vector<2x32xf32>
    %cst_356 = arith.constant dense<0.000000e+00> : vector<2xf32>
    %890 = vector.multi_reduction <add>, %889, %cst_356 [1] : vector<2x32xf32> to vector<2xf32>
    %891 = vector.shape_cast %890 : vector<2xf32> to vector<2x1xf32>
    %cst_357 = arith.constant 3.200000e+01 : f32
    %892 = vector.broadcast %cst_357 : f32 to vector<2x1xf32>
    %893 = arith.divf %891, %892 : vector<2x1xf32>
    %894 = vector.broadcast %893 : vector<2x1xf32> to vector<2x32xf32>
    %895 = arith.subf %889, %894 : vector<2x32xf32>
    %896 = arith.mulf %895, %895 : vector<2x32xf32>
    %cst_358 = arith.constant dense<0.000000e+00> : vector<2xf32>
    %897 = vector.multi_reduction <add>, %896, %cst_358 [1] : vector<2x32xf32> to vector<2xf32>
    %898 = vector.shape_cast %897 : vector<2xf32> to vector<2x1xf32>
    %cst_359 = arith.constant 3.200000e+01 : f32
    %899 = vector.broadcast %cst_359 : f32 to vector<2x1xf32>
    %900 = arith.divf %898, %899 : vector<2x1xf32>
    %901 = vector.broadcast %893 : vector<2x1xf32> to vector<2x32xf32>
    %902 = arith.subf %889, %901 : vector<2x32xf32>
    %cst_360 = arith.constant 9.99999974E-6 : f32
    %903 = vector.broadcast %cst_360 : f32 to vector<2x1xf32>
    %904 = arith.addf %900, %903 : vector<2x1xf32>
    %905 = math.rsqrt %904 : vector<2x1xf32>
    %906 = vector.broadcast %905 : vector<2x1xf32> to vector<2x32xf32>
    %907 = arith.mulf %902, %906 : vector<2x32xf32>
    %908 = vector.broadcast %81 : vector<1x32xf32> to vector<2x32xf32>
    %909 = arith.mulf %907, %908 : vector<2x32xf32>
    %910 = vector.broadcast %89 : vector<1x32xf32> to vector<2x32xf32>
    %911 = arith.addf %909, %910 : vector<2x32xf32>
    %c0_361 = arith.constant 0 : index
    %c128_362 = arith.constant 128 : index
    %c0_363 = arith.constant 0 : index
    %912 = vector.load %arg2[%c0_361, %c128_362, %c0_363] : memref<4x160x128xbf16, #tpu.memory_space<vmem>>, vector<1x32x128xbf16>
    %913 = vector.shape_cast %912 : vector<1x32x128xbf16> to vector<32x128xbf16>
    %914 = arith.truncf %888 : vector<2x32xf32> to vector<2x32xbf16>
    %cst_364 = arith.constant dense<0.000000e+00> : vector<2x128xf32>
    %915 = tpu.matmul %914, %913, %cst_364 {dimension_numbers = #tpu.dot_dimension_numbers<[1], [0], [0], [1], [0, 0, 1, 1], [], []>} : vector<2x32xbf16>, vector<32x128xbf16>, vector<2x128xf32> -> vector<2x128xf32>
    %916 = arith.addf %915, %19 : vector<2x128xf32>
    %917 = arith.negf %916 : vector<2x128xf32>
    %918 = math.exp %917 : vector<2x128xf32>
    %cst_365 = arith.constant 1.000000e+00 : f32
    %919 = vector.broadcast %cst_365 : f32 to vector<2x128xf32>
    %920 = arith.addf %919, %918 : vector<2x128xf32>
    %921 = arith.divf %919, %920 : vector<2x128xf32>
    %922 = vector.extract_strided_slice %921 {offsets = [0, 0], sizes = [2, 32], strides = [1, 1]} : vector<2x128xf32> to vector<2x32xf32>
    %923 = vector.extract_strided_slice %921 {offsets = [0, 32], sizes = [2, 32], strides = [1, 1]} : vector<2x128xf32> to vector<2x32xf32>
    %924 = vector.extract_strided_slice %921 {offsets = [0, 96], sizes = [2, 32], strides = [1, 1]} : vector<2x128xf32> to vector<2x32xf32>
    %925 = vector.extract_strided_slice %921 {offsets = [0, 64], sizes = [2, 32], strides = [1, 1]} : vector<2x128xf32> to vector<2x32xf32>
    %cst_366 = arith.constant 2.000000e+00 : f32
    %926 = vector.broadcast %cst_366 : f32 to vector<2x32xf32>
    %927 = arith.mulf %926, %925 : vector<2x32xf32>
    %cst_367 = arith.constant 1.000000e+00 : f32
    %928 = vector.broadcast %cst_367 : f32 to vector<2x32xf32>
    %929 = arith.subf %927, %928 : vector<2x32xf32>
    %930 = arith.mulf %923, %911 : vector<2x32xf32>
    %931 = arith.mulf %922, %929 : vector<2x32xf32>
    %932 = arith.addf %930, %931 : vector<2x32xf32>
    %933 = math.tanh %932 : vector<2x32xf32>
    %934 = arith.mulf %924, %933 : vector<2x32xf32>
    %935 = tpu.concatenate %934, %932 in 1 : vector<2x32xf32>, vector<2x32xf32> -> vector<2x64xf32>
    %936 = tpu.concatenate %935, %656 in 1 : vector<2x64xf32>, vector<2x64xf32> -> vector<2x128xf32>
    %c1_368 = arith.constant 1 : index
    %c0_369 = arith.constant 0 : index
    %c0_370 = arith.constant 0 : index
    %937 = vector.load %arg2[%c1_368, %c0_369, %c0_370] : memref<4x160x128xbf16, #tpu.memory_space<vmem>>, vector<1x128x128xbf16>
    %938 = vector.shape_cast %937 : vector<1x128x128xbf16> to vector<128x128xbf16>
    %939 = arith.truncf %936 : vector<2x128xf32> to vector<2x128xbf16>
    %cst_371 = arith.constant dense<0.000000e+00> : vector<2x128xf32>
    %940 = tpu.matmul %939, %938, %cst_371 {dimension_numbers = #tpu.dot_dimension_numbers<[1], [0], [0], [1], [0, 0, 1, 1], [], []>} : vector<2x128xbf16>, vector<128x128xbf16>, vector<2x128xf32> -> vector<2x128xf32>
    %941 = arith.addf %940, %7 : vector<2x128xf32>
    %942 = vector.extract_strided_slice %941 {offsets = [0, 0], sizes = [2, 64], strides = [1, 1]} : vector<2x128xf32> to vector<2x64xf32>
    %cst_372 = arith.constant 0.000000e+00 : f32
    %943 = vector.broadcast %cst_372 : f32 to vector<2x64xf32>
    %944 = arith.maximumf %942, %943 : vector<2x64xf32>
    %945 = vector.extract_strided_slice %941 {offsets = [0, 64], sizes = [2, 64], strides = [1, 1]} : vector<2x128xf32> to vector<2x64xf32>
    %c1_373 = arith.constant 1 : index
    %c0_374 = arith.constant 0 : index
    %c0_375 = arith.constant 0 : index
    %946 = vector.load %arg3[%c1_373, %c0_374, %c0_375] : memref<4x128x64xbf16, #tpu.memory_space<vmem>>, vector<1x64x64xbf16>
    %947 = vector.shape_cast %946 : vector<1x64x64xbf16> to vector<64x64xbf16>
    %948 = arith.truncf %944 : vector<2x64xf32> to vector<2x64xbf16>
    %cst_376 = arith.constant dense<0.000000e+00> : vector<2x64xf32>
    %949 = tpu.matmul %948, %947, %cst_376 {dimension_numbers = #tpu.dot_dimension_numbers<[1], [0], [0], [1], [0, 0, 1, 1], [], []>} : vector<2x64xbf16>, vector<64x64xbf16>, vector<2x64xf32> -> vector<2x64xf32>
    %950 = arith.addf %949, %39 : vector<2x64xf32>
    %cst_377 = arith.constant 0.000000e+00 : f32
    %951 = vector.broadcast %cst_377 : f32 to vector<2x64xf32>
    %952 = arith.maximumf %950, %951 : vector<2x64xf32>
    %c1_378 = arith.constant 1 : index
    %c64_379 = arith.constant 64 : index
    %c0_380 = arith.constant 0 : index
    %953 = vector.load %arg3[%c1_378, %c64_379, %c0_380] : memref<4x128x64xbf16, #tpu.memory_space<vmem>>, vector<1x64x64xbf16>
    %954 = vector.shape_cast %953 : vector<1x64x64xbf16> to vector<64x64xbf16>
    %955 = arith.truncf %952 : vector<2x64xf32> to vector<2x64xbf16>
    %cst_381 = arith.constant dense<0.000000e+00> : vector<2x64xf32>
    %956 = tpu.matmul %955, %954, %cst_381 {dimension_numbers = #tpu.dot_dimension_numbers<[1], [0], [0], [1], [0, 0, 1, 1], [], []>} : vector<2x64xbf16>, vector<64x64xbf16>, vector<2x64xf32> -> vector<2x64xf32>
    %957 = arith.addf %956, %55 : vector<2x64xf32>
    %958 = arith.addf %957, %945 : vector<2x64xf32>
    %959 = vector.extract_strided_slice %958 {offsets = [0, 0], sizes = [2, 32], strides = [1, 1]} : vector<2x64xf32> to vector<2x32xf32>
    %cst_382 = arith.constant dense<0.000000e+00> : vector<2xf32>
    %960 = vector.multi_reduction <add>, %959, %cst_382 [1] : vector<2x32xf32> to vector<2xf32>
    %961 = vector.shape_cast %960 : vector<2xf32> to vector<2x1xf32>
    %cst_383 = arith.constant 3.200000e+01 : f32
    %962 = vector.broadcast %cst_383 : f32 to vector<2x1xf32>
    %963 = arith.divf %961, %962 : vector<2x1xf32>
    %964 = vector.broadcast %963 : vector<2x1xf32> to vector<2x32xf32>
    %965 = arith.subf %959, %964 : vector<2x32xf32>
    %966 = arith.mulf %965, %965 : vector<2x32xf32>
    %cst_384 = arith.constant dense<0.000000e+00> : vector<2xf32>
    %967 = vector.multi_reduction <add>, %966, %cst_384 [1] : vector<2x32xf32> to vector<2xf32>
    %968 = vector.shape_cast %967 : vector<2xf32> to vector<2x1xf32>
    %cst_385 = arith.constant 3.200000e+01 : f32
    %969 = vector.broadcast %cst_385 : f32 to vector<2x1xf32>
    %970 = arith.divf %968, %969 : vector<2x1xf32>
    %971 = vector.broadcast %963 : vector<2x1xf32> to vector<2x32xf32>
    %972 = arith.subf %959, %971 : vector<2x32xf32>
    %cst_386 = arith.constant 9.99999974E-6 : f32
    %973 = vector.broadcast %cst_386 : f32 to vector<2x1xf32>
    %974 = arith.addf %970, %973 : vector<2x1xf32>
    %975 = math.rsqrt %974 : vector<2x1xf32>
    %976 = vector.broadcast %975 : vector<2x1xf32> to vector<2x32xf32>
    %977 = arith.mulf %972, %976 : vector<2x32xf32>
    %978 = vector.broadcast %67 : vector<1x32xf32> to vector<2x32xf32>
    %979 = arith.mulf %977, %978 : vector<2x32xf32>
    %980 = vector.broadcast %75 : vector<1x32xf32> to vector<2x32xf32>
    %981 = arith.addf %979, %980 : vector<2x32xf32>
    %982 = vector.extract_strided_slice %958 {offsets = [0, 32], sizes = [2, 32], strides = [1, 1]} : vector<2x64xf32> to vector<2x32xf32>
    %cst_387 = arith.constant dense<0.000000e+00> : vector<2xf32>
    %983 = vector.multi_reduction <add>, %982, %cst_387 [1] : vector<2x32xf32> to vector<2xf32>
    %984 = vector.shape_cast %983 : vector<2xf32> to vector<2x1xf32>
    %cst_388 = arith.constant 3.200000e+01 : f32
    %985 = vector.broadcast %cst_388 : f32 to vector<2x1xf32>
    %986 = arith.divf %984, %985 : vector<2x1xf32>
    %987 = vector.broadcast %986 : vector<2x1xf32> to vector<2x32xf32>
    %988 = arith.subf %982, %987 : vector<2x32xf32>
    %989 = arith.mulf %988, %988 : vector<2x32xf32>
    %cst_389 = arith.constant dense<0.000000e+00> : vector<2xf32>
    %990 = vector.multi_reduction <add>, %989, %cst_389 [1] : vector<2x32xf32> to vector<2xf32>
    %991 = vector.shape_cast %990 : vector<2xf32> to vector<2x1xf32>
    %cst_390 = arith.constant 3.200000e+01 : f32
    %992 = vector.broadcast %cst_390 : f32 to vector<2x1xf32>
    %993 = arith.divf %991, %992 : vector<2x1xf32>
    %994 = vector.broadcast %986 : vector<2x1xf32> to vector<2x32xf32>
    %995 = arith.subf %982, %994 : vector<2x32xf32>
    %cst_391 = arith.constant 9.99999974E-6 : f32
    %996 = vector.broadcast %cst_391 : f32 to vector<2x1xf32>
    %997 = arith.addf %993, %996 : vector<2x1xf32>
    %998 = math.rsqrt %997 : vector<2x1xf32>
    %999 = vector.broadcast %998 : vector<2x1xf32> to vector<2x32xf32>
    %1000 = arith.mulf %995, %999 : vector<2x32xf32>
    %1001 = vector.broadcast %83 : vector<1x32xf32> to vector<2x32xf32>
    %1002 = arith.mulf %1000, %1001 : vector<2x32xf32>
    %1003 = vector.broadcast %91 : vector<1x32xf32> to vector<2x32xf32>
    %1004 = arith.addf %1002, %1003 : vector<2x32xf32>
    %c1_392 = arith.constant 1 : index
    %c128_393 = arith.constant 128 : index
    %c0_394 = arith.constant 0 : index
    %1005 = vector.load %arg2[%c1_392, %c128_393, %c0_394] : memref<4x160x128xbf16, #tpu.memory_space<vmem>>, vector<1x32x128xbf16>
    %1006 = vector.shape_cast %1005 : vector<1x32x128xbf16> to vector<32x128xbf16>
    %1007 = arith.truncf %981 : vector<2x32xf32> to vector<2x32xbf16>
    %cst_395 = arith.constant dense<0.000000e+00> : vector<2x128xf32>
    %1008 = tpu.matmul %1007, %1006, %cst_395 {dimension_numbers = #tpu.dot_dimension_numbers<[1], [0], [0], [1], [0, 0, 1, 1], [], []>} : vector<2x32xbf16>, vector<32x128xbf16>, vector<2x128xf32> -> vector<2x128xf32>
    %1009 = arith.addf %1008, %23 : vector<2x128xf32>
    %1010 = arith.negf %1009 : vector<2x128xf32>
    %1011 = math.exp %1010 : vector<2x128xf32>
    %cst_396 = arith.constant 1.000000e+00 : f32
    %1012 = vector.broadcast %cst_396 : f32 to vector<2x128xf32>
    %1013 = arith.addf %1012, %1011 : vector<2x128xf32>
    %1014 = arith.divf %1012, %1013 : vector<2x128xf32>
    %1015 = vector.extract_strided_slice %1014 {offsets = [0, 0], sizes = [2, 32], strides = [1, 1]} : vector<2x128xf32> to vector<2x32xf32>
    %1016 = vector.extract_strided_slice %1014 {offsets = [0, 32], sizes = [2, 32], strides = [1, 1]} : vector<2x128xf32> to vector<2x32xf32>
    %1017 = vector.extract_strided_slice %1014 {offsets = [0, 96], sizes = [2, 32], strides = [1, 1]} : vector<2x128xf32> to vector<2x32xf32>
    %1018 = vector.extract_strided_slice %1014 {offsets = [0, 64], sizes = [2, 32], strides = [1, 1]} : vector<2x128xf32> to vector<2x32xf32>
    %cst_397 = arith.constant 2.000000e+00 : f32
    %1019 = vector.broadcast %cst_397 : f32 to vector<2x32xf32>
    %1020 = arith.mulf %1019, %1018 : vector<2x32xf32>
    %cst_398 = arith.constant 1.000000e+00 : f32
    %1021 = vector.broadcast %cst_398 : f32 to vector<2x32xf32>
    %1022 = arith.subf %1020, %1021 : vector<2x32xf32>
    %1023 = arith.mulf %1016, %1004 : vector<2x32xf32>
    %1024 = arith.mulf %1015, %1022 : vector<2x32xf32>
    %1025 = arith.addf %1023, %1024 : vector<2x32xf32>
    %1026 = math.tanh %1025 : vector<2x32xf32>
    %1027 = arith.mulf %1017, %1026 : vector<2x32xf32>
    %1028 = tpu.concatenate %1027, %1025 in 1 : vector<2x32xf32>, vector<2x32xf32> -> vector<2x64xf32>
    %1029 = tpu.concatenate %1028, %749 in 1 : vector<2x64xf32>, vector<2x64xf32> -> vector<2x128xf32>
    %c2_399 = arith.constant 2 : index
    %c0_400 = arith.constant 0 : index
    %c0_401 = arith.constant 0 : index
    %1030 = vector.load %arg2[%c2_399, %c0_400, %c0_401] : memref<4x160x128xbf16, #tpu.memory_space<vmem>>, vector<1x128x128xbf16>
    %1031 = vector.shape_cast %1030 : vector<1x128x128xbf16> to vector<128x128xbf16>
    %1032 = arith.truncf %1029 : vector<2x128xf32> to vector<2x128xbf16>
    %cst_402 = arith.constant dense<0.000000e+00> : vector<2x128xf32>
    %1033 = tpu.matmul %1032, %1031, %cst_402 {dimension_numbers = #tpu.dot_dimension_numbers<[1], [0], [0], [1], [0, 0, 1, 1], [], []>} : vector<2x128xbf16>, vector<128x128xbf16>, vector<2x128xf32> -> vector<2x128xf32>
    %1034 = arith.addf %1033, %11 : vector<2x128xf32>
    %1035 = vector.extract_strided_slice %1034 {offsets = [0, 0], sizes = [2, 64], strides = [1, 1]} : vector<2x128xf32> to vector<2x64xf32>
    %cst_403 = arith.constant 0.000000e+00 : f32
    %1036 = vector.broadcast %cst_403 : f32 to vector<2x64xf32>
    %1037 = arith.maximumf %1035, %1036 : vector<2x64xf32>
    %1038 = vector.extract_strided_slice %1034 {offsets = [0, 64], sizes = [2, 64], strides = [1, 1]} : vector<2x128xf32> to vector<2x64xf32>
    %c2_404 = arith.constant 2 : index
    %c0_405 = arith.constant 0 : index
    %c0_406 = arith.constant 0 : index
    %1039 = vector.load %arg3[%c2_404, %c0_405, %c0_406] : memref<4x128x64xbf16, #tpu.memory_space<vmem>>, vector<1x64x64xbf16>
    %1040 = vector.shape_cast %1039 : vector<1x64x64xbf16> to vector<64x64xbf16>
    %1041 = arith.truncf %1037 : vector<2x64xf32> to vector<2x64xbf16>
    %cst_407 = arith.constant dense<0.000000e+00> : vector<2x64xf32>
    %1042 = tpu.matmul %1041, %1040, %cst_407 {dimension_numbers = #tpu.dot_dimension_numbers<[1], [0], [0], [1], [0, 0, 1, 1], [], []>} : vector<2x64xbf16>, vector<64x64xbf16>, vector<2x64xf32> -> vector<2x64xf32>
    %1043 = arith.addf %1042, %43 : vector<2x64xf32>
    %cst_408 = arith.constant 0.000000e+00 : f32
    %1044 = vector.broadcast %cst_408 : f32 to vector<2x64xf32>
    %1045 = arith.maximumf %1043, %1044 : vector<2x64xf32>
    %c2_409 = arith.constant 2 : index
    %c64_410 = arith.constant 64 : index
    %c0_411 = arith.constant 0 : index
    %1046 = vector.load %arg3[%c2_409, %c64_410, %c0_411] : memref<4x128x64xbf16, #tpu.memory_space<vmem>>, vector<1x64x64xbf16>
    %1047 = vector.shape_cast %1046 : vector<1x64x64xbf16> to vector<64x64xbf16>
    %1048 = arith.truncf %1045 : vector<2x64xf32> to vector<2x64xbf16>
    %cst_412 = arith.constant dense<0.000000e+00> : vector<2x64xf32>
    %1049 = tpu.matmul %1048, %1047, %cst_412 {dimension_numbers = #tpu.dot_dimension_numbers<[1], [0], [0], [1], [0, 0, 1, 1], [], []>} : vector<2x64xbf16>, vector<64x64xbf16>, vector<2x64xf32> -> vector<2x64xf32>
    %1050 = arith.addf %1049, %59 : vector<2x64xf32>
    %1051 = arith.addf %1050, %1038 : vector<2x64xf32>
    %1052 = vector.extract_strided_slice %1051 {offsets = [0, 0], sizes = [2, 32], strides = [1, 1]} : vector<2x64xf32> to vector<2x32xf32>
    %cst_413 = arith.constant dense<0.000000e+00> : vector<2xf32>
    %1053 = vector.multi_reduction <add>, %1052, %cst_413 [1] : vector<2x32xf32> to vector<2xf32>
    %1054 = vector.shape_cast %1053 : vector<2xf32> to vector<2x1xf32>
    %cst_414 = arith.constant 3.200000e+01 : f32
    %1055 = vector.broadcast %cst_414 : f32 to vector<2x1xf32>
    %1056 = arith.divf %1054, %1055 : vector<2x1xf32>
    %1057 = vector.broadcast %1056 : vector<2x1xf32> to vector<2x32xf32>
    %1058 = arith.subf %1052, %1057 : vector<2x32xf32>
    %1059 = arith.mulf %1058, %1058 : vector<2x32xf32>
    %cst_415 = arith.constant dense<0.000000e+00> : vector<2xf32>
    %1060 = vector.multi_reduction <add>, %1059, %cst_415 [1] : vector<2x32xf32> to vector<2xf32>
    %1061 = vector.shape_cast %1060 : vector<2xf32> to vector<2x1xf32>
    %cst_416 = arith.constant 3.200000e+01 : f32
    %1062 = vector.broadcast %cst_416 : f32 to vector<2x1xf32>
    %1063 = arith.divf %1061, %1062 : vector<2x1xf32>
    %1064 = vector.broadcast %1056 : vector<2x1xf32> to vector<2x32xf32>
    %1065 = arith.subf %1052, %1064 : vector<2x32xf32>
    %cst_417 = arith.constant 9.99999974E-6 : f32
    %1066 = vector.broadcast %cst_417 : f32 to vector<2x1xf32>
    %1067 = arith.addf %1063, %1066 : vector<2x1xf32>
    %1068 = math.rsqrt %1067 : vector<2x1xf32>
    %1069 = vector.broadcast %1068 : vector<2x1xf32> to vector<2x32xf32>
    %1070 = arith.mulf %1065, %1069 : vector<2x32xf32>
    %1071 = vector.broadcast %69 : vector<1x32xf32> to vector<2x32xf32>
    %1072 = arith.mulf %1070, %1071 : vector<2x32xf32>
    %1073 = vector.broadcast %77 : vector<1x32xf32> to vector<2x32xf32>
    %1074 = arith.addf %1072, %1073 : vector<2x32xf32>
    %1075 = vector.extract_strided_slice %1051 {offsets = [0, 32], sizes = [2, 32], strides = [1, 1]} : vector<2x64xf32> to vector<2x32xf32>
    %cst_418 = arith.constant dense<0.000000e+00> : vector<2xf32>
    %1076 = vector.multi_reduction <add>, %1075, %cst_418 [1] : vector<2x32xf32> to vector<2xf32>
    %1077 = vector.shape_cast %1076 : vector<2xf32> to vector<2x1xf32>
    %cst_419 = arith.constant 3.200000e+01 : f32
    %1078 = vector.broadcast %cst_419 : f32 to vector<2x1xf32>
    %1079 = arith.divf %1077, %1078 : vector<2x1xf32>
    %1080 = vector.broadcast %1079 : vector<2x1xf32> to vector<2x32xf32>
    %1081 = arith.subf %1075, %1080 : vector<2x32xf32>
    %1082 = arith.mulf %1081, %1081 : vector<2x32xf32>
    %cst_420 = arith.constant dense<0.000000e+00> : vector<2xf32>
    %1083 = vector.multi_reduction <add>, %1082, %cst_420 [1] : vector<2x32xf32> to vector<2xf32>
    %1084 = vector.shape_cast %1083 : vector<2xf32> to vector<2x1xf32>
    %cst_421 = arith.constant 3.200000e+01 : f32
    %1085 = vector.broadcast %cst_421 : f32 to vector<2x1xf32>
    %1086 = arith.divf %1084, %1085 : vector<2x1xf32>
    %1087 = vector.broadcast %1079 : vector<2x1xf32> to vector<2x32xf32>
    %1088 = arith.subf %1075, %1087 : vector<2x32xf32>
    %cst_422 = arith.constant 9.99999974E-6 : f32
    %1089 = vector.broadcast %cst_422 : f32 to vector<2x1xf32>
    %1090 = arith.addf %1086, %1089 : vector<2x1xf32>
    %1091 = math.rsqrt %1090 : vector<2x1xf32>
    %1092 = vector.broadcast %1091 : vector<2x1xf32> to vector<2x32xf32>
    %1093 = arith.mulf %1088, %1092 : vector<2x32xf32>
    %1094 = vector.broadcast %85 : vector<1x32xf32> to vector<2x32xf32>
    %1095 = arith.mulf %1093, %1094 : vector<2x32xf32>
    %1096 = vector.broadcast %93 : vector<1x32xf32> to vector<2x32xf32>
    %1097 = arith.addf %1095, %1096 : vector<2x32xf32>
    %c2_423 = arith.constant 2 : index
    %c128_424 = arith.constant 128 : index
    %c0_425 = arith.constant 0 : index
    %1098 = vector.load %arg2[%c2_423, %c128_424, %c0_425] : memref<4x160x128xbf16, #tpu.memory_space<vmem>>, vector<1x32x128xbf16>
    %1099 = vector.shape_cast %1098 : vector<1x32x128xbf16> to vector<32x128xbf16>
    %1100 = arith.truncf %1074 : vector<2x32xf32> to vector<2x32xbf16>
    %cst_426 = arith.constant dense<0.000000e+00> : vector<2x128xf32>
    %1101 = tpu.matmul %1100, %1099, %cst_426 {dimension_numbers = #tpu.dot_dimension_numbers<[1], [0], [0], [1], [0, 0, 1, 1], [], []>} : vector<2x32xbf16>, vector<32x128xbf16>, vector<2x128xf32> -> vector<2x128xf32>
    %1102 = arith.addf %1101, %27 : vector<2x128xf32>
    %1103 = arith.negf %1102 : vector<2x128xf32>
    %1104 = math.exp %1103 : vector<2x128xf32>
    %cst_427 = arith.constant 1.000000e+00 : f32
    %1105 = vector.broadcast %cst_427 : f32 to vector<2x128xf32>
    %1106 = arith.addf %1105, %1104 : vector<2x128xf32>
    %1107 = arith.divf %1105, %1106 : vector<2x128xf32>
    %1108 = vector.extract_strided_slice %1107 {offsets = [0, 0], sizes = [2, 32], strides = [1, 1]} : vector<2x128xf32> to vector<2x32xf32>
    %1109 = vector.extract_strided_slice %1107 {offsets = [0, 32], sizes = [2, 32], strides = [1, 1]} : vector<2x128xf32> to vector<2x32xf32>
    %1110 = vector.extract_strided_slice %1107 {offsets = [0, 96], sizes = [2, 32], strides = [1, 1]} : vector<2x128xf32> to vector<2x32xf32>
    %1111 = vector.extract_strided_slice %1107 {offsets = [0, 64], sizes = [2, 32], strides = [1, 1]} : vector<2x128xf32> to vector<2x32xf32>
    %cst_428 = arith.constant 2.000000e+00 : f32
    %1112 = vector.broadcast %cst_428 : f32 to vector<2x32xf32>
    %1113 = arith.mulf %1112, %1111 : vector<2x32xf32>
    %cst_429 = arith.constant 1.000000e+00 : f32
    %1114 = vector.broadcast %cst_429 : f32 to vector<2x32xf32>
    %1115 = arith.subf %1113, %1114 : vector<2x32xf32>
    %1116 = arith.mulf %1109, %1097 : vector<2x32xf32>
    %1117 = arith.mulf %1108, %1115 : vector<2x32xf32>
    %1118 = arith.addf %1116, %1117 : vector<2x32xf32>
    %1119 = math.tanh %1118 : vector<2x32xf32>
    %1120 = arith.mulf %1110, %1119 : vector<2x32xf32>
    %1121 = tpu.concatenate %1120, %1118 in 1 : vector<2x32xf32>, vector<2x32xf32> -> vector<2x64xf32>
    %1122 = tpu.concatenate %1121, %842 in 1 : vector<2x64xf32>, vector<2x64xf32> -> vector<2x128xf32>
    %c3_430 = arith.constant 3 : index
    %c0_431 = arith.constant 0 : index
    %c0_432 = arith.constant 0 : index
    %1123 = vector.load %arg2[%c3_430, %c0_431, %c0_432] : memref<4x160x128xbf16, #tpu.memory_space<vmem>>, vector<1x128x128xbf16>
    %1124 = vector.shape_cast %1123 : vector<1x128x128xbf16> to vector<128x128xbf16>
    %1125 = arith.truncf %1122 : vector<2x128xf32> to vector<2x128xbf16>
    %cst_433 = arith.constant dense<0.000000e+00> : vector<2x128xf32>
    %1126 = tpu.matmul %1125, %1124, %cst_433 {dimension_numbers = #tpu.dot_dimension_numbers<[1], [0], [0], [1], [0, 0, 1, 1], [], []>} : vector<2x128xbf16>, vector<128x128xbf16>, vector<2x128xf32> -> vector<2x128xf32>
    %1127 = arith.addf %1126, %15 : vector<2x128xf32>
    %1128 = vector.extract_strided_slice %1127 {offsets = [0, 0], sizes = [2, 64], strides = [1, 1]} : vector<2x128xf32> to vector<2x64xf32>
    %cst_434 = arith.constant 0.000000e+00 : f32
    %1129 = vector.broadcast %cst_434 : f32 to vector<2x64xf32>
    %1130 = arith.maximumf %1128, %1129 : vector<2x64xf32>
    %1131 = vector.extract_strided_slice %1127 {offsets = [0, 64], sizes = [2, 64], strides = [1, 1]} : vector<2x128xf32> to vector<2x64xf32>
    %c3_435 = arith.constant 3 : index
    %c0_436 = arith.constant 0 : index
    %c0_437 = arith.constant 0 : index
    %1132 = vector.load %arg3[%c3_435, %c0_436, %c0_437] : memref<4x128x64xbf16, #tpu.memory_space<vmem>>, vector<1x64x64xbf16>
    %1133 = vector.shape_cast %1132 : vector<1x64x64xbf16> to vector<64x64xbf16>
    %1134 = arith.truncf %1130 : vector<2x64xf32> to vector<2x64xbf16>
    %cst_438 = arith.constant dense<0.000000e+00> : vector<2x64xf32>
    %1135 = tpu.matmul %1134, %1133, %cst_438 {dimension_numbers = #tpu.dot_dimension_numbers<[1], [0], [0], [1], [0, 0, 1, 1], [], []>} : vector<2x64xbf16>, vector<64x64xbf16>, vector<2x64xf32> -> vector<2x64xf32>
    %1136 = arith.addf %1135, %47 : vector<2x64xf32>
    %cst_439 = arith.constant 0.000000e+00 : f32
    %1137 = vector.broadcast %cst_439 : f32 to vector<2x64xf32>
    %1138 = arith.maximumf %1136, %1137 : vector<2x64xf32>
    %c3_440 = arith.constant 3 : index
    %c64_441 = arith.constant 64 : index
    %c0_442 = arith.constant 0 : index
    %1139 = vector.load %arg3[%c3_440, %c64_441, %c0_442] : memref<4x128x64xbf16, #tpu.memory_space<vmem>>, vector<1x64x64xbf16>
    %1140 = vector.shape_cast %1139 : vector<1x64x64xbf16> to vector<64x64xbf16>
    %1141 = arith.truncf %1138 : vector<2x64xf32> to vector<2x64xbf16>
    %cst_443 = arith.constant dense<0.000000e+00> : vector<2x64xf32>
    %1142 = tpu.matmul %1141, %1140, %cst_443 {dimension_numbers = #tpu.dot_dimension_numbers<[1], [0], [0], [1], [0, 0, 1, 1], [], []>} : vector<2x64xbf16>, vector<64x64xbf16>, vector<2x64xf32> -> vector<2x64xf32>
    %1143 = arith.addf %1142, %63 : vector<2x64xf32>
    %1144 = arith.addf %1143, %1131 : vector<2x64xf32>
    %1145 = vector.extract_strided_slice %1144 {offsets = [0, 0], sizes = [2, 32], strides = [1, 1]} : vector<2x64xf32> to vector<2x32xf32>
    %cst_444 = arith.constant dense<0.000000e+00> : vector<2xf32>
    %1146 = vector.multi_reduction <add>, %1145, %cst_444 [1] : vector<2x32xf32> to vector<2xf32>
    %1147 = vector.shape_cast %1146 : vector<2xf32> to vector<2x1xf32>
    %cst_445 = arith.constant 3.200000e+01 : f32
    %1148 = vector.broadcast %cst_445 : f32 to vector<2x1xf32>
    %1149 = arith.divf %1147, %1148 : vector<2x1xf32>
    %1150 = vector.broadcast %1149 : vector<2x1xf32> to vector<2x32xf32>
    %1151 = arith.subf %1145, %1150 : vector<2x32xf32>
    %1152 = arith.mulf %1151, %1151 : vector<2x32xf32>
    %cst_446 = arith.constant dense<0.000000e+00> : vector<2xf32>
    %1153 = vector.multi_reduction <add>, %1152, %cst_446 [1] : vector<2x32xf32> to vector<2xf32>
    %1154 = vector.shape_cast %1153 : vector<2xf32> to vector<2x1xf32>
    %cst_447 = arith.constant 3.200000e+01 : f32
    %1155 = vector.broadcast %cst_447 : f32 to vector<2x1xf32>
    %1156 = arith.divf %1154, %1155 : vector<2x1xf32>
    %1157 = vector.broadcast %1149 : vector<2x1xf32> to vector<2x32xf32>
    %1158 = arith.subf %1145, %1157 : vector<2x32xf32>
    %cst_448 = arith.constant 9.99999974E-6 : f32
    %1159 = vector.broadcast %cst_448 : f32 to vector<2x1xf32>
    %1160 = arith.addf %1156, %1159 : vector<2x1xf32>
    %1161 = math.rsqrt %1160 : vector<2x1xf32>
    %1162 = vector.broadcast %1161 : vector<2x1xf32> to vector<2x32xf32>
    %1163 = arith.mulf %1158, %1162 : vector<2x32xf32>
    %1164 = vector.broadcast %71 : vector<1x32xf32> to vector<2x32xf32>
    %1165 = arith.mulf %1163, %1164 : vector<2x32xf32>
    %1166 = vector.broadcast %79 : vector<1x32xf32> to vector<2x32xf32>
    %1167 = arith.addf %1165, %1166 : vector<2x32xf32>
    %1168 = vector.extract_strided_slice %1144 {offsets = [0, 32], sizes = [2, 32], strides = [1, 1]} : vector<2x64xf32> to vector<2x32xf32>
    %cst_449 = arith.constant dense<0.000000e+00> : vector<2xf32>
    %1169 = vector.multi_reduction <add>, %1168, %cst_449 [1] : vector<2x32xf32> to vector<2xf32>
    %1170 = vector.shape_cast %1169 : vector<2xf32> to vector<2x1xf32>
    %cst_450 = arith.constant 3.200000e+01 : f32
    %1171 = vector.broadcast %cst_450 : f32 to vector<2x1xf32>
    %1172 = arith.divf %1170, %1171 : vector<2x1xf32>
    %1173 = vector.broadcast %1172 : vector<2x1xf32> to vector<2x32xf32>
    %1174 = arith.subf %1168, %1173 : vector<2x32xf32>
    %1175 = arith.mulf %1174, %1174 : vector<2x32xf32>
    %cst_451 = arith.constant dense<0.000000e+00> : vector<2xf32>
    %1176 = vector.multi_reduction <add>, %1175, %cst_451 [1] : vector<2x32xf32> to vector<2xf32>
    %1177 = vector.shape_cast %1176 : vector<2xf32> to vector<2x1xf32>
    %cst_452 = arith.constant 3.200000e+01 : f32
    %1178 = vector.broadcast %cst_452 : f32 to vector<2x1xf32>
    %1179 = arith.divf %1177, %1178 : vector<2x1xf32>
    %1180 = vector.broadcast %1172 : vector<2x1xf32> to vector<2x32xf32>
    %1181 = arith.subf %1168, %1180 : vector<2x32xf32>
    %cst_453 = arith.constant 9.99999974E-6 : f32
    %1182 = vector.broadcast %cst_453 : f32 to vector<2x1xf32>
    %1183 = arith.addf %1179, %1182 : vector<2x1xf32>
    %1184 = math.rsqrt %1183 : vector<2x1xf32>
    %1185 = vector.broadcast %1184 : vector<2x1xf32> to vector<2x32xf32>
    %1186 = arith.mulf %1181, %1185 : vector<2x32xf32>
    %1187 = vector.broadcast %87 : vector<1x32xf32> to vector<2x32xf32>
    %1188 = arith.mulf %1186, %1187 : vector<2x32xf32>
    %1189 = vector.broadcast %95 : vector<1x32xf32> to vector<2x32xf32>
    %1190 = arith.addf %1188, %1189 : vector<2x32xf32>
    %c3_454 = arith.constant 3 : index
    %c128_455 = arith.constant 128 : index
    %c0_456 = arith.constant 0 : index
    %1191 = vector.load %arg2[%c3_454, %c128_455, %c0_456] : memref<4x160x128xbf16, #tpu.memory_space<vmem>>, vector<1x32x128xbf16>
    %1192 = vector.shape_cast %1191 : vector<1x32x128xbf16> to vector<32x128xbf16>
    %1193 = arith.truncf %1167 : vector<2x32xf32> to vector<2x32xbf16>
    %cst_457 = arith.constant dense<0.000000e+00> : vector<2x128xf32>
    %1194 = tpu.matmul %1193, %1192, %cst_457 {dimension_numbers = #tpu.dot_dimension_numbers<[1], [0], [0], [1], [0, 0, 1, 1], [], []>} : vector<2x32xbf16>, vector<32x128xbf16>, vector<2x128xf32> -> vector<2x128xf32>
    %1195 = arith.addf %1194, %31 : vector<2x128xf32>
    %1196 = arith.negf %1195 : vector<2x128xf32>
    %1197 = math.exp %1196 : vector<2x128xf32>
    %cst_458 = arith.constant 1.000000e+00 : f32
    %1198 = vector.broadcast %cst_458 : f32 to vector<2x128xf32>
    %1199 = arith.addf %1198, %1197 : vector<2x128xf32>
    %1200 = arith.divf %1198, %1199 : vector<2x128xf32>
    %1201 = vector.extract_strided_slice %1200 {offsets = [0, 0], sizes = [2, 32], strides = [1, 1]} : vector<2x128xf32> to vector<2x32xf32>
    %1202 = vector.extract_strided_slice %1200 {offsets = [0, 32], sizes = [2, 32], strides = [1, 1]} : vector<2x128xf32> to vector<2x32xf32>
    %1203 = vector.extract_strided_slice %1200 {offsets = [0, 96], sizes = [2, 32], strides = [1, 1]} : vector<2x128xf32> to vector<2x32xf32>
    %1204 = vector.extract_strided_slice %1200 {offsets = [0, 64], sizes = [2, 32], strides = [1, 1]} : vector<2x128xf32> to vector<2x32xf32>
    %cst_459 = arith.constant 2.000000e+00 : f32
    %1205 = vector.broadcast %cst_459 : f32 to vector<2x32xf32>
    %1206 = arith.mulf %1205, %1204 : vector<2x32xf32>
    %cst_460 = arith.constant 1.000000e+00 : f32
    %1207 = vector.broadcast %cst_460 : f32 to vector<2x32xf32>
    %1208 = arith.subf %1206, %1207 : vector<2x32xf32>
    %1209 = arith.mulf %1202, %1190 : vector<2x32xf32>
    %1210 = arith.mulf %1201, %1208 : vector<2x32xf32>
    %1211 = arith.addf %1209, %1210 : vector<2x32xf32>
    %1212 = math.tanh %1211 : vector<2x32xf32>
    %1213 = arith.mulf %1203, %1212 : vector<2x32xf32>
    %1214 = tpu.concatenate %1213, %1211 in 1 : vector<2x32xf32>, vector<2x32xf32> -> vector<2x64xf32>
    %c0_461 = arith.constant 0 : index
    %c0_462 = arith.constant 0 : index
    %1215 = vector.load %arg5[%c0_461, %c0_462] : memref<160x64xbf16, #tpu.memory_space<vmem>>, vector<64x64xbf16>
    %1216 = arith.truncf %1214 : vector<2x64xf32> to vector<2x64xbf16>
    %cst_463 = arith.constant dense<0.000000e+00> : vector<2x64xf32>
    %1217 = tpu.matmul %1216, %1215, %cst_463 {dimension_numbers = #tpu.dot_dimension_numbers<[1], [0], [0], [1], [0, 0, 1, 1], [], []>} : vector<2x64xbf16>, vector<64x64xbf16>, vector<2x64xf32> -> vector<2x64xf32>
    %c0_464 = arith.constant 0 : index
    %c0_465 = arith.constant 0 : index
    %1218 = vector.load %arg6[%c0_464, %c0_465] : memref<6x64xf32, #tpu.memory_space<vmem>>, vector<1x64xf32>
    %1219 = vector.broadcast %1218 : vector<1x64xf32> to vector<2x64xf32>
    %1220 = arith.addf %1217, %1219 : vector<2x64xf32>
    %1221 = vector.extract_strided_slice %1220 {offsets = [0, 0], sizes = [2, 32], strides = [1, 1]} : vector<2x64xf32> to vector<2x32xf32>
    %cst_466 = arith.constant 0.000000e+00 : f32
    %1222 = vector.broadcast %cst_466 : f32 to vector<2x32xf32>
    %1223 = arith.maximumf %1221, %1222 : vector<2x32xf32>
    %1224 = vector.extract_strided_slice %1220 {offsets = [0, 32], sizes = [2, 32], strides = [1, 1]} : vector<2x64xf32> to vector<2x32xf32>
    %c64_467 = arith.constant 64 : index
    %c0_468 = arith.constant 0 : index
    %1225 = vector.load %arg5[%c64_467, %c0_468] : memref<160x64xbf16, #tpu.memory_space<vmem>>, vector<32x32xbf16>
    %1226 = arith.truncf %1223 : vector<2x32xf32> to vector<2x32xbf16>
    %cst_469 = arith.constant dense<0.000000e+00> : vector<2x32xf32>
    %1227 = tpu.matmul %1226, %1225, %cst_469 {dimension_numbers = #tpu.dot_dimension_numbers<[1], [0], [0], [1], [0, 0, 1, 1], [], []>} : vector<2x32xbf16>, vector<32x32xbf16>, vector<2x32xf32> -> vector<2x32xf32>
    %c1_470 = arith.constant 1 : index
    %c0_471 = arith.constant 0 : index
    %1228 = vector.load %arg6[%c1_470, %c0_471] : memref<6x64xf32, #tpu.memory_space<vmem>>, vector<1x32xf32>
    %1229 = vector.broadcast %1228 : vector<1x32xf32> to vector<2x32xf32>
    %1230 = arith.addf %1227, %1229 : vector<2x32xf32>
    %cst_472 = arith.constant 0.000000e+00 : f32
    %1231 = vector.broadcast %cst_472 : f32 to vector<2x32xf32>
    %1232 = arith.maximumf %1230, %1231 : vector<2x32xf32>
    %c96 = arith.constant 96 : index
    %c0_473 = arith.constant 0 : index
    %1233 = vector.load %arg5[%c96, %c0_473] : memref<160x64xbf16, #tpu.memory_space<vmem>>, vector<32x32xbf16>
    %1234 = arith.truncf %1232 : vector<2x32xf32> to vector<2x32xbf16>
    %cst_474 = arith.constant dense<0.000000e+00> : vector<2x32xf32>
    %1235 = tpu.matmul %1234, %1233, %cst_474 {dimension_numbers = #tpu.dot_dimension_numbers<[1], [0], [0], [1], [0, 0, 1, 1], [], []>} : vector<2x32xbf16>, vector<32x32xbf16>, vector<2x32xf32> -> vector<2x32xf32>
    %c2_475 = arith.constant 2 : index
    %c0_476 = arith.constant 0 : index
    %1236 = vector.load %arg6[%c2_475, %c0_476] : memref<6x64xf32, #tpu.memory_space<vmem>>, vector<1x32xf32>
    %1237 = vector.broadcast %1236 : vector<1x32xf32> to vector<2x32xf32>
    %1238 = arith.addf %1235, %1237 : vector<2x32xf32>
    %1239 = arith.addf %1238, %1224 : vector<2x32xf32>
    %c3_477 = arith.constant 3 : index
    %c0_478 = arith.constant 0 : index
    %1240 = vector.load %arg6[%c3_477, %c0_478] : memref<6x64xf32, #tpu.memory_space<vmem>>, vector<1x32xf32>
    %c4_479 = arith.constant 4 : index
    %c0_480 = arith.constant 0 : index
    %1241 = vector.load %arg6[%c4_479, %c0_480] : memref<6x64xf32, #tpu.memory_space<vmem>>, vector<1x32xf32>
    %cst_481 = arith.constant dense<0.000000e+00> : vector<2xf32>
    %1242 = vector.multi_reduction <add>, %1239, %cst_481 [1] : vector<2x32xf32> to vector<2xf32>
    %1243 = vector.shape_cast %1242 : vector<2xf32> to vector<2x1xf32>
    %cst_482 = arith.constant 3.200000e+01 : f32
    %1244 = vector.broadcast %cst_482 : f32 to vector<2x1xf32>
    %1245 = arith.divf %1243, %1244 : vector<2x1xf32>
    %1246 = vector.broadcast %1245 : vector<2x1xf32> to vector<2x32xf32>
    %1247 = arith.subf %1239, %1246 : vector<2x32xf32>
    %1248 = arith.mulf %1247, %1247 : vector<2x32xf32>
    %cst_483 = arith.constant dense<0.000000e+00> : vector<2xf32>
    %1249 = vector.multi_reduction <add>, %1248, %cst_483 [1] : vector<2x32xf32> to vector<2xf32>
    %1250 = vector.shape_cast %1249 : vector<2xf32> to vector<2x1xf32>
    %cst_484 = arith.constant 3.200000e+01 : f32
    %1251 = vector.broadcast %cst_484 : f32 to vector<2x1xf32>
    %1252 = arith.divf %1250, %1251 : vector<2x1xf32>
    %1253 = vector.broadcast %1245 : vector<2x1xf32> to vector<2x32xf32>
    %1254 = arith.subf %1239, %1253 : vector<2x32xf32>
    %cst_485 = arith.constant 9.99999974E-6 : f32
    %1255 = vector.broadcast %cst_485 : f32 to vector<2x1xf32>
    %1256 = arith.addf %1252, %1255 : vector<2x1xf32>
    %1257 = math.rsqrt %1256 : vector<2x1xf32>
    %1258 = vector.broadcast %1257 : vector<2x1xf32> to vector<2x32xf32>
    %1259 = arith.mulf %1254, %1258 : vector<2x32xf32>
    %1260 = vector.broadcast %1240 : vector<1x32xf32> to vector<2x32xf32>
    %1261 = arith.mulf %1259, %1260 : vector<2x32xf32>
    %1262 = vector.broadcast %1241 : vector<1x32xf32> to vector<2x32xf32>
    %1263 = arith.addf %1261, %1262 : vector<2x32xf32>
    %c128_486 = arith.constant 128 : index
    %c0_487 = arith.constant 0 : index
    %1264 = vector.load %arg5[%c128_486, %c0_487] : memref<160x64xbf16, #tpu.memory_space<vmem>>, vector<32x4xbf16>
    %1265 = arith.truncf %1263 : vector<2x32xf32> to vector<2x32xbf16>
    %cst_488 = arith.constant dense<0.000000e+00> : vector<2x4xf32>
    %1266 = tpu.matmul %1265, %1264, %cst_488 {dimension_numbers = #tpu.dot_dimension_numbers<[1], [0], [0], [1], [0, 0, 1, 1], [], []>} : vector<2x32xbf16>, vector<32x4xbf16>, vector<2x4xf32> -> vector<2x4xf32>
    %c5_489 = arith.constant 5 : index
    %c0_490 = arith.constant 0 : index
    %1267 = vector.load %arg6[%c5_489, %c0_490] : memref<6x64xf32, #tpu.memory_space<vmem>>, vector<1x4xf32>
    %1268 = vector.broadcast %1267 : vector<1x4xf32> to vector<2x4xf32>
    %1269 = arith.addf %1266, %1268 : vector<2x4xf32>
    %1270 = arith.negf %1269 : vector<2x4xf32>
    %1271 = math.exp %1270 : vector<2x4xf32>
    %cst_491 = arith.constant 1.000000e+00 : f32
    %1272 = vector.broadcast %cst_491 : f32 to vector<2x4xf32>
    %1273 = arith.addf %1272, %1271 : vector<2x4xf32>
    %1274 = arith.divf %1272, %1273 : vector<2x4xf32>
    %c0_492 = arith.constant 0 : index
    %c0_493 = arith.constant 0 : index
    %1275 = vector.load %arg7[%c0_492, %c0_493] : memref<2x4xf32, #tpu.memory_space<vmem>>, vector<2x4xf32>
    tpu.vector_store %arg7[%c0_492, %c0_493], %1274 {strides = array<i32>} : memref<2x4xf32, #tpu.memory_space<vmem>>, vector<2x4xf32>,
    %1276 = vector.extract_strided_slice %1214 {offsets = [0, 0], sizes = [2, 32], strides = [1, 1]} : vector<2x64xf32> to vector<2x32xf32>
    %c0_494 = arith.constant 0 : index
    %c0_495 = arith.constant 0 : index
    %1277 = vector.load %arg8[%c0_494, %c0_495] : memref<2x32xf32, #tpu.memory_space<vmem>>, vector<2x32xf32>
    tpu.vector_store %arg8[%c0_494, %c0_495], %1276 {strides = array<i32>} : memref<2x32xf32, #tpu.memory_space<vmem>>, vector<2x32xf32>,
    return
  }
}

</mosaic_0001>

<llo_original>
// kernel: tpu_custom_call.1
$region0: #{tpu_custom_call.1}
  #allocation0 [shape = 'u32[]', space=smem, size = 0x4, offset = 0x4, fixed_abs, tag = 'smem constant byte address 0x4 - core index']
  #allocation1 [shape = 'u32[144,128]{1,0:T(1,128)}', space=vmem, size = 0x12000, scoped, tag = 'internal scratch']
  %s0 = inlined_call_operand.vmem [shape: f32[2,32], index: 0, kind: input, shape index: {}]
  %s1 = inlined_call_operand.vmem [shape: f32[2,32], index: 1, kind: input, shape index: {}]
  %s2 = inlined_call_operand.vmem [shape: bf16[4,160,128], index: 2, kind: input, shape index: {}]
  %s3 = inlined_call_operand.vmem [shape: bf16[4,128,64], index: 3, kind: input, shape index: {}]
  %s4 = inlined_call_operand.vmem [shape: f32[4,8,128], index: 4, kind: input, shape index: {}]
  %s5 = inlined_call_operand.vmem [shape: bf16[160,64], index: 5, kind: input, shape index: {}]
  %s6 = inlined_call_operand.vmem [shape: f32[6,64], index: 6, kind: input, shape index: {}]
  %s7 = inlined_call_operand.hbm [shape: f32[2,4], index: 7, kind: output, shape index: {0}]
  %s8 = inlined_call_operand.hbm [shape: f32[2,32], index: 8, kind: output, shape index: {1}]
  %9 = xla_tuple %s7, %s8
  %s10 = sld [smem:[#allocation0]]
  $region46: #{tpu_custom_call.1} parent=0
    _
  %s12 = ssub.s32 1, %s10
  %s13 = scalar_select 0, %s12, %s10
  $region1: #{tpu_custom_call.1} parent=0
    #allocation2 [shape = 'u8[1024]{0}', space=vmem, size = 0x400, scoped, tag = 'output window, operand 0, single buffered']
    #allocation3 [shape = 's32[1]{0}', space=sflag, size = 0x4, scoped, tag = 'scoped memory for tpu_custom_call.1']
    #allocation4 [shape = 'u8[1024]{0}', space=vmem, size = 0x400, scoped, tag = 'output window, operand 1, single buffered']
    #allocation5 [shape = 's32[1]{0}', space=sflag, size = 0x4, scoped, tag = 'scoped memory for tpu_custom_call.1']
    %14 = vsyncpa [#allocation3], 0
    %15 = vsyncpa [#allocation5], 0
    // Predicated region
    $region2: #{tpu_custom_call.1} parent=1 // pred_check
      _
    $region3: #{tpu_custom_call.1} parent=1 // pred_check_branch
      %17 = sbr.rel (0) target = $region5
    $region4: #{tpu_custom_call.1} parent=1 // pred_region
      _
    $region5: #{tpu_custom_call.1} parent=1 // pred_fallthru
      _
    // Predicated region
    $region6: #{tpu_custom_call.1} parent=1 // pred_check
      _
    $region7: #{tpu_custom_call.1} parent=1 // pred_check_branch
      %19 = sbr.rel (0) target = $region9
    $region8: #{tpu_custom_call.1} parent=1 // pred_region
      _
    $region9: #{tpu_custom_call.1} parent=1 // pred_fallthru
      _
    // Predicated region
    $region10: #{tpu_custom_call.1} parent=1 // pred_check
      _
    $region11: #{tpu_custom_call.1} parent=1 // pred_check_branch
      %21 = sbr.rel (0) target = $region13
    $region12: #{tpu_custom_call.1} parent=1 // pred_region
      _
    $region13: #{tpu_custom_call.1} parent=1 // pred_fallthru
      _
    // Predicated region
    $region14: #{tpu_custom_call.1} parent=1 // pred_check
      _
    $region15: #{tpu_custom_call.1} parent=1 // pred_check_branch
      %23 = sbr.rel (0) target = $region17
    $region16: #{tpu_custom_call.1} parent=1 // pred_region
      _
    $region17: #{tpu_custom_call.1} parent=1 // pred_fallthru
      _
    // Predicated region
    $region18: #{tpu_custom_call.1} parent=1 // pred_check
      _
    $region19: #{tpu_custom_call.1} parent=1 // pred_check_branch
      %25 = sbr.rel (0) target = $region21
    $region20: #{tpu_custom_call.1} parent=1 // pred_region
      _
    $region21: #{tpu_custom_call.1} parent=1 // pred_fallthru
      _
    // Predicated region
    $region22: #{tpu_custom_call.1} parent=1 // pred_check
      _
    $region23: #{tpu_custom_call.1} parent=1 // pred_check_branch
      %27 = sbr.rel (0) target = $region25
    $region24: #{tpu_custom_call.1} parent=1 // pred_region
      _
    $region25: #{tpu_custom_call.1} parent=1 // pred_fallthru
      _
    // Predicated region
    $region26: #{tpu_custom_call.1} parent=1 // pred_check
      _
    $region27: #{tpu_custom_call.1} parent=1 // pred_check_branch
      %29 = sbr.rel (0) target = $region29
    $region28: #{tpu_custom_call.1} parent=1 // pred_region
      _
    $region29: #{tpu_custom_call.1} parent=1 // pred_fallthru
      _
    %v31 = vld [vmem:[%s4] sm:$0x1]
    %v32 = vlaneseq
    %v33 = vshrl.u32 %v32, 7
    %v34 = vsub.s32 0, %v33
    %v35 = vrot.slane %v31, %v34
    %s36 = scalar_lea.vmem %s4, 8
    %v37 = vld [vmem:[%s36] sm:$0x1]
    %v38 = vlaneseq
    %v39 = vshrl.u32 %v38, 7
    %v40 = vsub.s32 0, %v39
    %v41 = vrot.slane %v37, %v40
    %s42 = scalar_lea.vmem %s4, 16
    %v43 = vld [vmem:[%s42] sm:$0x1]
    %v44 = vlaneseq
    %v45 = vshrl.u32 %v44, 7
    %v46 = vsub.s32 0, %v45
    %v47 = vrot.slane %v43, %v46
    %s48 = scalar_lea.vmem %s4, 24
    %v49 = vld [vmem:[%s48] sm:$0x1]
    %v50 = vlaneseq
    %v51 = vshrl.u32 %v50, 7
    %v52 = vsub.s32 0, %v51
    %v53 = vrot.slane %v49, %v52
    %v54 = vld [vmem:[%s4 + $0x1] sm:$0x1]
    %v55 = vlaneseq
    %v56 = vshrl.u32 %v55, 7
    %v57 = vsub.s32 0, %v56
    %v58 = vrot.slane %v54, %v57
    %v59 = vld [vmem:[%s36 + $0x1] sm:$0x1]
    %v60 = vlaneseq
    %v61 = vshrl.u32 %v60, 7
    %v62 = vsub.s32 0, %v61
    %v63 = vrot.slane %v59, %v62
    %v64 = vld [vmem:[%s42 + $0x1] sm:$0x1]
    %v65 = vlaneseq
    %v66 = vshrl.u32 %v65, 7
    %v67 = vsub.s32 0, %v66
    %v68 = vrot.slane %v64, %v67
    %v69 = vld [vmem:[%s48 + $0x1] sm:$0x1]
    %v70 = vlaneseq
    %v71 = vshrl.u32 %v70, 7
    %v72 = vsub.s32 0, %v71
    %v73 = vrot.slane %v69, %v72
    %v74 = vld [vmem:[%s4 + $0x2] sm:$0x1]
    %v75 = vlaneseq
    %v76 = vshrl.u32 %v75, 7
    %v77 = vsub.s32 0, %v76
    %v78 = vrot.slane %v74, %v77
    %v79 = vld [vmem:[%s36 + $0x2] sm:$0x1]
    %v80 = vlaneseq
    %v81 = vshrl.u32 %v80, 7
    %v82 = vsub.s32 0, %v81
    %v83 = vrot.slane %v79, %v82
    %v84 = vld [vmem:[%s42 + $0x2] sm:$0x1]
    %v85 = vlaneseq
    %v86 = vshrl.u32 %v85, 7
    %v87 = vsub.s32 0, %v86
    %v88 = vrot.slane %v84, %v87
    %v89 = vld [vmem:[%s48 + $0x2] sm:$0x1]
    %v90 = vlaneseq
    %v91 = vshrl.u32 %v90, 7
    %v92 = vsub.s32 0, %v91
    %v93 = vrot.slane %v89, %v92
    %v94 = vld [vmem:[%s4 + $0x3] sm:$0x1]
    %v95 = vlaneseq
    %v96 = vshrl.u32 %v95, 7
    %v97 = vsub.s32 0, %v96
    %v98 = vrot.slane %v94, %v97
    %v99 = vld [vmem:[%s36 + $0x3] sm:$0x1]
    %v100 = vlaneseq
    %v101 = vshrl.u32 %v100, 7
    %v102 = vsub.s32 0, %v101
    %v103 = vrot.slane %v99, %v102
    %v104 = vld [vmem:[%s42 + $0x3] sm:$0x1]
    %v105 = vlaneseq
    %v106 = vshrl.u32 %v105, 7
    %v107 = vsub.s32 0, %v106
    %v108 = vrot.slane %v104, %v107
    %v109 = vld [vmem:[%s48 + $0x3] sm:$0x1]
    %v110 = vlaneseq
    %v111 = vshrl.u32 %v110, 7
    %v112 = vsub.s32 0, %v111
    %v113 = vrot.slane %v109, %v112
    %v114 = vld [vmem:[%s4 + $0x4] sm:$0x1]
    %v115 = vld [vmem:[%s36 + $0x4] sm:$0x1]
    %v116 = vld [vmem:[%s42 + $0x4] sm:$0x1]
    %v117 = vld [vmem:[%s48 + $0x4] sm:$0x1]
    %v118 = vld [vmem:[%s4 + $0x5] sm:$0x1]
    %v119 = vld [vmem:[%s36 + $0x5] sm:$0x1]
    %v120 = vld [vmem:[%s42 + $0x5] sm:$0x1]
    %v121 = vld [vmem:[%s48 + $0x5] sm:$0x1]
    %v122 = vld [vmem:[%s4 + $0x6] sm:$0x1]
    %v123 = vld [vmem:[%s36 + $0x6] sm:$0x1]
    %v124 = vld [vmem:[%s42 + $0x6] sm:$0x1]
    %v125 = vld [vmem:[%s48 + $0x6] sm:$0x1]
    %v126 = vld [vmem:[%s4 + $0x7] sm:$0x1]
    %v127 = vld [vmem:[%s36 + $0x7] sm:$0x1]
    %v128 = vld [vmem:[%s42 + $0x7] sm:$0x1]
    %v129 = vld [vmem:[%s48 + $0x7] sm:$0x1]
    %v130 = vld [vmem:[%s0] sm:$0x3]
    %v131 = vld [vmem:[%s1] sm:$0x3]
    %133 = vrot.lane.b32.xlu0 %v131, 32
    %v134 = vpop.permute.xlu0 %133
    %vm136 = vcmask 261120
    %v137 = vsel %vm136, %v130, %v134
    %139 = vrot.lane.b32.xlu0 %v137, 64
    %v140 = vpop.permute.xlu0 %139
    %vm142 = vcmask 523264
    %v143 = vsel %vm142, %v137, %v140
    %v144 = vld [vmem:[%s2] sm:$0xf]
    %v145 = vld [vmem:[%s2 + $0x4] sm:$0xf]
    %v146 = vld [vmem:[%s2 + $0x8] sm:$0xf]
    %v147 = vld [vmem:[%s2 + $0xc] sm:$0xf]
    %v148 = vld [vmem:[%s2 + $0x10] sm:$0xf]
    %v149 = vld [vmem:[%s2 + $0x14] sm:$0xf]
    %v150 = vld [vmem:[%s2 + $0x18] sm:$0xf]
    %v151 = vld [vmem:[%s2 + $0x1c] sm:$0xf]
    %v152 = vld [vmem:[%s2 + $0x20] sm:$0xf]
    %v153 = vld [vmem:[%s2 + $0x24] sm:$0xf]
    %v154 = vld [vmem:[%s2 + $0x28] sm:$0xf]
    %v155 = vld [vmem:[%s2 + $0x2c] sm:$0xf]
    %v156 = vld [vmem:[%s2 + $0x30] sm:$0xf]
    %v157 = vld [vmem:[%s2 + $0x34] sm:$0xf]
    %v158 = vld [vmem:[%s2 + $0x38] sm:$0xf]
    %v159 = vld [vmem:[%s2 + $0x3c] sm:$0xf]
    %v160 = vpack.c.bf16 %v143, %v143
    %v177 = vunpack.c.l.b16 %v144
    %v178 = vunpack.c.l.b16 %v145
    %v179 = vunpack.c.l.b16 %v146
    %v180 = vunpack.c.l.b16 %v147
    %v181 = vunpack.c.l.b16 %v148
    %v182 = vunpack.c.l.b16 %v149
    %v183 = vunpack.c.l.b16 %v150
    %v184 = vunpack.c.l.b16 %v151
    %v185 = vunpack.c.l.b16 %v152
    %v186 = vunpack.c.l.b16 %v153
    %v187 = vunpack.c.l.b16 %v154
    %v188 = vunpack.c.l.b16 %v155
    %v189 = vunpack.c.l.b16 %v156
    %v190 = vunpack.c.l.b16 %v157
    %v191 = vunpack.c.l.b16 %v158
    %v192 = vunpack.c.l.b16 %v159
    %v193 = vpack.c.b16 %v178, %v177
    %v194 = vpack.c.b16 %v180, %v179
    %v195 = vpack.c.b16 %v182, %v181
    %v196 = vpack.c.b16 %v184, %v183
    %v197 = vpack.c.b16 %v186, %v185
    %v198 = vpack.c.b16 %v188, %v187
    %v199 = vpack.c.b16 %v190, %v189
    %v200 = vpack.c.b16 %v192, %v191
    %209 = vmatprep.subr.bf16.mxu0 0
    %210 = vmatpush1.bf16.msra.mxu0 %v193
    %211 = vmatprep.subr.bf16.mxu0 0
    %212 = vmatpush1.bf16.msra.mxu0 %v194
    %213 = vmatprep.subr.bf16.mxu0 0
    %214 = vmatpush1.bf16.msra.mxu0 %v195
    %215 = vmatprep.subr.bf16.mxu0 0
    %216 = vmatpush1.bf16.msra.mxu0 %v196
    %217 = vmatprep.subr.bf16.mxu0 0
    %218 = vmatpush1.bf16.msra.mxu0 %v197
    %219 = vmatprep.subr.bf16.mxu0 0
    %220 = vmatpush1.bf16.msra.mxu0 %v198
    %221 = vmatprep.subr.bf16.mxu0 0
    %222 = vmatpush1.bf16.msra.mxu0 %v199
    %223 = vmatprep.subr.bf16.mxu0 0
    %224 = vmatpush1.bf16.msra.mxu0 %v200
    %225 = vmatprep.subr.bf16.mxu0 0
    %226 = vmatpush1.bf16.msra.mxu0 0
    %227 = vmatprep.subr.bf16.mxu0 0
    %228 = vmatpush1.bf16.msra.mxu0 0
    %229 = vmatprep.subr.bf16.mxu0 0
    %230 = vmatpush1.bf16.msra.mxu0 0
    %231 = vmatprep.subr.bf16.mxu0 0
    %232 = vmatpush1.bf16.msra.mxu0 0
    %233 = vmatprep.subr.bf16.mxu0 0
    %234 = vmatpush1.bf16.msra.mxu0 0
    %235 = vmatprep.subr.bf16.mxu0 0
    %236 = vmatpush1.bf16.msra.mxu0 0
    %237 = vmatprep.subr.bf16.mxu0 0
    %238 = vmatpush1.bf16.msra.mxu0 0
    %239 = vmatprep.subr.bf16.mxu0 0
    %240 = vmatpush1.bf16.msra.mxu0 0
    %241 = vmatprep.mubr.bf16.mxu0 0
    %242 = vmatmul.mubr.bf16.gmra.mrb[0].mxu0 %v160
    %v243 = vpop.f32.mrb[0].mxu0
    %v244 = vadd.f32 %v35, %v243
    %v245 = vpop.f32.mrb[0].mxu0
    %v246 = vpop.f32.mrb[0].mxu0
    %v247 = vpop.f32.mrb[0].mxu0
    %248 = vdwg.mxu0
    %v249 = vmax.f32 %v244, 0.0
    %v250 = vld [vmem:[%s3] sm:$0xf]
    %v251 = vld [vmem:[%s3 + $0x4] sm:$0xf]
    %v252 = vld [vmem:[%s3 + $0x8] sm:$0xf]
    %v253 = vld [vmem:[%s3 + $0xc] sm:$0xf]
    %v254 = vld [vmem:[%s3 + $0x10] sm:$0xf]
    %v255 = vld [vmem:[%s3 + $0x14] sm:$0xf]
    %v256 = vld [vmem:[%s3 + $0x18] sm:$0xf]
    %v257 = vld [vmem:[%s3 + $0x1c] sm:$0xf]
    %v258 = vpack.c.bf16 %v249, %v249
    %v267 = vunpack.c.l.b16 %v250
    %v268 = vunpack.c.l.b16 %v251
    %v269 = vunpack.c.l.b16 %v252
    %v270 = vunpack.c.l.b16 %v253
    %v271 = vunpack.c.l.b16 %v254
    %v272 = vunpack.c.l.b16 %v255
    %v273 = vunpack.c.l.b16 %v256
    %v274 = vunpack.c.l.b16 %v257
    %v275 = vpack.c.b16 %v268, %v267
    %v276 = vpack.c.b16 %v270, %v269
    %v277 = vpack.c.b16 %v272, %v271
    %v278 = vpack.c.b16 %v274, %v273
    %v284 = vsel %vm142, %v258, 0
    %286 = vmatprep.subr.bf16.mxu0 0
    %287 = vmatpush1.bf16.msra.mxu0 %v275
    %288 = vmatprep.subr.bf16.mxu0 0
    %289 = vmatpush1.bf16.msra.mxu0 %v276
    %290 = vmatprep.subr.bf16.mxu0 0
    %291 = vmatpush1.bf16.msra.mxu0 %v277
    %292 = vmatprep.subr.bf16.mxu0 0
    %293 = vmatpush1.bf16.msra.mxu0 %v278
    %294 = vmatprep.subr.bf16.mxu0 0
    %295 = vmatpush1.bf16.msra.mxu0 0
    %296 = vmatprep.subr.bf16.mxu0 0
    %297 = vmatpush1.bf16.msra.mxu0 0
    %298 = vmatprep.subr.bf16.mxu0 0
    %299 = vmatpush1.bf16.msra.mxu0 0
    %300 = vmatprep.subr.bf16.mxu0 0
    %301 = vmatpush1.bf16.msra.mxu0 0
    %302 = vmatprep.subr.bf16.mxu0 0
    %303 = vmatpush1.bf16.msra.mxu0 0
    %304 = vmatprep.subr.bf16.mxu0 0
    %305 = vmatpush1.bf16.msra.mxu0 0
    %306 = vmatprep.subr.bf16.mxu0 0
    %307 = vmatpush1.bf16.msra.mxu0 0
    %308 = vmatprep.subr.bf16.mxu0 0
    %309 = vmatpush1.bf16.msra.mxu0 0
    %310 = vmatprep.subr.bf16.mxu0 0
    %311 = vmatpush1.bf16.msra.mxu0 0
    %312 = vmatprep.subr.bf16.mxu0 0
    %313 = vmatpush1.bf16.msra.mxu0 0
    %314 = vmatprep.subr.bf16.mxu0 0
    %315 = vmatpush1.bf16.msra.mxu0 0
    %316 = vmatprep.subr.bf16.mxu0 0
    %317 = vmatpush1.bf16.msra.mxu0 0
    %318 = vmatprep.mubr.bf16.mxu0 0
    %319 = vmatmul.mubr.bf16.gmra.mrb[0].mxu0 %v284
    %v320 = vpop.f32.mrb[0].mxu0
    %v321 = vadd.f32 %v78, %v320
    %v322 = vpop.f32.mrb[0].mxu0
    %v323 = vpop.f32.mrb[0].mxu0
    %v324 = vpop.f32.mrb[0].mxu0
    %325 = vdwg.mxu0
    %v326 = vmax.f32 %v321, 0.0
    %v327 = vld [vmem:[%s3 + $0x20] sm:$0xf]
    %v328 = vld [vmem:[%s3 + $0x24] sm:$0xf]
    %v329 = vld [vmem:[%s3 + $0x28] sm:$0xf]
    %v330 = vld [vmem:[%s3 + $0x2c] sm:$0xf]
    %v331 = vld [vmem:[%s3 + $0x30] sm:$0xf]
    %v332 = vld [vmem:[%s3 + $0x34] sm:$0xf]
    %v333 = vld [vmem:[%s3 + $0x38] sm:$0xf]
    %v334 = vld [vmem:[%s3 + $0x3c] sm:$0xf]
    %v335 = vpack.c.bf16 %v326, %v326
    %v344 = vunpack.c.l.b16 %v327
    %v345 = vunpack.c.l.b16 %v328
    %v346 = vunpack.c.l.b16 %v329
    %v347 = vunpack.c.l.b16 %v330
    %v348 = vunpack.c.l.b16 %v331
    %v349 = vunpack.c.l.b16 %v332
    %v350 = vunpack.c.l.b16 %v333
    %v351 = vunpack.c.l.b16 %v334
    %v352 = vpack.c.b16 %v345, %v344
    %v353 = vpack.c.b16 %v347, %v346
    %v354 = vpack.c.b16 %v349, %v348
    %v355 = vpack.c.b16 %v351, %v350
    %v361 = vsel %vm142, %v335, 0
    %363 = vmatprep.subr.bf16.mxu0 0
    %364 = vmatpush1.bf16.msra.mxu0 %v352
    %365 = vmatprep.subr.bf16.mxu0 0
    %366 = vmatpush1.bf16.msra.mxu0 %v353
    %367 = vmatprep.subr.bf16.mxu0 0
    %368 = vmatpush1.bf16.msra.mxu0 %v354
    %369 = vmatprep.subr.bf16.mxu0 0
    %370 = vmatpush1.bf16.msra.mxu0 %v355
    %371 = vmatprep.subr.bf16.mxu0 0
    %372 = vmatpush1.bf16.msra.mxu0 0
    %373 = vmatprep.subr.bf16.mxu0 0
    %374 = vmatpush1.bf16.msra.mxu0 0
    %375 = vmatprep.subr.bf16.mxu0 0
    %376 = vmatpush1.bf16.msra.mxu0 0
    %377 = vmatprep.subr.bf16.mxu0 0
    %378 = vmatpush1.bf16.msra.mxu0 0
    %379 = vmatprep.subr.bf16.mxu0 0
    %380 = vmatpush1.bf16.msra.mxu0 0
    %381 = vmatprep.subr.bf16.mxu0 0
    %382 = vmatpush1.bf16.msra.mxu0 0
    %383 = vmatprep.subr.bf16.mxu0 0
    %384 = vmatpush1.bf16.msra.mxu0 0
    %385 = vmatprep.subr.bf16.mxu0 0
    %386 = vmatpush1.bf16.msra.mxu0 0
    %387 = vmatprep.subr.bf16.mxu0 0
    %388 = vmatpush1.bf16.msra.mxu0 0
    %389 = vmatprep.subr.bf16.mxu0 0
    %390 = vmatpush1.bf16.msra.mxu0 0
    %391 = vmatprep.subr.bf16.mxu0 0
    %392 = vmatpush1.bf16.msra.mxu0 0
    %393 = vmatprep.subr.bf16.mxu0 0
    %394 = vmatpush1.bf16.msra.mxu0 0
    %395 = vmatprep.mubr.bf16.mxu0 0
    %396 = vmatmul.mubr.bf16.gmra.mrb[0].mxu0 %v361
    %v397 = vpop.f32.mrb[0].mxu0
    %v398 = vadd.f32 %v98, %v397
    %v399 = vpop.f32.mrb[0].mxu0
    %v400 = vpop.f32.mrb[0].mxu0
    %v401 = vpop.f32.mrb[0].mxu0
    %402 = vdwg.mxu0
    %404 = vrot.lane.b32.xlu0 %v244, 64
    %v405 = vpop.permute.xlu0 %404
    %v407 = vadd.f32 %v398, %v405
    %vm408 = vcmask 254976
    %v409 = vsel %vm408, %v407, 0.0
    %410 = vadd.xlane.f32.xlu0 %v409
    %v411 = vpop.xlane.xlu0 %410
    %v412 = vrcp.pop 32.0
    %v413 = vmul.f32 %v411, %v412
    %v414 = vsub.f32 %v407, %v413
    %v415 = vmul.f32 %v414, %v414
    %v416 = vsel %vm408, %v415, 0.0
    %417 = vadd.xlane.f32.xlu0 %v416
    %v418 = vpop.xlane.xlu0 %417
    %v419 = vmul.f32 %v418, %v412
    %v420 = vadd.f32 %v419, 1e-05
    %v421 = vrsqrt.pop %v420
    %v422 = vmul.f32 %v414, %v421
    %v423 = vlaneseq
    %v424 = vshrl.u32 %v423, 7
    %v425 = vsub.s32 0, %v424
    %v426 = vrot.slane %v114, %v425
    %v427 = vmul.f32 %v422, %v426
    %v428 = vlaneseq
    %v429 = vshrl.u32 %v428, 7
    %v430 = vsub.s32 0, %v429
    %v431 = vrot.slane %v118, %v430
    %v432 = vadd.f32 %v427, %v431
    %434 = vrot.lane.b32.xlu0 %v407, 96
    %v435 = vpop.permute.xlu0 %434
    %v437 = vsel %vm408, %v435, 0.0
    %438 = vadd.xlane.f32.xlu0 %v437
    %v439 = vpop.xlane.xlu0 %438
    %v440 = vmul.f32 %v439, %v412
    %v441 = vsub.f32 %v407, %v440
    %v442 = vmul.f32 %v441, %v441
    %444 = vrot.lane.b32.xlu0 %v442, 96
    %v445 = vpop.permute.xlu0 %444
    %v447 = vsel %vm408, %v445, 0.0
    %448 = vadd.xlane.f32.xlu0 %v447
    %v449 = vpop.xlane.xlu0 %448
    %v450 = vmul.f32 %v449, %v412
    %v451 = vadd.f32 %v450, 1e-05
    %v452 = vrsqrt.pop %v451
    %v453 = vmul.f32 %v441, %v452
    %v454 = vlaneseq
    %v455 = vshrl.u32 %v454, 7
    %v456 = vsub.s32 0, %v455
    %v457 = vrot.slane %v122, %v456
    %459 = vrot.lane.b32.xlu0 %v457, 32
    %v460 = vpop.permute.xlu0 %459
    %v462 = vmul.f32 %v453, %v460
    %v463 = vlaneseq
    %v464 = vshrl.u32 %v463, 7
    %v465 = vsub.s32 0, %v464
    %v466 = vrot.slane %v126, %v465
    %468 = vrot.lane.b32.xlu0 %v466, 32
    %v469 = vpop.permute.xlu0 %468
    %v471 = vadd.f32 %v462, %v469
    %v472 = vld [vmem:[%s2 + $0x40] sm:$0xf]
    %v473 = vld [vmem:[%s2 + $0x44] sm:$0xf]
    %v474 = vld [vmem:[%s2 + $0x48] sm:$0xf]
    %v475 = vld [vmem:[%s2 + $0x4c] sm:$0xf]
    %v476 = vpack.c.bf16 %v432, %v432
    %v481 = vunpack.c.l.b16 %v472
    %v482 = vunpack.c.l.b16 %v473
    %v483 = vunpack.c.l.b16 %v474
    %v484 = vunpack.c.l.b16 %v475
    %v485 = vpack.c.b16 %v482, %v481
    %v486 = vpack.c.b16 %v484, %v483
    %v490 = vsel %vm136, %v476, 0
    %492 = vmatprep.subr.bf16.mxu0 0
    %493 = vmatpush1.bf16.msra.mxu0 %v485
    %494 = vmatprep.subr.bf16.mxu0 0
    %495 = vmatpush1.bf16.msra.mxu0 %v486
    %496 = vmatprep.subr.bf16.mxu0 0
    %497 = vmatpush1.bf16.msra.mxu0 0
    %498 = vmatprep.subr.bf16.mxu0 0
    %499 = vmatpush1.bf16.msra.mxu0 0
    %500 = vmatprep.subr.bf16.mxu0 0
    %501 = vmatpush1.bf16.msra.mxu0 0
    %502 = vmatprep.subr.bf16.mxu0 0
    %503 = vmatpush1.bf16.msra.mxu0 0
    %504 = vmatprep.subr.bf16.mxu0 0
    %505 = vmatpush1.bf16.msra.mxu0 0
    %506 = vmatprep.subr.bf16.mxu0 0
    %507 = vmatpush1.bf16.msra.mxu0 0
    %508 = vmatprep.subr.bf16.mxu0 0
    %509 = vmatpush1.bf16.msra.mxu0 0
    %510 = vmatprep.subr.bf16.mxu0 0
    %511 = vmatpush1.bf16.msra.mxu0 0
    %512 = vmatprep.subr.bf16.mxu0 0
    %513 = vmatpush1.bf16.msra.mxu0 0
    %514 = vmatprep.subr.bf16.mxu0 0
    %515 = vmatpush1.bf16.msra.mxu0 0
    %516 = vmatprep.subr.bf16.mxu0 0
    %517 = vmatpush1.bf16.msra.mxu0 0
    %518 = vmatprep.subr.bf16.mxu0 0
    %519 = vmatpush1.bf16.msra.mxu0 0
    %520 = vmatprep.subr.bf16.mxu0 0
    %521 = vmatpush1.bf16.msra.mxu0 0
    %522 = vmatprep.subr.bf16.mxu0 0
    %523 = vmatpush1.bf16.msra.mxu0 0
    %524 = vmatprep.mubr.bf16.mxu0 0
    %525 = vmatmul.mubr.bf16.gmra.mrb[0].mxu0 %v490
    %v526 = vpop.f32.mrb[0].mxu0
    %v527 = vadd.f32 %v58, %v526
    %v528 = vpop.f32.mrb[0].mxu0
    %v529 = vpop.f32.mrb[0].mxu0
    %v530 = vpop.f32.mrb[0].mxu0
    %531 = vdwg.mxu0
    %v532 = vxor.u32 %v527, 2147483648
    %v533 = vmul.f32 %v532, 1.442695
    %v534 = vpow.pop %v533
    %v535 = vadd.f32 %v534, 1.0
    %v536 = vrcp.pop %v535
    %v537 = vmul.f32 1.0, %v536
    %v538 = vmul.f32 %v537, 2.0
    %v539 = vsub.f32 %v538, 1.0
    %v540 = vmul.f32 %v537, %v471
    %542 = vrot.lane.b32.xlu0 %v539, 64
    %v543 = vpop.permute.xlu0 %542
    %v545 = vmul.f32 %v537, %v543
    %547 = vrot.lane.b32.xlu0 %v545, 32
    %v548 = vpop.permute.xlu0 %547
    %v550 = vadd.f32 %v540, %v548
    %v551 = vtanh.pop %v550
    %553 = vrot.lane.b32.xlu0 %v551, 64
    %v554 = vpop.permute.xlu0 %553
    %v556 = vmul.f32 %v537, %v554
    %558 = vrot.lane.b32.xlu0 %v556, 32
    %v559 = vpop.permute.xlu0 %558
    %v561 = vsel %vm136, %v559, %v550
    %v562 = vsel %vm142, %v561, %v140
    %s563 = scalar_lea.vmem %s2, 80
    %v564 = vld [vmem:[%s563] sm:$0xf]
    %v565 = vld [vmem:[%s563 + $0x4] sm:$0xf]
    %v566 = vld [vmem:[%s563 + $0x8] sm:$0xf]
    %v567 = vld [vmem:[%s563 + $0xc] sm:$0xf]
    %v568 = vld [vmem:[%s563 + $0x10] sm:$0xf]
    %v569 = vld [vmem:[%s563 + $0x14] sm:$0xf]
    %v570 = vld [vmem:[%s563 + $0x18] sm:$0xf]
    %v571 = vld [vmem:[%s563 + $0x1c] sm:$0xf]
    %v572 = vld [vmem:[%s563 + $0x20] sm:$0xf]
    %v573 = vld [vmem:[%s563 + $0x24] sm:$0xf]
    %v574 = vld [vmem:[%s563 + $0x28] sm:$0xf]
    %v575 = vld [vmem:[%s563 + $0x2c] sm:$0xf]
    %v576 = vld [vmem:[%s563 + $0x30] sm:$0xf]
    %v577 = vld [vmem:[%s563 + $0x34] sm:$0xf]
    %v578 = vld [vmem:[%s563 + $0x38] sm:$0xf]
    %v579 = vld [vmem:[%s563 + $0x3c] sm:$0xf]
    %v580 = vpack.c.bf16 %v562, %v562
    %v597 = vunpack.c.l.b16 %v564
    %v598 = vunpack.c.l.b16 %v565
    %v599 = vunpack.c.l.b16 %v566
    %v600 = vunpack.c.l.b16 %v567
    %v601 = vunpack.c.l.b16 %v568
    %v602 = vunpack.c.l.b16 %v569
    %v603 = vunpack.c.l.b16 %v570
    %v604 = vunpack.c.l.b16 %v571
    %v605 = vunpack.c.l.b16 %v572
    %v606 = vunpack.c.l.b16 %v573
    %v607 = vunpack.c.l.b16 %v574
    %v608 = vunpack.c.l.b16 %v575
    %v609 = vunpack.c.l.b16 %v576
    %v610 = vunpack.c.l.b16 %v577
    %v611 = vunpack.c.l.b16 %v578
    %v612 = vunpack.c.l.b16 %v579
    %v613 = vpack.c.b16 %v598, %v597
    %v614 = vpack.c.b16 %v600, %v599
    %v615 = vpack.c.b16 %v602, %v601
    %v616 = vpack.c.b16 %v604, %v603
    %v617 = vpack.c.b16 %v606, %v605
    %v618 = vpack.c.b16 %v608, %v607
    %v619 = vpack.c.b16 %v610, %v609
    %v620 = vpack.c.b16 %v612, %v611
    %629 = vmatprep.subr.bf16.mxu0 0
    %630 = vmatpush1.bf16.msra.mxu0 %v613
    %631 = vmatprep.subr.bf16.mxu0 0
    %632 = vmatpush1.bf16.msra.mxu0 %v614
    %633 = vmatprep.subr.bf16.mxu0 0
    %634 = vmatpush1.bf16.msra.mxu0 %v615
    %635 = vmatprep.subr.bf16.mxu0 0
    %636 = vmatpush1.bf16.msra.mxu0 %v616
    %637 = vmatprep.subr.bf16.mxu0 0
    %638 = vmatpush1.bf16.msra.mxu0 %v617
    %639 = vmatprep.subr.bf16.mxu0 0
    %640 = vmatpush1.bf16.msra.mxu0 %v618
    %641 = vmatprep.subr.bf16.mxu0 0
    %642 = vmatpush1.bf16.msra.mxu0 %v619
    %643 = vmatprep.subr.bf16.mxu0 0
    %644 = vmatpush1.bf16.msra.mxu0 %v620
    %645 = vmatprep.subr.bf16.mxu0 0
    %646 = vmatpush1.bf16.msra.mxu0 0
    %647 = vmatprep.subr.bf16.mxu0 0
    %648 = vmatpush1.bf16.msra.mxu0 0
    %649 = vmatprep.subr.bf16.mxu0 0
    %650 = vmatpush1.bf16.msra.mxu0 0
    %651 = vmatprep.subr.bf16.mxu0 0
    %652 = vmatpush1.bf16.msra.mxu0 0
    %653 = vmatprep.subr.bf16.mxu0 0
    %654 = vmatpush1.bf16.msra.mxu0 0
    %655 = vmatprep.subr.bf16.mxu0 0
    %656 = vmatpush1.bf16.msra.mxu0 0
    %657 = vmatprep.subr.bf16.mxu0 0
    %658 = vmatpush1.bf16.msra.mxu0 0
    %659 = vmatprep.subr.bf16.mxu0 0
    %660 = vmatpush1.bf16.msra.mxu0 0
    %661 = vmatprep.mubr.bf16.mxu0 0
    %662 = vmatmul.mubr.bf16.gmra.mrb[0].mxu0 %v580
    %v663 = vpop.f32.mrb[0].mxu0
    %v664 = vadd.f32 %v41, %v663
    %v665 = vpop.f32.mrb[0].mxu0
    %v666 = vpop.f32.mrb[0].mxu0
    %v667 = vpop.f32.mrb[0].mxu0
    %668 = vdwg.mxu0
    %v669 = vmax.f32 %v664, 0.0
    %s670 = scalar_lea.vmem %s3, 64
    %v671 = vld [vmem:[%s670] sm:$0xf]
    %v672 = vld [vmem:[%s670 + $0x4] sm:$0xf]
    %v673 = vld [vmem:[%s670 + $0x8] sm:$0xf]
    %v674 = vld [vmem:[%s670 + $0xc] sm:$0xf]
    %v675 = vld [vmem:[%s670 + $0x10] sm:$0xf]
    %v676 = vld [vmem:[%s670 + $0x14] sm:$0xf]
    %v677 = vld [vmem:[%s670 + $0x18] sm:$0xf]
    %v678 = vld [vmem:[%s670 + $0x1c] sm:$0xf]
    %v679 = vpack.c.bf16 %v669, %v669
    %v688 = vunpack.c.l.b16 %v671
    %v689 = vunpack.c.l.b16 %v672
    %v690 = vunpack.c.l.b16 %v673
    %v691 = vunpack.c.l.b16 %v674
    %v692 = vunpack.c.l.b16 %v675
    %v693 = vunpack.c.l.b16 %v676
    %v694 = vunpack.c.l.b16 %v677
    %v695 = vunpack.c.l.b16 %v678
    %v696 = vpack.c.b16 %v689, %v688
    %v697 = vpack.c.b16 %v691, %v690
    %v698 = vpack.c.b16 %v693, %v692
    %v699 = vpack.c.b16 %v695, %v694
    %v705 = vsel %vm142, %v679, 0
    %707 = vmatprep.subr.bf16.mxu0 0
    %708 = vmatpush1.bf16.msra.mxu0 %v696
    %709 = vmatprep.subr.bf16.mxu0 0
    %710 = vmatpush1.bf16.msra.mxu0 %v697
    %711 = vmatprep.subr.bf16.mxu0 0
    %712 = vmatpush1.bf16.msra.mxu0 %v698
    %713 = vmatprep.subr.bf16.mxu0 0
    %714 = vmatpush1.bf16.msra.mxu0 %v699
    %715 = vmatprep.subr.bf16.mxu0 0
    %716 = vmatpush1.bf16.msra.mxu0 0
    %717 = vmatprep.subr.bf16.mxu0 0
    %718 = vmatpush1.bf16.msra.mxu0 0
    %719 = vmatprep.subr.bf16.mxu0 0
    %720 = vmatpush1.bf16.msra.mxu0 0
    %721 = vmatprep.subr.bf16.mxu0 0
    %722 = vmatpush1.bf16.msra.mxu0 0
    %723 = vmatprep.subr.bf16.mxu0 0
    %724 = vmatpush1.bf16.msra.mxu0 0
    %725 = vmatprep.subr.bf16.mxu0 0
    %726 = vmatpush1.bf16.msra.mxu0 0
    %727 = vmatprep.subr.bf16.mxu0 0
    %728 = vmatpush1.bf16.msra.mxu0 0
    %729 = vmatprep.subr.bf16.mxu0 0
    %730 = vmatpush1.bf16.msra.mxu0 0
    %731 = vmatprep.subr.bf16.mxu0 0
    %732 = vmatpush1.bf16.msra.mxu0 0
    %733 = vmatprep.subr.bf16.mxu0 0
    %734 = vmatpush1.bf16.msra.mxu0 0
    %735 = vmatprep.subr.bf16.mxu0 0
    %736 = vmatpush1.bf16.msra.mxu0 0
    %737 = vmatprep.subr.bf16.mxu0 0
    %738 = vmatpush1.bf16.msra.mxu0 0
    %739 = vmatprep.mubr.bf16.mxu0 0
    %740 = vmatmul.mubr.bf16.gmra.mrb[0].mxu0 %v705
    %v741 = vpop.f32.mrb[0].mxu0
    %v742 = vadd.f32 %v83, %v741
    %v743 = vpop.f32.mrb[0].mxu0
    %v744 = vpop.f32.mrb[0].mxu0
    %v745 = vpop.f32.mrb[0].mxu0
    %746 = vdwg.mxu0
    %v747 = vmax.f32 %v742, 0.0
    %v748 = vld [vmem:[%s670 + $0x20] sm:$0xf]
    %v749 = vld [vmem:[%s670 + $0x24] sm:$0xf]
    %v750 = vld [vmem:[%s670 + $0x28] sm:$0xf]
    %v751 = vld [vmem:[%s670 + $0x2c] sm:$0xf]
    %v752 = vld [vmem:[%s670 + $0x30] sm:$0xf]
    %v753 = vld [vmem:[%s670 + $0x34] sm:$0xf]
    %v754 = vld [vmem:[%s670 + $0x38] sm:$0xf]
    %v755 = vld [vmem:[%s670 + $0x3c] sm:$0xf]
    %v756 = vpack.c.bf16 %v747, %v747
    %v765 = vunpack.c.l.b16 %v748
    %v766 = vunpack.c.l.b16 %v749
    %v767 = vunpack.c.l.b16 %v750
    %v768 = vunpack.c.l.b16 %v751
    %v769 = vunpack.c.l.b16 %v752
    %v770 = vunpack.c.l.b16 %v753
    %v771 = vunpack.c.l.b16 %v754
    %v772 = vunpack.c.l.b16 %v755
    %v773 = vpack.c.b16 %v766, %v765
    %v774 = vpack.c.b16 %v768, %v767
    %v775 = vpack.c.b16 %v770, %v769
    %v776 = vpack.c.b16 %v772, %v771
    %v782 = vsel %vm142, %v756, 0
    %784 = vmatprep.subr.bf16.mxu0 0
    %785 = vmatpush1.bf16.msra.mxu0 %v773
    %786 = vmatprep.subr.bf16.mxu0 0
    %787 = vmatpush1.bf16.msra.mxu0 %v774
    %788 = vmatprep.subr.bf16.mxu0 0
    %789 = vmatpush1.bf16.msra.mxu0 %v775
    %790 = vmatprep.subr.bf16.mxu0 0
    %791 = vmatpush1.bf16.msra.mxu0 %v776
    %792 = vmatprep.subr.bf16.mxu0 0
    %793 = vmatpush1.bf16.msra.mxu0 0
    %794 = vmatprep.subr.bf16.mxu0 0
    %795 = vmatpush1.bf16.msra.mxu0 0
    %796 = vmatprep.subr.bf16.mxu0 0
    %797 = vmatpush1.bf16.msra.mxu0 0
    %798 = vmatprep.subr.bf16.mxu0 0
    %799 = vmatpush1.bf16.msra.mxu0 0
    %800 = vmatprep.subr.bf16.mxu0 0
    %801 = vmatpush1.bf16.msra.mxu0 0
    %802 = vmatprep.subr.bf16.mxu0 0
    %803 = vmatpush1.bf16.msra.mxu0 0
    %804 = vmatprep.subr.bf16.mxu0 0
    %805 = vmatpush1.bf16.msra.mxu0 0
    %806 = vmatprep.subr.bf16.mxu0 0
    %807 = vmatpush1.bf16.msra.mxu0 0
    %808 = vmatprep.subr.bf16.mxu0 0
    %809 = vmatpush1.bf16.msra.mxu0 0
    %810 = vmatprep.subr.bf16.mxu0 0
    %811 = vmatpush1.bf16.msra.mxu0 0
    %812 = vmatprep.subr.bf16.mxu0 0
    %813 = vmatpush1.bf16.msra.mxu0 0
    %814 = vmatprep.subr.bf16.mxu0 0
    %815 = vmatpush1.bf16.msra.mxu0 0
    %816 = vmatprep.mubr.bf16.mxu0 0
    %817 = vmatmul.mubr.bf16.gmra.mrb[0].mxu0 %v782
    %v818 = vpop.f32.mrb[0].mxu0
    %v819 = vadd.f32 %v103, %v818
    %v820 = vpop.f32.mrb[0].mxu0
    %v821 = vpop.f32.mrb[0].mxu0
    %v822 = vpop.f32.mrb[0].mxu0
    %823 = vdwg.mxu0
    %825 = vrot.lane.b32.xlu0 %v664, 64
    %v826 = vpop.permute.xlu0 %825
    %v828 = vadd.f32 %v819, %v826
    %v829 = vsel %vm408, %v828, 0.0
    %830 = vadd.xlane.f32.xlu0 %v829
    %v831 = vpop.xlane.xlu0 %830
    %v832 = vmul.f32 %v831, %v412
    %v833 = vsub.f32 %v828, %v832
    %v834 = vmul.f32 %v833, %v833
    %v835 = vsel %vm408, %v834, 0.0
    %836 = vadd.xlane.f32.xlu0 %v835
    %v837 = vpop.xlane.xlu0 %836
    %v838 = vmul.f32 %v837, %v412
    %v839 = vadd.f32 %v838, 1e-05
    %v840 = vrsqrt.pop %v839
    %v841 = vmul.f32 %v833, %v840
    %v842 = vlaneseq
    %v843 = vshrl.u32 %v842, 7
    %v844 = vsub.s32 0, %v843
    %v845 = vrot.slane %v115, %v844
    %v846 = vmul.f32 %v841, %v845
    %v847 = vlaneseq
    %v848 = vshrl.u32 %v847, 7
    %v849 = vsub.s32 0, %v848
    %v850 = vrot.slane %v119, %v849
    %v851 = vadd.f32 %v846, %v850
    %853 = vrot.lane.b32.xlu0 %v828, 96
    %v854 = vpop.permute.xlu0 %853
    %v856 = vsel %vm408, %v854, 0.0
    %857 = vadd.xlane.f32.xlu0 %v856
    %v858 = vpop.xlane.xlu0 %857
    %v859 = vmul.f32 %v858, %v412
    %v860 = vsub.f32 %v828, %v859
    %v861 = vmul.f32 %v860, %v860
    %863 = vrot.lane.b32.xlu0 %v861, 96
    %v864 = vpop.permute.xlu0 %863
    %v866 = vsel %vm408, %v864, 0.0
    %867 = vadd.xlane.f32.xlu0 %v866
    %v868 = vpop.xlane.xlu0 %867
    %v869 = vmul.f32 %v868, %v412
    %v870 = vadd.f32 %v869, 1e-05
    %v871 = vrsqrt.pop %v870
    %v872 = vmul.f32 %v860, %v871
    %v873 = vlaneseq
    %v874 = vshrl.u32 %v873, 7
    %v875 = vsub.s32 0, %v874
    %v876 = vrot.slane %v123, %v875
    %878 = vrot.lane.b32.xlu0 %v876, 32
    %v879 = vpop.permute.xlu0 %878
    %v881 = vmul.f32 %v872, %v879
    %v882 = vlaneseq
    %v883 = vshrl.u32 %v882, 7
    %v884 = vsub.s32 0, %v883
    %v885 = vrot.slane %v127, %v884
    %887 = vrot.lane.b32.xlu0 %v885, 32
    %v888 = vpop.permute.xlu0 %887
    %v890 = vadd.f32 %v881, %v888
    %v891 = vld [vmem:[%s563 + $0x40] sm:$0xf]
    %v892 = vld [vmem:[%s563 + $0x44] sm:$0xf]
    %v893 = vld [vmem:[%s563 + $0x48] sm:$0xf]
    %v894 = vld [vmem:[%s563 + $0x4c] sm:$0xf]
    %v895 = vpack.c.bf16 %v851, %v851
    %v900 = vunpack.c.l.b16 %v891
    %v901 = vunpack.c.l.b16 %v892
    %v902 = vunpack.c.l.b16 %v893
    %v903 = vunpack.c.l.b16 %v894
    %v904 = vpack.c.b16 %v901, %v900
    %v905 = vpack.c.b16 %v903, %v902
    %v909 = vsel %vm136, %v895, 0
    %911 = vmatprep.subr.bf16.mxu0 0
    %912 = vmatpush1.bf16.msra.mxu0 %v904
    %913 = vmatprep.subr.bf16.mxu0 0
    %914 = vmatpush1.bf16.msra.mxu0 %v905
    %915 = vmatprep.subr.bf16.mxu0 0
    %916 = vmatpush1.bf16.msra.mxu0 0
    %917 = vmatprep.subr.bf16.mxu0 0
    %918 = vmatpush1.bf16.msra.mxu0 0
    %919 = vmatprep.subr.bf16.mxu0 0
    %920 = vmatpush1.bf16.msra.mxu0 0
    %921 = vmatprep.subr.bf16.mxu0 0
    %922 = vmatpush1.bf16.msra.mxu0 0
    %923 = vmatprep.subr.bf16.mxu0 0
    %924 = vmatpush1.bf16.msra.mxu0 0
    %925 = vmatprep.subr.bf16.mxu0 0
    %926 = vmatpush1.bf16.msra.mxu0 0
    %927 = vmatprep.subr.bf16.mxu0 0
    %928 = vmatpush1.bf16.msra.mxu0 0
    %929 = vmatprep.subr.bf16.mxu0 0
    %930 = vmatpush1.bf16.msra.mxu0 0
    %931 = vmatprep.subr.bf16.mxu0 0
    %932 = vmatpush1.bf16.msra.mxu0 0
    %933 = vmatprep.subr.bf16.mxu0 0
    %934 = vmatpush1.bf16.msra.mxu0 0
    %935 = vmatprep.subr.bf16.mxu0 0
    %936 = vmatpush1.bf16.msra.mxu0 0
    %937 = vmatprep.subr.bf16.mxu0 0
    %938 = vmatpush1.bf16.msra.mxu0 0
    %939 = vmatprep.subr.bf16.mxu0 0
    %940 = vmatpush1.bf16.msra.mxu0 0
    %941 = vmatprep.subr.bf16.mxu0 0
    %942 = vmatpush1.bf16.msra.mxu0 0
    %943 = vmatprep.mubr.bf16.mxu0 0
    %944 = vmatmul.mubr.bf16.gmra.mrb[0].mxu0 %v909
    %v945 = vpop.f32.mrb[0].mxu0
    %v946 = vadd.f32 %v63, %v945
    %v947 = vpop.f32.mrb[0].mxu0
    %v948 = vpop.f32.mrb[0].mxu0
    %v949 = vpop.f32.mrb[0].mxu0
    %950 = vdwg.mxu0
    %v951 = vxor.u32 %v946, 2147483648
    %v952 = vmul.f32 %v951, 1.442695
    %v953 = vpow.pop %v952
    %v954 = vadd.f32 %v953, 1.0
    %v955 = vrcp.pop %v954
    %v956 = vmul.f32 1.0, %v955
    %v957 = vmul.f32 %v956, 2.0
    %v958 = vsub.f32 %v957, 1.0
    %v959 = vmul.f32 %v956, %v890
    %961 = vrot.lane.b32.xlu0 %v958, 64
    %v962 = vpop.permute.xlu0 %961
    %v964 = vmul.f32 %v956, %v962
    %966 = vrot.lane.b32.xlu0 %v964, 32
    %v967 = vpop.permute.xlu0 %966
    %v969 = vadd.f32 %v959, %v967
    %v970 = vtanh.pop %v969
    %972 = vrot.lane.b32.xlu0 %v970, 64
    %v973 = vpop.permute.xlu0 %972
    %v975 = vmul.f32 %v956, %v973
    %977 = vrot.lane.b32.xlu0 %v975, 32
    %v978 = vpop.permute.xlu0 %977
    %v980 = vsel %vm136, %v978, %v969
    %v981 = vsel %vm142, %v980, %v140
    %s982 = scalar_lea.vmem %s2, 160
    %v983 = vld [vmem:[%s982] sm:$0xf]
    %v984 = vld [vmem:[%s982 + $0x4] sm:$0xf]
    %v985 = vld [vmem:[%s982 + $0x8] sm:$0xf]
    %v986 = vld [vmem:[%s982 + $0xc] sm:$0xf]
    %v987 = vld [vmem:[%s982 + $0x10] sm:$0xf]
    %v988 = vld [vmem:[%s982 + $0x14] sm:$0xf]
    %v989 = vld [vmem:[%s982 + $0x18] sm:$0xf]
    %v990 = vld [vmem:[%s982 + $0x1c] sm:$0xf]
    %v991 = vld [vmem:[%s982 + $0x20] sm:$0xf]
    %v992 = vld [vmem:[%s982 + $0x24] sm:$0xf]
    %v993 = vld [vmem:[%s982 + $0x28] sm:$0xf]
    %v994 = vld [vmem:[%s982 + $0x2c] sm:$0xf]
    %v995 = vld [vmem:[%s982 + $0x30] sm:$0xf]
    %v996 = vld [vmem:[%s982 + $0x34] sm:$0xf]
    %v997 = vld [vmem:[%s982 + $0x38] sm:$0xf]
    %v998 = vld [vmem:[%s982 + $0x3c] sm:$0xf]
    %v999 = vpack.c.bf16 %v981, %v981
    %v1016 = vunpack.c.l.b16 %v983
    %v1017 = vunpack.c.l.b16 %v984
    %v1018 = vunpack.c.l.b16 %v985
    %v1019 = vunpack.c.l.b16 %v986
    %v1020 = vunpack.c.l.b16 %v987
    %v1021 = vunpack.c.l.b16 %v988
    %v1022 = vunpack.c.l.b16 %v989
    %v1023 = vunpack.c.l.b16 %v990
    %v1024 = vunpack.c.l.b16 %v991
    %v1025 = vunpack.c.l.b16 %v992
    %v1026 = vunpack.c.l.b16 %v993
    %v1027 = vunpack.c.l.b16 %v994
    %v1028 = vunpack.c.l.b16 %v995
    %v1029 = vunpack.c.l.b16 %v996
    %v1030 = vunpack.c.l.b16 %v997
    %v1031 = vunpack.c.l.b16 %v998
    %v1032 = vpack.c.b16 %v1017, %v1016
    %v1033 = vpack.c.b16 %v1019, %v1018
    %v1034 = vpack.c.b16 %v1021, %v1020
    %v1035 = vpack.c.b16 %v1023, %v1022
    %v1036 = vpack.c.b16 %v1025, %v1024
    %v1037 = vpack.c.b16 %v1027, %v1026
    %v1038 = vpack.c.b16 %v1029, %v1028
    %v1039 = vpack.c.b16 %v1031, %v1030
    %1048 = vmatprep.subr.bf16.mxu0 0
    %1049 = vmatpush1.bf16.msra.mxu0 %v1032
    %1050 = vmatprep.subr.bf16.mxu0 0
    %1051 = vmatpush1.bf16.msra.mxu0 %v1033
    %1052 = vmatprep.subr.bf16.mxu0 0
    %1053 = vmatpush1.bf16.msra.mxu0 %v1034
    %1054 = vmatprep.subr.bf16.mxu0 0
    %1055 = vmatpush1.bf16.msra.mxu0 %v1035
    %1056 = vmatprep.subr.bf16.mxu0 0
    %1057 = vmatpush1.bf16.msra.mxu0 %v1036
    %1058 = vmatprep.subr.bf16.mxu0 0
    %1059 = vmatpush1.bf16.msra.mxu0 %v1037
    %1060 = vmatprep.subr.bf16.mxu0 0
    %1061 = vmatpush1.bf16.msra.mxu0 %v1038
    %1062 = vmatprep.subr.bf16.mxu0 0
    %1063 = vmatpush1.bf16.msra.mxu0 %v1039
    %1064 = vmatprep.subr.bf16.mxu0 0
    %1065 = vmatpush1.bf16.msra.mxu0 0
    %1066 = vmatprep.subr.bf16.mxu0 0
    %1067 = vmatpush1.bf16.msra.mxu0 0
    %1068 = vmatprep.subr.bf16.mxu0 0
    %1069 = vmatpush1.bf16.msra.mxu0 0
    %1070 = vmatprep.subr.bf16.mxu0 0
    %1071 = vmatpush1.bf16.msra.mxu0 0
    %1072 = vmatprep.subr.bf16.mxu0 0
    %1073 = vmatpush1.bf16.msra.mxu0 0
    %1074 = vmatprep.subr.bf16.mxu0 0
    %1075 = vmatpush1.bf16.msra.mxu0 0
    %1076 = vmatprep.subr.bf16.mxu0 0
    %1077 = vmatpush1.bf16.msra.mxu0 0
    %1078 = vmatprep.subr.bf16.mxu0 0
    %1079 = vmatpush1.bf16.msra.mxu0 0
    %1080 = vmatprep.mubr.bf16.mxu0 0
    %1081 = vmatmul.mubr.bf16.gmra.mrb[0].mxu0 %v999
    %v1082 = vpop.f32.mrb[0].mxu0
    %v1083 = vadd.f32 %v47, %v1082
    %v1084 = vpop.f32.mrb[0].mxu0
    %v1085 = vpop.f32.mrb[0].mxu0
    %v1086 = vpop.f32.mrb[0].mxu0
    %1087 = vdwg.mxu0
    %v1088 = vmax.f32 %v1083, 0.0
    %s1089 = scalar_lea.vmem %s3, 128
    %v1090 = vld [vmem:[%s1089] sm:$0xf]
    %v1091 = vld [vmem:[%s1089 + $0x4] sm:$0xf]
    %v1092 = vld [vmem:[%s1089 + $0x8] sm:$0xf]
    %v1093 = vld [vmem:[%s1089 + $0xc] sm:$0xf]
    %v1094 = vld [vmem:[%s1089 + $0x10] sm:$0xf]
    %v1095 = vld [vmem:[%s1089 + $0x14] sm:$0xf]
    %v1096 = vld [vmem:[%s1089 + $0x18] sm:$0xf]
    %v1097 = vld [vmem:[%s1089 + $0x1c] sm:$0xf]
    %v1098 = vpack.c.bf16 %v1088, %v1088
    %v1107 = vunpack.c.l.b16 %v1090
    %v1108 = vunpack.c.l.b16 %v1091
    %v1109 = vunpack.c.l.b16 %v1092
    %v1110 = vunpack.c.l.b16 %v1093
    %v1111 = vunpack.c.l.b16 %v1094
    %v1112 = vunpack.c.l.b16 %v1095
    %v1113 = vunpack.c.l.b16 %v1096
    %v1114 = vunpack.c.l.b16 %v1097
    %v1115 = vpack.c.b16 %v1108, %v1107
    %v1116 = vpack.c.b16 %v1110, %v1109
    %v1117 = vpack.c.b16 %v1112, %v1111
    %v1118 = vpack.c.b16 %v1114, %v1113
    %v1124 = vsel %vm142, %v1098, 0
    %1126 = vmatprep.subr.bf16.mxu0 0
    %1127 = vmatpush1.bf16.msra.mxu0 %v1115
    %1128 = vmatprep.subr.bf16.mxu0 0
    %1129 = vmatpush1.bf16.msra.mxu0 %v1116
    %1130 = vmatprep.subr.bf16.mxu0 0
    %1131 = vmatpush1.bf16.msra.mxu0 %v1117
    %1132 = vmatprep.subr.bf16.mxu0 0
    %1133 = vmatpush1.bf16.msra.mxu0 %v1118
    %1134 = vmatprep.subr.bf16.mxu0 0
    %1135 = vmatpush1.bf16.msra.mxu0 0
    %1136 = vmatprep.subr.bf16.mxu0 0
    %1137 = vmatpush1.bf16.msra.mxu0 0
    %1138 = vmatprep.subr.bf16.mxu0 0
    %1139 = vmatpush1.bf16.msra.mxu0 0
    %1140 = vmatprep.subr.bf16.mxu0 0
    %1141 = vmatpush1.bf16.msra.mxu0 0
    %1142 = vmatprep.subr.bf16.mxu0 0
    %1143 = vmatpush1.bf16.msra.mxu0 0
    %1144 = vmatprep.subr.bf16.mxu0 0
    %1145 = vmatpush1.bf16.msra.mxu0 0
    %1146 = vmatprep.subr.bf16.mxu0 0
    %1147 = vmatpush1.bf16.msra.mxu0 0
    %1148 = vmatprep.subr.bf16.mxu0 0
    %1149 = vmatpush1.bf16.msra.mxu0 0
    %1150 = vmatprep.subr.bf16.mxu0 0
    %1151 = vmatpush1.bf16.msra.mxu0 0
    %1152 = vmatprep.subr.bf16.mxu0 0
    %1153 = vmatpush1.bf16.msra.mxu0 0
    %1154 = vmatprep.subr.bf16.mxu0 0
    %1155 = vmatpush1.bf16.msra.mxu0 0
    %1156 = vmatprep.subr.bf16.mxu0 0
    %1157 = vmatpush1.bf16.msra.mxu0 0
    %1158 = vmatprep.mubr.bf16.mxu0 0
    %1159 = vmatmul.mubr.bf16.gmra.mrb[0].mxu0 %v1124
    %v1160 = vpop.f32.mrb[0].mxu0
    %v1161 = vadd.f32 %v88, %v1160
    %v1162 = vpop.f32.mrb[0].mxu0
    %v1163 = vpop.f32.mrb[0].mxu0
    %v1164 = vpop.f32.mrb[0].mxu0
    %1165 = vdwg.mxu0
    %v1166 = vmax.f32 %v1161, 0.0
    %v1167 = vld [vmem:[%s1089 + $0x20] sm:$0xf]
    %v1168 = vld [vmem:[%s1089 + $0x24] sm:$0xf]
    %v1169 = vld [vmem:[%s1089 + $0x28] sm:$0xf]
    %v1170 = vld [vmem:[%s1089 + $0x2c] sm:$0xf]
    %v1171 = vld [vmem:[%s1089 + $0x30] sm:$0xf]
    %v1172 = vld [vmem:[%s1089 + $0x34] sm:$0xf]
    %v1173 = vld [vmem:[%s1089 + $0x38] sm:$0xf]
    %v1174 = vld [vmem:[%s1089 + $0x3c] sm:$0xf]
    %v1175 = vpack.c.bf16 %v1166, %v1166
    %v1184 = vunpack.c.l.b16 %v1167
    %v1185 = vunpack.c.l.b16 %v1168
    %v1186 = vunpack.c.l.b16 %v1169
    %v1187 = vunpack.c.l.b16 %v1170
    %v1188 = vunpack.c.l.b16 %v1171
    %v1189 = vunpack.c.l.b16 %v1172
    %v1190 = vunpack.c.l.b16 %v1173
    %v1191 = vunpack.c.l.b16 %v1174
    %v1192 = vpack.c.b16 %v1185, %v1184
    %v1193 = vpack.c.b16 %v1187, %v1186
    %v1194 = vpack.c.b16 %v1189, %v1188
    %v1195 = vpack.c.b16 %v1191, %v1190
    %v1201 = vsel %vm142, %v1175, 0
    %1203 = vmatprep.subr.bf16.mxu0 0
    %1204 = vmatpush1.bf16.msra.mxu0 %v1192
    %1205 = vmatprep.subr.bf16.mxu0 0
    %1206 = vmatpush1.bf16.msra.mxu0 %v1193
    %1207 = vmatprep.subr.bf16.mxu0 0
    %1208 = vmatpush1.bf16.msra.mxu0 %v1194
    %1209 = vmatprep.subr.bf16.mxu0 0
    %1210 = vmatpush1.bf16.msra.mxu0 %v1195
    %1211 = vmatprep.subr.bf16.mxu0 0
    %1212 = vmatpush1.bf16.msra.mxu0 0
    %1213 = vmatprep.subr.bf16.mxu0 0
    %1214 = vmatpush1.bf16.msra.mxu0 0
    %1215 = vmatprep.subr.bf16.mxu0 0
    %1216 = vmatpush1.bf16.msra.mxu0 0
    %1217 = vmatprep.subr.bf16.mxu0 0
    %1218 = vmatpush1.bf16.msra.mxu0 0
    %1219 = vmatprep.subr.bf16.mxu0 0
    %1220 = vmatpush1.bf16.msra.mxu0 0
    %1221 = vmatprep.subr.bf16.mxu0 0
    %1222 = vmatpush1.bf16.msra.mxu0 0
    %1223 = vmatprep.subr.bf16.mxu0 0
    %1224 = vmatpush1.bf16.msra.mxu0 0
    %1225 = vmatprep.subr.bf16.mxu0 0
    %1226 = vmatpush1.bf16.msra.mxu0 0
    %1227 = vmatprep.subr.bf16.mxu0 0
    %1228 = vmatpush1.bf16.msra.mxu0 0
    %1229 = vmatprep.subr.bf16.mxu0 0
    %1230 = vmatpush1.bf16.msra.mxu0 0
    %1231 = vmatprep.subr.bf16.mxu0 0
    %1232 = vmatpush1.bf16.msra.mxu0 0
    %1233 = vmatprep.subr.bf16.mxu0 0
    %1234 = vmatpush1.bf16.msra.mxu0 0
    %1235 = vmatprep.mubr.bf16.mxu0 0
    %1236 = vmatmul.mubr.bf16.gmra.mrb[0].mxu0 %v1201
    %v1237 = vpop.f32.mrb[0].mxu0
    %v1238 = vadd.f32 %v108, %v1237
    %v1239 = vpop.f32.mrb[0].mxu0
    %v1240 = vpop.f32.mrb[0].mxu0
    %v1241 = vpop.f32.mrb[0].mxu0
    %1242 = vdwg.mxu0
    %1244 = vrot.lane.b32.xlu0 %v1083, 64
    %v1245 = vpop.permute.xlu0 %1244
    %v1247 = vadd.f32 %v1238, %v1245
    %v1248 = vsel %vm408, %v1247, 0.0
    %1249 = vadd.xlane.f32.xlu0 %v1248
    %v1250 = vpop.xlane.xlu0 %1249
    %v1251 = vmul.f32 %v1250, %v412
    %v1252 = vsub.f32 %v1247, %v1251
    %v1253 = vmul.f32 %v1252, %v1252
    %v1254 = vsel %vm408, %v1253, 0.0
    %1255 = vadd.xlane.f32.xlu0 %v1254
    %v1256 = vpop.xlane.xlu0 %1255
    %v1257 = vmul.f32 %v1256, %v412
    %v1258 = vadd.f32 %v1257, 1e-05
    %v1259 = vrsqrt.pop %v1258
    %v1260 = vmul.f32 %v1252, %v1259
    %v1261 = vlaneseq
    %v1262 = vshrl.u32 %v1261, 7
    %v1263 = vsub.s32 0, %v1262
    %v1264 = vrot.slane %v116, %v1263
    %v1265 = vmul.f32 %v1260, %v1264
    %v1266 = vlaneseq
    %v1267 = vshrl.u32 %v1266, 7
    %v1268 = vsub.s32 0, %v1267
    %v1269 = vrot.slane %v120, %v1268
    %v1270 = vadd.f32 %v1265, %v1269
    %1272 = vrot.lane.b32.xlu0 %v1247, 96
    %v1273 = vpop.permute.xlu0 %1272
    %v1275 = vsel %vm408, %v1273, 0.0
    %1276 = vadd.xlane.f32.xlu0 %v1275
    %v1277 = vpop.xlane.xlu0 %1276
    %v1278 = vmul.f32 %v1277, %v412
    %v1279 = vsub.f32 %v1247, %v1278
    %v1280 = vmul.f32 %v1279, %v1279
    %1282 = vrot.lane.b32.xlu0 %v1280, 96
    %v1283 = vpop.permute.xlu0 %1282
    %v1285 = vsel %vm408, %v1283, 0.0
    %1286 = vadd.xlane.f32.xlu0 %v1285
    %v1287 = vpop.xlane.xlu0 %1286
    %v1288 = vmul.f32 %v1287, %v412
    %v1289 = vadd.f32 %v1288, 1e-05
    %v1290 = vrsqrt.pop %v1289
    %v1291 = vmul.f32 %v1279, %v1290
    %v1292 = vlaneseq
    %v1293 = vshrl.u32 %v1292, 7
    %v1294 = vsub.s32 0, %v1293
    %v1295 = vrot.slane %v124, %v1294
    %1297 = vrot.lane.b32.xlu0 %v1295, 32
    %v1298 = vpop.permute.xlu0 %1297
    %v1300 = vmul.f32 %v1291, %v1298
    %v1301 = vlaneseq
    %v1302 = vshrl.u32 %v1301, 7
    %v1303 = vsub.s32 0, %v1302
    %v1304 = vrot.slane %v128, %v1303
    %1306 = vrot.lane.b32.xlu0 %v1304, 32
    %v1307 = vpop.permute.xlu0 %1306
    %v1309 = vadd.f32 %v1300, %v1307
    %v1310 = vld [vmem:[%s982 + $0x40] sm:$0xf]
    %v1311 = vld [vmem:[%s982 + $0x44] sm:$0xf]
    %v1312 = vld [vmem:[%s982 + $0x48] sm:$0xf]
    %v1313 = vld [vmem:[%s982 + $0x4c] sm:$0xf]
    %v1314 = vpack.c.bf16 %v1270, %v1270
    %v1319 = vunpack.c.l.b16 %v1310
    %v1320 = vunpack.c.l.b16 %v1311
    %v1321 = vunpack.c.l.b16 %v1312
    %v1322 = vunpack.c.l.b16 %v1313
    %v1323 = vpack.c.b16 %v1320, %v1319
    %v1324 = vpack.c.b16 %v1322, %v1321
    %v1328 = vsel %vm136, %v1314, 0
    %1330 = vmatprep.subr.bf16.mxu0 0
    %1331 = vmatpush1.bf16.msra.mxu0 %v1323
    %1332 = vmatprep.subr.bf16.mxu0 0
    %1333 = vmatpush1.bf16.msra.mxu0 %v1324
    %1334 = vmatprep.subr.bf16.mxu0 0
    %1335 = vmatpush1.bf16.msra.mxu0 0
    %1336 = vmatprep.subr.bf16.mxu0 0
    %1337 = vmatpush1.bf16.msra.mxu0 0
    %1338 = vmatprep.subr.bf16.mxu0 0
    %1339 = vmatpush1.bf16.msra.mxu0 0
    %1340 = vmatprep.subr.bf16.mxu0 0
    %1341 = vmatpush1.bf16.msra.mxu0 0
    %1342 = vmatprep.subr.bf16.mxu0 0
    %1343 = vmatpush1.bf16.msra.mxu0 0
    %1344 = vmatprep.subr.bf16.mxu0 0
    %1345 = vmatpush1.bf16.msra.mxu0 0
    %1346 = vmatprep.subr.bf16.mxu0 0
    %1347 = vmatpush1.bf16.msra.mxu0 0
    %1348 = vmatprep.subr.bf16.mxu0 0
    %1349 = vmatpush1.bf16.msra.mxu0 0
    %1350 = vmatprep.subr.bf16.mxu0 0
    %1351 = vmatpush1.bf16.msra.mxu0 0
    %1352 = vmatprep.subr.bf16.mxu0 0
    %1353 = vmatpush1.bf16.msra.mxu0 0
    %1354 = vmatprep.subr.bf16.mxu0 0
    %1355 = vmatpush1.bf16.msra.mxu0 0
    %1356 = vmatprep.subr.bf16.mxu0 0
    %1357 = vmatpush1.bf16.msra.mxu0 0
    %1358 = vmatprep.subr.bf16.mxu0 0
    %1359 = vmatpush1.bf16.msra.mxu0 0
    %1360 = vmatprep.subr.bf16.mxu0 0
    %1361 = vmatpush1.bf16.msra.mxu0 0
    %1362 = vmatprep.mubr.bf16.mxu0 0
    %1363 = vmatmul.mubr.bf16.gmra.mrb[0].mxu0 %v1328
    %v1364 = vpop.f32.mrb[0].mxu0
    %v1365 = vadd.f32 %v68, %v1364
    %v1366 = vpop.f32.mrb[0].mxu0
    %v1367 = vpop.f32.mrb[0].mxu0
    %v1368 = vpop.f32.mrb[0].mxu0
    %1369 = vdwg.mxu0
    %v1370 = vxor.u32 %v1365, 2147483648
    %v1371 = vmul.f32 %v1370, 1.442695
    %v1372 = vpow.pop %v1371
    %v1373 = vadd.f32 %v1372, 1.0
    %v1374 = vrcp.pop %v1373
    %v1375 = vmul.f32 1.0, %v1374
    %v1376 = vmul.f32 %v1375, 2.0
    %v1377 = vsub.f32 %v1376, 1.0
    %v1378 = vmul.f32 %v1375, %v1309
    %1380 = vrot.lane.b32.xlu0 %v1377, 64
    %v1381 = vpop.permute.xlu0 %1380
    %v1383 = vmul.f32 %v1375, %v1381
    %1385 = vrot.lane.b32.xlu0 %v1383, 32
    %v1386 = vpop.permute.xlu0 %1385
    %v1388 = vadd.f32 %v1378, %v1386
    %v1389 = vtanh.pop %v1388
    %1391 = vrot.lane.b32.xlu0 %v1389, 64
    %v1392 = vpop.permute.xlu0 %1391
    %v1394 = vmul.f32 %v1375, %v1392
    %1396 = vrot.lane.b32.xlu0 %v1394, 32
    %v1397 = vpop.permute.xlu0 %1396
    %v1399 = vsel %vm136, %v1397, %v1388
    %v1400 = vsel %vm142, %v1399, %v140
    %s1401 = scalar_lea.vmem %s2, 240
    %v1402 = vld [vmem:[%s1401] sm:$0xf]
    %v1403 = vld [vmem:[%s1401 + $0x4] sm:$0xf]
    %v1404 = vld [vmem:[%s1401 + $0x8] sm:$0xf]
    %v1405 = vld [vmem:[%s1401 + $0xc] sm:$0xf]
    %v1406 = vld [vmem:[%s1401 + $0x10] sm:$0xf]
    %v1407 = vld [vmem:[%s1401 + $0x14] sm:$0xf]
    %v1408 = vld [vmem:[%s1401 + $0x18] sm:$0xf]
    %v1409 = vld [vmem:[%s1401 + $0x1c] sm:$0xf]
    %v1410 = vld [vmem:[%s1401 + $0x20] sm:$0xf]
    %v1411 = vld [vmem:[%s1401 + $0x24] sm:$0xf]
    %v1412 = vld [vmem:[%s1401 + $0x28] sm:$0xf]
    %v1413 = vld [vmem:[%s1401 + $0x2c] sm:$0xf]
    %v1414 = vld [vmem:[%s1401 + $0x30] sm:$0xf]
    %v1415 = vld [vmem:[%s1401 + $0x34] sm:$0xf]
    %v1416 = vld [vmem:[%s1401 + $0x38] sm:$0xf]
    %v1417 = vld [vmem:[%s1401 + $0x3c] sm:$0xf]
    %v1418 = vpack.c.bf16 %v1400, %v1400
    %v1435 = vunpack.c.l.b16 %v1402
    %v1436 = vunpack.c.l.b16 %v1403
    %v1437 = vunpack.c.l.b16 %v1404
    %v1438 = vunpack.c.l.b16 %v1405
    %v1439 = vunpack.c.l.b16 %v1406
    %v1440 = vunpack.c.l.b16 %v1407
    %v1441 = vunpack.c.l.b16 %v1408
    %v1442 = vunpack.c.l.b16 %v1409
    %v1443 = vunpack.c.l.b16 %v1410
    %v1444 = vunpack.c.l.b16 %v1411
    %v1445 = vunpack.c.l.b16 %v1412
    %v1446 = vunpack.c.l.b16 %v1413
    %v1447 = vunpack.c.l.b16 %v1414
    %v1448 = vunpack.c.l.b16 %v1415
    %v1449 = vunpack.c.l.b16 %v1416
    %v1450 = vunpack.c.l.b16 %v1417
    %v1451 = vpack.c.b16 %v1436, %v1435
    %v1452 = vpack.c.b16 %v1438, %v1437
    %v1453 = vpack.c.b16 %v1440, %v1439
    %v1454 = vpack.c.b16 %v1442, %v1441
    %v1455 = vpack.c.b16 %v1444, %v1443
    %v1456 = vpack.c.b16 %v1446, %v1445
    %v1457 = vpack.c.b16 %v1448, %v1447
    %v1458 = vpack.c.b16 %v1450, %v1449
    %1467 = vmatprep.subr.bf16.mxu0 0
    %1468 = vmatpush1.bf16.msra.mxu0 %v1451
    %1469 = vmatprep.subr.bf16.mxu0 0
    %1470 = vmatpush1.bf16.msra.mxu0 %v1452
    %1471 = vmatprep.subr.bf16.mxu0 0
    %1472 = vmatpush1.bf16.msra.mxu0 %v1453
    %1473 = vmatprep.subr.bf16.mxu0 0
    %1474 = vmatpush1.bf16.msra.mxu0 %v1454
    %1475 = vmatprep.subr.bf16.mxu0 0
    %1476 = vmatpush1.bf16.msra.mxu0 %v1455
    %1477 = vmatprep.subr.bf16.mxu0 0
    %1478 = vmatpush1.bf16.msra.mxu0 %v1456
    %1479 = vmatprep.subr.bf16.mxu0 0
    %1480 = vmatpush1.bf16.msra.mxu0 %v1457
    %1481 = vmatprep.subr.bf16.mxu0 0
    %1482 = vmatpush1.bf16.msra.mxu0 %v1458
    %1483 = vmatprep.subr.bf16.mxu0 0
    %1484 = vmatpush1.bf16.msra.mxu0 0
    %1485 = vmatprep.subr.bf16.mxu0 0
    %1486 = vmatpush1.bf16.msra.mxu0 0
    %1487 = vmatprep.subr.bf16.mxu0 0
    %1488 = vmatpush1.bf16.msra.mxu0 0
    %1489 = vmatprep.subr.bf16.mxu0 0
    %1490 = vmatpush1.bf16.msra.mxu0 0
    %1491 = vmatprep.subr.bf16.mxu0 0
    %1492 = vmatpush1.bf16.msra.mxu0 0
    %1493 = vmatprep.subr.bf16.mxu0 0
    %1494 = vmatpush1.bf16.msra.mxu0 0
    %1495 = vmatprep.subr.bf16.mxu0 0
    %1496 = vmatpush1.bf16.msra.mxu0 0
    %1497 = vmatprep.subr.bf16.mxu0 0
    %1498 = vmatpush1.bf16.msra.mxu0 0
    %1499 = vmatprep.mubr.bf16.mxu0 0
    %1500 = vmatmul.mubr.bf16.gmra.mrb[0].mxu0 %v1418
    %v1501 = vpop.f32.mrb[0].mxu0
    %v1502 = vadd.f32 %v53, %v1501
    %v1503 = vpop.f32.mrb[0].mxu0
    %v1504 = vpop.f32.mrb[0].mxu0
    %v1505 = vpop.f32.mrb[0].mxu0
    %1506 = vdwg.mxu0
    %v1507 = vmax.f32 %v1502, 0.0
    %s1508 = scalar_lea.vmem %s3, 192
    %v1509 = vld [vmem:[%s1508] sm:$0xf]
    %v1510 = vld [vmem:[%s1508 + $0x4] sm:$0xf]
    %v1511 = vld [vmem:[%s1508 + $0x8] sm:$0xf]
    %v1512 = vld [vmem:[%s1508 + $0xc] sm:$0xf]
    %v1513 = vld [vmem:[%s1508 + $0x10] sm:$0xf]
    %v1514 = vld [vmem:[%s1508 + $0x14] sm:$0xf]
    %v1515 = vld [vmem:[%s1508 + $0x18] sm:$0xf]
    %v1516 = vld [vmem:[%s1508 + $0x1c] sm:$0xf]
    %v1517 = vpack.c.bf16 %v1507, %v1507
    %v1526 = vunpack.c.l.b16 %v1509
    %v1527 = vunpack.c.l.b16 %v1510
    %v1528 = vunpack.c.l.b16 %v1511
    %v1529 = vunpack.c.l.b16 %v1512
    %v1530 = vunpack.c.l.b16 %v1513
    %v1531 = vunpack.c.l.b16 %v1514
    %v1532 = vunpack.c.l.b16 %v1515
    %v1533 = vunpack.c.l.b16 %v1516
    %v1534 = vpack.c.b16 %v1527, %v1526
    %v1535 = vpack.c.b16 %v1529, %v1528
    %v1536 = vpack.c.b16 %v1531, %v1530
    %v1537 = vpack.c.b16 %v1533, %v1532
    %v1543 = vsel %vm142, %v1517, 0
    %1545 = vmatprep.subr.bf16.mxu0 0
    %1546 = vmatpush1.bf16.msra.mxu0 %v1534
    %1547 = vmatprep.subr.bf16.mxu0 0
    %1548 = vmatpush1.bf16.msra.mxu0 %v1535
    %1549 = vmatprep.subr.bf16.mxu0 0
    %1550 = vmatpush1.bf16.msra.mxu0 %v1536
    %1551 = vmatprep.subr.bf16.mxu0 0
    %1552 = vmatpush1.bf16.msra.mxu0 %v1537
    %1553 = vmatprep.subr.bf16.mxu0 0
    %1554 = vmatpush1.bf16.msra.mxu0 0
    %1555 = vmatprep.subr.bf16.mxu0 0
    %1556 = vmatpush1.bf16.msra.mxu0 0
    %1557 = vmatprep.subr.bf16.mxu0 0
    %1558 = vmatpush1.bf16.msra.mxu0 0
    %1559 = vmatprep.subr.bf16.mxu0 0
    %1560 = vmatpush1.bf16.msra.mxu0 0
    %1561 = vmatprep.subr.bf16.mxu0 0
    %1562 = vmatpush1.bf16.msra.mxu0 0
    %1563 = vmatprep.subr.bf16.mxu0 0
    %1564 = vmatpush1.bf16.msra.mxu0 0
    %1565 = vmatprep.subr.bf16.mxu0 0
    %1566 = vmatpush1.bf16.msra.mxu0 0
    %1567 = vmatprep.subr.bf16.mxu0 0
    %1568 = vmatpush1.bf16.msra.mxu0 0
    %1569 = vmatprep.subr.bf16.mxu0 0
    %1570 = vmatpush1.bf16.msra.mxu0 0
    %1571 = vmatprep.subr.bf16.mxu0 0
    %1572 = vmatpush1.bf16.msra.mxu0 0
    %1573 = vmatprep.subr.bf16.mxu0 0
    %1574 = vmatpush1.bf16.msra.mxu0 0
    %1575 = vmatprep.subr.bf16.mxu0 0
    %1576 = vmatpush1.bf16.msra.mxu0 0
    %1577 = vmatprep.mubr.bf16.mxu0 0
    %1578 = vmatmul.mubr.bf16.gmra.mrb[0].mxu0 %v1543
    %v1579 = vpop.f32.mrb[0].mxu0
    %v1580 = vadd.f32 %v93, %v1579
    %v1581 = vpop.f32.mrb[0].mxu0
    %v1582 = vpop.f32.mrb[0].mxu0
    %v1583 = vpop.f32.mrb[0].mxu0
    %1584 = vdwg.mxu0
    %v1585 = vmax.f32 %v1580, 0.0
    %v1586 = vld [vmem:[%s1508 + $0x20] sm:$0xf]
    %v1587 = vld [vmem:[%s1508 + $0x24] sm:$0xf]
    %v1588 = vld [vmem:[%s1508 + $0x28] sm:$0xf]
    %v1589 = vld [vmem:[%s1508 + $0x2c] sm:$0xf]
    %v1590 = vld [vmem:[%s1508 + $0x30] sm:$0xf]
    %v1591 = vld [vmem:[%s1508 + $0x34] sm:$0xf]
    %v1592 = vld [vmem:[%s1508 + $0x38] sm:$0xf]
    %v1593 = vld [vmem:[%s1508 + $0x3c] sm:$0xf]
    %v1594 = vpack.c.bf16 %v1585, %v1585
    %v1603 = vunpack.c.l.b16 %v1586
    %v1604 = vunpack.c.l.b16 %v1587
    %v1605 = vunpack.c.l.b16 %v1588
    %v1606 = vunpack.c.l.b16 %v1589
    %v1607 = vunpack.c.l.b16 %v1590
    %v1608 = vunpack.c.l.b16 %v1591
    %v1609 = vunpack.c.l.b16 %v1592
    %v1610 = vunpack.c.l.b16 %v1593
    %v1611 = vpack.c.b16 %v1604, %v1603
    %v1612 = vpack.c.b16 %v1606, %v1605
    %v1613 = vpack.c.b16 %v1608, %v1607
    %v1614 = vpack.c.b16 %v1610, %v1609
    %v1620 = vsel %vm142, %v1594, 0
    %1622 = vmatprep.subr.bf16.mxu0 0
    %1623 = vmatpush1.bf16.msra.mxu0 %v1611
    %1624 = vmatprep.subr.bf16.mxu0 0
    %1625 = vmatpush1.bf16.msra.mxu0 %v1612
    %1626 = vmatprep.subr.bf16.mxu0 0
    %1627 = vmatpush1.bf16.msra.mxu0 %v1613
    %1628 = vmatprep.subr.bf16.mxu0 0
    %1629 = vmatpush1.bf16.msra.mxu0 %v1614
    %1630 = vmatprep.subr.bf16.mxu0 0
    %1631 = vmatpush1.bf16.msra.mxu0 0
    %1632 = vmatprep.subr.bf16.mxu0 0
    %1633 = vmatpush1.bf16.msra.mxu0 0
    %1634 = vmatprep.subr.bf16.mxu0 0
    %1635 = vmatpush1.bf16.msra.mxu0 0
    %1636 = vmatprep.subr.bf16.mxu0 0
    %1637 = vmatpush1.bf16.msra.mxu0 0
    %1638 = vmatprep.subr.bf16.mxu0 0
    %1639 = vmatpush1.bf16.msra.mxu0 0
    %1640 = vmatprep.subr.bf16.mxu0 0
    %1641 = vmatpush1.bf16.msra.mxu0 0
    %1642 = vmatprep.subr.bf16.mxu0 0
    %1643 = vmatpush1.bf16.msra.mxu0 0
    %1644 = vmatprep.subr.bf16.mxu0 0
    %1645 = vmatpush1.bf16.msra.mxu0 0
    %1646 = vmatprep.subr.bf16.mxu0 0
    %1647 = vmatpush1.bf16.msra.mxu0 0
    %1648 = vmatprep.subr.bf16.mxu0 0
    %1649 = vmatpush1.bf16.msra.mxu0 0
    %1650 = vmatprep.subr.bf16.mxu0 0
    %1651 = vmatpush1.bf16.msra.mxu0 0
    %1652 = vmatprep.subr.bf16.mxu0 0
    %1653 = vmatpush1.bf16.msra.mxu0 0
    %1654 = vmatprep.mubr.bf16.mxu0 0
    %1655 = vmatmul.mubr.bf16.gmra.mrb[0].mxu0 %v1620
    %v1656 = vpop.f32.mrb[0].mxu0
    %v1657 = vadd.f32 %v113, %v1656
    %v1658 = vpop.f32.mrb[0].mxu0
    %v1659 = vpop.f32.mrb[0].mxu0
    %v1660 = vpop.f32.mrb[0].mxu0
    %1661 = vdwg.mxu0
    %1663 = vrot.lane.b32.xlu0 %v1502, 64
    %v1664 = vpop.permute.xlu0 %1663
    %v1666 = vadd.f32 %v1657, %v1664
    %v1667 = vsel %vm408, %v1666, 0.0
    %1668 = vadd.xlane.f32.xlu0 %v1667
    %v1669 = vpop.xlane.xlu0 %1668
    %v1670 = vmul.f32 %v1669, %v412
    %v1671 = vsub.f32 %v1666, %v1670
    %v1672 = vmul.f32 %v1671, %v1671
    %v1673 = vsel %vm408, %v1672, 0.0
    %1674 = vadd.xlane.f32.xlu0 %v1673
    %v1675 = vpop.xlane.xlu0 %1674
    %v1676 = vmul.f32 %v1675, %v412
    %v1677 = vadd.f32 %v1676, 1e-05
    %v1678 = vrsqrt.pop %v1677
    %v1679 = vmul.f32 %v1671, %v1678
    %v1680 = vlaneseq
    %v1681 = vshrl.u32 %v1680, 7
    %v1682 = vsub.s32 0, %v1681
    %v1683 = vrot.slane %v117, %v1682
    %v1684 = vmul.f32 %v1679, %v1683
    %v1685 = vlaneseq
    %v1686 = vshrl.u32 %v1685, 7
    %v1687 = vsub.s32 0, %v1686
    %v1688 = vrot.slane %v121, %v1687
    %v1689 = vadd.f32 %v1684, %v1688
    %1691 = vrot.lane.b32.xlu0 %v1666, 96
    %v1692 = vpop.permute.xlu0 %1691
    %v1694 = vsel %vm408, %v1692, 0.0
    %1695 = vadd.xlane.f32.xlu0 %v1694
    %v1696 = vpop.xlane.xlu0 %1695
    %v1697 = vmul.f32 %v1696, %v412
    %v1698 = vsub.f32 %v1666, %v1697
    %v1699 = vmul.f32 %v1698, %v1698
    %1701 = vrot.lane.b32.xlu0 %v1699, 96
    %v1702 = vpop.permute.xlu0 %1701
    %v1704 = vsel %vm408, %v1702, 0.0
    %1705 = vadd.xlane.f32.xlu0 %v1704
    %v1706 = vpop.xlane.xlu0 %1705
    %v1707 = vmul.f32 %v1706, %v412
    %v1708 = vadd.f32 %v1707, 1e-05
    %v1709 = vrsqrt.pop %v1708
    %v1710 = vmul.f32 %v1698, %v1709
    %v1711 = vlaneseq
    %v1712 = vshrl.u32 %v1711, 7
    %v1713 = vsub.s32 0, %v1712
    %v1714 = vrot.slane %v125, %v1713
    %1716 = vrot.lane.b32.xlu0 %v1714, 32
    %v1717 = vpop.permute.xlu0 %1716
    %v1719 = vmul.f32 %v1710, %v1717
    %v1720 = vlaneseq
    %v1721 = vshrl.u32 %v1720, 7
    %v1722 = vsub.s32 0, %v1721
    %v1723 = vrot.slane %v129, %v1722
    %1725 = vrot.lane.b32.xlu0 %v1723, 32
    %v1726 = vpop.permute.xlu0 %1725
    %v1728 = vadd.f32 %v1719, %v1726
    %v1729 = vld [vmem:[%s1401 + $0x40] sm:$0xf]
    %v1730 = vld [vmem:[%s1401 + $0x44] sm:$0xf]
    %v1731 = vld [vmem:[%s1401 + $0x48] sm:$0xf]
    %v1732 = vld [vmem:[%s1401 + $0x4c] sm:$0xf]
    %v1733 = vpack.c.bf16 %v1689, %v1689
    %v1738 = vunpack.c.l.b16 %v1729
    %v1739 = vunpack.c.l.b16 %v1730
    %v1740 = vunpack.c.l.b16 %v1731
    %v1741 = vunpack.c.l.b16 %v1732
    %v1742 = vpack.c.b16 %v1739, %v1738
    %v1743 = vpack.c.b16 %v1741, %v1740
    %v1747 = vsel %vm136, %v1733, 0
    %1749 = vmatprep.subr.bf16.mxu0 0
    %1750 = vmatpush1.bf16.msra.mxu0 %v1742
    %1751 = vmatprep.subr.bf16.mxu0 0
    %1752 = vmatpush1.bf16.msra.mxu0 %v1743
    %1753 = vmatprep.subr.bf16.mxu0 0
    %1754 = vmatpush1.bf16.msra.mxu0 0
    %1755 = vmatprep.subr.bf16.mxu0 0
    %1756 = vmatpush1.bf16.msra.mxu0 0
    %1757 = vmatprep.subr.bf16.mxu0 0
    %1758 = vmatpush1.bf16.msra.mxu0 0
    %1759 = vmatprep.subr.bf16.mxu0 0
    %1760 = vmatpush1.bf16.msra.mxu0 0
    %1761 = vmatprep.subr.bf16.mxu0 0
    %1762 = vmatpush1.bf16.msra.mxu0 0
    %1763 = vmatprep.subr.bf16.mxu0 0
    %1764 = vmatpush1.bf16.msra.mxu0 0
    %1765 = vmatprep.subr.bf16.mxu0 0
    %1766 = vmatpush1.bf16.msra.mxu0 0
    %1767 = vmatprep.subr.bf16.mxu0 0
    %1768 = vmatpush1.bf16.msra.mxu0 0
    %1769 = vmatprep.subr.bf16.mxu0 0
    %1770 = vmatpush1.bf16.msra.mxu0 0
    %1771 = vmatprep.subr.bf16.mxu0 0
    %1772 = vmatpush1.bf16.msra.mxu0 0
    %1773 = vmatprep.subr.bf16.mxu0 0
    %1774 = vmatpush1.bf16.msra.mxu0 0
    %1775 = vmatprep.subr.bf16.mxu0 0
    %1776 = vmatpush1.bf16.msra.mxu0 0
    %1777 = vmatprep.subr.bf16.mxu0 0
    %1778 = vmatpush1.bf16.msra.mxu0 0
    %1779 = vmatprep.subr.bf16.mxu0 0
    %1780 = vmatpush1.bf16.msra.mxu0 0
    %1781 = vmatprep.mubr.bf16.mxu0 0
    %1782 = vmatmul.mubr.bf16.gmra.mrb[0].mxu0 %v1747
    %v1783 = vpop.f32.mrb[0].mxu0
    %v1784 = vadd.f32 %v73, %v1783
    %v1785 = vpop.f32.mrb[0].mxu0
    %v1786 = vpop.f32.mrb[0].mxu0
    %v1787 = vpop.f32.mrb[0].mxu0
    %1788 = vdwg.mxu0
    %v1789 = vxor.u32 %v1784, 2147483648
    %v1790 = vmul.f32 %v1789, 1.442695
    %v1791 = vpow.pop %v1790
    %v1792 = vadd.f32 %v1791, 1.0
    %v1793 = vrcp.pop %v1792
    %v1794 = vmul.f32 1.0, %v1793
    %v1795 = vmul.f32 %v1794, 2.0
    %v1796 = vsub.f32 %v1795, 1.0
    %v1797 = vmul.f32 %v1794, %v1728
    %1799 = vrot.lane.b32.xlu0 %v1796, 64
    %v1800 = vpop.permute.xlu0 %1799
    %v1802 = vmul.f32 %v1794, %v1800
    %1804 = vrot.lane.b32.xlu0 %v1802, 32
    %v1805 = vpop.permute.xlu0 %1804
    %v1807 = vadd.f32 %v1797, %v1805
    %v1808 = vtanh.pop %v1807
    %1810 = vrot.lane.b32.xlu0 %v1808, 64
    %v1811 = vpop.permute.xlu0 %1810
    %v1813 = vmul.f32 %v1794, %v1811
    %1815 = vrot.lane.b32.xlu0 %v1813, 32
    %v1816 = vpop.permute.xlu0 %1815
    %v1818 = vsel %vm136, %v1816, %v1807
    %1820 = vrot.lane.b32.xlu0 %v561, 64
    %v1821 = vpop.permute.xlu0 %1820
    %v1823 = vsel %vm142, %v1818, %v1821
    %v1824 = vpack.c.bf16 %v1823, %v1823
    %1825 = vmatprep.subr.bf16.mxu0 0
    %1826 = vmatpush1.bf16.msra.mxu0 %v193
    %1827 = vmatprep.subr.bf16.mxu0 0
    %1828 = vmatpush1.bf16.msra.mxu0 %v194
    %1829 = vmatprep.subr.bf16.mxu0 0
    %1830 = vmatpush1.bf16.msra.mxu0 %v195
    %1831 = vmatprep.subr.bf16.mxu0 0
    %1832 = vmatpush1.bf16.msra.mxu0 %v196
    %1833 = vmatprep.subr.bf16.mxu0 0
    %1834 = vmatpush1.bf16.msra.mxu0 %v197
    %1835 = vmatprep.subr.bf16.mxu0 0
    %1836 = vmatpush1.bf16.msra.mxu0 %v198
    %1837 = vmatprep.subr.bf16.mxu0 0
    %1838 = vmatpush1.bf16.msra.mxu0 %v199
    %1839 = vmatprep.subr.bf16.mxu0 0
    %1840 = vmatpush1.bf16.msra.mxu0 %v200
    %1841 = vmatprep.subr.bf16.mxu0 0
    %1842 = vmatpush1.bf16.msra.mxu0 0
    %1843 = vmatprep.subr.bf16.mxu0 0
    %1844 = vmatpush1.bf16.msra.mxu0 0
    %1845 = vmatprep.subr.bf16.mxu0 0
    %1846 = vmatpush1.bf16.msra.mxu0 0
    %1847 = vmatprep.subr.bf16.mxu0 0
    %1848 = vmatpush1.bf16.msra.mxu0 0
    %1849 = vmatprep.subr.bf16.mxu0 0
    %1850 = vmatpush1.bf16.msra.mxu0 0
    %1851 = vmatprep.subr.bf16.mxu0 0
    %1852 = vmatpush1.bf16.msra.mxu0 0
    %1853 = vmatprep.subr.bf16.mxu0 0
    %1854 = vmatpush1.bf16.msra.mxu0 0
    %1855 = vmatprep.subr.bf16.mxu0 0
    %1856 = vmatpush1.bf16.msra.mxu0 0
    %1857 = vmatprep.mubr.bf16.mxu0 0
    %1858 = vmatmul.mubr.bf16.gmra.mrb[0].mxu0 %v1824
    %v1859 = vpop.f32.mrb[0].mxu0
    %v1860 = vadd.f32 %v35, %v1859
    %v1861 = vpop.f32.mrb[0].mxu0
    %v1862 = vpop.f32.mrb[0].mxu0
    %v1863 = vpop.f32.mrb[0].mxu0
    %1864 = vdwg.mxu0
    %v1865 = vmax.f32 %v1860, 0.0
    %v1866 = vpack.c.bf16 %v1865, %v1865
    %v1868 = vsel %vm142, %v1866, 0
    %1870 = vmatprep.subr.bf16.mxu0 0
    %1871 = vmatpush1.bf16.msra.mxu0 %v275
    %1872 = vmatprep.subr.bf16.mxu0 0
    %1873 = vmatpush1.bf16.msra.mxu0 %v276
    %1874 = vmatprep.subr.bf16.mxu0 0
    %1875 = vmatpush1.bf16.msra.mxu0 %v277
    %1876 = vmatprep.subr.bf16.mxu0 0
    %1877 = vmatpush1.bf16.msra.mxu0 %v278
    %1878 = vmatprep.subr.bf16.mxu0 0
    %1879 = vmatpush1.bf16.msra.mxu0 0
    %1880 = vmatprep.subr.bf16.mxu0 0
    %1881 = vmatpush1.bf16.msra.mxu0 0
    %1882 = vmatprep.subr.bf16.mxu0 0
    %1883 = vmatpush1.bf16.msra.mxu0 0
    %1884 = vmatprep.subr.bf16.mxu0 0
    %1885 = vmatpush1.bf16.msra.mxu0 0
    %1886 = vmatprep.subr.bf16.mxu0 0
    %1887 = vmatpush1.bf16.msra.mxu0 0
    %1888 = vmatprep.subr.bf16.mxu0 0
    %1889 = vmatpush1.bf16.msra.mxu0 0
    %1890 = vmatprep.subr.bf16.mxu0 0
    %1891 = vmatpush1.bf16.msra.mxu0 0
    %1892 = vmatprep.subr.bf16.mxu0 0
    %1893 = vmatpush1.bf16.msra.mxu0 0
    %1894 = vmatprep.subr.bf16.mxu0 0
    %1895 = vmatpush1.bf16.msra.mxu0 0
    %1896 = vmatprep.subr.bf16.mxu0 0
    %1897 = vmatpush1.bf16.msra.mxu0 0
    %1898 = vmatprep.subr.bf16.mxu0 0
    %1899 = vmatpush1.bf16.msra.mxu0 0
    %1900 = vmatprep.subr.bf16.mxu0 0
    %1901 = vmatpush1.bf16.msra.mxu0 0
    %1902 = vmatprep.mubr.bf16.mxu0 0
    %1903 = vmatmul.mubr.bf16.gmra.mrb[0].mxu0 %v1868
    %v1904 = vpop.f32.mrb[0].mxu0
    %v1905 = vadd.f32 %v78, %v1904
    %v1906 = vpop.f32.mrb[0].mxu0
    %v1907 = vpop.f32.mrb[0].mxu0
    %v1908 = vpop.f32.mrb[0].mxu0
    %1909 = vdwg.mxu0
    %v1910 = vmax.f32 %v1905, 0.0
    %v1911 = vpack.c.bf16 %v1910, %v1910
    %v1913 = vsel %vm142, %v1911, 0
    %1915 = vmatprep.subr.bf16.mxu0 0
    %1916 = vmatpush1.bf16.msra.mxu0 %v352
    %1917 = vmatprep.subr.bf16.mxu0 0
    %1918 = vmatpush1.bf16.msra.mxu0 %v353
    %1919 = vmatprep.subr.bf16.mxu0 0
    %1920 = vmatpush1.bf16.msra.mxu0 %v354
    %1921 = vmatprep.subr.bf16.mxu0 0
    %1922 = vmatpush1.bf16.msra.mxu0 %v355
    %1923 = vmatprep.subr.bf16.mxu0 0
    %1924 = vmatpush1.bf16.msra.mxu0 0
    %1925 = vmatprep.subr.bf16.mxu0 0
    %1926 = vmatpush1.bf16.msra.mxu0 0
    %1927 = vmatprep.subr.bf16.mxu0 0
    %1928 = vmatpush1.bf16.msra.mxu0 0
    %1929 = vmatprep.subr.bf16.mxu0 0
    %1930 = vmatpush1.bf16.msra.mxu0 0
    %1931 = vmatprep.subr.bf16.mxu0 0
    %1932 = vmatpush1.bf16.msra.mxu0 0
    %1933 = vmatprep.subr.bf16.mxu0 0
    %1934 = vmatpush1.bf16.msra.mxu0 0
    %1935 = vmatprep.subr.bf16.mxu0 0
    %1936 = vmatpush1.bf16.msra.mxu0 0
    %1937 = vmatprep.subr.bf16.mxu0 0
    %1938 = vmatpush1.bf16.msra.mxu0 0
    %1939 = vmatprep.subr.bf16.mxu0 0
    %1940 = vmatpush1.bf16.msra.mxu0 0
    %1941 = vmatprep.subr.bf16.mxu0 0
    %1942 = vmatpush1.bf16.msra.mxu0 0
    %1943 = vmatprep.subr.bf16.mxu0 0
    %1944 = vmatpush1.bf16.msra.mxu0 0
    %1945 = vmatprep.subr.bf16.mxu0 0
    %1946 = vmatpush1.bf16.msra.mxu0 0
    %1947 = vmatprep.mubr.bf16.mxu0 0
    %1948 = vmatmul.mubr.bf16.gmra.mrb[0].mxu0 %v1913
    %v1949 = vpop.f32.mrb[0].mxu0
    %v1950 = vadd.f32 %v98, %v1949
    %v1951 = vpop.f32.mrb[0].mxu0
    %v1952 = vpop.f32.mrb[0].mxu0
    %v1953 = vpop.f32.mrb[0].mxu0
    %1954 = vdwg.mxu0
    %1956 = vrot.lane.b32.xlu0 %v1860, 64
    %v1957 = vpop.permute.xlu0 %1956
    %v1959 = vadd.f32 %v1950, %v1957
    %v1960 = vsel %vm408, %v1959, 0.0
    %1961 = vadd.xlane.f32.xlu0 %v1960
    %v1962 = vpop.xlane.xlu0 %1961
    %v1963 = vmul.f32 %v1962, %v412
    %v1964 = vsub.f32 %v1959, %v1963
    %v1965 = vmul.f32 %v1964, %v1964
    %v1966 = vsel %vm408, %v1965, 0.0
    %1967 = vadd.xlane.f32.xlu0 %v1966
    %v1968 = vpop.xlane.xlu0 %1967
    %v1969 = vmul.f32 %v1968, %v412
    %v1970 = vadd.f32 %v1969, 1e-05
    %v1971 = vrsqrt.pop %v1970
    %v1972 = vmul.f32 %v1964, %v1971
    %v1973 = vmul.f32 %v1972, %v426
    %v1974 = vadd.f32 %v1973, %v431
    %1976 = vrot.lane.b32.xlu0 %v1959, 96
    %v1977 = vpop.permute.xlu0 %1976
    %v1979 = vsel %vm408, %v1977, 0.0
    %1980 = vadd.xlane.f32.xlu0 %v1979
    %v1981 = vpop.xlane.xlu0 %1980
    %v1982 = vmul.f32 %v1981, %v412
    %v1983 = vsub.f32 %v1959, %v1982
    %v1984 = vmul.f32 %v1983, %v1983
    %1986 = vrot.lane.b32.xlu0 %v1984, 96
    %v1987 = vpop.permute.xlu0 %1986
    %v1989 = vsel %vm408, %v1987, 0.0
    %1990 = vadd.xlane.f32.xlu0 %v1989
    %v1991 = vpop.xlane.xlu0 %1990
    %v1992 = vmul.f32 %v1991, %v412
    %v1993 = vadd.f32 %v1992, 1e-05
    %v1994 = vrsqrt.pop %v1993
    %v1995 = vmul.f32 %v1983, %v1994
    %v1996 = vmul.f32 %v1995, %v460
    %v1997 = vadd.f32 %v1996, %v469
    %v1998 = vpack.c.bf16 %v1974, %v1974
    %v2000 = vsel %vm136, %v1998, 0
    %2002 = vmatprep.subr.bf16.mxu0 0
    %2003 = vmatpush1.bf16.msra.mxu0 %v485
    %2004 = vmatprep.subr.bf16.mxu0 0
    %2005 = vmatpush1.bf16.msra.mxu0 %v486
    %2006 = vmatprep.subr.bf16.mxu0 0
    %2007 = vmatpush1.bf16.msra.mxu0 0
    %2008 = vmatprep.subr.bf16.mxu0 0
    %2009 = vmatpush1.bf16.msra.mxu0 0
    %2010 = vmatprep.subr.bf16.mxu0 0
    %2011 = vmatpush1.bf16.msra.mxu0 0
    %2012 = vmatprep.subr.bf16.mxu0 0
    %2013 = vmatpush1.bf16.msra.mxu0 0
    %2014 = vmatprep.subr.bf16.mxu0 0
    %2015 = vmatpush1.bf16.msra.mxu0 0
    %2016 = vmatprep.subr.bf16.mxu0 0
    %2017 = vmatpush1.bf16.msra.mxu0 0
    %2018 = vmatprep.subr.bf16.mxu0 0
    %2019 = vmatpush1.bf16.msra.mxu0 0
    %2020 = vmatprep.subr.bf16.mxu0 0
    %2021 = vmatpush1.bf16.msra.mxu0 0
    %2022 = vmatprep.subr.bf16.mxu0 0
    %2023 = vmatpush1.bf16.msra.mxu0 0
    %2024 = vmatprep.subr.bf16.mxu0 0
    %2025 = vmatpush1.bf16.msra.mxu0 0
    %2026 = vmatprep.subr.bf16.mxu0 0
    %2027 = vmatpush1.bf16.msra.mxu0 0
    %2028 = vmatprep.subr.bf16.mxu0 0
    %2029 = vmatpush1.bf16.msra.mxu0 0
    %2030 = vmatprep.subr.bf16.mxu0 0
    %2031 = vmatpush1.bf16.msra.mxu0 0
    %2032 = vmatprep.subr.bf16.mxu0 0
    %2033 = vmatpush1.bf16.msra.mxu0 0
    %2034 = vmatprep.mubr.bf16.mxu0 0
    %2035 = vmatmul.mubr.bf16.gmra.mrb[0].mxu0 %v2000
    %v2036 = vpop.f32.mrb[0].mxu0
    %v2037 = vadd.f32 %v58, %v2036
    %v2038 = vpop.f32.mrb[0].mxu0
    %v2039 = vpop.f32.mrb[0].mxu0
    %v2040 = vpop.f32.mrb[0].mxu0
    %2041 = vdwg.mxu0
    %v2042 = vxor.u32 %v2037, 2147483648
    %v2043 = vmul.f32 %v2042, 1.442695
    %v2044 = vpow.pop %v2043
    %v2045 = vadd.f32 %v2044, 1.0
    %v2046 = vrcp.pop %v2045
    %v2047 = vmul.f32 1.0, %v2046
    %v2048 = vmul.f32 %v2047, 2.0
    %v2049 = vsub.f32 %v2048, 1.0
    %v2050 = vmul.f32 %v2047, %v1997
    %2052 = vrot.lane.b32.xlu0 %v2049, 64
    %v2053 = vpop.permute.xlu0 %2052
    %v2055 = vmul.f32 %v2047, %v2053
    %2057 = vrot.lane.b32.xlu0 %v2055, 32
    %v2058 = vpop.permute.xlu0 %2057
    %v2060 = vadd.f32 %v2050, %v2058
    %v2061 = vtanh.pop %v2060
    %2063 = vrot.lane.b32.xlu0 %v2061, 64
    %v2064 = vpop.permute.xlu0 %2063
    %v2066 = vmul.f32 %v2047, %v2064
    %2068 = vrot.lane.b32.xlu0 %v2066, 32
    %v2069 = vpop.permute.xlu0 %2068
    %v2071 = vsel %vm136, %v2069, %v2060
    %2073 = vrot.lane.b32.xlu0 %v980, 64
    %v2074 = vpop.permute.xlu0 %2073
    %v2076 = vsel %vm142, %v2071, %v2074
    %v2077 = vpack.c.bf16 %v2076, %v2076
    %2078 = vmatprep.subr.bf16.mxu0 0
    %2079 = vmatpush1.bf16.msra.mxu0 %v613
    %2080 = vmatprep.subr.bf16.mxu0 0
    %2081 = vmatpush1.bf16.msra.mxu0 %v614
    %2082 = vmatprep.subr.bf16.mxu0 0
    %2083 = vmatpush1.bf16.msra.mxu0 %v615
    %2084 = vmatprep.subr.bf16.mxu0 0
    %2085 = vmatpush1.bf16.msra.mxu0 %v616
    %2086 = vmatprep.subr.bf16.mxu0 0
    %2087 = vmatpush1.bf16.msra.mxu0 %v617
    %2088 = vmatprep.subr.bf16.mxu0 0
    %2089 = vmatpush1.bf16.msra.mxu0 %v618
    %2090 = vmatprep.subr.bf16.mxu0 0
    %2091 = vmatpush1.bf16.msra.mxu0 %v619
    %2092 = vmatprep.subr.bf16.mxu0 0
    %2093 = vmatpush1.bf16.msra.mxu0 %v620
    %2094 = vmatprep.subr.bf16.mxu0 0
    %2095 = vmatpush1.bf16.msra.mxu0 0
    %2096 = vmatprep.subr.bf16.mxu0 0
    %2097 = vmatpush1.bf16.msra.mxu0 0
    %2098 = vmatprep.subr.bf16.mxu0 0
    %2099 = vmatpush1.bf16.msra.mxu0 0
    %2100 = vmatprep.subr.bf16.mxu0 0
    %2101 = vmatpush1.bf16.msra.mxu0 0
    %2102 = vmatprep.subr.bf16.mxu0 0
    %2103 = vmatpush1.bf16.msra.mxu0 0
    %2104 = vmatprep.subr.bf16.mxu0 0
    %2105 = vmatpush1.bf16.msra.mxu0 0
    %2106 = vmatprep.subr.bf16.mxu0 0
    %2107 = vmatpush1.bf16.msra.mxu0 0
    %2108 = vmatprep.subr.bf16.mxu0 0
    %2109 = vmatpush1.bf16.msra.mxu0 0
    %2110 = vmatprep.mubr.bf16.mxu0 0
    %2111 = vmatmul.mubr.bf16.gmra.mrb[0].mxu0 %v2077
    %v2112 = vpop.f32.mrb[0].mxu0
    %v2113 = vadd.f32 %v41, %v2112
    %v2114 = vpop.f32.mrb[0].mxu0
    %v2115 = vpop.f32.mrb[0].mxu0
    %v2116 = vpop.f32.mrb[0].mxu0
    %2117 = vdwg.mxu0
    %v2118 = vmax.f32 %v2113, 0.0
    %v2119 = vpack.c.bf16 %v2118, %v2118
    %v2121 = vsel %vm142, %v2119, 0
    %2123 = vmatprep.subr.bf16.mxu0 0
    %2124 = vmatpush1.bf16.msra.mxu0 %v696
    %2125 = vmatprep.subr.bf16.mxu0 0
    %2126 = vmatpush1.bf16.msra.mxu0 %v697
    %2127 = vmatprep.subr.bf16.mxu0 0
    %2128 = vmatpush1.bf16.msra.mxu0 %v698
    %2129 = vmatprep.subr.bf16.mxu0 0
    %2130 = vmatpush1.bf16.msra.mxu0 %v699
    %2131 = vmatprep.subr.bf16.mxu0 0
    %2132 = vmatpush1.bf16.msra.mxu0 0
    %2133 = vmatprep.subr.bf16.mxu0 0
    %2134 = vmatpush1.bf16.msra.mxu0 0
    %2135 = vmatprep.subr.bf16.mxu0 0
    %2136 = vmatpush1.bf16.msra.mxu0 0
    %2137 = vmatprep.subr.bf16.mxu0 0
    %2138 = vmatpush1.bf16.msra.mxu0 0
    %2139 = vmatprep.subr.bf16.mxu0 0
    %2140 = vmatpush1.bf16.msra.mxu0 0
    %2141 = vmatprep.subr.bf16.mxu0 0
    %2142 = vmatpush1.bf16.msra.mxu0 0
    %2143 = vmatprep.subr.bf16.mxu0 0
    %2144 = vmatpush1.bf16.msra.mxu0 0
    %2145 = vmatprep.subr.bf16.mxu0 0
    %2146 = vmatpush1.bf16.msra.mxu0 0
    %2147 = vmatprep.subr.bf16.mxu0 0
    %2148 = vmatpush1.bf16.msra.mxu0 0
    %2149 = vmatprep.subr.bf16.mxu0 0
    %2150 = vmatpush1.bf16.msra.mxu0 0
    %2151 = vmatprep.subr.bf16.mxu0 0
    %2152 = vmatpush1.bf16.msra.mxu0 0
    %2153 = vmatprep.subr.bf16.mxu0 0
    %2154 = vmatpush1.bf16.msra.mxu0 0
    %2155 = vmatprep.mubr.bf16.mxu0 0
    %2156 = vmatmul.mubr.bf16.gmra.mrb[0].mxu0 %v2121
    %v2157 = vpop.f32.mrb[0].mxu0
    %v2158 = vadd.f32 %v83, %v2157
    %v2159 = vpop.f32.mrb[0].mxu0
    %v2160 = vpop.f32.mrb[0].mxu0
    %v2161 = vpop.f32.mrb[0].mxu0
    %2162 = vdwg.mxu0
    %v2163 = vmax.f32 %v2158, 0.0
    %v2164 = vpack.c.bf16 %v2163, %v2163
    %v2166 = vsel %vm142, %v2164, 0
    %2168 = vmatprep.subr.bf16.mxu0 0
    %2169 = vmatpush1.bf16.msra.mxu0 %v773
    %2170 = vmatprep.subr.bf16.mxu0 0
    %2171 = vmatpush1.bf16.msra.mxu0 %v774
    %2172 = vmatprep.subr.bf16.mxu0 0
    %2173 = vmatpush1.bf16.msra.mxu0 %v775
    %2174 = vmatprep.subr.bf16.mxu0 0
    %2175 = vmatpush1.bf16.msra.mxu0 %v776
    %2176 = vmatprep.subr.bf16.mxu0 0
    %2177 = vmatpush1.bf16.msra.mxu0 0
    %2178 = vmatprep.subr.bf16.mxu0 0
    %2179 = vmatpush1.bf16.msra.mxu0 0
    %2180 = vmatprep.subr.bf16.mxu0 0
    %2181 = vmatpush1.bf16.msra.mxu0 0
    %2182 = vmatprep.subr.bf16.mxu0 0
    %2183 = vmatpush1.bf16.msra.mxu0 0
    %2184 = vmatprep.subr.bf16.mxu0 0
    %2185 = vmatpush1.bf16.msra.mxu0 0
    %2186 = vmatprep.subr.bf16.mxu0 0
    %2187 = vmatpush1.bf16.msra.mxu0 0
    %2188 = vmatprep.subr.bf16.mxu0 0
    %2189 = vmatpush1.bf16.msra.mxu0 0
    %2190 = vmatprep.subr.bf16.mxu0 0
    %2191 = vmatpush1.bf16.msra.mxu0 0
    %2192 = vmatprep.subr.bf16.mxu0 0
    %2193 = vmatpush1.bf16.msra.mxu0 0
    %2194 = vmatprep.subr.bf16.mxu0 0
    %2195 = vmatpush1.bf16.msra.mxu0 0
    %2196 = vmatprep.subr.bf16.mxu0 0
    %2197 = vmatpush1.bf16.msra.mxu0 0
    %2198 = vmatprep.subr.bf16.mxu0 0
    %2199 = vmatpush1.bf16.msra.mxu0 0
    %2200 = vmatprep.mubr.bf16.mxu0 0
    %2201 = vmatmul.mubr.bf16.gmra.mrb[0].mxu0 %v2166
    %v2202 = vpop.f32.mrb[0].mxu0
    %v2203 = vadd.f32 %v103, %v2202
    %v2204 = vpop.f32.mrb[0].mxu0
    %v2205 = vpop.f32.mrb[0].mxu0
    %v2206 = vpop.f32.mrb[0].mxu0
    %2207 = vdwg.mxu0
    %2209 = vrot.lane.b32.xlu0 %v2113, 64
    %v2210 = vpop.permute.xlu0 %2209
    %v2212 = vadd.f32 %v2203, %v2210
    %v2213 = vsel %vm408, %v2212, 0.0
    %2214 = vadd.xlane.f32.xlu0 %v2213
    %v2215 = vpop.xlane.xlu0 %2214
    %v2216 = vmul.f32 %v2215, %v412
    %v2217 = vsub.f32 %v2212, %v2216
    %v2218 = vmul.f32 %v2217, %v2217
    %v2219 = vsel %vm408, %v2218, 0.0
    %2220 = vadd.xlane.f32.xlu0 %v2219
    %v2221 = vpop.xlane.xlu0 %2220
    %v2222 = vmul.f32 %v2221, %v412
    %v2223 = vadd.f32 %v2222, 1e-05
    %v2224 = vrsqrt.pop %v2223
    %v2225 = vmul.f32 %v2217, %v2224
    %v2226 = vmul.f32 %v2225, %v845
    %v2227 = vadd.f32 %v2226, %v850
    %2229 = vrot.lane.b32.xlu0 %v2212, 96
    %v2230 = vpop.permute.xlu0 %2229
    %v2232 = vsel %vm408, %v2230, 0.0
    %2233 = vadd.xlane.f32.xlu0 %v2232
    %v2234 = vpop.xlane.xlu0 %2233
    %v2235 = vmul.f32 %v2234, %v412
    %v2236 = vsub.f32 %v2212, %v2235
    %v2237 = vmul.f32 %v2236, %v2236
    %2239 = vrot.lane.b32.xlu0 %v2237, 96
    %v2240 = vpop.permute.xlu0 %2239
    %v2242 = vsel %vm408, %v2240, 0.0
    %2243 = vadd.xlane.f32.xlu0 %v2242
    %v2244 = vpop.xlane.xlu0 %2243
    %v2245 = vmul.f32 %v2244, %v412
    %v2246 = vadd.f32 %v2245, 1e-05
    %v2247 = vrsqrt.pop %v2246
    %v2248 = vmul.f32 %v2236, %v2247
    %v2249 = vmul.f32 %v2248, %v879
    %v2250 = vadd.f32 %v2249, %v888
    %v2251 = vpack.c.bf16 %v2227, %v2227
    %v2253 = vsel %vm136, %v2251, 0
    %2255 = vmatprep.subr.bf16.mxu0 0
    %2256 = vmatpush1.bf16.msra.mxu0 %v904
    %2257 = vmatprep.subr.bf16.mxu0 0
    %2258 = vmatpush1.bf16.msra.mxu0 %v905
    %2259 = vmatprep.subr.bf16.mxu0 0
    %2260 = vmatpush1.bf16.msra.mxu0 0
    %2261 = vmatprep.subr.bf16.mxu0 0
    %2262 = vmatpush1.bf16.msra.mxu0 0
    %2263 = vmatprep.subr.bf16.mxu0 0
    %2264 = vmatpush1.bf16.msra.mxu0 0
    %2265 = vmatprep.subr.bf16.mxu0 0
    %2266 = vmatpush1.bf16.msra.mxu0 0
    %2267 = vmatprep.subr.bf16.mxu0 0
    %2268 = vmatpush1.bf16.msra.mxu0 0
    %2269 = vmatprep.subr.bf16.mxu0 0
    %2270 = vmatpush1.bf16.msra.mxu0 0
    %2271 = vmatprep.subr.bf16.mxu0 0
    %2272 = vmatpush1.bf16.msra.mxu0 0
    %2273 = vmatprep.subr.bf16.mxu0 0
    %2274 = vmatpush1.bf16.msra.mxu0 0
    %2275 = vmatprep.subr.bf16.mxu0 0
    %2276 = vmatpush1.bf16.msra.mxu0 0
    %2277 = vmatprep.subr.bf16.mxu0 0
    %2278 = vmatpush1.bf16.msra.mxu0 0
    %2279 = vmatprep.subr.bf16.mxu0 0
    %2280 = vmatpush1.bf16.msra.mxu0 0
    %2281 = vmatprep.subr.bf16.mxu0 0
    %2282 = vmatpush1.bf16.msra.mxu0 0
    %2283 = vmatprep.subr.bf16.mxu0 0
    %2284 = vmatpush1.bf16.msra.mxu0 0
    %2285 = vmatprep.subr.bf16.mxu0 0
    %2286 = vmatpush1.bf16.msra.mxu0 0
    %2287 = vmatprep.mubr.bf16.mxu0 0
    %2288 = vmatmul.mubr.bf16.gmra.mrb[0].mxu0 %v2253
    %v2289 = vpop.f32.mrb[0].mxu0
    %v2290 = vadd.f32 %v63, %v2289
    %v2291 = vpop.f32.mrb[0].mxu0
    %v2292 = vpop.f32.mrb[0].mxu0
    %v2293 = vpop.f32.mrb[0].mxu0
    %2294 = vdwg.mxu0
    %v2295 = vxor.u32 %v2290, 2147483648
    %v2296 = vmul.f32 %v2295, 1.442695
    %v2297 = vpow.pop %v2296
    %v2298 = vadd.f32 %v2297, 1.0
    %v2299 = vrcp.pop %v2298
    %v2300 = vmul.f32 1.0, %v2299
    %v2301 = vmul.f32 %v2300, 2.0
    %v2302 = vsub.f32 %v2301, 1.0
    %v2303 = vmul.f32 %v2300, %v2250
    %2305 = vrot.lane.b32.xlu0 %v2302, 64
    %v2306 = vpop.permute.xlu0 %2305
    %v2308 = vmul.f32 %v2300, %v2306
    %2310 = vrot.lane.b32.xlu0 %v2308, 32
    %v2311 = vpop.permute.xlu0 %2310
    %v2313 = vadd.f32 %v2303, %v2311
    %v2314 = vtanh.pop %v2313
    %2316 = vrot.lane.b32.xlu0 %v2314, 64
    %v2317 = vpop.permute.xlu0 %2316
    %v2319 = vmul.f32 %v2300, %v2317
    %2321 = vrot.lane.b32.xlu0 %v2319, 32
    %v2322 = vpop.permute.xlu0 %2321
    %v2324 = vsel %vm136, %v2322, %v2313
    %2326 = vrot.lane.b32.xlu0 %v1399, 64
    %v2327 = vpop.permute.xlu0 %2326
    %v2329 = vsel %vm142, %v2324, %v2327
    %v2330 = vpack.c.bf16 %v2329, %v2329
    %2331 = vmatprep.subr.bf16.mxu0 0
    %2332 = vmatpush1.bf16.msra.mxu0 %v1032
    %2333 = vmatprep.subr.bf16.mxu0 0
    %2334 = vmatpush1.bf16.msra.mxu0 %v1033
    %2335 = vmatprep.subr.bf16.mxu0 0
    %2336 = vmatpush1.bf16.msra.mxu0 %v1034
    %2337 = vmatprep.subr.bf16.mxu0 0
    %2338 = vmatpush1.bf16.msra.mxu0 %v1035
    %2339 = vmatprep.subr.bf16.mxu0 0
    %2340 = vmatpush1.bf16.msra.mxu0 %v1036
    %2341 = vmatprep.subr.bf16.mxu0 0
    %2342 = vmatpush1.bf16.msra.mxu0 %v1037
    %2343 = vmatprep.subr.bf16.mxu0 0
    %2344 = vmatpush1.bf16.msra.mxu0 %v1038
    %2345 = vmatprep.subr.bf16.mxu0 0
    %2346 = vmatpush1.bf16.msra.mxu0 %v1039
    %2347 = vmatprep.subr.bf16.mxu0 0
    %2348 = vmatpush1.bf16.msra.mxu0 0
    %2349 = vmatprep.subr.bf16.mxu0 0
    %2350 = vmatpush1.bf16.msra.mxu0 0
    %2351 = vmatprep.subr.bf16.mxu0 0
    %2352 = vmatpush1.bf16.msra.mxu0 0
    %2353 = vmatprep.subr.bf16.mxu0 0
    %2354 = vmatpush1.bf16.msra.mxu0 0
    %2355 = vmatprep.subr.bf16.mxu0 0
    %2356 = vmatpush1.bf16.msra.mxu0 0
    %2357 = vmatprep.subr.bf16.mxu0 0
    %2358 = vmatpush1.bf16.msra.mxu0 0
    %2359 = vmatprep.subr.bf16.mxu0 0
    %2360 = vmatpush1.bf16.msra.mxu0 0
    %2361 = vmatprep.subr.bf16.mxu0 0
    %2362 = vmatpush1.bf16.msra.mxu0 0
    %2363 = vmatprep.mubr.bf16.mxu0 0
    %2364 = vmatmul.mubr.bf16.gmra.mrb[0].mxu0 %v2330
    %v2365 = vpop.f32.mrb[0].mxu0
    %v2366 = vadd.f32 %v47, %v2365
    %v2367 = vpop.f32.mrb[0].mxu0
    %v2368 = vpop.f32.mrb[0].mxu0
    %v2369 = vpop.f32.mrb[0].mxu0
    %2370 = vdwg.mxu0
    %v2371 = vmax.f32 %v2366, 0.0
    %v2372 = vpack.c.bf16 %v2371, %v2371
    %v2374 = vsel %vm142, %v2372, 0
    %2376 = vmatprep.subr.bf16.mxu0 0
    %2377 = vmatpush1.bf16.msra.mxu0 %v1115
    %2378 = vmatprep.subr.bf16.mxu0 0
    %2379 = vmatpush1.bf16.msra.mxu0 %v1116
    %2380 = vmatprep.subr.bf16.mxu0 0
    %2381 = vmatpush1.bf16.msra.mxu0 %v1117
    %2382 = vmatprep.subr.bf16.mxu0 0
    %2383 = vmatpush1.bf16.msra.mxu0 %v1118
    %2384 = vmatprep.subr.bf16.mxu0 0
    %2385 = vmatpush1.bf16.msra.mxu0 0
    %2386 = vmatprep.subr.bf16.mxu0 0
    %2387 = vmatpush1.bf16.msra.mxu0 0
    %2388 = vmatprep.subr.bf16.mxu0 0
    %2389 = vmatpush1.bf16.msra.mxu0 0
    %2390 = vmatprep.subr.bf16.mxu0 0
    %2391 = vmatpush1.bf16.msra.mxu0 0
    %2392 = vmatprep.subr.bf16.mxu0 0
    %2393 = vmatpush1.bf16.msra.mxu0 0
    %2394 = vmatprep.subr.bf16.mxu0 0
    %2395 = vmatpush1.bf16.msra.mxu0 0
    %2396 = vmatprep.subr.bf16.mxu0 0
    %2397 = vmatpush1.bf16.msra.mxu0 0
    %2398 = vmatprep.subr.bf16.mxu0 0
    %2399 = vmatpush1.bf16.msra.mxu0 0
    %2400 = vmatprep.subr.bf16.mxu0 0
    %2401 = vmatpush1.bf16.msra.mxu0 0
    %2402 = vmatprep.subr.bf16.mxu0 0
    %2403 = vmatpush1.bf16.msra.mxu0 0
    %2404 = vmatprep.subr.bf16.mxu0 0
    %2405 = vmatpush1.bf16.msra.mxu0 0
    %2406 = vmatprep.subr.bf16.mxu0 0
    %2407 = vmatpush1.bf16.msra.mxu0 0
    %2408 = vmatprep.mubr.bf16.mxu0 0
    %2409 = vmatmul.mubr.bf16.gmra.mrb[0].mxu0 %v2374
    %v2410 = vpop.f32.mrb[0].mxu0
    %v2411 = vadd.f32 %v88, %v2410
    %v2412 = vpop.f32.mrb[0].mxu0
    %v2413 = vpop.f32.mrb[0].mxu0
    %v2414 = vpop.f32.mrb[0].mxu0
    %2415 = vdwg.mxu0
    %v2416 = vmax.f32 %v2411, 0.0
    %v2417 = vpack.c.bf16 %v2416, %v2416
    %v2419 = vsel %vm142, %v2417, 0
    %2421 = vmatprep.subr.bf16.mxu0 0
    %2422 = vmatpush1.bf16.msra.mxu0 %v1192
    %2423 = vmatprep.subr.bf16.mxu0 0
    %2424 = vmatpush1.bf16.msra.mxu0 %v1193
    %2425 = vmatprep.subr.bf16.mxu0 0
    %2426 = vmatpush1.bf16.msra.mxu0 %v1194
    %2427 = vmatprep.subr.bf16.mxu0 0
    %2428 = vmatpush1.bf16.msra.mxu0 %v1195
    %2429 = vmatprep.subr.bf16.mxu0 0
    %2430 = vmatpush1.bf16.msra.mxu0 0
    %2431 = vmatprep.subr.bf16.mxu0 0
    %2432 = vmatpush1.bf16.msra.mxu0 0
    %2433 = vmatprep.subr.bf16.mxu0 0
    %2434 = vmatpush1.bf16.msra.mxu0 0
    %2435 = vmatprep.subr.bf16.mxu0 0
    %2436 = vmatpush1.bf16.msra.mxu0 0
    %2437 = vmatprep.subr.bf16.mxu0 0
    %2438 = vmatpush1.bf16.msra.mxu0 0
    %2439 = vmatprep.subr.bf16.mxu0 0
    %2440 = vmatpush1.bf16.msra.mxu0 0
    %2441 = vmatprep.subr.bf16.mxu0 0
    %2442 = vmatpush1.bf16.msra.mxu0 0
    %2443 = vmatprep.subr.bf16.mxu0 0
    %2444 = vmatpush1.bf16.msra.mxu0 0
    %2445 = vmatprep.subr.bf16.mxu0 0
    %2446 = vmatpush1.bf16.msra.mxu0 0
    %2447 = vmatprep.subr.bf16.mxu0 0
    %2448 = vmatpush1.bf16.msra.mxu0 0
    %2449 = vmatprep.subr.bf16.mxu0 0
    %2450 = vmatpush1.bf16.msra.mxu0 0
    %2451 = vmatprep.subr.bf16.mxu0 0
    %2452 = vmatpush1.bf16.msra.mxu0 0
    %2453 = vmatprep.mubr.bf16.mxu0 0
    %2454 = vmatmul.mubr.bf16.gmra.mrb[0].mxu0 %v2419
    %v2455 = vpop.f32.mrb[0].mxu0
    %v2456 = vadd.f32 %v108, %v2455
    %v2457 = vpop.f32.mrb[0].mxu0
    %v2458 = vpop.f32.mrb[0].mxu0
    %v2459 = vpop.f32.mrb[0].mxu0
    %2460 = vdwg.mxu0
    %2462 = vrot.lane.b32.xlu0 %v2366, 64
    %v2463 = vpop.permute.xlu0 %2462
    %v2465 = vadd.f32 %v2456, %v2463
    %v2466 = vsel %vm408, %v2465, 0.0
    %2467 = vadd.xlane.f32.xlu0 %v2466
    %v2468 = vpop.xlane.xlu0 %2467
    %v2469 = vmul.f32 %v2468, %v412
    %v2470 = vsub.f32 %v2465, %v2469
    %v2471 = vmul.f32 %v2470, %v2470
    %v2472 = vsel %vm408, %v2471, 0.0
    %2473 = vadd.xlane.f32.xlu0 %v2472
    %v2474 = vpop.xlane.xlu0 %2473
    %v2475 = vmul.f32 %v2474, %v412
    %v2476 = vadd.f32 %v2475, 1e-05
    %v2477 = vrsqrt.pop %v2476
    %v2478 = vmul.f32 %v2470, %v2477
    %v2479 = vmul.f32 %v2478, %v1264
    %v2480 = vadd.f32 %v2479, %v1269
    %2482 = vrot.lane.b32.xlu0 %v2465, 96
    %v2483 = vpop.permute.xlu0 %2482
    %v2485 = vsel %vm408, %v2483, 0.0
    %2486 = vadd.xlane.f32.xlu0 %v2485
    %v2487 = vpop.xlane.xlu0 %2486
    %v2488 = vmul.f32 %v2487, %v412
    %v2489 = vsub.f32 %v2465, %v2488
    %v2490 = vmul.f32 %v2489, %v2489
    %2492 = vrot.lane.b32.xlu0 %v2490, 96
    %v2493 = vpop.permute.xlu0 %2492
    %v2495 = vsel %vm408, %v2493, 0.0
    %2496 = vadd.xlane.f32.xlu0 %v2495
    %v2497 = vpop.xlane.xlu0 %2496
    %v2498 = vmul.f32 %v2497, %v412
    %v2499 = vadd.f32 %v2498, 1e-05
    %v2500 = vrsqrt.pop %v2499
    %v2501 = vmul.f32 %v2489, %v2500
    %v2502 = vmul.f32 %v2501, %v1298
    %v2503 = vadd.f32 %v2502, %v1307
    %v2504 = vpack.c.bf16 %v2480, %v2480
    %v2506 = vsel %vm136, %v2504, 0
    %2508 = vmatprep.subr.bf16.mxu0 0
    %2509 = vmatpush1.bf16.msra.mxu0 %v1323
    %2510 = vmatprep.subr.bf16.mxu0 0
    %2511 = vmatpush1.bf16.msra.mxu0 %v1324
    %2512 = vmatprep.subr.bf16.mxu0 0
    %2513 = vmatpush1.bf16.msra.mxu0 0
    %2514 = vmatprep.subr.bf16.mxu0 0
    %2515 = vmatpush1.bf16.msra.mxu0 0
    %2516 = vmatprep.subr.bf16.mxu0 0
    %2517 = vmatpush1.bf16.msra.mxu0 0
    %2518 = vmatprep.subr.bf16.mxu0 0
    %2519 = vmatpush1.bf16.msra.mxu0 0
    %2520 = vmatprep.subr.bf16.mxu0 0
    %2521 = vmatpush1.bf16.msra.mxu0 0
    %2522 = vmatprep.subr.bf16.mxu0 0
    %2523 = vmatpush1.bf16.msra.mxu0 0
    %2524 = vmatprep.subr.bf16.mxu0 0
    %2525 = vmatpush1.bf16.msra.mxu0 0
    %2526 = vmatprep.subr.bf16.mxu0 0
    %2527 = vmatpush1.bf16.msra.mxu0 0
    %2528 = vmatprep.subr.bf16.mxu0 0
    %2529 = vmatpush1.bf16.msra.mxu0 0
    %2530 = vmatprep.subr.bf16.mxu0 0
    %2531 = vmatpush1.bf16.msra.mxu0 0
    %2532 = vmatprep.subr.bf16.mxu0 0
    %2533 = vmatpush1.bf16.msra.mxu0 0
    %2534 = vmatprep.subr.bf16.mxu0 0
    %2535 = vmatpush1.bf16.msra.mxu0 0
    %2536 = vmatprep.subr.bf16.mxu0 0
    %2537 = vmatpush1.bf16.msra.mxu0 0
    %2538 = vmatprep.subr.bf16.mxu0 0
    %2539 = vmatpush1.bf16.msra.mxu0 0
    %2540 = vmatprep.mubr.bf16.mxu0 0
    %2541 = vmatmul.mubr.bf16.gmra.mrb[0].mxu0 %v2506
    %v2542 = vpop.f32.mrb[0].mxu0
    %v2543 = vadd.f32 %v68, %v2542
    %v2544 = vpop.f32.mrb[0].mxu0
    %v2545 = vpop.f32.mrb[0].mxu0
    %v2546 = vpop.f32.mrb[0].mxu0
    %2547 = vdwg.mxu0
    %v2548 = vxor.u32 %v2543, 2147483648
    %v2549 = vmul.f32 %v2548, 1.442695
    %v2550 = vpow.pop %v2549
    %v2551 = vadd.f32 %v2550, 1.0
    %v2552 = vrcp.pop %v2551
    %v2553 = vmul.f32 1.0, %v2552
    %v2554 = vmul.f32 %v2553, 2.0
    %v2555 = vsub.f32 %v2554, 1.0
    %v2556 = vmul.f32 %v2553, %v2503
    %2558 = vrot.lane.b32.xlu0 %v2555, 64
    %v2559 = vpop.permute.xlu0 %2558
    %v2561 = vmul.f32 %v2553, %v2559
    %2563 = vrot.lane.b32.xlu0 %v2561, 32
    %v2564 = vpop.permute.xlu0 %2563
    %v2566 = vadd.f32 %v2556, %v2564
    %v2567 = vtanh.pop %v2566
    %2569 = vrot.lane.b32.xlu0 %v2567, 64
    %v2570 = vpop.permute.xlu0 %2569
    %v2572 = vmul.f32 %v2553, %v2570
    %2574 = vrot.lane.b32.xlu0 %v2572, 32
    %v2575 = vpop.permute.xlu0 %2574
    %v2577 = vsel %vm136, %v2575, %v2566
    %2579 = vrot.lane.b32.xlu0 %v1818, 64
    %v2580 = vpop.permute.xlu0 %2579
    %v2582 = vsel %vm142, %v2577, %v2580
    %v2583 = vpack.c.bf16 %v2582, %v2582
    %2584 = vmatprep.subr.bf16.mxu0 0
    %2585 = vmatpush1.bf16.msra.mxu0 %v1451
    %2586 = vmatprep.subr.bf16.mxu0 0
    %2587 = vmatpush1.bf16.msra.mxu0 %v1452
    %2588 = vmatprep.subr.bf16.mxu0 0
    %2589 = vmatpush1.bf16.msra.mxu0 %v1453
    %2590 = vmatprep.subr.bf16.mxu0 0
    %2591 = vmatpush1.bf16.msra.mxu0 %v1454
    %2592 = vmatprep.subr.bf16.mxu0 0
    %2593 = vmatpush1.bf16.msra.mxu0 %v1455
    %2594 = vmatprep.subr.bf16.mxu0 0
    %2595 = vmatpush1.bf16.msra.mxu0 %v1456
    %2596 = vmatprep.subr.bf16.mxu0 0
    %2597 = vmatpush1.bf16.msra.mxu0 %v1457
    %2598 = vmatprep.subr.bf16.mxu0 0
    %2599 = vmatpush1.bf16.msra.mxu0 %v1458
    %2600 = vmatprep.subr.bf16.mxu0 0
    %2601 = vmatpush1.bf16.msra.mxu0 0
    %2602 = vmatprep.subr.bf16.mxu0 0
    %2603 = vmatpush1.bf16.msra.mxu0 0
    %2604 = vmatprep.subr.bf16.mxu0 0
    %2605 = vmatpush1.bf16.msra.mxu0 0
    %2606 = vmatprep.subr.bf16.mxu0 0
    %2607 = vmatpush1.bf16.msra.mxu0 0
    %2608 = vmatprep.subr.bf16.mxu0 0
    %2609 = vmatpush1.bf16.msra.mxu0 0
    %2610 = vmatprep.subr.bf16.mxu0 0
    %2611 = vmatpush1.bf16.msra.mxu0 0
    %2612 = vmatprep.subr.bf16.mxu0 0
    %2613 = vmatpush1.bf16.msra.mxu0 0
    %2614 = vmatprep.subr.bf16.mxu0 0
    %2615 = vmatpush1.bf16.msra.mxu0 0
    %2616 = vmatprep.mubr.bf16.mxu0 0
    %2617 = vmatmul.mubr.bf16.gmra.mrb[0].mxu0 %v2583
    %v2618 = vpop.f32.mrb[0].mxu0
    %v2619 = vadd.f32 %v53, %v2618
    %v2620 = vpop.f32.mrb[0].mxu0
    %v2621 = vpop.f32.mrb[0].mxu0
    %v2622 = vpop.f32.mrb[0].mxu0
    %2623 = vdwg.mxu0
    %v2624 = vmax.f32 %v2619, 0.0
    %v2625 = vpack.c.bf16 %v2624, %v2624
    %v2627 = vsel %vm142, %v2625, 0
    %2629 = vmatprep.subr.bf16.mxu0 0
    %2630 = vmatpush1.bf16.msra.mxu0 %v1534
    %2631 = vmatprep.subr.bf16.mxu0 0
    %2632 = vmatpush1.bf16.msra.mxu0 %v1535
    %2633 = vmatprep.subr.bf16.mxu0 0
    %2634 = vmatpush1.bf16.msra.mxu0 %v1536
    %2635 = vmatprep.subr.bf16.mxu0 0
    %2636 = vmatpush1.bf16.msra.mxu0 %v1537
    %2637 = vmatprep.subr.bf16.mxu0 0
    %2638 = vmatpush1.bf16.msra.mxu0 0
    %2639 = vmatprep.subr.bf16.mxu0 0
    %2640 = vmatpush1.bf16.msra.mxu0 0
    %2641 = vmatprep.subr.bf16.mxu0 0
    %2642 = vmatpush1.bf16.msra.mxu0 0
    %2643 = vmatprep.subr.bf16.mxu0 0
    %2644 = vmatpush1.bf16.msra.mxu0 0
    %2645 = vmatprep.subr.bf16.mxu0 0
    %2646 = vmatpush1.bf16.msra.mxu0 0
    %2647 = vmatprep.subr.bf16.mxu0 0
    %2648 = vmatpush1.bf16.msra.mxu0 0
    %2649 = vmatprep.subr.bf16.mxu0 0
    %2650 = vmatpush1.bf16.msra.mxu0 0
    %2651 = vmatprep.subr.bf16.mxu0 0
    %2652 = vmatpush1.bf16.msra.mxu0 0
    %2653 = vmatprep.subr.bf16.mxu0 0
    %2654 = vmatpush1.bf16.msra.mxu0 0
    %2655 = vmatprep.subr.bf16.mxu0 0
    %2656 = vmatpush1.bf16.msra.mxu0 0
    %2657 = vmatprep.subr.bf16.mxu0 0
    %2658 = vmatpush1.bf16.msra.mxu0 0
    %2659 = vmatprep.subr.bf16.mxu0 0
    %2660 = vmatpush1.bf16.msra.mxu0 0
    %2661 = vmatprep.mubr.bf16.mxu0 0
    %2662 = vmatmul.mubr.bf16.gmra.mrb[0].mxu0 %v2627
    %v2663 = vpop.f32.mrb[0].mxu0
    %v2664 = vadd.f32 %v93, %v2663
    %v2665 = vpop.f32.mrb[0].mxu0
    %v2666 = vpop.f32.mrb[0].mxu0
    %v2667 = vpop.f32.mrb[0].mxu0
    %2668 = vdwg.mxu0
    %v2669 = vmax.f32 %v2664, 0.0
    %v2670 = vpack.c.bf16 %v2669, %v2669
    %v2672 = vsel %vm142, %v2670, 0
    %2674 = vmatprep.subr.bf16.mxu0 0
    %2675 = vmatpush1.bf16.msra.mxu0 %v1611
    %2676 = vmatprep.subr.bf16.mxu0 0
    %2677 = vmatpush1.bf16.msra.mxu0 %v1612
    %2678 = vmatprep.subr.bf16.mxu0 0
    %2679 = vmatpush1.bf16.msra.mxu0 %v1613
    %2680 = vmatprep.subr.bf16.mxu0 0
    %2681 = vmatpush1.bf16.msra.mxu0 %v1614
    %2682 = vmatprep.subr.bf16.mxu0 0
    %2683 = vmatpush1.bf16.msra.mxu0 0
    %2684 = vmatprep.subr.bf16.mxu0 0
    %2685 = vmatpush1.bf16.msra.mxu0 0
    %2686 = vmatprep.subr.bf16.mxu0 0
    %2687 = vmatpush1.bf16.msra.mxu0 0
    %2688 = vmatprep.subr.bf16.mxu0 0
    %2689 = vmatpush1.bf16.msra.mxu0 0
    %2690 = vmatprep.subr.bf16.mxu0 0
    %2691 = vmatpush1.bf16.msra.mxu0 0
    %2692 = vmatprep.subr.bf16.mxu0 0
    %2693 = vmatpush1.bf16.msra.mxu0 0
    %2694 = vmatprep.subr.bf16.mxu0 0
    %2695 = vmatpush1.bf16.msra.mxu0 0
    %2696 = vmatprep.subr.bf16.mxu0 0
    %2697 = vmatpush1.bf16.msra.mxu0 0
    %2698 = vmatprep.subr.bf16.mxu0 0
    %2699 = vmatpush1.bf16.msra.mxu0 0
    %2700 = vmatprep.subr.bf16.mxu0 0
    %2701 = vmatpush1.bf16.msra.mxu0 0
    %2702 = vmatprep.subr.bf16.mxu0 0
    %2703 = vmatpush1.bf16.msra.mxu0 0
    %2704 = vmatprep.subr.bf16.mxu0 0
    %2705 = vmatpush1.bf16.msra.mxu0 0
    %2706 = vmatprep.mubr.bf16.mxu0 0
    %2707 = vmatmul.mubr.bf16.gmra.mrb[0].mxu0 %v2672
    %v2708 = vpop.f32.mrb[0].mxu0
    %v2709 = vadd.f32 %v113, %v2708
    %v2710 = vpop.f32.mrb[0].mxu0
    %v2711 = vpop.f32.mrb[0].mxu0
    %v2712 = vpop.f32.mrb[0].mxu0
    %2713 = vdwg.mxu0
    %2715 = vrot.lane.b32.xlu0 %v2619, 64
    %v2716 = vpop.permute.xlu0 %2715
    %v2718 = vadd.f32 %v2709, %v2716
    %v2719 = vsel %vm408, %v2718, 0.0
    %2720 = vadd.xlane.f32.xlu0 %v2719
    %v2721 = vpop.xlane.xlu0 %2720
    %v2722 = vmul.f32 %v2721, %v412
    %v2723 = vsub.f32 %v2718, %v2722
    %v2724 = vmul.f32 %v2723, %v2723
    %v2725 = vsel %vm408, %v2724, 0.0
    %2726 = vadd.xlane.f32.xlu0 %v2725
    %v2727 = vpop.xlane.xlu0 %2726
    %v2728 = vmul.f32 %v2727, %v412
    %v2729 = vadd.f32 %v2728, 1e-05
    %v2730 = vrsqrt.pop %v2729
    %v2731 = vmul.f32 %v2723, %v2730
    %v2732 = vmul.f32 %v2731, %v1683
    %v2733 = vadd.f32 %v2732, %v1688
    %2735 = vrot.lane.b32.xlu0 %v2718, 96
    %v2736 = vpop.permute.xlu0 %2735
    %v2738 = vsel %vm408, %v2736, 0.0
    %2739 = vadd.xlane.f32.xlu0 %v2738
    %v2740 = vpop.xlane.xlu0 %2739
    %v2741 = vmul.f32 %v2740, %v412
    %v2742 = vsub.f32 %v2718, %v2741
    %v2743 = vmul.f32 %v2742, %v2742
    %2745 = vrot.lane.b32.xlu0 %v2743, 96
    %v2746 = vpop.permute.xlu0 %2745
    %v2748 = vsel %vm408, %v2746, 0.0
    %2749 = vadd.xlane.f32.xlu0 %v2748
    %v2750 = vpop.xlane.xlu0 %2749
    %v2751 = vmul.f32 %v2750, %v412
    %v2752 = vadd.f32 %v2751, 1e-05
    %v2753 = vrsqrt.pop %v2752
    %v2754 = vmul.f32 %v2742, %v2753
    %v2755 = vmul.f32 %v2754, %v1717
    %v2756 = vadd.f32 %v2755, %v1726
    %v2757 = vpack.c.bf16 %v2733, %v2733
    %v2759 = vsel %vm136, %v2757, 0
    %2761 = vmatprep.subr.bf16.mxu0 0
    %2762 = vmatpush1.bf16.msra.mxu0 %v1742
    %2763 = vmatprep.subr.bf16.mxu0 0
    %2764 = vmatpush1.bf16.msra.mxu0 %v1743
    %2765 = vmatprep.subr.bf16.mxu0 0
    %2766 = vmatpush1.bf16.msra.mxu0 0
    %2767 = vmatprep.subr.bf16.mxu0 0
    %2768 = vmatpush1.bf16.msra.mxu0 0
    %2769 = vmatprep.subr.bf16.mxu0 0
    %2770 = vmatpush1.bf16.msra.mxu0 0
    %2771 = vmatprep.subr.bf16.mxu0 0
    %2772 = vmatpush1.bf16.msra.mxu0 0
    %2773 = vmatprep.subr.bf16.mxu0 0
    %2774 = vmatpush1.bf16.msra.mxu0 0
    %2775 = vmatprep.subr.bf16.mxu0 0
    %2776 = vmatpush1.bf16.msra.mxu0 0
    %2777 = vmatprep.subr.bf16.mxu0 0
    %2778 = vmatpush1.bf16.msra.mxu0 0
    %2779 = vmatprep.subr.bf16.mxu0 0
    %2780 = vmatpush1.bf16.msra.mxu0 0
    %2781 = vmatprep.subr.bf16.mxu0 0
    %2782 = vmatpush1.bf16.msra.mxu0 0
    %2783 = vmatprep.subr.bf16.mxu0 0
    %2784 = vmatpush1.bf16.msra.mxu0 0
    %2785 = vmatprep.subr.bf16.mxu0 0
    %2786 = vmatpush1.bf16.msra.mxu0 0
    %2787 = vmatprep.subr.bf16.mxu0 0
    %2788 = vmatpush1.bf16.msra.mxu0 0
    %2789 = vmatprep.subr.bf16.mxu0 0
    %2790 = vmatpush1.bf16.msra.mxu0 0
    %2791 = vmatprep.subr.bf16.mxu0 0
    %2792 = vmatpush1.bf16.msra.mxu0 0
    %2793 = vmatprep.mubr.bf16.mxu0 0
    %2794 = vmatmul.mubr.bf16.gmra.mrb[0].mxu0 %v2759
    %v2795 = vpop.f32.mrb[0].mxu0
    %v2796 = vadd.f32 %v73, %v2795
    %v2797 = vpop.f32.mrb[0].mxu0
    %v2798 = vpop.f32.mrb[0].mxu0
    %v2799 = vpop.f32.mrb[0].mxu0
    %2800 = vdwg.mxu0
    %v2801 = vxor.u32 %v2796, 2147483648
    %v2802 = vmul.f32 %v2801, 1.442695
    %v2803 = vpow.pop %v2802
    %v2804 = vadd.f32 %v2803, 1.0
    %v2805 = vrcp.pop %v2804
    %v2806 = vmul.f32 1.0, %v2805
    %v2807 = vmul.f32 %v2806, 2.0
    %v2808 = vsub.f32 %v2807, 1.0
    %v2809 = vmul.f32 %v2806, %v2756
    %2811 = vrot.lane.b32.xlu0 %v2808, 64
    %v2812 = vpop.permute.xlu0 %2811
    %v2814 = vmul.f32 %v2806, %v2812
    %2816 = vrot.lane.b32.xlu0 %v2814, 32
    %v2817 = vpop.permute.xlu0 %2816
    %v2819 = vadd.f32 %v2809, %v2817
    %v2820 = vtanh.pop %v2819
    %2822 = vrot.lane.b32.xlu0 %v2820, 64
    %v2823 = vpop.permute.xlu0 %2822
    %v2825 = vmul.f32 %v2806, %v2823
    %2827 = vrot.lane.b32.xlu0 %v2825, 32
    %v2828 = vpop.permute.xlu0 %2827
    %v2830 = vsel %vm136, %v2828, %v2819
    %2832 = vrot.lane.b32.xlu0 %v2071, 64
    %v2833 = vpop.permute.xlu0 %2832
    %v2835 = vsel %vm142, %v2830, %v2833
    %v2836 = vpack.c.bf16 %v2835, %v2835
    %2837 = vmatprep.subr.bf16.mxu0 0
    %2838 = vmatpush1.bf16.msra.mxu0 %v193
    %2839 = vmatprep.subr.bf16.mxu0 0
    %2840 = vmatpush1.bf16.msra.mxu0 %v194
    %2841 = vmatprep.subr.bf16.mxu0 0
    %2842 = vmatpush1.bf16.msra.mxu0 %v195
    %2843 = vmatprep.subr.bf16.mxu0 0
    %2844 = vmatpush1.bf16.msra.mxu0 %v196
    %2845 = vmatprep.subr.bf16.mxu0 0
    %2846 = vmatpush1.bf16.msra.mxu0 %v197
    %2847 = vmatprep.subr.bf16.mxu0 0
    %2848 = vmatpush1.bf16.msra.mxu0 %v198
    %2849 = vmatprep.subr.bf16.mxu0 0
    %2850 = vmatpush1.bf16.msra.mxu0 %v199
    %2851 = vmatprep.subr.bf16.mxu0 0
    %2852 = vmatpush1.bf16.msra.mxu0 %v200
    %2853 = vmatprep.subr.bf16.mxu0 0
    %2854 = vmatpush1.bf16.msra.mxu0 0
    %2855 = vmatprep.subr.bf16.mxu0 0
    %2856 = vmatpush1.bf16.msra.mxu0 0
    %2857 = vmatprep.subr.bf16.mxu0 0
    %2858 = vmatpush1.bf16.msra.mxu0 0
    %2859 = vmatprep.subr.bf16.mxu0 0
    %2860 = vmatpush1.bf16.msra.mxu0 0
    %2861 = vmatprep.subr.bf16.mxu0 0
    %2862 = vmatpush1.bf16.msra.mxu0 0
    %2863 = vmatprep.subr.bf16.mxu0 0
    %2864 = vmatpush1.bf16.msra.mxu0 0
    %2865 = vmatprep.subr.bf16.mxu0 0
    %2866 = vmatpush1.bf16.msra.mxu0 0
    %2867 = vmatprep.subr.bf16.mxu0 0
    %2868 = vmatpush1.bf16.msra.mxu0 0
    %2869 = vmatprep.mubr.bf16.mxu0 0
    %2870 = vmatmul.mubr.bf16.gmra.mrb[0].mxu0 %v2836
    %v2871 = vpop.f32.mrb[0].mxu0
    %v2872 = vadd.f32 %v35, %v2871
    %v2873 = vpop.f32.mrb[0].mxu0
    %v2874 = vpop.f32.mrb[0].mxu0
    %v2875 = vpop.f32.mrb[0].mxu0
    %2876 = vdwg.mxu0
    %v2877 = vmax.f32 %v2872, 0.0
    %v2878 = vpack.c.bf16 %v2877, %v2877
    %v2880 = vsel %vm142, %v2878, 0
    %2882 = vmatprep.subr.bf16.mxu0 0
    %2883 = vmatpush1.bf16.msra.mxu0 %v275
    %2884 = vmatprep.subr.bf16.mxu0 0
    %2885 = vmatpush1.bf16.msra.mxu0 %v276
    %2886 = vmatprep.subr.bf16.mxu0 0
    %2887 = vmatpush1.bf16.msra.mxu0 %v277
    %2888 = vmatprep.subr.bf16.mxu0 0
    %2889 = vmatpush1.bf16.msra.mxu0 %v278
    %2890 = vmatprep.subr.bf16.mxu0 0
    %2891 = vmatpush1.bf16.msra.mxu0 0
    %2892 = vmatprep.subr.bf16.mxu0 0
    %2893 = vmatpush1.bf16.msra.mxu0 0
    %2894 = vmatprep.subr.bf16.mxu0 0
    %2895 = vmatpush1.bf16.msra.mxu0 0
    %2896 = vmatprep.subr.bf16.mxu0 0
    %2897 = vmatpush1.bf16.msra.mxu0 0
    %2898 = vmatprep.subr.bf16.mxu0 0
    %2899 = vmatpush1.bf16.msra.mxu0 0
    %2900 = vmatprep.subr.bf16.mxu0 0
    %2901 = vmatpush1.bf16.msra.mxu0 0
    %2902 = vmatprep.subr.bf16.mxu0 0
    %2903 = vmatpush1.bf16.msra.mxu0 0
    %2904 = vmatprep.subr.bf16.mxu0 0
    %2905 = vmatpush1.bf16.msra.mxu0 0
    %2906 = vmatprep.subr.bf16.mxu0 0
    %2907 = vmatpush1.bf16.msra.mxu0 0
    %2908 = vmatprep.subr.bf16.mxu0 0
    %2909 = vmatpush1.bf16.msra.mxu0 0
    %2910 = vmatprep.subr.bf16.mxu0 0
    %2911 = vmatpush1.bf16.msra.mxu0 0
    %2912 = vmatprep.subr.bf16.mxu0 0
    %2913 = vmatpush1.bf16.msra.mxu0 0
    %2914 = vmatprep.mubr.bf16.mxu0 0
    %2915 = vmatmul.mubr.bf16.gmra.mrb[0].mxu0 %v2880
    %v2916 = vpop.f32.mrb[0].mxu0
    %v2917 = vadd.f32 %v78, %v2916
    %v2918 = vpop.f32.mrb[0].mxu0
    %v2919 = vpop.f32.mrb[0].mxu0
    %v2920 = vpop.f32.mrb[0].mxu0
    %2921 = vdwg.mxu0
    %v2922 = vmax.f32 %v2917, 0.0
    %v2923 = vpack.c.bf16 %v2922, %v2922
    %v2925 = vsel %vm142, %v2923, 0
    %2927 = vmatprep.subr.bf16.mxu0 0
    %2928 = vmatpush1.bf16.msra.mxu0 %v352
    %2929 = vmatprep.subr.bf16.mxu0 0
    %2930 = vmatpush1.bf16.msra.mxu0 %v353
    %2931 = vmatprep.subr.bf16.mxu0 0
    %2932 = vmatpush1.bf16.msra.mxu0 %v354
    %2933 = vmatprep.subr.bf16.mxu0 0
    %2934 = vmatpush1.bf16.msra.mxu0 %v355
    %2935 = vmatprep.subr.bf16.mxu0 0
    %2936 = vmatpush1.bf16.msra.mxu0 0
    %2937 = vmatprep.subr.bf16.mxu0 0
    %2938 = vmatpush1.bf16.msra.mxu0 0
    %2939 = vmatprep.subr.bf16.mxu0 0
    %2940 = vmatpush1.bf16.msra.mxu0 0
    %2941 = vmatprep.subr.bf16.mxu0 0
    %2942 = vmatpush1.bf16.msra.mxu0 0
    %2943 = vmatprep.subr.bf16.mxu0 0
    %2944 = vmatpush1.bf16.msra.mxu0 0
    %2945 = vmatprep.subr.bf16.mxu0 0
    %2946 = vmatpush1.bf16.msra.mxu0 0
    %2947 = vmatprep.subr.bf16.mxu0 0
    %2948 = vmatpush1.bf16.msra.mxu0 0
    %2949 = vmatprep.subr.bf16.mxu0 0
    %2950 = vmatpush1.bf16.msra.mxu0 0
    %2951 = vmatprep.subr.bf16.mxu0 0
    %2952 = vmatpush1.bf16.msra.mxu0 0
    %2953 = vmatprep.subr.bf16.mxu0 0
    %2954 = vmatpush1.bf16.msra.mxu0 0
    %2955 = vmatprep.subr.bf16.mxu0 0
    %2956 = vmatpush1.bf16.msra.mxu0 0
    %2957 = vmatprep.subr.bf16.mxu0 0
    %2958 = vmatpush1.bf16.msra.mxu0 0
    %2959 = vmatprep.mubr.bf16.mxu0 0
    %2960 = vmatmul.mubr.bf16.gmra.mrb[0].mxu0 %v2925
    %v2961 = vpop.f32.mrb[0].mxu0
    %v2962 = vadd.f32 %v98, %v2961
    %v2963 = vpop.f32.mrb[0].mxu0
    %v2964 = vpop.f32.mrb[0].mxu0
    %v2965 = vpop.f32.mrb[0].mxu0
    %2966 = vdwg.mxu0
    %2968 = vrot.lane.b32.xlu0 %v2872, 64
    %v2969 = vpop.permute.xlu0 %2968
    %v2971 = vadd.f32 %v2962, %v2969
    %v2972 = vsel %vm408, %v2971, 0.0
    %2973 = vadd.xlane.f32.xlu0 %v2972
    %v2974 = vpop.xlane.xlu0 %2973
    %v2975 = vmul.f32 %v2974, %v412
    %v2976 = vsub.f32 %v2971, %v2975
    %v2977 = vmul.f32 %v2976, %v2976
    %v2978 = vsel %vm408, %v2977, 0.0
    %2979 = vadd.xlane.f32.xlu0 %v2978
    %v2980 = vpop.xlane.xlu0 %2979
    %v2981 = vmul.f32 %v2980, %v412
    %v2982 = vadd.f32 %v2981, 1e-05
    %v2983 = vrsqrt.pop %v2982
    %v2984 = vmul.f32 %v2976, %v2983
    %v2985 = vmul.f32 %v2984, %v426
    %v2986 = vadd.f32 %v2985, %v431
    %2988 = vrot.lane.b32.xlu0 %v2971, 96
    %v2989 = vpop.permute.xlu0 %2988
    %v2991 = vsel %vm408, %v2989, 0.0
    %2992 = vadd.xlane.f32.xlu0 %v2991
    %v2993 = vpop.xlane.xlu0 %2992
    %v2994 = vmul.f32 %v2993, %v412
    %v2995 = vsub.f32 %v2971, %v2994
    %v2996 = vmul.f32 %v2995, %v2995
    %2998 = vrot.lane.b32.xlu0 %v2996, 96
    %v2999 = vpop.permute.xlu0 %2998
    %v3001 = vsel %vm408, %v2999, 0.0
    %3002 = vadd.xlane.f32.xlu0 %v3001
    %v3003 = vpop.xlane.xlu0 %3002
    %v3004 = vmul.f32 %v3003, %v412
    %v3005 = vadd.f32 %v3004, 1e-05
    %v3006 = vrsqrt.pop %v3005
    %v3007 = vmul.f32 %v2995, %v3006
    %v3008 = vmul.f32 %v3007, %v460
    %v3009 = vadd.f32 %v3008, %v469
    %v3010 = vpack.c.bf16 %v2986, %v2986
    %v3012 = vsel %vm136, %v3010, 0
    %3014 = vmatprep.subr.bf16.mxu0 0
    %3015 = vmatpush1.bf16.msra.mxu0 %v485
    %3016 = vmatprep.subr.bf16.mxu0 0
    %3017 = vmatpush1.bf16.msra.mxu0 %v486
    %3018 = vmatprep.subr.bf16.mxu0 0
    %3019 = vmatpush1.bf16.msra.mxu0 0
    %3020 = vmatprep.subr.bf16.mxu0 0
    %3021 = vmatpush1.bf16.msra.mxu0 0
    %3022 = vmatprep.subr.bf16.mxu0 0
    %3023 = vmatpush1.bf16.msra.mxu0 0
    %3024 = vmatprep.subr.bf16.mxu0 0
    %3025 = vmatpush1.bf16.msra.mxu0 0
    %3026 = vmatprep.subr.bf16.mxu0 0
    %3027 = vmatpush1.bf16.msra.mxu0 0
    %3028 = vmatprep.subr.bf16.mxu0 0
    %3029 = vmatpush1.bf16.msra.mxu0 0
    %3030 = vmatprep.subr.bf16.mxu0 0
    %3031 = vmatpush1.bf16.msra.mxu0 0
    %3032 = vmatprep.subr.bf16.mxu0 0
    %3033 = vmatpush1.bf16.msra.mxu0 0
    %3034 = vmatprep.subr.bf16.mxu0 0
    %3035 = vmatpush1.bf16.msra.mxu0 0
    %3036 = vmatprep.subr.bf16.mxu0 0
    %3037 = vmatpush1.bf16.msra.mxu0 0
    %3038 = vmatprep.subr.bf16.mxu0 0
    %3039 = vmatpush1.bf16.msra.mxu0 0
    %3040 = vmatprep.subr.bf16.mxu0 0
    %3041 = vmatpush1.bf16.msra.mxu0 0
    %3042 = vmatprep.subr.bf16.mxu0 0
    %3043 = vmatpush1.bf16.msra.mxu0 0
    %3044 = vmatprep.subr.bf16.mxu0 0
    %3045 = vmatpush1.bf16.msra.mxu0 0
    %3046 = vmatprep.mubr.bf16.mxu0 0
    %3047 = vmatmul.mubr.bf16.gmra.mrb[0].mxu0 %v3012
    %v3048 = vpop.f32.mrb[0].mxu0
    %v3049 = vadd.f32 %v58, %v3048
    %v3050 = vpop.f32.mrb[0].mxu0
    %v3051 = vpop.f32.mrb[0].mxu0
    %v3052 = vpop.f32.mrb[0].mxu0
    %3053 = vdwg.mxu0
    %v3054 = vxor.u32 %v3049, 2147483648
    %v3055 = vmul.f32 %v3054, 1.442695
    %v3056 = vpow.pop %v3055
    %v3057 = vadd.f32 %v3056, 1.0
    %v3058 = vrcp.pop %v3057
    %v3059 = vmul.f32 1.0, %v3058
    %v3060 = vmul.f32 %v3059, 2.0
    %v3061 = vsub.f32 %v3060, 1.0
    %v3062 = vmul.f32 %v3059, %v3009
    %3064 = vrot.lane.b32.xlu0 %v3061, 64
    %v3065 = vpop.permute.xlu0 %3064
    %v3067 = vmul.f32 %v3059, %v3065
    %3069 = vrot.lane.b32.xlu0 %v3067, 32
    %v3070 = vpop.permute.xlu0 %3069
    %v3072 = vadd.f32 %v3062, %v3070
    %v3073 = vtanh.pop %v3072
    %3075 = vrot.lane.b32.xlu0 %v3073, 64
    %v3076 = vpop.permute.xlu0 %3075
    %v3078 = vmul.f32 %v3059, %v3076
    %3080 = vrot.lane.b32.xlu0 %v3078, 32
    %v3081 = vpop.permute.xlu0 %3080
    %v3083 = vsel %vm136, %v3081, %v3072
    %3085 = vrot.lane.b32.xlu0 %v2324, 64
    %v3086 = vpop.permute.xlu0 %3085
    %v3088 = vsel %vm142, %v3083, %v3086
    %v3089 = vpack.c.bf16 %v3088, %v3088
    %3090 = vmatprep.subr.bf16.mxu0 0
    %3091 = vmatpush1.bf16.msra.mxu0 %v613
    %3092 = vmatprep.subr.bf16.mxu0 0
    %3093 = vmatpush1.bf16.msra.mxu0 %v614
    %3094 = vmatprep.subr.bf16.mxu0 0
    %3095 = vmatpush1.bf16.msra.mxu0 %v615
    %3096 = vmatprep.subr.bf16.mxu0 0
    %3097 = vmatpush1.bf16.msra.mxu0 %v616
    %3098 = vmatprep.subr.bf16.mxu0 0
    %3099 = vmatpush1.bf16.msra.mxu0 %v617
    %3100 = vmatprep.subr.bf16.mxu0 0
    %3101 = vmatpush1.bf16.msra.mxu0 %v618
    %3102 = vmatprep.subr.bf16.mxu0 0
    %3103 = vmatpush1.bf16.msra.mxu0 %v619
    %3104 = vmatprep.subr.bf16.mxu0 0
    %3105 = vmatpush1.bf16.msra.mxu0 %v620
    %3106 = vmatprep.subr.bf16.mxu0 0
    %3107 = vmatpush1.bf16.msra.mxu0 0
    %3108 = vmatprep.subr.bf16.mxu0 0
    %3109 = vmatpush1.bf16.msra.mxu0 0
    %3110 = vmatprep.subr.bf16.mxu0 0
    %3111 = vmatpush1.bf16.msra.mxu0 0
    %3112 = vmatprep.subr.bf16.mxu0 0
    %3113 = vmatpush1.bf16.msra.mxu0 0
    %3114 = vmatprep.subr.bf16.mxu0 0
    %3115 = vmatpush1.bf16.msra.mxu0 0
    %3116 = vmatprep.subr.bf16.mxu0 0
    %3117 = vmatpush1.bf16.msra.mxu0 0
    %3118 = vmatprep.subr.bf16.mxu0 0
    %3119 = vmatpush1.bf16.msra.mxu0 0
    %3120 = vmatprep.subr.bf16.mxu0 0
    %3121 = vmatpush1.bf16.msra.mxu0 0
    %3122 = vmatprep.mubr.bf16.mxu0 0
    %3123 = vmatmul.mubr.bf16.gmra.mrb[0].mxu0 %v3089
    %v3124 = vpop.f32.mrb[0].mxu0
    %v3125 = vadd.f32 %v41, %v3124
    %v3126 = vpop.f32.mrb[0].mxu0
    %v3127 = vpop.f32.mrb[0].mxu0
    %v3128 = vpop.f32.mrb[0].mxu0
    %3129 = vdwg.mxu0
    %v3130 = vmax.f32 %v3125, 0.0
    %v3131 = vpack.c.bf16 %v3130, %v3130
    %v3133 = vsel %vm142, %v3131, 0
    %3135 = vmatprep.subr.bf16.mxu0 0
    %3136 = vmatpush1.bf16.msra.mxu0 %v696
    %3137 = vmatprep.subr.bf16.mxu0 0
    %3138 = vmatpush1.bf16.msra.mxu0 %v697
    %3139 = vmatprep.subr.bf16.mxu0 0
    %3140 = vmatpush1.bf16.msra.mxu0 %v698
    %3141 = vmatprep.subr.bf16.mxu0 0
    %3142 = vmatpush1.bf16.msra.mxu0 %v699
    %3143 = vmatprep.subr.bf16.mxu0 0
    %3144 = vmatpush1.bf16.msra.mxu0 0
    %3145 = vmatprep.subr.bf16.mxu0 0
    %3146 = vmatpush1.bf16.msra.mxu0 0
    %3147 = vmatprep.subr.bf16.mxu0 0
    %3148 = vmatpush1.bf16.msra.mxu0 0
    %3149 = vmatprep.subr.bf16.mxu0 0
    %3150 = vmatpush1.bf16.msra.mxu0 0
    %3151 = vmatprep.subr.bf16.mxu0 0
    %3152 = vmatpush1.bf16.msra.mxu0 0
    %3153 = vmatprep.subr.bf16.mxu0 0
    %3154 = vmatpush1.bf16.msra.mxu0 0
    %3155 = vmatprep.subr.bf16.mxu0 0
    %3156 = vmatpush1.bf16.msra.mxu0 0
    %3157 = vmatprep.subr.bf16.mxu0 0
    %3158 = vmatpush1.bf16.msra.mxu0 0
    %3159 = vmatprep.subr.bf16.mxu0 0
    %3160 = vmatpush1.bf16.msra.mxu0 0
    %3161 = vmatprep.subr.bf16.mxu0 0
    %3162 = vmatpush1.bf16.msra.mxu0 0
    %3163 = vmatprep.subr.bf16.mxu0 0
    %3164 = vmatpush1.bf16.msra.mxu0 0
    %3165 = vmatprep.subr.bf16.mxu0 0
    %3166 = vmatpush1.bf16.msra.mxu0 0
    %3167 = vmatprep.mubr.bf16.mxu0 0
    %3168 = vmatmul.mubr.bf16.gmra.mrb[0].mxu0 %v3133
    %v3169 = vpop.f32.mrb[0].mxu0
    %v3170 = vadd.f32 %v83, %v3169
    %v3171 = vpop.f32.mrb[0].mxu0
    %v3172 = vpop.f32.mrb[0].mxu0
    %v3173 = vpop.f32.mrb[0].mxu0
    %3174 = vdwg.mxu0
    %v3175 = vmax.f32 %v3170, 0.0
    %v3176 = vpack.c.bf16 %v3175, %v3175
    %v3178 = vsel %vm142, %v3176, 0
    %3180 = vmatprep.subr.bf16.mxu0 0
    %3181 = vmatpush1.bf16.msra.mxu0 %v773
    %3182 = vmatprep.subr.bf16.mxu0 0
    %3183 = vmatpush1.bf16.msra.mxu0 %v774
    %3184 = vmatprep.subr.bf16.mxu0 0
    %3185 = vmatpush1.bf16.msra.mxu0 %v775
    %3186 = vmatprep.subr.bf16.mxu0 0
    %3187 = vmatpush1.bf16.msra.mxu0 %v776
    %3188 = vmatprep.subr.bf16.mxu0 0
    %3189 = vmatpush1.bf16.msra.mxu0 0
    %3190 = vmatprep.subr.bf16.mxu0 0
    %3191 = vmatpush1.bf16.msra.mxu0 0
    %3192 = vmatprep.subr.bf16.mxu0 0
    %3193 = vmatpush1.bf16.msra.mxu0 0
    %3194 = vmatprep.subr.bf16.mxu0 0
    %3195 = vmatpush1.bf16.msra.mxu0 0
    %3196 = vmatprep.subr.bf16.mxu0 0
    %3197 = vmatpush1.bf16.msra.mxu0 0
    %3198 = vmatprep.subr.bf16.mxu0 0
    %3199 = vmatpush1.bf16.msra.mxu0 0
    %3200 = vmatprep.subr.bf16.mxu0 0
    %3201 = vmatpush1.bf16.msra.mxu0 0
    %3202 = vmatprep.subr.bf16.mxu0 0
    %3203 = vmatpush1.bf16.msra.mxu0 0
    %3204 = vmatprep.subr.bf16.mxu0 0
    %3205 = vmatpush1.bf16.msra.mxu0 0
    %3206 = vmatprep.subr.bf16.mxu0 0
    %3207 = vmatpush1.bf16.msra.mxu0 0
    %3208 = vmatprep.subr.bf16.mxu0 0
    %3209 = vmatpush1.bf16.msra.mxu0 0
    %3210 = vmatprep.subr.bf16.mxu0 0
    %3211 = vmatpush1.bf16.msra.mxu0 0
    %3212 = vmatprep.mubr.bf16.mxu0 0
    %3213 = vmatmul.mubr.bf16.gmra.mrb[0].mxu0 %v3178
    %v3214 = vpop.f32.mrb[0].mxu0
    %v3215 = vadd.f32 %v103, %v3214
    %v3216 = vpop.f32.mrb[0].mxu0
    %v3217 = vpop.f32.mrb[0].mxu0
    %v3218 = vpop.f32.mrb[0].mxu0
    %3219 = vdwg.mxu0
    %3221 = vrot.lane.b32.xlu0 %v3125, 64
    %v3222 = vpop.permute.xlu0 %3221
    %v3224 = vadd.f32 %v3215, %v3222
    %v3225 = vsel %vm408, %v3224, 0.0
    %3226 = vadd.xlane.f32.xlu0 %v3225
    %v3227 = vpop.xlane.xlu0 %3226
    %v3228 = vmul.f32 %v3227, %v412
    %v3229 = vsub.f32 %v3224, %v3228
    %v3230 = vmul.f32 %v3229, %v3229
    %v3231 = vsel %vm408, %v3230, 0.0
    %3232 = vadd.xlane.f32.xlu0 %v3231
    %v3233 = vpop.xlane.xlu0 %3232
    %v3234 = vmul.f32 %v3233, %v412
    %v3235 = vadd.f32 %v3234, 1e-05
    %v3236 = vrsqrt.pop %v3235
    %v3237 = vmul.f32 %v3229, %v3236
    %v3238 = vmul.f32 %v3237, %v845
    %v3239 = vadd.f32 %v3238, %v850
    %3241 = vrot.lane.b32.xlu0 %v3224, 96
    %v3242 = vpop.permute.xlu0 %3241
    %v3244 = vsel %vm408, %v3242, 0.0
    %3245 = vadd.xlane.f32.xlu0 %v3244
    %v3246 = vpop.xlane.xlu0 %3245
    %v3247 = vmul.f32 %v3246, %v412
    %v3248 = vsub.f32 %v3224, %v3247
    %v3249 = vmul.f32 %v3248, %v3248
    %3251 = vrot.lane.b32.xlu0 %v3249, 96
    %v3252 = vpop.permute.xlu0 %3251
    %v3254 = vsel %vm408, %v3252, 0.0
    %3255 = vadd.xlane.f32.xlu0 %v3254
    %v3256 = vpop.xlane.xlu0 %3255
    %v3257 = vmul.f32 %v3256, %v412
    %v3258 = vadd.f32 %v3257, 1e-05
    %v3259 = vrsqrt.pop %v3258
    %v3260 = vmul.f32 %v3248, %v3259
    %v3261 = vmul.f32 %v3260, %v879
    %v3262 = vadd.f32 %v3261, %v888
    %v3263 = vpack.c.bf16 %v3239, %v3239
    %v3265 = vsel %vm136, %v3263, 0
    %3267 = vmatprep.subr.bf16.mxu0 0
    %3268 = vmatpush1.bf16.msra.mxu0 %v904
    %3269 = vmatprep.subr.bf16.mxu0 0
    %3270 = vmatpush1.bf16.msra.mxu0 %v905
    %3271 = vmatprep.subr.bf16.mxu0 0
    %3272 = vmatpush1.bf16.msra.mxu0 0
    %3273 = vmatprep.subr.bf16.mxu0 0
    %3274 = vmatpush1.bf16.msra.mxu0 0
    %3275 = vmatprep.subr.bf16.mxu0 0
    %3276 = vmatpush1.bf16.msra.mxu0 0
    %3277 = vmatprep.subr.bf16.mxu0 0
    %3278 = vmatpush1.bf16.msra.mxu0 0
    %3279 = vmatprep.subr.bf16.mxu0 0
    %3280 = vmatpush1.bf16.msra.mxu0 0
    %3281 = vmatprep.subr.bf16.mxu0 0
    %3282 = vmatpush1.bf16.msra.mxu0 0
    %3283 = vmatprep.subr.bf16.mxu0 0
    %3284 = vmatpush1.bf16.msra.mxu0 0
    %3285 = vmatprep.subr.bf16.mxu0 0
    %3286 = vmatpush1.bf16.msra.mxu0 0
    %3287 = vmatprep.subr.bf16.mxu0 0
    %3288 = vmatpush1.bf16.msra.mxu0 0
    %3289 = vmatprep.subr.bf16.mxu0 0
    %3290 = vmatpush1.bf16.msra.mxu0 0
    %3291 = vmatprep.subr.bf16.mxu0 0
    %3292 = vmatpush1.bf16.msra.mxu0 0
    %3293 = vmatprep.subr.bf16.mxu0 0
    %3294 = vmatpush1.bf16.msra.mxu0 0
    %3295 = vmatprep.subr.bf16.mxu0 0
    %3296 = vmatpush1.bf16.msra.mxu0 0
    %3297 = vmatprep.subr.bf16.mxu0 0
    %3298 = vmatpush1.bf16.msra.mxu0 0
    %3299 = vmatprep.mubr.bf16.mxu0 0
    %3300 = vmatmul.mubr.bf16.gmra.mrb[0].mxu0 %v3265
    %v3301 = vpop.f32.mrb[0].mxu0
    %v3302 = vadd.f32 %v63, %v3301
    %v3303 = vpop.f32.mrb[0].mxu0
    %v3304 = vpop.f32.mrb[0].mxu0
    %v3305 = vpop.f32.mrb[0].mxu0
    %3306 = vdwg.mxu0
    %v3307 = vxor.u32 %v3302, 2147483648
    %v3308 = vmul.f32 %v3307, 1.442695
    %v3309 = vpow.pop %v3308
    %v3310 = vadd.f32 %v3309, 1.0
    %v3311 = vrcp.pop %v3310
    %v3312 = vmul.f32 1.0, %v3311
    %v3313 = vmul.f32 %v3312, 2.0
    %v3314 = vsub.f32 %v3313, 1.0
    %v3315 = vmul.f32 %v3312, %v3262
    %3317 = vrot.lane.b32.xlu0 %v3314, 64
    %v3318 = vpop.permute.xlu0 %3317
    %v3320 = vmul.f32 %v3312, %v3318
    %3322 = vrot.lane.b32.xlu0 %v3320, 32
    %v3323 = vpop.permute.xlu0 %3322
    %v3325 = vadd.f32 %v3315, %v3323
    %v3326 = vtanh.pop %v3325
    %3328 = vrot.lane.b32.xlu0 %v3326, 64
    %v3329 = vpop.permute.xlu0 %3328
    %v3331 = vmul.f32 %v3312, %v3329
    %3333 = vrot.lane.b32.xlu0 %v3331, 32
    %v3334 = vpop.permute.xlu0 %3333
    %v3336 = vsel %vm136, %v3334, %v3325
    %3338 = vrot.lane.b32.xlu0 %v2577, 64
    %v3339 = vpop.permute.xlu0 %3338
    %v3341 = vsel %vm142, %v3336, %v3339
    %v3342 = vpack.c.bf16 %v3341, %v3341
    %3343 = vmatprep.subr.bf16.mxu0 0
    %3344 = vmatpush1.bf16.msra.mxu0 %v1032
    %3345 = vmatprep.subr.bf16.mxu0 0
    %3346 = vmatpush1.bf16.msra.mxu0 %v1033
    %3347 = vmatprep.subr.bf16.mxu0 0
    %3348 = vmatpush1.bf16.msra.mxu0 %v1034
    %3349 = vmatprep.subr.bf16.mxu0 0
    %3350 = vmatpush1.bf16.msra.mxu0 %v1035
    %3351 = vmatprep.subr.bf16.mxu0 0
    %3352 = vmatpush1.bf16.msra.mxu0 %v1036
    %3353 = vmatprep.subr.bf16.mxu0 0
    %3354 = vmatpush1.bf16.msra.mxu0 %v1037
    %3355 = vmatprep.subr.bf16.mxu0 0
    %3356 = vmatpush1.bf16.msra.mxu0 %v1038
    %3357 = vmatprep.subr.bf16.mxu0 0
    %3358 = vmatpush1.bf16.msra.mxu0 %v1039
    %3359 = vmatprep.subr.bf16.mxu0 0
    %3360 = vmatpush1.bf16.msra.mxu0 0
    %3361 = vmatprep.subr.bf16.mxu0 0
    %3362 = vmatpush1.bf16.msra.mxu0 0
    %3363 = vmatprep.subr.bf16.mxu0 0
    %3364 = vmatpush1.bf16.msra.mxu0 0
    %3365 = vmatprep.subr.bf16.mxu0 0
    %3366 = vmatpush1.bf16.msra.mxu0 0
    %3367 = vmatprep.subr.bf16.mxu0 0
    %3368 = vmatpush1.bf16.msra.mxu0 0
    %3369 = vmatprep.subr.bf16.mxu0 0
    %3370 = vmatpush1.bf16.msra.mxu0 0
    %3371 = vmatprep.subr.bf16.mxu0 0
    %3372 = vmatpush1.bf16.msra.mxu0 0
    %3373 = vmatprep.subr.bf16.mxu0 0
    %3374 = vmatpush1.bf16.msra.mxu0 0
    %3375 = vmatprep.mubr.bf16.mxu0 0
    %3376 = vmatmul.mubr.bf16.gmra.mrb[0].mxu0 %v3342
    %v3377 = vpop.f32.mrb[0].mxu0
    %v3378 = vadd.f32 %v47, %v3377
    %v3379 = vpop.f32.mrb[0].mxu0
    %v3380 = vpop.f32.mrb[0].mxu0
    %v3381 = vpop.f32.mrb[0].mxu0
    %3382 = vdwg.mxu0
    %v3383 = vmax.f32 %v3378, 0.0
    %v3384 = vpack.c.bf16 %v3383, %v3383
    %v3386 = vsel %vm142, %v3384, 0
    %3388 = vmatprep.subr.bf16.mxu0 0
    %3389 = vmatpush1.bf16.msra.mxu0 %v1115
    %3390 = vmatprep.subr.bf16.mxu0 0
    %3391 = vmatpush1.bf16.msra.mxu0 %v1116
    %3392 = vmatprep.subr.bf16.mxu0 0
    %3393 = vmatpush1.bf16.msra.mxu0 %v1117
    %3394 = vmatprep.subr.bf16.mxu0 0
    %3395 = vmatpush1.bf16.msra.mxu0 %v1118
    %3396 = vmatprep.subr.bf16.mxu0 0
    %3397 = vmatpush1.bf16.msra.mxu0 0
    %3398 = vmatprep.subr.bf16.mxu0 0
    %3399 = vmatpush1.bf16.msra.mxu0 0
    %3400 = vmatprep.subr.bf16.mxu0 0
    %3401 = vmatpush1.bf16.msra.mxu0 0
    %3402 = vmatprep.subr.bf16.mxu0 0
    %3403 = vmatpush1.bf16.msra.mxu0 0
    %3404 = vmatprep.subr.bf16.mxu0 0
    %3405 = vmatpush1.bf16.msra.mxu0 0
    %3406 = vmatprep.subr.bf16.mxu0 0
    %3407 = vmatpush1.bf16.msra.mxu0 0
    %3408 = vmatprep.subr.bf16.mxu0 0
    %3409 = vmatpush1.bf16.msra.mxu0 0
    %3410 = vmatprep.subr.bf16.mxu0 0
    %3411 = vmatpush1.bf16.msra.mxu0 0
    %3412 = vmatprep.subr.bf16.mxu0 0
    %3413 = vmatpush1.bf16.msra.mxu0 0
    %3414 = vmatprep.subr.bf16.mxu0 0
    %3415 = vmatpush1.bf16.msra.mxu0 0
    %3416 = vmatprep.subr.bf16.mxu0 0
    %3417 = vmatpush1.bf16.msra.mxu0 0
    %3418 = vmatprep.subr.bf16.mxu0 0
    %3419 = vmatpush1.bf16.msra.mxu0 0
    %3420 = vmatprep.mubr.bf16.mxu0 0
    %3421 = vmatmul.mubr.bf16.gmra.mrb[0].mxu0 %v3386
    %v3422 = vpop.f32.mrb[0].mxu0
    %v3423 = vadd.f32 %v88, %v3422
    %v3424 = vpop.f32.mrb[0].mxu0
    %v3425 = vpop.f32.mrb[0].mxu0
    %v3426 = vpop.f32.mrb[0].mxu0
    %3427 = vdwg.mxu0
    %v3428 = vmax.f32 %v3423, 0.0
    %v3429 = vpack.c.bf16 %v3428, %v3428
    %v3431 = vsel %vm142, %v3429, 0
    %3433 = vmatprep.subr.bf16.mxu0 0
    %3434 = vmatpush1.bf16.msra.mxu0 %v1192
    %3435 = vmatprep.subr.bf16.mxu0 0
    %3436 = vmatpush1.bf16.msra.mxu0 %v1193
    %3437 = vmatprep.subr.bf16.mxu0 0
    %3438 = vmatpush1.bf16.msra.mxu0 %v1194
    %3439 = vmatprep.subr.bf16.mxu0 0
    %3440 = vmatpush1.bf16.msra.mxu0 %v1195
    %3441 = vmatprep.subr.bf16.mxu0 0
    %3442 = vmatpush1.bf16.msra.mxu0 0
    %3443 = vmatprep.subr.bf16.mxu0 0
    %3444 = vmatpush1.bf16.msra.mxu0 0
    %3445 = vmatprep.subr.bf16.mxu0 0
    %3446 = vmatpush1.bf16.msra.mxu0 0
    %3447 = vmatprep.subr.bf16.mxu0 0
    %3448 = vmatpush1.bf16.msra.mxu0 0
    %3449 = vmatprep.subr.bf16.mxu0 0
    %3450 = vmatpush1.bf16.msra.mxu0 0
    %3451 = vmatprep.subr.bf16.mxu0 0
    %3452 = vmatpush1.bf16.msra.mxu0 0
    %3453 = vmatprep.subr.bf16.mxu0 0
    %3454 = vmatpush1.bf16.msra.mxu0 0
    %3455 = vmatprep.subr.bf16.mxu0 0
    %3456 = vmatpush1.bf16.msra.mxu0 0
    %3457 = vmatprep.subr.bf16.mxu0 0
    %3458 = vmatpush1.bf16.msra.mxu0 0
    %3459 = vmatprep.subr.bf16.mxu0 0
    %3460 = vmatpush1.bf16.msra.mxu0 0
    %3461 = vmatprep.subr.bf16.mxu0 0
    %3462 = vmatpush1.bf16.msra.mxu0 0
    %3463 = vmatprep.subr.bf16.mxu0 0
    %3464 = vmatpush1.bf16.msra.mxu0 0
    %3465 = vmatprep.mubr.bf16.mxu0 0
    %3466 = vmatmul.mubr.bf16.gmra.mrb[0].mxu0 %v3431
    %v3467 = vpop.f32.mrb[0].mxu0
    %v3468 = vadd.f32 %v108, %v3467
    %v3469 = vpop.f32.mrb[0].mxu0
    %v3470 = vpop.f32.mrb[0].mxu0
    %v3471 = vpop.f32.mrb[0].mxu0
    %3472 = vdwg.mxu0
    %3474 = vrot.lane.b32.xlu0 %v3378, 64
    %v3475 = vpop.permute.xlu0 %3474
    %v3477 = vadd.f32 %v3468, %v3475
    %v3478 = vsel %vm408, %v3477, 0.0
    %3479 = vadd.xlane.f32.xlu0 %v3478
    %v3480 = vpop.xlane.xlu0 %3479
    %v3481 = vmul.f32 %v3480, %v412
    %v3482 = vsub.f32 %v3477, %v3481
    %v3483 = vmul.f32 %v3482, %v3482
    %v3484 = vsel %vm408, %v3483, 0.0
    %3485 = vadd.xlane.f32.xlu0 %v3484
    %v3486 = vpop.xlane.xlu0 %3485
    %v3487 = vmul.f32 %v3486, %v412
    %v3488 = vadd.f32 %v3487, 1e-05
    %v3489 = vrsqrt.pop %v3488
    %v3490 = vmul.f32 %v3482, %v3489
    %v3491 = vmul.f32 %v3490, %v1264
    %v3492 = vadd.f32 %v3491, %v1269
    %3494 = vrot.lane.b32.xlu0 %v3477, 96
    %v3495 = vpop.permute.xlu0 %3494
    %v3497 = vsel %vm408, %v3495, 0.0
    %3498 = vadd.xlane.f32.xlu0 %v3497
    %v3499 = vpop.xlane.xlu0 %3498
    %v3500 = vmul.f32 %v3499, %v412
    %v3501 = vsub.f32 %v3477, %v3500
    %v3502 = vmul.f32 %v3501, %v3501
    %3504 = vrot.lane.b32.xlu0 %v3502, 96
    %v3505 = vpop.permute.xlu0 %3504
    %v3507 = vsel %vm408, %v3505, 0.0
    %3508 = vadd.xlane.f32.xlu0 %v3507
    %v3509 = vpop.xlane.xlu0 %3508
    %v3510 = vmul.f32 %v3509, %v412
    %v3511 = vadd.f32 %v3510, 1e-05
    %v3512 = vrsqrt.pop %v3511
    %v3513 = vmul.f32 %v3501, %v3512
    %v3514 = vmul.f32 %v3513, %v1298
    %v3515 = vadd.f32 %v3514, %v1307
    %v3516 = vpack.c.bf16 %v3492, %v3492
    %v3518 = vsel %vm136, %v3516, 0
    %3520 = vmatprep.subr.bf16.mxu0 0
    %3521 = vmatpush1.bf16.msra.mxu0 %v1323
    %3522 = vmatprep.subr.bf16.mxu0 0
    %3523 = vmatpush1.bf16.msra.mxu0 %v1324
    %3524 = vmatprep.subr.bf16.mxu0 0
    %3525 = vmatpush1.bf16.msra.mxu0 0
    %3526 = vmatprep.subr.bf16.mxu0 0
    %3527 = vmatpush1.bf16.msra.mxu0 0
    %3528 = vmatprep.subr.bf16.mxu0 0
    %3529 = vmatpush1.bf16.msra.mxu0 0
    %3530 = vmatprep.subr.bf16.mxu0 0
    %3531 = vmatpush1.bf16.msra.mxu0 0
    %3532 = vmatprep.subr.bf16.mxu0 0
    %3533 = vmatpush1.bf16.msra.mxu0 0
    %3534 = vmatprep.subr.bf16.mxu0 0
    %3535 = vmatpush1.bf16.msra.mxu0 0
    %3536 = vmatprep.subr.bf16.mxu0 0
    %3537 = vmatpush1.bf16.msra.mxu0 0
    %3538 = vmatprep.subr.bf16.mxu0 0
    %3539 = vmatpush1.bf16.msra.mxu0 0
    %3540 = vmatprep.subr.bf16.mxu0 0
    %3541 = vmatpush1.bf16.msra.mxu0 0
    %3542 = vmatprep.subr.bf16.mxu0 0
    %3543 = vmatpush1.bf16.msra.mxu0 0
    %3544 = vmatprep.subr.bf16.mxu0 0
    %3545 = vmatpush1.bf16.msra.mxu0 0
    %3546 = vmatprep.subr.bf16.mxu0 0
    %3547 = vmatpush1.bf16.msra.mxu0 0
    %3548 = vmatprep.subr.bf16.mxu0 0
    %3549 = vmatpush1.bf16.msra.mxu0 0
    %3550 = vmatprep.subr.bf16.mxu0 0
    %3551 = vmatpush1.bf16.msra.mxu0 0
    %3552 = vmatprep.mubr.bf16.mxu0 0
    %3553 = vmatmul.mubr.bf16.gmra.mrb[0].mxu0 %v3518
    %v3554 = vpop.f32.mrb[0].mxu0
    %v3555 = vadd.f32 %v68, %v3554
    %v3556 = vpop.f32.mrb[0].mxu0
    %v3557 = vpop.f32.mrb[0].mxu0
    %v3558 = vpop.f32.mrb[0].mxu0
    %3559 = vdwg.mxu0
    %v3560 = vxor.u32 %v3555, 2147483648
    %v3561 = vmul.f32 %v3560, 1.442695
    %v3562 = vpow.pop %v3561
    %v3563 = vadd.f32 %v3562, 1.0
    %v3564 = vrcp.pop %v3563
    %v3565 = vmul.f32 1.0, %v3564
    %v3566 = vmul.f32 %v3565, 2.0
    %v3567 = vsub.f32 %v3566, 1.0
    %v3568 = vmul.f32 %v3565, %v3515
    %3570 = vrot.lane.b32.xlu0 %v3567, 64
    %v3571 = vpop.permute.xlu0 %3570
    %v3573 = vmul.f32 %v3565, %v3571
    %3575 = vrot.lane.b32.xlu0 %v3573, 32
    %v3576 = vpop.permute.xlu0 %3575
    %v3578 = vadd.f32 %v3568, %v3576
    %v3579 = vtanh.pop %v3578
    %3581 = vrot.lane.b32.xlu0 %v3579, 64
    %v3582 = vpop.permute.xlu0 %3581
    %v3584 = vmul.f32 %v3565, %v3582
    %3586 = vrot.lane.b32.xlu0 %v3584, 32
    %v3587 = vpop.permute.xlu0 %3586
    %v3589 = vsel %vm136, %v3587, %v3578
    %3591 = vrot.lane.b32.xlu0 %v2830, 64
    %v3592 = vpop.permute.xlu0 %3591
    %v3594 = vsel %vm142, %v3589, %v3592
    %v3595 = vpack.c.bf16 %v3594, %v3594
    %3596 = vmatprep.subr.bf16.mxu0 0
    %3597 = vmatpush1.bf16.msra.mxu0 %v1451
    %3598 = vmatprep.subr.bf16.mxu0 0
    %3599 = vmatpush1.bf16.msra.mxu0 %v1452
    %3600 = vmatprep.subr.bf16.mxu0 0
    %3601 = vmatpush1.bf16.msra.mxu0 %v1453
    %3602 = vmatprep.subr.bf16.mxu0 0
    %3603 = vmatpush1.bf16.msra.mxu0 %v1454
    %3604 = vmatprep.subr.bf16.mxu0 0
    %3605 = vmatpush1.bf16.msra.mxu0 %v1455
    %3606 = vmatprep.subr.bf16.mxu0 0
    %3607 = vmatpush1.bf16.msra.mxu0 %v1456
    %3608 = vmatprep.subr.bf16.mxu0 0
    %3609 = vmatpush1.bf16.msra.mxu0 %v1457
    %3610 = vmatprep.subr.bf16.mxu0 0
    %3611 = vmatpush1.bf16.msra.mxu0 %v1458
    %3612 = vmatprep.subr.bf16.mxu0 0
    %3613 = vmatpush1.bf16.msra.mxu0 0
    %3614 = vmatprep.subr.bf16.mxu0 0
    %3615 = vmatpush1.bf16.msra.mxu0 0
    %3616 = vmatprep.subr.bf16.mxu0 0
    %3617 = vmatpush1.bf16.msra.mxu0 0
    %3618 = vmatprep.subr.bf16.mxu0 0
    %3619 = vmatpush1.bf16.msra.mxu0 0
    %3620 = vmatprep.subr.bf16.mxu0 0
    %3621 = vmatpush1.bf16.msra.mxu0 0
    %3622 = vmatprep.subr.bf16.mxu0 0
    %3623 = vmatpush1.bf16.msra.mxu0 0
    %3624 = vmatprep.subr.bf16.mxu0 0
    %3625 = vmatpush1.bf16.msra.mxu0 0
    %3626 = vmatprep.subr.bf16.mxu0 0
    %3627 = vmatpush1.bf16.msra.mxu0 0
    %3628 = vmatprep.mubr.bf16.mxu0 0
    %3629 = vmatmul.mubr.bf16.gmra.mrb[0].mxu0 %v3595
    %v3630 = vpop.f32.mrb[0].mxu0
    %v3631 = vadd.f32 %v53, %v3630
    %v3632 = vpop.f32.mrb[0].mxu0
    %v3633 = vpop.f32.mrb[0].mxu0
    %v3634 = vpop.f32.mrb[0].mxu0
    %3635 = vdwg.mxu0
    %v3636 = vmax.f32 %v3631, 0.0
    %v3637 = vpack.c.bf16 %v3636, %v3636
    %v3639 = vsel %vm142, %v3637, 0
    %3641 = vmatprep.subr.bf16.mxu0 0
    %3642 = vmatpush1.bf16.msra.mxu0 %v1534
    %3643 = vmatprep.subr.bf16.mxu0 0
    %3644 = vmatpush1.bf16.msra.mxu0 %v1535
    %3645 = vmatprep.subr.bf16.mxu0 0
    %3646 = vmatpush1.bf16.msra.mxu0 %v1536
    %3647 = vmatprep.subr.bf16.mxu0 0
    %3648 = vmatpush1.bf16.msra.mxu0 %v1537
    %3649 = vmatprep.subr.bf16.mxu0 0
    %3650 = vmatpush1.bf16.msra.mxu0 0
    %3651 = vmatprep.subr.bf16.mxu0 0
    %3652 = vmatpush1.bf16.msra.mxu0 0
    %3653 = vmatprep.subr.bf16.mxu0 0
    %3654 = vmatpush1.bf16.msra.mxu0 0
    %3655 = vmatprep.subr.bf16.mxu0 0
    %3656 = vmatpush1.bf16.msra.mxu0 0
    %3657 = vmatprep.subr.bf16.mxu0 0
    %3658 = vmatpush1.bf16.msra.mxu0 0
    %3659 = vmatprep.subr.bf16.mxu0 0
    %3660 = vmatpush1.bf16.msra.mxu0 0
    %3661 = vmatprep.subr.bf16.mxu0 0
    %3662 = vmatpush1.bf16.msra.mxu0 0
    %3663 = vmatprep.subr.bf16.mxu0 0
    %3664 = vmatpush1.bf16.msra.mxu0 0
    %3665 = vmatprep.subr.bf16.mxu0 0
    %3666 = vmatpush1.bf16.msra.mxu0 0
    %3667 = vmatprep.subr.bf16.mxu0 0
    %3668 = vmatpush1.bf16.msra.mxu0 0
    %3669 = vmatprep.subr.bf16.mxu0 0
    %3670 = vmatpush1.bf16.msra.mxu0 0
    %3671 = vmatprep.subr.bf16.mxu0 0
    %3672 = vmatpush1.bf16.msra.mxu0 0
    %3673 = vmatprep.mubr.bf16.mxu0 0
    %3674 = vmatmul.mubr.bf16.gmra.mrb[0].mxu0 %v3639
    %v3675 = vpop.f32.mrb[0].mxu0
    %v3676 = vadd.f32 %v93, %v3675
    %v3677 = vpop.f32.mrb[0].mxu0
    %v3678 = vpop.f32.mrb[0].mxu0
    %v3679 = vpop.f32.mrb[0].mxu0
    %3680 = vdwg.mxu0
    %v3681 = vmax.f32 %v3676, 0.0
    %v3682 = vpack.c.bf16 %v3681, %v3681
    %v3684 = vsel %vm142, %v3682, 0
    %3686 = vmatprep.subr.bf16.mxu0 0
    %3687 = vmatpush1.bf16.msra.mxu0 %v1611
    %3688 = vmatprep.subr.bf16.mxu0 0
    %3689 = vmatpush1.bf16.msra.mxu0 %v1612
    %3690 = vmatprep.subr.bf16.mxu0 0
    %3691 = vmatpush1.bf16.msra.mxu0 %v1613
    %3692 = vmatprep.subr.bf16.mxu0 0
    %3693 = vmatpush1.bf16.msra.mxu0 %v1614
    %3694 = vmatprep.subr.bf16.mxu0 0
    %3695 = vmatpush1.bf16.msra.mxu0 0
    %3696 = vmatprep.subr.bf16.mxu0 0
    %3697 = vmatpush1.bf16.msra.mxu0 0
    %3698 = vmatprep.subr.bf16.mxu0 0
    %3699 = vmatpush1.bf16.msra.mxu0 0
    %3700 = vmatprep.subr.bf16.mxu0 0
    %3701 = vmatpush1.bf16.msra.mxu0 0
    %3702 = vmatprep.subr.bf16.mxu0 0
    %3703 = vmatpush1.bf16.msra.mxu0 0
    %3704 = vmatprep.subr.bf16.mxu0 0
    %3705 = vmatpush1.bf16.msra.mxu0 0
    %3706 = vmatprep.subr.bf16.mxu0 0
    %3707 = vmatpush1.bf16.msra.mxu0 0
    %3708 = vmatprep.subr.bf16.mxu0 0
    %3709 = vmatpush1.bf16.msra.mxu0 0
    %3710 = vmatprep.subr.bf16.mxu0 0
    %3711 = vmatpush1.bf16.msra.mxu0 0
    %3712 = vmatprep.subr.bf16.mxu0 0
    %3713 = vmatpush1.bf16.msra.mxu0 0
    %3714 = vmatprep.subr.bf16.mxu0 0
    %3715 = vmatpush1.bf16.msra.mxu0 0
    %3716 = vmatprep.subr.bf16.mxu0 0
    %3717 = vmatpush1.bf16.msra.mxu0 0
    %3718 = vmatprep.mubr.bf16.mxu0 0
    %3719 = vmatmul.mubr.bf16.gmra.mrb[0].mxu0 %v3684
    %v3720 = vpop.f32.mrb[0].mxu0
    %v3721 = vadd.f32 %v113, %v3720
    %v3722 = vpop.f32.mrb[0].mxu0
    %v3723 = vpop.f32.mrb[0].mxu0
    %v3724 = vpop.f32.mrb[0].mxu0
    %3725 = vdwg.mxu0
    %3727 = vrot.lane.b32.xlu0 %v3631, 64
    %v3728 = vpop.permute.xlu0 %3727
    %v3730 = vadd.f32 %v3721, %v3728
    %v3731 = vsel %vm408, %v3730, 0.0
    %3732 = vadd.xlane.f32.xlu0 %v3731
    %v3733 = vpop.xlane.xlu0 %3732
    %v3734 = vmul.f32 %v3733, %v412
    %v3735 = vsub.f32 %v3730, %v3734
    %v3736 = vmul.f32 %v3735, %v3735
    %v3737 = vsel %vm408, %v3736, 0.0
    %3738 = vadd.xlane.f32.xlu0 %v3737
    %v3739 = vpop.xlane.xlu0 %3738
    %v3740 = vmul.f32 %v3739, %v412
    %v3741 = vadd.f32 %v3740, 1e-05
    %v3742 = vrsqrt.pop %v3741
    %v3743 = vmul.f32 %v3735, %v3742
    %v3744 = vmul.f32 %v3743, %v1683
    %v3745 = vadd.f32 %v3744, %v1688
    %3747 = vrot.lane.b32.xlu0 %v3730, 96
    %v3748 = vpop.permute.xlu0 %3747
    %v3750 = vsel %vm408, %v3748, 0.0
    %3751 = vadd.xlane.f32.xlu0 %v3750
    %v3752 = vpop.xlane.xlu0 %3751
    %v3753 = vmul.f32 %v3752, %v412
    %v3754 = vsub.f32 %v3730, %v3753
    %v3755 = vmul.f32 %v3754, %v3754
    %3757 = vrot.lane.b32.xlu0 %v3755, 96
    %v3758 = vpop.permute.xlu0 %3757
    %v3760 = vsel %vm408, %v3758, 0.0
    %3761 = vadd.xlane.f32.xlu0 %v3760
    %v3762 = vpop.xlane.xlu0 %3761
    %v3763 = vmul.f32 %v3762, %v412
    %v3764 = vadd.f32 %v3763, 1e-05
    %v3765 = vrsqrt.pop %v3764
    %v3766 = vmul.f32 %v3754, %v3765
    %v3767 = vmul.f32 %v3766, %v1717
    %v3768 = vadd.f32 %v3767, %v1726
    %v3769 = vpack.c.bf16 %v3745, %v3745
    %v3771 = vsel %vm136, %v3769, 0
    %3773 = vmatprep.subr.bf16.mxu0 0
    %3774 = vmatpush1.bf16.msra.mxu0 %v1742
    %3775 = vmatprep.subr.bf16.mxu0 0
    %3776 = vmatpush1.bf16.msra.mxu0 %v1743
    %3777 = vmatprep.subr.bf16.mxu0 0
    %3778 = vmatpush1.bf16.msra.mxu0 0
    %3779 = vmatprep.subr.bf16.mxu0 0
    %3780 = vmatpush1.bf16.msra.mxu0 0
    %3781 = vmatprep.subr.bf16.mxu0 0
    %3782 = vmatpush1.bf16.msra.mxu0 0
    %3783 = vmatprep.subr.bf16.mxu0 0
    %3784 = vmatpush1.bf16.msra.mxu0 0
    %3785 = vmatprep.subr.bf16.mxu0 0
    %3786 = vmatpush1.bf16.msra.mxu0 0
    %3787 = vmatprep.subr.bf16.mxu0 0
    %3788 = vmatpush1.bf16.msra.mxu0 0
    %3789 = vmatprep.subr.bf16.mxu0 0
    %3790 = vmatpush1.bf16.msra.mxu0 0
    %3791 = vmatprep.subr.bf16.mxu0 0
    %3792 = vmatpush1.bf16.msra.mxu0 0
    %3793 = vmatprep.subr.bf16.mxu0 0
    %3794 = vmatpush1.bf16.msra.mxu0 0
    %3795 = vmatprep.subr.bf16.mxu0 0
    %3796 = vmatpush1.bf16.msra.mxu0 0
    %3797 = vmatprep.subr.bf16.mxu0 0
    %3798 = vmatpush1.bf16.msra.mxu0 0
    %3799 = vmatprep.subr.bf16.mxu0 0
    %3800 = vmatpush1.bf16.msra.mxu0 0
    %3801 = vmatprep.subr.bf16.mxu0 0
    %3802 = vmatpush1.bf16.msra.mxu0 0
    %3803 = vmatprep.subr.bf16.mxu0 0
    %3804 = vmatpush1.bf16.msra.mxu0 0
    %3805 = vmatprep.mubr.bf16.mxu0 0
    %3806 = vmatmul.mubr.bf16.gmra.mrb[0].mxu0 %v3771
    %v3807 = vpop.f32.mrb[0].mxu0
    %v3808 = vadd.f32 %v73, %v3807
    %v3809 = vpop.f32.mrb[0].mxu0
    %v3810 = vpop.f32.mrb[0].mxu0
    %v3811 = vpop.f32.mrb[0].mxu0
    %3812 = vdwg.mxu0
    %v3813 = vxor.u32 %v3808, 2147483648
    %v3814 = vmul.f32 %v3813, 1.442695
    %v3815 = vpow.pop %v3814
    %v3816 = vadd.f32 %v3815, 1.0
    %v3817 = vrcp.pop %v3816
    %v3818 = vmul.f32 1.0, %v3817
    %v3819 = vmul.f32 %v3818, 2.0
    %v3820 = vsub.f32 %v3819, 1.0
    %v3821 = vmul.f32 %v3818, %v3768
    %3823 = vrot.lane.b32.xlu0 %v3820, 64
    %v3824 = vpop.permute.xlu0 %3823
    %v3826 = vmul.f32 %v3818, %v3824
    %3828 = vrot.lane.b32.xlu0 %v3826, 32
    %v3829 = vpop.permute.xlu0 %3828
    %v3831 = vadd.f32 %v3821, %v3829
    %v3832 = vtanh.pop %v3831
    %3834 = vrot.lane.b32.xlu0 %v3832, 64
    %v3835 = vpop.permute.xlu0 %3834
    %v3837 = vmul.f32 %v3818, %v3835
    %3839 = vrot.lane.b32.xlu0 %v3837, 32
    %v3840 = vpop.permute.xlu0 %3839
    %v3842 = vsel %vm136, %v3840, %v3831
    %v3843 = vld [vmem:[%s5] sm:$0xf]
    %v3844 = vld [vmem:[%s5 + $0x4] sm:$0xf]
    %v3845 = vld [vmem:[%s5 + $0x8] sm:$0xf]
    %v3846 = vld [vmem:[%s5 + $0xc] sm:$0xf]
    %v3847 = vld [vmem:[%s5 + $0x10] sm:$0xf]
    %v3848 = vld [vmem:[%s5 + $0x14] sm:$0xf]
    %v3849 = vld [vmem:[%s5 + $0x18] sm:$0xf]
    %v3850 = vld [vmem:[%s5 + $0x1c] sm:$0xf]
    %v3851 = vpack.c.bf16 %v3842, %v3842
    %v3852 = vld [vmem:[%s6] sm:$0x1]
    %v3853 = vlaneseq
    %v3854 = vshrl.u32 %v3853, 7
    %v3855 = vsub.s32 0, %v3854
    %v3856 = vrot.slane %v3852, %v3855
    %v3865 = vunpack.c.l.b16 %v3843
    %v3866 = vunpack.c.l.b16 %v3844
    %v3867 = vunpack.c.l.b16 %v3845
    %v3868 = vunpack.c.l.b16 %v3846
    %v3869 = vunpack.c.l.b16 %v3847
    %v3870 = vunpack.c.l.b16 %v3848
    %v3871 = vunpack.c.l.b16 %v3849
    %v3872 = vunpack.c.l.b16 %v3850
    %v3873 = vpack.c.b16 %v3866, %v3865
    %v3874 = vpack.c.b16 %v3868, %v3867
    %v3875 = vpack.c.b16 %v3870, %v3869
    %v3876 = vpack.c.b16 %v3872, %v3871
    %v3882 = vsel %vm142, %v3851, 0
    %3884 = vmatprep.subr.bf16.mxu0 0
    %3885 = vmatpush1.bf16.msra.mxu0 %v3873
    %3886 = vmatprep.subr.bf16.mxu0 0
    %3887 = vmatpush1.bf16.msra.mxu0 %v3874
    %3888 = vmatprep.subr.bf16.mxu0 0
    %3889 = vmatpush1.bf16.msra.mxu0 %v3875
    %3890 = vmatprep.subr.bf16.mxu0 0
    %3891 = vmatpush1.bf16.msra.mxu0 %v3876
    %3892 = vmatprep.subr.bf16.mxu0 0
    %3893 = vmatpush1.bf16.msra.mxu0 0
    %3894 = vmatprep.subr.bf16.mxu0 0
    %3895 = vmatpush1.bf16.msra.mxu0 0
    %3896 = vmatprep.subr.bf16.mxu0 0
    %3897 = vmatpush1.bf16.msra.mxu0 0
    %3898 = vmatprep.subr.bf16.mxu0 0
    %3899 = vmatpush1.bf16.msra.mxu0 0
    %3900 = vmatprep.subr.bf16.mxu0 0
    %3901 = vmatpush1.bf16.msra.mxu0 0
    %3902 = vmatprep.subr.bf16.mxu0 0
    %3903 = vmatpush1.bf16.msra.mxu0 0
    %3904 = vmatprep.subr.bf16.mxu0 0
    %3905 = vmatpush1.bf16.msra.mxu0 0
    %3906 = vmatprep.subr.bf16.mxu0 0
    %3907 = vmatpush1.bf16.msra.mxu0 0
    %3908 = vmatprep.subr.bf16.mxu0 0
    %3909 = vmatpush1.bf16.msra.mxu0 0
    %3910 = vmatprep.subr.bf16.mxu0 0
    %3911 = vmatpush1.bf16.msra.mxu0 0
    %3912 = vmatprep.subr.bf16.mxu0 0
    %3913 = vmatpush1.bf16.msra.mxu0 0
    %3914 = vmatprep.subr.bf16.mxu0 0
    %3915 = vmatpush1.bf16.msra.mxu0 0
    %3916 = vmatprep.mubr.bf16.mxu0 0
    %3917 = vmatmul.mubr.bf16.gmra.mrb[0].mxu0 %v3882
    %v3918 = vpop.f32.mrb[0].mxu0
    %v3919 = vadd.f32 %v3856, %v3918
    %v3920 = vpop.f32.mrb[0].mxu0
    %v3921 = vpop.f32.mrb[0].mxu0
    %v3922 = vpop.f32.mrb[0].mxu0
    %3923 = vdwg.mxu0
    %v3924 = vmax.f32 %v3919, 0.0
    %v3925 = vld [vmem:[%s5 + $0x20] sm:$0xf]
    %v3926 = vld [vmem:[%s5 + $0x24] sm:$0xf]
    %v3927 = vld [vmem:[%s5 + $0x28] sm:$0xf]
    %v3928 = vld [vmem:[%s5 + $0x2c] sm:$0xf]
    %v3929 = vpack.c.bf16 %v3924, %v3924
    %v3930 = vld [vmem:[%s6 + $0x1] sm:$0x1]
    %v3931 = vlaneseq
    %v3932 = vshrl.u32 %v3931, 7
    %v3933 = vsub.s32 0, %v3932
    %v3934 = vrot.slane %v3930, %v3933
    %v3939 = vunpack.c.l.b16 %v3925
    %v3940 = vunpack.c.l.b16 %v3926
    %v3941 = vunpack.c.l.b16 %v3927
    %v3942 = vunpack.c.l.b16 %v3928
    %v3943 = vpack.c.b16 %v3940, %v3939
    %v3944 = vpack.c.b16 %v3942, %v3941
    %v3948 = vsel %vm136, %v3929, 0
    %3950 = vmatprep.subr.bf16.mxu0 0
    %3951 = vmatpush1.bf16.msra.mxu0 %v3943
    %3952 = vmatprep.subr.bf16.mxu0 0
    %3953 = vmatpush1.bf16.msra.mxu0 %v3944
    %3954 = vmatprep.subr.bf16.mxu0 0
    %3955 = vmatpush1.bf16.msra.mxu0 0
    %3956 = vmatprep.subr.bf16.mxu0 0
    %3957 = vmatpush1.bf16.msra.mxu0 0
    %3958 = vmatprep.subr.bf16.mxu0 0
    %3959 = vmatpush1.bf16.msra.mxu0 0
    %3960 = vmatprep.subr.bf16.mxu0 0
    %3961 = vmatpush1.bf16.msra.mxu0 0
    %3962 = vmatprep.subr.bf16.mxu0 0
    %3963 = vmatpush1.bf16.msra.mxu0 0
    %3964 = vmatprep.subr.bf16.mxu0 0
    %3965 = vmatpush1.bf16.msra.mxu0 0
    %3966 = vmatprep.subr.bf16.mxu0 0
    %3967 = vmatpush1.bf16.msra.mxu0 0
    %3968 = vmatprep.subr.bf16.mxu0 0
    %3969 = vmatpush1.bf16.msra.mxu0 0
    %3970 = vmatprep.subr.bf16.mxu0 0
    %3971 = vmatpush1.bf16.msra.mxu0 0
    %3972 = vmatprep.subr.bf16.mxu0 0
    %3973 = vmatpush1.bf16.msra.mxu0 0
    %3974 = vmatprep.subr.bf16.mxu0 0
    %3975 = vmatpush1.bf16.msra.mxu0 0
    %3976 = vmatprep.subr.bf16.mxu0 0
    %3977 = vmatpush1.bf16.msra.mxu0 0
    %3978 = vmatprep.subr.bf16.mxu0 0
    %3979 = vmatpush1.bf16.msra.mxu0 0
    %3980 = vmatprep.subr.bf16.mxu0 0
    %3981 = vmatpush1.bf16.msra.mxu0 0
    %3982 = vmatprep.mubr.bf16.mxu0 0
    %3983 = vmatmul.mubr.bf16.gmra.mrb[0].mxu0 %v3948
    %v3984 = vpop.f32.mrb[0].mxu0
    %v3985 = vadd.f32 %v3934, %v3984
    %v3986 = vpop.f32.mrb[0].mxu0
    %v3987 = vpop.f32.mrb[0].mxu0
    %v3988 = vpop.f32.mrb[0].mxu0
    %3989 = vdwg.mxu0
    %v3990 = vmax.f32 %v3985, 0.0
    %v3991 = vld [vmem:[%s5 + $0x30] sm:$0xf]
    %v3992 = vld [vmem:[%s5 + $0x34] sm:$0xf]
    %v3993 = vld [vmem:[%s5 + $0x38] sm:$0xf]
    %v3994 = vld [vmem:[%s5 + $0x3c] sm:$0xf]
    %v3995 = vpack.c.bf16 %v3990, %v3990
    %v3996 = vld [vmem:[%s6 + $0x2] sm:$0x1]
    %v3997 = vlaneseq
    %v3998 = vshrl.u32 %v3997, 7
    %v3999 = vsub.s32 0, %v3998
    %v4000 = vrot.slane %v3996, %v3999
    %v4005 = vunpack.c.l.b16 %v3991
    %v4006 = vunpack.c.l.b16 %v3992
    %v4007 = vunpack.c.l.b16 %v3993
    %v4008 = vunpack.c.l.b16 %v3994
    %v4009 = vpack.c.b16 %v4006, %v4005
    %v4010 = vpack.c.b16 %v4008, %v4007
    %v4014 = vsel %vm136, %v3995, 0
    %4016 = vmatprep.subr.bf16.mxu0 0
    %4017 = vmatpush1.bf16.msra.mxu0 %v4009
    %4018 = vmatprep.subr.bf16.mxu0 0
    %4019 = vmatpush1.bf16.msra.mxu0 %v4010
    %4020 = vmatprep.subr.bf16.mxu0 0
    %4021 = vmatpush1.bf16.msra.mxu0 0
    %4022 = vmatprep.subr.bf16.mxu0 0
    %4023 = vmatpush1.bf16.msra.mxu0 0
    %4024 = vmatprep.subr.bf16.mxu0 0
    %4025 = vmatpush1.bf16.msra.mxu0 0
    %4026 = vmatprep.subr.bf16.mxu0 0
    %4027 = vmatpush1.bf16.msra.mxu0 0
    %4028 = vmatprep.subr.bf16.mxu0 0
    %4029 = vmatpush1.bf16.msra.mxu0 0
    %4030 = vmatprep.subr.bf16.mxu0 0
    %4031 = vmatpush1.bf16.msra.mxu0 0
    %4032 = vmatprep.subr.bf16.mxu0 0
    %4033 = vmatpush1.bf16.msra.mxu0 0
    %4034 = vmatprep.subr.bf16.mxu0 0
    %4035 = vmatpush1.bf16.msra.mxu0 0
    %4036 = vmatprep.subr.bf16.mxu0 0
    %4037 = vmatpush1.bf16.msra.mxu0 0
    %4038 = vmatprep.subr.bf16.mxu0 0
    %4039 = vmatpush1.bf16.msra.mxu0 0
    %4040 = vmatprep.subr.bf16.mxu0 0
    %4041 = vmatpush1.bf16.msra.mxu0 0
    %4042 = vmatprep.subr.bf16.mxu0 0
    %4043 = vmatpush1.bf16.msra.mxu0 0
    %4044 = vmatprep.subr.bf16.mxu0 0
    %4045 = vmatpush1.bf16.msra.mxu0 0
    %4046 = vmatprep.subr.bf16.mxu0 0
    %4047 = vmatpush1.bf16.msra.mxu0 0
    %4048 = vmatprep.mubr.bf16.mxu0 0
    %4049 = vmatmul.mubr.bf16.gmra.mrb[0].mxu0 %v4014
    %v4050 = vpop.f32.mrb[0].mxu0
    %v4051 = vadd.f32 %v4000, %v4050
    %v4052 = vpop.f32.mrb[0].mxu0
    %v4053 = vpop.f32.mrb[0].mxu0
    %v4054 = vpop.f32.mrb[0].mxu0
    %4055 = vdwg.mxu0
    %4057 = vrot.lane.b32.xlu0 %v3919, 96
    %v4058 = vpop.permute.xlu0 %4057
    %v4060 = vadd.f32 %v4051, %v4058
    %v4061 = vld [vmem:[%s6 + $0x3] sm:$0x1]
    %v4062 = vld [vmem:[%s6 + $0x4] sm:$0x1]
    %v4063 = vsel %vm408, %v4060, 0.0
    %4064 = vadd.xlane.f32.xlu0 %v4063
    %v4065 = vpop.xlane.xlu0 %4064
    %v4066 = vmul.f32 %v4065, %v412
    %v4067 = vsub.f32 %v4060, %v4066
    %v4068 = vmul.f32 %v4067, %v4067
    %v4069 = vsel %vm408, %v4068, 0.0
    %4070 = vadd.xlane.f32.xlu0 %v4069
    %v4071 = vpop.xlane.xlu0 %4070
    %v4072 = vmul.f32 %v4071, %v412
    %v4073 = vadd.f32 %v4072, 1e-05
    %v4074 = vrsqrt.pop %v4073
    %v4075 = vmul.f32 %v4067, %v4074
    %v4076 = vlaneseq
    %v4077 = vshrl.u32 %v4076, 7
    %v4078 = vsub.s32 0, %v4077
    %v4079 = vrot.slane %v4061, %v4078
    %v4080 = vmul.f32 %v4075, %v4079
    %v4081 = vlaneseq
    %v4082 = vshrl.u32 %v4081, 7
    %v4083 = vsub.s32 0, %v4082
    %v4084 = vrot.slane %v4062, %v4083
    %v4085 = vadd.f32 %v4080, %v4084
    %v4086 = vld [vmem:[%s5 + $0x40] sm:$0xf]
    %v4087 = vld [vmem:[%s5 + $0x44] sm:$0xf]
    %v4088 = vld [vmem:[%s5 + $0x48] sm:$0xf]
    %v4089 = vld [vmem:[%s5 + $0x4c] sm:$0xf]
    %v4090 = vpack.c.bf16 %v4085, %v4085
    %v4091 = vld [vmem:[%s6 + $0x5] sm:$0x1]
    %v4092 = vlaneseq
    %v4093 = vshrl.u32 %v4092, 7
    %v4094 = vsub.s32 0, %v4093
    %v4095 = vrot.slane %v4091, %v4094
    %v4100 = vunpack.c.l.b16 %v4086
    %v4101 = vunpack.c.l.b16 %v4087
    %v4102 = vunpack.c.l.b16 %v4088
    %v4103 = vunpack.c.l.b16 %v4089
    %v4104 = vpack.c.b16 %v4101, %v4100
    %v4105 = vpack.c.b16 %v4103, %v4102
    %v4109 = vsel %vm136, %v4090, 0
    %4111 = vmatprep.subr.bf16.mxu0 0
    %4112 = vmatpush1.bf16.msra.mxu0 %v4104
    %4113 = vmatprep.subr.bf16.mxu0 0
    %4114 = vmatpush1.bf16.msra.mxu0 %v4105
    %4115 = vmatprep.subr.bf16.mxu0 0
    %4116 = vmatpush1.bf16.msra.mxu0 0
    %4117 = vmatprep.subr.bf16.mxu0 0
    %4118 = vmatpush1.bf16.msra.mxu0 0
    %4119 = vmatprep.subr.bf16.mxu0 0
    %4120 = vmatpush1.bf16.msra.mxu0 0
    %4121 = vmatprep.subr.bf16.mxu0 0
    %4122 = vmatpush1.bf16.msra.mxu0 0
    %4123 = vmatprep.subr.bf16.mxu0 0
    %4124 = vmatpush1.bf16.msra.mxu0 0
    %4125 = vmatprep.subr.bf16.mxu0 0
    %4126 = vmatpush1.bf16.msra.mxu0 0
    %4127 = vmatprep.subr.bf16.mxu0 0
    %4128 = vmatpush1.bf16.msra.mxu0 0
    %4129 = vmatprep.subr.bf16.mxu0 0
    %4130 = vmatpush1.bf16.msra.mxu0 0
    %4131 = vmatprep.subr.bf16.mxu0 0
    %4132 = vmatpush1.bf16.msra.mxu0 0
    %4133 = vmatprep.subr.bf16.mxu0 0
    %4134 = vmatpush1.bf16.msra.mxu0 0
    %4135 = vmatprep.subr.bf16.mxu0 0
    %4136 = vmatpush1.bf16.msra.mxu0 0
    %4137 = vmatprep.subr.bf16.mxu0 0
    %4138 = vmatpush1.bf16.msra.mxu0 0
    %4139 = vmatprep.subr.bf16.mxu0 0
    %4140 = vmatpush1.bf16.msra.mxu0 0
    %4141 = vmatprep.subr.bf16.mxu0 0
    %4142 = vmatpush1.bf16.msra.mxu0 0
    %4143 = vmatprep.mubr.bf16.mxu0 0
    %4144 = vmatmul.mubr.bf16.gmra.mrb[0].mxu0 %v4109
    %v4145 = vpop.f32.mrb[0].mxu0
    %v4146 = vadd.f32 %v4095, %v4145
    %v4147 = vpop.f32.mrb[0].mxu0
    %v4148 = vpop.f32.mrb[0].mxu0
    %v4149 = vpop.f32.mrb[0].mxu0
    %4150 = vdwg.mxu0
    %v4151 = vxor.u32 %v4146, 2147483648
    %v4152 = vmul.f32 %v4151, 1.442695
    %v4153 = vpow.pop %v4152
    %v4154 = vadd.f32 %v4153, 1.0
    %v4155 = vrcp.pop %v4154
    %v4156 = vmul.f32 1.0, %v4155
    %vm4157 = vcmask 25600
    %4158 = vst.msk [vmem:[#allocation2] sm:$0x3] %vm4157, %v4156
    %4159 = vst.msk [vmem:[#allocation4] sm:$0x3] %vm408, %v3842
    // Predicated region
    $region30: #{tpu_custom_call.1} parent=1 // pred_check
      _
    $region31: #{tpu_custom_call.1} parent=1 // pred_check_branch
      %4161 = sbr.rel (0) target = $region33
    $region32: #{tpu_custom_call.1} parent=1 // pred_region
      %s4163 = ssub.s32 32, 32
      %4164 = vsyncadd [#allocation3], %s4163
      %s4166 = sshll.u32 [#allocation2], 4
      %s4167 = int_to_ptr.vmem [resolvable:$true] %s4166
      %4169 = dma.vmem_to_hbm [thread:$0]  %s4167, 32, %s7, [#allocation3]
    $region33: #{tpu_custom_call.1} parent=1 // pred_fallthru
      _
    // Predicated region
    $region34: #{tpu_custom_call.1} parent=1 // pred_check
      _
    $region35: #{tpu_custom_call.1} parent=1 // pred_check_branch
      %4171 = sbr.rel (0) target = $region37
    $region36: #{tpu_custom_call.1} parent=1 // pred_region
      %s4173 = ssub.s32 32, 32
      %4174 = vsyncadd [#allocation5], %s4173
      %s4176 = sshll.u32 [#allocation4], 4
      %s4177 = int_to_ptr.vmem [resolvable:$true] %s4176
      %4179 = dma.vmem_to_hbm [thread:$0]  %s4177, 32, %s8, [#allocation5]
    $region37: #{tpu_custom_call.1} parent=1 // pred_fallthru
      _
    // Predicated region
    $region38: #{tpu_custom_call.1} parent=1 // pred_check
      _
    $region39: #{tpu_custom_call.1} parent=1 // pred_check_branch
      %4181 = sbr.rel (0) target = $region41
    $region40: #{tpu_custom_call.1} parent=1 // pred_region
      %4182 = dma.done [#allocation3], 32
    $region41: #{tpu_custom_call.1} parent=1 // pred_fallthru
      _
    // Predicated region
    $region42: #{tpu_custom_call.1} parent=1 // pred_check
      _
    $region43: #{tpu_custom_call.1} parent=1 // pred_check_branch
      %4184 = sbr.rel (0) target = $region45
    $region44: #{tpu_custom_call.1} parent=1 // pred_region
      %4185 = dma.done [#allocation5], 32
    $region45: #{tpu_custom_call.1} parent=1 // pred_fallthru
      _
    %4186 = vsyncpa [#allocation3], 1
    %4187 = vsyncpa [#allocation5], 1

</llo_original>
